<compile_context>
chip_gen: v7x
topology: tpu7x:2x2x1
jax: 0.10.0
libtpu: 0.0.40
codegen_flags: <defaults>
</compile_context>

<pallas_src>
import functools

import jax
import jax.numpy as jnp
from jax import lax
from jax.experimental import pallas as pl
from jax.experimental.pallas import tpu as pltpu

FEATURE_D = 1280
FEATURE_H = 3
FEATURE_W = 3
FEATURE_EXTRACTOR_SIZE = FEATURE_D * FEATURE_H * FEATURE_W   # 11520
SOFTMAX_NEURONS = 40
N_PAD = 128                                                  # lane-dense out dim

# Fits under v7x's 64 MiB physical VMEM, and well above v5e/v6e scoped defaults.
_DEFAULT_VMEM_LIMIT = 48 * 1024 * 1024


def _round_up(x, m):
    return ((x + m - 1) // m) * m


def _linear_kernel(x_ref, w_ref, b_ref, o_ref):
    """One M-tile: o = x @ W.T + b in a single full-K shot (no scratch)."""
    # Cast activations to the weight dtype (bf16) on the VPU; this is a no-op
    # if the caller already supplies bf16 activations. MXU accumulates in f32.
    x = x_ref[...].astype(w_ref.dtype)
    acc = lax.dot_general(
        x, w_ref[...],
        dimension_numbers=(((1,), (1,)), ((), ())),   # contract K of both operands
        preferred_element_type=jnp.float32,
    )
    o_ref[...] = acc + b_ref[...]                     # (tm, 128) + (1, 128) broadcast


def prepare_edge_classifier_params(weight, bias, *, param_dtype=jnp.bfloat16):
    """One-time parameter prep (call once at load time, not per forward).

    weight: (40, 11520) torch nn.Linear layout (out_features, in_features)
    bias:   (40,)
    Returns:
      w_pad: (128, 11520) param_dtype  -- N padded to 128 with zero rows
      b_pad: (1, 128)     float32      -- N padded to 128 with zeros
    """
    # TODO(synk): optional weight quantization (int8 + per-output-channel scales
    # on v5e/v6e, fp8 on v7x since its MXU has no integer path) would halve the
    # resident weight HBM stream for small-batch inference; kept bf16 here to
    # stay close to the f32 PyTorch reference.
    n, k = weight.shape
    assert n == SOFTMAX_NEURONS and k == FEATURE_EXTRACTOR_SIZE
    w_pad = jnp.zeros((N_PAD, k), dtype=param_dtype)
    w_pad = w_pad.at[:n, :].set(weight.astype(param_dtype))
    b_pad = jnp.zeros((1, N_PAD), dtype=jnp.float32)
    b_pad = b_pad.at[:, :n].set(bias.astype(jnp.float32).reshape(1, n))
    return w_pad, b_pad


def edge_classifier_forward(x, w_pad, b_pad, *, tm=256,
                            vmem_limit_bytes=_DEFAULT_VMEM_LIMIT,
                            single_buffer_params=True):
    """Forward pass of EdgeClassifier.

    x:     (B, 1280, 3, 3) f32/bf16 NCHW feature map, or already (B, 11520)
    w_pad: (128, 11520) from prepare_edge_classifier_params
    b_pad: (1, 128)     from prepare_edge_classifier_params
    returns (B, 40) float32
    """
    if x.ndim == 4:
        x = x.reshape(x.shape[0], -1)      # same as torch .view(-1, 11520)
    B, K = x.shape
    NP, Kw = w_pad.shape
    assert K == FEATURE_EXTRACTOR_SIZE and Kw == K and NP == N_PAD

    # Dropout(p=0.25) is identity in eval/inference mode (what forward()
    # computes at serving time).
    # TODO(synk): training-mode dropout (pltpu.prng_random_bits mask + 1/(1-p)
    # scale) not implemented.

    # ---- M-tile selection: multiples of 8, no activation padding. ----------
    b8 = _round_up(B, 8)
    if b8 <= 8:
        tm_eff = 8
    elif b8 <= 2 * tm:
        # Split moderate batches into >= 2 balanced M-tiles so the "parallel"
        # grid axis can shard across v7x's two TensorCores.
        tm_eff = max(8, _round_up(pl.cdiv(b8, 2), 8))
    else:
        tm_eff = tm
    grid_m = pl.cdiv(B, tm_eff)
    # Any ragged last tile is handled by Pallas block bounds: out-of-bounds
    # output rows are dropped, and the garbage read into out-of-bounds
    # activation rows only affects those dropped rows.

    if single_buffer_params:
        # Weight/bias never change across the grid -> one VMEM copy is enough.
        w_spec = pl.BlockSpec((NP, K), lambda m: (0, 0),
                              pipeline_mode=pl.Buffered(1))
        b_spec = pl.BlockSpec((1, NP), lambda m: (0, 0),
                              pipeline_mode=pl.Buffered(1))
    else:
        w_spec = pl.BlockSpec((NP, K), lambda m: (0, 0))
        b_spec = pl.BlockSpec((1, NP), lambda m: (0, 0))

    bytes_accessed = (x.size * x.dtype.itemsize
                      + w_pad.size * w_pad.dtype.itemsize
                      + b_pad.size * b_pad.dtype.itemsize
                      + B * NP * 4)

    out = pl.pallas_call(
        _linear_kernel,
        out_shape=jax.ShapeDtypeStruct((B, NP), jnp.float32),
        grid=(grid_m,),
        in_specs=[
            pl.BlockSpec((tm_eff, K), lambda m: (m, 0)),  # activation M-tile (full K)
            w_spec,                                       # weight: resident in VMEM
            b_spec,                                       # bias:   resident in VMEM
        ],
        out_specs=pl.BlockSpec((tm_eff, NP), lambda m: (m, 0)),
        compiler_params=pltpu.CompilerParams(
            dimension_semantics=("parallel",),            # shard M across TCs (v7x)
            vmem_limit_bytes=vmem_limit_bytes,
        ),
        cost_estimate=pl.CostEstimate(
            flops=2 * B * K * NP,
            transcendentals=0,
            bytes_accessed=bytes_accessed,
        ),
    )(x, w_pad, b_pad)

    return out[:, :SOFTMAX_NEURONS]


def _init_params(key):
    """Deterministic nn.Linear-style init: U(-1/sqrt(in), 1/sqrt(in))."""
    kw, kb = jax.random.split(key)
    bound = 1.0 / (FEATURE_EXTRACTOR_SIZE ** 0.5)
    weight = jax.random.uniform(
        kw, (SOFTMAX_NEURONS, FEATURE_EXTRACTOR_SIZE),
        minval=-bound, maxval=bound, dtype=jnp.float32)
    bias = jax.random.uniform(
        kb, (SOFTMAX_NEURONS,), minval=-bound, maxval=bound, dtype=jnp.float32)
    return weight, bias


if __name__ == "__main__":
    key = jax.random.PRNGKey(0)
    k_x, k_p = jax.random.split(key)

    # Small batch of feature maps consistent with the module's expected input.
    B = 2
    x = jax.random.normal(k_x, (B, FEATURE_D, FEATURE_H, FEATURE_W),
                          dtype=jnp.float32)
    weight, bias = _init_params(k_p)

    # One-time parameter prep (pad N to 128, cast weight to bf16).
    w_pad, b_pad = prepare_edge_classifier_params(weight, bias)

    try:
        fwd = jax.jit(edge_classifier_forward)
        out = jax.block_until_ready(fwd(x, w_pad, b_pad))
    except Exception:
        # Installed JAX may not honor per-BlockSpec pipeline_mode; fall back to
        # default double-buffered params (~3 MiB extra VMEM, still well under
        # the 48 MiB limit).
        fwd = jax.jit(functools.partial(edge_classifier_forward,
                                        single_buffer_params=False))
        out = jax.block_until_ready(fwd(x, w_pad, b_pad))
    assert out.shape == (B, SOFTMAX_NEURONS)

    x_flat = x.reshape(B, -1)

    # Tight check against a reference that applies the same bf16 quantization
    # of both operands (only accumulation order differs).
    xq = x_flat.astype(jnp.bfloat16).astype(jnp.float32)
    wq = w_pad[:SOFTMAX_NEURONS].astype(jnp.float32)
    ref_q = lax.dot_general(xq, wq, (((1,), (1,)), ((), ())),
                            precision=lax.Precision.HIGHEST) + bias
    assert jnp.allclose(out, ref_q, atol=2e-3, rtol=2e-3)

    # Loose check against the full-f32 PyTorch-equivalent reference
    # (bf16 weight/activation quantization is the only difference).
    ref = lax.dot_general(x_flat, weight, (((1,), (1,)), ((), ())),
                          precision=lax.Precision.HIGHEST) + bias
    assert jnp.allclose(out, ref, atol=3e-2, rtol=3e-2)

    print("KERNEL_OK")
</pallas_src>

<mosaic_0001>
module attributes {stable_mosaic.version = 11 : i64} {
  func.func @_linear_kernel(%arg0: i32, %arg1: memref<8x11520xf32, #tpu.memory_space<vmem>>, %arg2: memref<128x11520xbf16, #tpu.memory_space<vmem>>, %arg3: memref<1x128xf32, #tpu.memory_space<vmem>>, %arg4: memref<8x128xf32, #tpu.memory_space<vmem>>) attributes {dimension_semantics = [#tpu.dimension_semantics<parallel>], iteration_bounds = array<i64: 1>, scalar_prefetch = 0 : i64, scratch_operands = 0 : i64, tpu.core_type = #tpu.core_type<tc>, window_params = [{transform_indices = @transform_0, window_bounds = array<i64: 8, 11520>}, {pipeline_mode = #tpu.pipeline_mode<synchronous>, transform_indices = @transform_1, window_bounds = array<i64: 128, 11520>}, {pipeline_mode = #tpu.pipeline_mode<synchronous>, transform_indices = @transform_2, window_bounds = array<i64: 1, 128>}, {transform_indices = @transform_3, window_bounds = array<i64: 8, 128>}]} {
    %c0 = arith.constant 0 : index
    %c0_0 = arith.constant 0 : index
    %0 = vector.load %arg1[%c0, %c0_0] : memref<8x11520xf32, #tpu.memory_space<vmem>>, vector<8x11520xf32>
    %1 = arith.truncf %0 : vector<8x11520xf32> to vector<8x11520xbf16>
    %c0_1 = arith.constant 0 : index
    %c0_2 = arith.constant 0 : index
    %2 = vector.load %arg2[%c0_1, %c0_2] : memref<128x11520xbf16, #tpu.memory_space<vmem>>, vector<128x11520xbf16>
    %cst = arith.constant dense<0.000000e+00> : vector<8x128xf32>
    %3 = tpu.matmul %1, %2, %cst {dimension_numbers = #tpu.dot_dimension_numbers<[1], [1], [0], [0], [0, 0, 1, 0], [], []>} : vector<8x11520xbf16>, vector<128x11520xbf16>, vector<8x128xf32> -> vector<8x128xf32>
    %c0_3 = arith.constant 0 : index
    %c0_4 = arith.constant 0 : index
    %4 = vector.load %arg3[%c0_3, %c0_4] : memref<1x128xf32, #tpu.memory_space<vmem>>, vector<1x128xf32>
    %5 = vector.broadcast %4 : vector<1x128xf32> to vector<8x128xf32>
    %6 = arith.addf %3, %5 : vector<8x128xf32>
    %c0_5 = arith.constant 0 : index
    %c0_6 = arith.constant 0 : index
    %7 = vector.load %arg4[%c0_5, %c0_6] : memref<8x128xf32, #tpu.memory_space<vmem>>, vector<8x128xf32>
    tpu.vector_store %arg4[%c0_5, %c0_6], %6 {strides = array<i32>} : memref<8x128xf32, #tpu.memory_space<vmem>>, vector<8x128xf32>,
    return
  }
  func.func @transform_0(%arg0: i32) -> (i32, i32) {
    %c0_i32 = arith.constant 0 : i32
    %c0_i32_0 = arith.constant 0 : i32
    return %arg0, %c0_i32 : i32, i32
  }
  func.func @transform_1(%arg0: i32) -> (i32, i32) {
    %c0_i32 = arith.constant 0 : i32
    %c0_i32_0 = arith.constant 0 : i32
    %c0_i32_1 = arith.constant 0 : i32
    return %c0_i32, %c0_i32_0 : i32, i32
  }
  func.func @transform_2(%arg0: i32) -> (i32, i32) {
    %c0_i32 = arith.constant 0 : i32
    %c0_i32_0 = arith.constant 0 : i32
    %c0_i32_1 = arith.constant 0 : i32
    return %c0_i32, %c0_i32_0 : i32, i32
  }
  func.func @transform_3(%arg0: i32) -> (i32, i32) {
    %c0_i32 = arith.constant 0 : i32
    %c0_i32_0 = arith.constant 0 : i32
    return %arg0, %c0_i32 : i32, i32
  }
}

module attributes {stable_mosaic.version = 11 : i64} {
  func.func @_linear_kernel(%arg0: i32, %arg1: memref<8x11520xf32, #tpu.memory_space<vmem>>, %arg2: memref<128x11520xbf16, #tpu.memory_space<vmem>>, %arg3: memref<1x128xf32, #tpu.memory_space<vmem>>, %arg4: memref<8x128xf32, #tpu.memory_space<vmem>>) attributes {dimension_semantics = [#tpu.dimension_semantics<parallel>], iteration_bounds = array<i64: 1>, scalar_prefetch = 0 : i64, scratch_operands = 0 : i64, tpu.core_type = #tpu.core_type<tc>, window_params = [{transform_indices = @transform_0, window_bounds = array<i64: 8, 11520>}, {pipeline_mode = #tpu.pipeline_mode<synchronous>, transform_indices = @transform_1, window_bounds = array<i64: 128, 11520>}, {pipeline_mode = #tpu.pipeline_mode<synchronous>, transform_indices = @transform_2, window_bounds = array<i64: 1, 128>}, {transform_indices = @transform_3, window_bounds = array<i64: 8, 128>}]} {
    %c0 = arith.constant 0 : index
    %c0_0 = arith.constant 0 : index
    %0 = vector.load %arg1[%c0, %c0_0] : memref<8x11520xf32, #tpu.memory_space<vmem>>, vector<8x11520xf32>
    %1 = arith.truncf %0 : vector<8x11520xf32> to vector<8x11520xbf16>
    %c0_1 = arith.constant 0 : index
    %c0_2 = arith.constant 0 : index
    %2 = vector.load %arg2[%c0_1, %c0_2] : memref<128x11520xbf16, #tpu.memory_space<vmem>>, vector<128x11520xbf16>
    %cst = arith.constant dense<0.000000e+00> : vector<8x128xf32>
    %3 = tpu.matmul %1, %2, %cst {dimension_numbers = #tpu.dot_dimension_numbers<[1], [1], [0], [0], [0, 0, 1, 0], [], []>} : vector<8x11520xbf16>, vector<128x11520xbf16>, vector<8x128xf32> -> vector<8x128xf32>
    %c0_3 = arith.constant 0 : index
    %c0_4 = arith.constant 0 : index
    %4 = vector.load %arg3[%c0_3, %c0_4] : memref<1x128xf32, #tpu.memory_space<vmem>>, vector<1x128xf32>
    %5 = vector.broadcast %4 : vector<1x128xf32> to vector<8x128xf32>
    %6 = arith.addf %3, %5 : vector<8x128xf32>
    %c0_5 = arith.constant 0 : index
    %c0_6 = arith.constant 0 : index
    %7 = vector.load %arg4[%c0_5, %c0_6] : memref<8x128xf32, #tpu.memory_space<vmem>>, vector<8x128xf32>
    tpu.vector_store %arg4[%c0_5, %c0_6], %6 {strides = array<i32>} : memref<8x128xf32, #tpu.memory_space<vmem>>, vector<8x128xf32>,
    return
  }
  func.func @transform_0(%arg0: i32) -> (i32, i32) {
    %c0_i32 = arith.constant 0 : i32
    %c0_i32_0 = arith.constant 0 : i32
    return %arg0, %c0_i32 : i32, i32
  }
  func.func @transform_1(%arg0: i32) -> (i32, i32) {
    %c0_i32 = arith.constant 0 : i32
    %c0_i32_0 = arith.constant 0 : i32
    %c0_i32_1 = arith.constant 0 : i32
    return %c0_i32, %c0_i32_0 : i32, i32
  }
  func.func @transform_2(%arg0: i32) -> (i32, i32) {
    %c0_i32 = arith.constant 0 : i32
    %c0_i32_0 = arith.constant 0 : i32
    %c0_i32_1 = arith.constant 0 : i32
    return %c0_i32, %c0_i32_0 : i32, i32
  }
  func.func @transform_3(%arg0: i32) -> (i32, i32) {
    %c0_i32 = arith.constant 0 : i32
    %c0_i32_0 = arith.constant 0 : i32
    return %arg0, %c0_i32 : i32, i32
  }
}

</mosaic_0001>

<llo_original>
// kernel: edge_classifier_forward.1
$region0: #{edge_classifier_forward.1}
  #allocation0 [shape = 'u32[]', space=smem, size = 0x4, offset = 0x4, fixed_abs, tag = 'smem constant byte address 0x4 - core index']
  #allocation1 [shape = 'u32[144,128]{1,0:T(1,128)}', space=vmem, size = 0x12000, scoped, tag = 'internal scratch']
  %s0 = inlined_call_operand.vmem [shape: f32[2,11520], index: 0, kind: input, shape index: {}]
  %s1 = inlined_call_operand.vmem [shape: bf16[128,11520], index: 1, kind: input, shape index: {}]
  %s2 = inlined_call_operand.vmem [shape: f32[1,128], index: 2, kind: input, shape index: {}]
  %s3 = inlined_call_operand.hbm [shape: f32[2,128], index: 3, kind: output, shape index: {}]
  %s4 = sld [smem:[#allocation0]]
  $region22: #{edge_classifier_forward.1} parent=0
    _
  %s6 = ssub.s32 1, %s4
  %s7 = scalar_select 0, %s6, %s4
  $region1: #{edge_classifier_forward.1} parent=0
    #allocation2 [shape = 'u8[4096]{0}', space=vmem, size = 0x1000, scoped, tag = 'output window, operand 0, single buffered']
    #allocation3 [shape = 's32[1]{0}', space=sflag, size = 0x4, scoped, tag = 'scoped memory for edge_classifier_forward.1']
    %8 = vsyncpa [#allocation3], 0
    // Predicated region
    $region2: #{edge_classifier_forward.1} parent=1 // pred_check
      _
    $region3: #{edge_classifier_forward.1} parent=1 // pred_check_branch
      %10 = sbr.rel (0) target = $region5
    $region4: #{edge_classifier_forward.1} parent=1 // pred_region
      _
    $region5: #{edge_classifier_forward.1} parent=1 // pred_fallthru
      _
    // Predicated region
    $region6: #{edge_classifier_forward.1} parent=1 // pred_check
      _
    $region7: #{edge_classifier_forward.1} parent=1 // pred_check_branch
      %12 = sbr.rel (0) target = $region9
    $region8: #{edge_classifier_forward.1} parent=1 // pred_region
      _
    $region9: #{edge_classifier_forward.1} parent=1 // pred_fallthru
      _
    // Predicated region
    $region10: #{edge_classifier_forward.1} parent=1 // pred_check
      _
    $region11: #{edge_classifier_forward.1} parent=1 // pred_check_branch
      %14 = sbr.rel (0) target = $region13
    $region12: #{edge_classifier_forward.1} parent=1 // pred_region
      _
    $region13: #{edge_classifier_forward.1} parent=1 // pred_fallthru
      _
    %v16 = vld [vmem:[%s0] sm:$0xff]
    %v17 = vld [vmem:[%s0 + $0x8] sm:$0xff]
    %v18 = vld [vmem:[%s0 + $0x10] sm:$0xff]
    %v19 = vld [vmem:[%s0 + $0x18] sm:$0xff]
    %v20 = vld [vmem:[%s0 + $0x20] sm:$0xff]
    %v21 = vld [vmem:[%s0 + $0x28] sm:$0xff]
    %v22 = vld [vmem:[%s0 + $0x30] sm:$0xff]
    %v23 = vld [vmem:[%s0 + $0x38] sm:$0xff]
    %v24 = vld [vmem:[%s0 + $0x40] sm:$0xff]
    %v25 = vld [vmem:[%s0 + $0x48] sm:$0xff]
    %v26 = vld [vmem:[%s0 + $0x50] sm:$0xff]
    %v27 = vld [vmem:[%s0 + $0x58] sm:$0xff]
    %v28 = vld [vmem:[%s0 + $0x60] sm:$0xff]
    %v29 = vld [vmem:[%s0 + $0x68] sm:$0xff]
    %v30 = vld [vmem:[%s0 + $0x70] sm:$0xff]
    %v31 = vld [vmem:[%s0 + $0x78] sm:$0xff]
    %v32 = vld [vmem:[%s0 + $0x80] sm:$0xff]
    %v33 = vld [vmem:[%s0 + $0x88] sm:$0xff]
    %v34 = vld [vmem:[%s0 + $0x90] sm:$0xff]
    %v35 = vld [vmem:[%s0 + $0x98] sm:$0xff]
    %v36 = vld [vmem:[%s0 + $0xa0] sm:$0xff]
    %v37 = vld [vmem:[%s0 + $0xa8] sm:$0xff]
    %v38 = vld [vmem:[%s0 + $0xb0] sm:$0xf]
    %v39 = vld [vmem:[%s0 + $0xb4] sm:$0xff]
    %v40 = vld [vmem:[%s0 + $0xbc] sm:$0xff]
    %v41 = vld [vmem:[%s0 + $0xc4] sm:$0xff]
    %v42 = vld [vmem:[%s0 + $0xcc] sm:$0xff]
    %v43 = vld [vmem:[%s0 + $0xd4] sm:$0xff]
    %v44 = vld [vmem:[%s0 + $0xdc] sm:$0xff]
    %v45 = vld [vmem:[%s0 + $0xe4] sm:$0xff]
    %v46 = vld [vmem:[%s0 + $0xec] sm:$0xff]
    %v47 = vld [vmem:[%s0 + $0xf4] sm:$0xff]
    %v48 = vld [vmem:[%s0 + $0xfc] sm:$0xff]
    %v49 = vld [vmem:[%s0 + $0x104] sm:$0xff]
    %v50 = vld [vmem:[%s0 + $0x10c] sm:$0xff]
    %v51 = vld [vmem:[%s0 + $0x114] sm:$0xff]
    %v52 = vld [vmem:[%s0 + $0x11c] sm:$0xff]
    %v53 = vld [vmem:[%s0 + $0x124] sm:$0xff]
    %v54 = vld [vmem:[%s0 + $0x12c] sm:$0xff]
    %v55 = vld [vmem:[%s0 + $0x134] sm:$0xff]
    %v56 = vld [vmem:[%s0 + $0x13c] sm:$0xff]
    %v57 = vld [vmem:[%s0 + $0x144] sm:$0xff]
    %v58 = vld [vmem:[%s0 + $0x14c] sm:$0xff]
    %v59 = vld [vmem:[%s0 + $0x154] sm:$0xff]
    %v60 = vld [vmem:[%s0 + $0x15c] sm:$0xff]
    %v61 = vld [vmem:[%s0 + $0x164] sm:$0xf]
    %v62 = vld [vmem:[%s0 + $0x168] sm:$0xff]
    %v63 = vld [vmem:[%s0 + $0x170] sm:$0xff]
    %v64 = vld [vmem:[%s0 + $0x178] sm:$0xff]
    %v65 = vld [vmem:[%s0 + $0x180] sm:$0xff]
    %v66 = vld [vmem:[%s0 + $0x188] sm:$0xff]
    %v67 = vld [vmem:[%s0 + $0x190] sm:$0xff]
    %v68 = vld [vmem:[%s0 + $0x198] sm:$0xff]
    %v69 = vld [vmem:[%s0 + $0x1a0] sm:$0xff]
    %v70 = vld [vmem:[%s0 + $0x1a8] sm:$0xff]
    %v71 = vld [vmem:[%s0 + $0x1b0] sm:$0xff]
    %v72 = vld [vmem:[%s0 + $0x1b8] sm:$0xff]
    %v73 = vld [vmem:[%s0 + $0x1c0] sm:$0xff]
    %v74 = vld [vmem:[%s0 + $0x1c8] sm:$0xff]
    %v75 = vld [vmem:[%s0 + $0x1d0] sm:$0xff]
    %v76 = vld [vmem:[%s0 + $0x1d8] sm:$0xff]
    %v77 = vld [vmem:[%s0 + $0x1e0] sm:$0xff]
    %v78 = vld [vmem:[%s0 + $0x1e8] sm:$0xff]
    %v79 = vld [vmem:[%s0 + $0x1f0] sm:$0xff]
    %v80 = vld [vmem:[%s0 + $0x1f8] sm:$0xff]
    %v81 = vld [vmem:[%s0 + $0x200] sm:$0xff]
    %v82 = vld [vmem:[%s0 + $0x208] sm:$0xff]
    %v83 = vld [vmem:[%s0 + $0x210] sm:$0xff]
    %v84 = vld [vmem:[%s0 + $0x218] sm:$0xf]
    %v85 = vld [vmem:[%s0 + $0x21c] sm:$0xff]
    %v86 = vld [vmem:[%s0 + $0x224] sm:$0xff]
    %v87 = vld [vmem:[%s0 + $0x22c] sm:$0xff]
    %v88 = vld [vmem:[%s0 + $0x234] sm:$0xff]
    %v89 = vld [vmem:[%s0 + $0x23c] sm:$0xff]
    %v90 = vld [vmem:[%s0 + $0x244] sm:$0xff]
    %v91 = vld [vmem:[%s0 + $0x24c] sm:$0xff]
    %v92 = vld [vmem:[%s0 + $0x254] sm:$0xff]
    %v93 = vld [vmem:[%s0 + $0x25c] sm:$0xff]
    %v94 = vld [vmem:[%s0 + $0x264] sm:$0xff]
    %v95 = vld [vmem:[%s0 + $0x26c] sm:$0xff]
    %v96 = vld [vmem:[%s0 + $0x274] sm:$0xff]
    %v97 = vld [vmem:[%s0 + $0x27c] sm:$0xff]
    %v98 = vld [vmem:[%s0 + $0x284] sm:$0xff]
    %v99 = vld [vmem:[%s0 + $0x28c] sm:$0xff]
    %v100 = vld [vmem:[%s0 + $0x294] sm:$0xff]
    %v101 = vld [vmem:[%s0 + $0x29c] sm:$0xff]
    %v102 = vld [vmem:[%s0 + $0x2a4] sm:$0xff]
    %v103 = vld [vmem:[%s0 + $0x2ac] sm:$0xff]
    %v104 = vld [vmem:[%s0 + $0x2b4] sm:$0xff]
    %v105 = vld [vmem:[%s0 + $0x2bc] sm:$0xff]
    %v106 = vld [vmem:[%s0 + $0x2c4] sm:$0xff]
    %v107 = vld [vmem:[%s0 + $0x2cc] sm:$0xf]
    %v200 = vcombine.low %v16, %v39
    %v201 = vcombine.high %v16, %v39
    %v202 = vcombine.low %v62, %v85
    %v203 = vcombine.high %v62, %v85
    %v205 = vunpack.c.l.s4 1983009808
    %v206 = vunpack.c.0.s8 %v205
    %v207 = vlaneseq
    %v208 = vshrl.u32 %v207, 7
    %v209 = vsub.s32 %v206, %v208
    %v210 = vrot.slane %v200, %v209
    %v212 = vunpack.c.l.s4 1983009808
    %v213 = vunpack.c.0.s8 %v212
    %v214 = vlaneseq
    %v215 = vshrl.u32 %v214, 7
    %v216 = vsub.s32 %v213, %v215
    %v217 = vrot.slane %v201, %v216
    %v219 = vunpack.c.l.s4 1983009808
    %v220 = vunpack.c.0.s8 %v219
    %v221 = vlaneseq
    %v222 = vshrl.u32 %v221, 7
    %v223 = vsub.s32 %v220, %v222
    %v224 = vrot.slane %v202, %v223
    %v226 = vunpack.c.l.s4 1983009808
    %v227 = vunpack.c.0.s8 %v226
    %v228 = vlaneseq
    %v229 = vshrl.u32 %v228, 7
    %v230 = vsub.s32 %v227, %v229
    %v231 = vrot.slane %v203, %v230
    %v232 = vcombine.low %v210, %v224
    %v233 = vcombine.high %v210, %v224
    %v234 = vcombine.low %v217, %v231
    %v235 = vcombine.high %v217, %v231
    %v236 = vcombine.low %v17, %v40
    %v237 = vcombine.high %v17, %v40
    %v238 = vcombine.low %v63, %v86
    %v239 = vcombine.high %v63, %v86
    %v241 = vunpack.c.l.s4 1983009808
    %v242 = vunpack.c.0.s8 %v241
    %v243 = vlaneseq
    %v244 = vshrl.u32 %v243, 7
    %v245 = vsub.s32 %v242, %v244
    %v246 = vrot.slane %v236, %v245
    %v248 = vunpack.c.l.s4 1983009808
    %v249 = vunpack.c.0.s8 %v248
    %v250 = vlaneseq
    %v251 = vshrl.u32 %v250, 7
    %v252 = vsub.s32 %v249, %v251
    %v253 = vrot.slane %v237, %v252
    %v255 = vunpack.c.l.s4 1983009808
    %v256 = vunpack.c.0.s8 %v255
    %v257 = vlaneseq
    %v258 = vshrl.u32 %v257, 7
    %v259 = vsub.s32 %v256, %v258
    %v260 = vrot.slane %v238, %v259
    %v262 = vunpack.c.l.s4 1983009808
    %v263 = vunpack.c.0.s8 %v262
    %v264 = vlaneseq
    %v265 = vshrl.u32 %v264, 7
    %v266 = vsub.s32 %v263, %v265
    %v267 = vrot.slane %v239, %v266
    %v268 = vcombine.low %v246, %v260
    %v269 = vcombine.high %v246, %v260
    %v270 = vcombine.low %v253, %v267
    %v271 = vcombine.high %v253, %v267
    %v272 = vcombine.low %v18, %v41
    %v273 = vcombine.high %v18, %v41
    %v274 = vcombine.low %v64, %v87
    %v275 = vcombine.high %v64, %v87
    %v277 = vunpack.c.l.s4 1983009808
    %v278 = vunpack.c.0.s8 %v277
    %v279 = vlaneseq
    %v280 = vshrl.u32 %v279, 7
    %v281 = vsub.s32 %v278, %v280
    %v282 = vrot.slane %v272, %v281
    %v284 = vunpack.c.l.s4 1983009808
    %v285 = vunpack.c.0.s8 %v284
    %v286 = vlaneseq
    %v287 = vshrl.u32 %v286, 7
    %v288 = vsub.s32 %v285, %v287
    %v289 = vrot.slane %v273, %v288
    %v291 = vunpack.c.l.s4 1983009808
    %v292 = vunpack.c.0.s8 %v291
    %v293 = vlaneseq
    %v294 = vshrl.u32 %v293, 7
    %v295 = vsub.s32 %v292, %v294
    %v296 = vrot.slane %v274, %v295
    %v298 = vunpack.c.l.s4 1983009808
    %v299 = vunpack.c.0.s8 %v298
    %v300 = vlaneseq
    %v301 = vshrl.u32 %v300, 7
    %v302 = vsub.s32 %v299, %v301
    %v303 = vrot.slane %v275, %v302
    %v304 = vcombine.low %v282, %v296
    %v305 = vcombine.high %v282, %v296
    %v306 = vcombine.low %v289, %v303
    %v307 = vcombine.high %v289, %v303
    %v308 = vcombine.low %v19, %v42
    %v309 = vcombine.high %v19, %v42
    %v310 = vcombine.low %v65, %v88
    %v311 = vcombine.high %v65, %v88
    %v313 = vunpack.c.l.s4 1983009808
    %v314 = vunpack.c.0.s8 %v313
    %v315 = vlaneseq
    %v316 = vshrl.u32 %v315, 7
    %v317 = vsub.s32 %v314, %v316
    %v318 = vrot.slane %v308, %v317
    %v320 = vunpack.c.l.s4 1983009808
    %v321 = vunpack.c.0.s8 %v320
    %v322 = vlaneseq
    %v323 = vshrl.u32 %v322, 7
    %v324 = vsub.s32 %v321, %v323
    %v325 = vrot.slane %v309, %v324
    %v327 = vunpack.c.l.s4 1983009808
    %v328 = vunpack.c.0.s8 %v327
    %v329 = vlaneseq
    %v330 = vshrl.u32 %v329, 7
    %v331 = vsub.s32 %v328, %v330
    %v332 = vrot.slane %v310, %v331
    %v334 = vunpack.c.l.s4 1983009808
    %v335 = vunpack.c.0.s8 %v334
    %v336 = vlaneseq
    %v337 = vshrl.u32 %v336, 7
    %v338 = vsub.s32 %v335, %v337
    %v339 = vrot.slane %v311, %v338
    %v340 = vcombine.low %v318, %v332
    %v341 = vcombine.high %v318, %v332
    %v342 = vcombine.low %v325, %v339
    %v343 = vcombine.high %v325, %v339
    %v344 = vcombine.low %v20, %v43
    %v345 = vcombine.high %v20, %v43
    %v346 = vcombine.low %v66, %v89
    %v347 = vcombine.high %v66, %v89
    %v349 = vunpack.c.l.s4 1983009808
    %v350 = vunpack.c.0.s8 %v349
    %v351 = vlaneseq
    %v352 = vshrl.u32 %v351, 7
    %v353 = vsub.s32 %v350, %v352
    %v354 = vrot.slane %v344, %v353
    %v356 = vunpack.c.l.s4 1983009808
    %v357 = vunpack.c.0.s8 %v356
    %v358 = vlaneseq
    %v359 = vshrl.u32 %v358, 7
    %v360 = vsub.s32 %v357, %v359
    %v361 = vrot.slane %v345, %v360
    %v363 = vunpack.c.l.s4 1983009808
    %v364 = vunpack.c.0.s8 %v363
    %v365 = vlaneseq
    %v366 = vshrl.u32 %v365, 7
    %v367 = vsub.s32 %v364, %v366
    %v368 = vrot.slane %v346, %v367
    %v370 = vunpack.c.l.s4 1983009808
    %v371 = vunpack.c.0.s8 %v370
    %v372 = vlaneseq
    %v373 = vshrl.u32 %v372, 7
    %v374 = vsub.s32 %v371, %v373
    %v375 = vrot.slane %v347, %v374
    %v376 = vcombine.low %v354, %v368
    %v377 = vcombine.high %v354, %v368
    %v378 = vcombine.low %v361, %v375
    %v379 = vcombine.high %v361, %v375
    %v380 = vcombine.low %v21, %v44
    %v381 = vcombine.high %v21, %v44
    %v382 = vcombine.low %v67, %v90
    %v383 = vcombine.high %v67, %v90
    %v385 = vunpack.c.l.s4 1983009808
    %v386 = vunpack.c.0.s8 %v385
    %v387 = vlaneseq
    %v388 = vshrl.u32 %v387, 7
    %v389 = vsub.s32 %v386, %v388
    %v390 = vrot.slane %v380, %v389
    %v392 = vunpack.c.l.s4 1983009808
    %v393 = vunpack.c.0.s8 %v392
    %v394 = vlaneseq
    %v395 = vshrl.u32 %v394, 7
    %v396 = vsub.s32 %v393, %v395
    %v397 = vrot.slane %v381, %v396
    %v399 = vunpack.c.l.s4 1983009808
    %v400 = vunpack.c.0.s8 %v399
    %v401 = vlaneseq
    %v402 = vshrl.u32 %v401, 7
    %v403 = vsub.s32 %v400, %v402
    %v404 = vrot.slane %v382, %v403
    %v406 = vunpack.c.l.s4 1983009808
    %v407 = vunpack.c.0.s8 %v406
    %v408 = vlaneseq
    %v409 = vshrl.u32 %v408, 7
    %v410 = vsub.s32 %v407, %v409
    %v411 = vrot.slane %v383, %v410
    %v412 = vcombine.low %v390, %v404
    %v413 = vcombine.high %v390, %v404
    %v414 = vcombine.low %v397, %v411
    %v415 = vcombine.high %v397, %v411
    %v416 = vcombine.low %v22, %v45
    %v417 = vcombine.high %v22, %v45
    %v418 = vcombine.low %v68, %v91
    %v419 = vcombine.high %v68, %v91
    %v421 = vunpack.c.l.s4 1983009808
    %v422 = vunpack.c.0.s8 %v421
    %v423 = vlaneseq
    %v424 = vshrl.u32 %v423, 7
    %v425 = vsub.s32 %v422, %v424
    %v426 = vrot.slane %v416, %v425
    %v428 = vunpack.c.l.s4 1983009808
    %v429 = vunpack.c.0.s8 %v428
    %v430 = vlaneseq
    %v431 = vshrl.u32 %v430, 7
    %v432 = vsub.s32 %v429, %v431
    %v433 = vrot.slane %v417, %v432
    %v435 = vunpack.c.l.s4 1983009808
    %v436 = vunpack.c.0.s8 %v435
    %v437 = vlaneseq
    %v438 = vshrl.u32 %v437, 7
    %v439 = vsub.s32 %v436, %v438
    %v440 = vrot.slane %v418, %v439
    %v442 = vunpack.c.l.s4 1983009808
    %v443 = vunpack.c.0.s8 %v442
    %v444 = vlaneseq
    %v445 = vshrl.u32 %v444, 7
    %v446 = vsub.s32 %v443, %v445
    %v447 = vrot.slane %v419, %v446
    %v448 = vcombine.low %v426, %v440
    %v449 = vcombine.high %v426, %v440
    %v450 = vcombine.low %v433, %v447
    %v451 = vcombine.high %v433, %v447
    %v452 = vcombine.low %v23, %v46
    %v453 = vcombine.high %v23, %v46
    %v454 = vcombine.low %v69, %v92
    %v455 = vcombine.high %v69, %v92
    %v457 = vunpack.c.l.s4 1983009808
    %v458 = vunpack.c.0.s8 %v457
    %v459 = vlaneseq
    %v460 = vshrl.u32 %v459, 7
    %v461 = vsub.s32 %v458, %v460
    %v462 = vrot.slane %v452, %v461
    %v464 = vunpack.c.l.s4 1983009808
    %v465 = vunpack.c.0.s8 %v464
    %v466 = vlaneseq
    %v467 = vshrl.u32 %v466, 7
    %v468 = vsub.s32 %v465, %v467
    %v469 = vrot.slane %v453, %v468
    %v471 = vunpack.c.l.s4 1983009808
    %v472 = vunpack.c.0.s8 %v471
    %v473 = vlaneseq
    %v474 = vshrl.u32 %v473, 7
    %v475 = vsub.s32 %v472, %v474
    %v476 = vrot.slane %v454, %v475
    %v478 = vunpack.c.l.s4 1983009808
    %v479 = vunpack.c.0.s8 %v478
    %v480 = vlaneseq
    %v481 = vshrl.u32 %v480, 7
    %v482 = vsub.s32 %v479, %v481
    %v483 = vrot.slane %v455, %v482
    %v484 = vcombine.low %v462, %v476
    %v485 = vcombine.high %v462, %v476
    %v486 = vcombine.low %v469, %v483
    %v487 = vcombine.high %v469, %v483
    %v488 = vcombine.low %v24, %v47
    %v489 = vcombine.high %v24, %v47
    %v490 = vcombine.low %v70, %v93
    %v491 = vcombine.high %v70, %v93
    %v493 = vunpack.c.l.s4 1983009808
    %v494 = vunpack.c.0.s8 %v493
    %v495 = vlaneseq
    %v496 = vshrl.u32 %v495, 7
    %v497 = vsub.s32 %v494, %v496
    %v498 = vrot.slane %v488, %v497
    %v500 = vunpack.c.l.s4 1983009808
    %v501 = vunpack.c.0.s8 %v500
    %v502 = vlaneseq
    %v503 = vshrl.u32 %v502, 7
    %v504 = vsub.s32 %v501, %v503
    %v505 = vrot.slane %v489, %v504
    %v507 = vunpack.c.l.s4 1983009808
    %v508 = vunpack.c.0.s8 %v507
    %v509 = vlaneseq
    %v510 = vshrl.u32 %v509, 7
    %v511 = vsub.s32 %v508, %v510
    %v512 = vrot.slane %v490, %v511
    %v514 = vunpack.c.l.s4 1983009808
    %v515 = vunpack.c.0.s8 %v514
    %v516 = vlaneseq
    %v517 = vshrl.u32 %v516, 7
    %v518 = vsub.s32 %v515, %v517
    %v519 = vrot.slane %v491, %v518
    %v520 = vcombine.low %v498, %v512
    %v521 = vcombine.high %v498, %v512
    %v522 = vcombine.low %v505, %v519
    %v523 = vcombine.high %v505, %v519
    %v524 = vcombine.low %v25, %v48
    %v525 = vcombine.high %v25, %v48
    %v526 = vcombine.low %v71, %v94
    %v527 = vcombine.high %v71, %v94
    %v529 = vunpack.c.l.s4 1983009808
    %v530 = vunpack.c.0.s8 %v529
    %v531 = vlaneseq
    %v532 = vshrl.u32 %v531, 7
    %v533 = vsub.s32 %v530, %v532
    %v534 = vrot.slane %v524, %v533
    %v536 = vunpack.c.l.s4 1983009808
    %v537 = vunpack.c.0.s8 %v536
    %v538 = vlaneseq
    %v539 = vshrl.u32 %v538, 7
    %v540 = vsub.s32 %v537, %v539
    %v541 = vrot.slane %v525, %v540
    %v543 = vunpack.c.l.s4 1983009808
    %v544 = vunpack.c.0.s8 %v543
    %v545 = vlaneseq
    %v546 = vshrl.u32 %v545, 7
    %v547 = vsub.s32 %v544, %v546
    %v548 = vrot.slane %v526, %v547
    %v550 = vunpack.c.l.s4 1983009808
    %v551 = vunpack.c.0.s8 %v550
    %v552 = vlaneseq
    %v553 = vshrl.u32 %v552, 7
    %v554 = vsub.s32 %v551, %v553
    %v555 = vrot.slane %v527, %v554
    %v556 = vcombine.low %v534, %v548
    %v557 = vcombine.high %v534, %v548
    %v558 = vcombine.low %v541, %v555
    %v559 = vcombine.high %v541, %v555
    %v560 = vcombine.low %v26, %v49
    %v561 = vcombine.high %v26, %v49
    %v562 = vcombine.low %v72, %v95
    %v563 = vcombine.high %v72, %v95
    %v565 = vunpack.c.l.s4 1983009808
    %v566 = vunpack.c.0.s8 %v565
    %v567 = vlaneseq
    %v568 = vshrl.u32 %v567, 7
    %v569 = vsub.s32 %v566, %v568
    %v570 = vrot.slane %v560, %v569
    %v572 = vunpack.c.l.s4 1983009808
    %v573 = vunpack.c.0.s8 %v572
    %v574 = vlaneseq
    %v575 = vshrl.u32 %v574, 7
    %v576 = vsub.s32 %v573, %v575
    %v577 = vrot.slane %v561, %v576
    %v579 = vunpack.c.l.s4 1983009808
    %v580 = vunpack.c.0.s8 %v579
    %v581 = vlaneseq
    %v582 = vshrl.u32 %v581, 7
    %v583 = vsub.s32 %v580, %v582
    %v584 = vrot.slane %v562, %v583
    %v586 = vunpack.c.l.s4 1983009808
    %v587 = vunpack.c.0.s8 %v586
    %v588 = vlaneseq
    %v589 = vshrl.u32 %v588, 7
    %v590 = vsub.s32 %v587, %v589
    %v591 = vrot.slane %v563, %v590
    %v592 = vcombine.low %v570, %v584
    %v593 = vcombine.high %v570, %v584
    %v594 = vcombine.low %v577, %v591
    %v595 = vcombine.high %v577, %v591
    %v596 = vcombine.low %v27, %v50
    %v597 = vcombine.high %v27, %v50
    %v598 = vcombine.low %v73, %v96
    %v599 = vcombine.high %v73, %v96
    %v601 = vunpack.c.l.s4 1983009808
    %v602 = vunpack.c.0.s8 %v601
    %v603 = vlaneseq
    %v604 = vshrl.u32 %v603, 7
    %v605 = vsub.s32 %v602, %v604
    %v606 = vrot.slane %v596, %v605
    %v608 = vunpack.c.l.s4 1983009808
    %v609 = vunpack.c.0.s8 %v608
    %v610 = vlaneseq
    %v611 = vshrl.u32 %v610, 7
    %v612 = vsub.s32 %v609, %v611
    %v613 = vrot.slane %v597, %v612
    %v615 = vunpack.c.l.s4 1983009808
    %v616 = vunpack.c.0.s8 %v615
    %v617 = vlaneseq
    %v618 = vshrl.u32 %v617, 7
    %v619 = vsub.s32 %v616, %v618
    %v620 = vrot.slane %v598, %v619
    %v622 = vunpack.c.l.s4 1983009808
    %v623 = vunpack.c.0.s8 %v622
    %v624 = vlaneseq
    %v625 = vshrl.u32 %v624, 7
    %v626 = vsub.s32 %v623, %v625
    %v627 = vrot.slane %v599, %v626
    %v628 = vcombine.low %v606, %v620
    %v629 = vcombine.high %v606, %v620
    %v630 = vcombine.low %v613, %v627
    %v631 = vcombine.high %v613, %v627
    %v632 = vcombine.low %v28, %v51
    %v633 = vcombine.high %v28, %v51
    %v634 = vcombine.low %v74, %v97
    %v635 = vcombine.high %v74, %v97
    %v637 = vunpack.c.l.s4 1983009808
    %v638 = vunpack.c.0.s8 %v637
    %v639 = vlaneseq
    %v640 = vshrl.u32 %v639, 7
    %v641 = vsub.s32 %v638, %v640
    %v642 = vrot.slane %v632, %v641
    %v644 = vunpack.c.l.s4 1983009808
    %v645 = vunpack.c.0.s8 %v644
    %v646 = vlaneseq
    %v647 = vshrl.u32 %v646, 7
    %v648 = vsub.s32 %v645, %v647
    %v649 = vrot.slane %v633, %v648
    %v651 = vunpack.c.l.s4 1983009808
    %v652 = vunpack.c.0.s8 %v651
    %v653 = vlaneseq
    %v654 = vshrl.u32 %v653, 7
    %v655 = vsub.s32 %v652, %v654
    %v656 = vrot.slane %v634, %v655
    %v658 = vunpack.c.l.s4 1983009808
    %v659 = vunpack.c.0.s8 %v658
    %v660 = vlaneseq
    %v661 = vshrl.u32 %v660, 7
    %v662 = vsub.s32 %v659, %v661
    %v663 = vrot.slane %v635, %v662
    %v664 = vcombine.low %v642, %v656
    %v665 = vcombine.high %v642, %v656
    %v666 = vcombine.low %v649, %v663
    %v667 = vcombine.high %v649, %v663
    %v668 = vcombine.low %v29, %v52
    %v669 = vcombine.high %v29, %v52
    %v670 = vcombine.low %v75, %v98
    %v671 = vcombine.high %v75, %v98
    %v673 = vunpack.c.l.s4 1983009808
    %v674 = vunpack.c.0.s8 %v673
    %v675 = vlaneseq
    %v676 = vshrl.u32 %v675, 7
    %v677 = vsub.s32 %v674, %v676
    %v678 = vrot.slane %v668, %v677
    %v680 = vunpack.c.l.s4 1983009808
    %v681 = vunpack.c.0.s8 %v680
    %v682 = vlaneseq
    %v683 = vshrl.u32 %v682, 7
    %v684 = vsub.s32 %v681, %v683
    %v685 = vrot.slane %v669, %v684
    %v687 = vunpack.c.l.s4 1983009808
    %v688 = vunpack.c.0.s8 %v687
    %v689 = vlaneseq
    %v690 = vshrl.u32 %v689, 7
    %v691 = vsub.s32 %v688, %v690
    %v692 = vrot.slane %v670, %v691
    %v694 = vunpack.c.l.s4 1983009808
    %v695 = vunpack.c.0.s8 %v694
    %v696 = vlaneseq
    %v697 = vshrl.u32 %v696, 7
    %v698 = vsub.s32 %v695, %v697
    %v699 = vrot.slane %v671, %v698
    %v700 = vcombine.low %v678, %v692
    %v701 = vcombine.high %v678, %v692
    %v702 = vcombine.low %v685, %v699
    %v703 = vcombine.high %v685, %v699
    %v704 = vcombine.low %v30, %v53
    %v705 = vcombine.high %v30, %v53
    %v706 = vcombine.low %v76, %v99
    %v707 = vcombine.high %v76, %v99
    %v709 = vunpack.c.l.s4 1983009808
    %v710 = vunpack.c.0.s8 %v709
    %v711 = vlaneseq
    %v712 = vshrl.u32 %v711, 7
    %v713 = vsub.s32 %v710, %v712
    %v714 = vrot.slane %v704, %v713
    %v716 = vunpack.c.l.s4 1983009808
    %v717 = vunpack.c.0.s8 %v716
    %v718 = vlaneseq
    %v719 = vshrl.u32 %v718, 7
    %v720 = vsub.s32 %v717, %v719
    %v721 = vrot.slane %v705, %v720
    %v723 = vunpack.c.l.s4 1983009808
    %v724 = vunpack.c.0.s8 %v723
    %v725 = vlaneseq
    %v726 = vshrl.u32 %v725, 7
    %v727 = vsub.s32 %v724, %v726
    %v728 = vrot.slane %v706, %v727
    %v730 = vunpack.c.l.s4 1983009808
    %v731 = vunpack.c.0.s8 %v730
    %v732 = vlaneseq
    %v733 = vshrl.u32 %v732, 7
    %v734 = vsub.s32 %v731, %v733
    %v735 = vrot.slane %v707, %v734
    %v736 = vcombine.low %v714, %v728
    %v737 = vcombine.high %v714, %v728
    %v738 = vcombine.low %v721, %v735
    %v739 = vcombine.high %v721, %v735
    %v740 = vcombine.low %v31, %v54
    %v741 = vcombine.high %v31, %v54
    %v742 = vcombine.low %v77, %v100
    %v743 = vcombine.high %v77, %v100
    %v745 = vunpack.c.l.s4 1983009808
    %v746 = vunpack.c.0.s8 %v745
    %v747 = vlaneseq
    %v748 = vshrl.u32 %v747, 7
    %v749 = vsub.s32 %v746, %v748
    %v750 = vrot.slane %v740, %v749
    %v752 = vunpack.c.l.s4 1983009808
    %v753 = vunpack.c.0.s8 %v752
    %v754 = vlaneseq
    %v755 = vshrl.u32 %v754, 7
    %v756 = vsub.s32 %v753, %v755
    %v757 = vrot.slane %v741, %v756
    %v759 = vunpack.c.l.s4 1983009808
    %v760 = vunpack.c.0.s8 %v759
    %v761 = vlaneseq
    %v762 = vshrl.u32 %v761, 7
    %v763 = vsub.s32 %v760, %v762
    %v764 = vrot.slane %v742, %v763
    %v766 = vunpack.c.l.s4 1983009808
    %v767 = vunpack.c.0.s8 %v766
    %v768 = vlaneseq
    %v769 = vshrl.u32 %v768, 7
    %v770 = vsub.s32 %v767, %v769
    %v771 = vrot.slane %v743, %v770
    %v772 = vcombine.low %v750, %v764
    %v773 = vcombine.high %v750, %v764
    %v774 = vcombine.low %v757, %v771
    %v775 = vcombine.high %v757, %v771
    %v776 = vcombine.low %v32, %v55
    %v777 = vcombine.high %v32, %v55
    %v778 = vcombine.low %v78, %v101
    %v779 = vcombine.high %v78, %v101
    %v781 = vunpack.c.l.s4 1983009808
    %v782 = vunpack.c.0.s8 %v781
    %v783 = vlaneseq
    %v784 = vshrl.u32 %v783, 7
    %v785 = vsub.s32 %v782, %v784
    %v786 = vrot.slane %v776, %v785
    %v788 = vunpack.c.l.s4 1983009808
    %v789 = vunpack.c.0.s8 %v788
    %v790 = vlaneseq
    %v791 = vshrl.u32 %v790, 7
    %v792 = vsub.s32 %v789, %v791
    %v793 = vrot.slane %v777, %v792
    %v795 = vunpack.c.l.s4 1983009808
    %v796 = vunpack.c.0.s8 %v795
    %v797 = vlaneseq
    %v798 = vshrl.u32 %v797, 7
    %v799 = vsub.s32 %v796, %v798
    %v800 = vrot.slane %v778, %v799
    %v802 = vunpack.c.l.s4 1983009808
    %v803 = vunpack.c.0.s8 %v802
    %v804 = vlaneseq
    %v805 = vshrl.u32 %v804, 7
    %v806 = vsub.s32 %v803, %v805
    %v807 = vrot.slane %v779, %v806
    %v808 = vcombine.low %v786, %v800
    %v809 = vcombine.high %v786, %v800
    %v810 = vcombine.low %v793, %v807
    %v811 = vcombine.high %v793, %v807
    %v812 = vcombine.low %v33, %v56
    %v813 = vcombine.high %v33, %v56
    %v814 = vcombine.low %v79, %v102
    %v815 = vcombine.high %v79, %v102
    %v817 = vunpack.c.l.s4 1983009808
    %v818 = vunpack.c.0.s8 %v817
    %v819 = vlaneseq
    %v820 = vshrl.u32 %v819, 7
    %v821 = vsub.s32 %v818, %v820
    %v822 = vrot.slane %v812, %v821
    %v824 = vunpack.c.l.s4 1983009808
    %v825 = vunpack.c.0.s8 %v824
    %v826 = vlaneseq
    %v827 = vshrl.u32 %v826, 7
    %v828 = vsub.s32 %v825, %v827
    %v829 = vrot.slane %v813, %v828
    %v831 = vunpack.c.l.s4 1983009808
    %v832 = vunpack.c.0.s8 %v831
    %v833 = vlaneseq
    %v834 = vshrl.u32 %v833, 7
    %v835 = vsub.s32 %v832, %v834
    %v836 = vrot.slane %v814, %v835
    %v838 = vunpack.c.l.s4 1983009808
    %v839 = vunpack.c.0.s8 %v838
    %v840 = vlaneseq
    %v841 = vshrl.u32 %v840, 7
    %v842 = vsub.s32 %v839, %v841
    %v843 = vrot.slane %v815, %v842
    %v844 = vcombine.low %v822, %v836
    %v845 = vcombine.high %v822, %v836
    %v846 = vcombine.low %v829, %v843
    %v847 = vcombine.high %v829, %v843
    %v848 = vcombine.low %v34, %v57
    %v849 = vcombine.high %v34, %v57
    %v850 = vcombine.low %v80, %v103
    %v851 = vcombine.high %v80, %v103
    %v853 = vunpack.c.l.s4 1983009808
    %v854 = vunpack.c.0.s8 %v853
    %v855 = vlaneseq
    %v856 = vshrl.u32 %v855, 7
    %v857 = vsub.s32 %v854, %v856
    %v858 = vrot.slane %v848, %v857
    %v860 = vunpack.c.l.s4 1983009808
    %v861 = vunpack.c.0.s8 %v860
    %v862 = vlaneseq
    %v863 = vshrl.u32 %v862, 7
    %v864 = vsub.s32 %v861, %v863
    %v865 = vrot.slane %v849, %v864
    %v867 = vunpack.c.l.s4 1983009808
    %v868 = vunpack.c.0.s8 %v867
    %v869 = vlaneseq
    %v870 = vshrl.u32 %v869, 7
    %v871 = vsub.s32 %v868, %v870
    %v872 = vrot.slane %v850, %v871
    %v874 = vunpack.c.l.s4 1983009808
    %v875 = vunpack.c.0.s8 %v874
    %v876 = vlaneseq
    %v877 = vshrl.u32 %v876, 7
    %v878 = vsub.s32 %v875, %v877
    %v879 = vrot.slane %v851, %v878
    %v880 = vcombine.low %v858, %v872
    %v881 = vcombine.high %v858, %v872
    %v882 = vcombine.low %v865, %v879
    %v883 = vcombine.high %v865, %v879
    %v884 = vcombine.low %v35, %v58
    %v885 = vcombine.high %v35, %v58
    %v886 = vcombine.low %v81, %v104
    %v887 = vcombine.high %v81, %v104
    %v889 = vunpack.c.l.s4 1983009808
    %v890 = vunpack.c.0.s8 %v889
    %v891 = vlaneseq
    %v892 = vshrl.u32 %v891, 7
    %v893 = vsub.s32 %v890, %v892
    %v894 = vrot.slane %v884, %v893
    %v896 = vunpack.c.l.s4 1983009808
    %v897 = vunpack.c.0.s8 %v896
    %v898 = vlaneseq
    %v899 = vshrl.u32 %v898, 7
    %v900 = vsub.s32 %v897, %v899
    %v901 = vrot.slane %v885, %v900
    %v903 = vunpack.c.l.s4 1983009808
    %v904 = vunpack.c.0.s8 %v903
    %v905 = vlaneseq
    %v906 = vshrl.u32 %v905, 7
    %v907 = vsub.s32 %v904, %v906
    %v908 = vrot.slane %v886, %v907
    %v910 = vunpack.c.l.s4 1983009808
    %v911 = vunpack.c.0.s8 %v910
    %v912 = vlaneseq
    %v913 = vshrl.u32 %v912, 7
    %v914 = vsub.s32 %v911, %v913
    %v915 = vrot.slane %v887, %v914
    %v916 = vcombine.low %v894, %v908
    %v917 = vcombine.high %v894, %v908
    %v918 = vcombine.low %v901, %v915
    %v919 = vcombine.high %v901, %v915
    %v920 = vcombine.low %v36, %v59
    %v921 = vcombine.high %v36, %v59
    %v922 = vcombine.low %v82, %v105
    %v923 = vcombine.high %v82, %v105
    %v925 = vunpack.c.l.s4 1983009808
    %v926 = vunpack.c.0.s8 %v925
    %v927 = vlaneseq
    %v928 = vshrl.u32 %v927, 7
    %v929 = vsub.s32 %v926, %v928
    %v930 = vrot.slane %v920, %v929
    %v932 = vunpack.c.l.s4 1983009808
    %v933 = vunpack.c.0.s8 %v932
    %v934 = vlaneseq
    %v935 = vshrl.u32 %v934, 7
    %v936 = vsub.s32 %v933, %v935
    %v937 = vrot.slane %v921, %v936
    %v939 = vunpack.c.l.s4 1983009808
    %v940 = vunpack.c.0.s8 %v939
    %v941 = vlaneseq
    %v942 = vshrl.u32 %v941, 7
    %v943 = vsub.s32 %v940, %v942
    %v944 = vrot.slane %v922, %v943
    %v946 = vunpack.c.l.s4 1983009808
    %v947 = vunpack.c.0.s8 %v946
    %v948 = vlaneseq
    %v949 = vshrl.u32 %v948, 7
    %v950 = vsub.s32 %v947, %v949
    %v951 = vrot.slane %v923, %v950
    %v952 = vcombine.low %v930, %v944
    %v953 = vcombine.high %v930, %v944
    %v954 = vcombine.low %v937, %v951
    %v955 = vcombine.high %v937, %v951
    %v956 = vcombine.low %v37, %v60
    %v957 = vcombine.high %v37, %v60
    %v958 = vcombine.low %v83, %v106
    %v959 = vcombine.high %v83, %v106
    %v961 = vunpack.c.l.s4 1983009808
    %v962 = vunpack.c.0.s8 %v961
    %v963 = vlaneseq
    %v964 = vshrl.u32 %v963, 7
    %v965 = vsub.s32 %v962, %v964
    %v966 = vrot.slane %v956, %v965
    %v968 = vunpack.c.l.s4 1983009808
    %v969 = vunpack.c.0.s8 %v968
    %v970 = vlaneseq
    %v971 = vshrl.u32 %v970, 7
    %v972 = vsub.s32 %v969, %v971
    %v973 = vrot.slane %v957, %v972
    %v975 = vunpack.c.l.s4 1983009808
    %v976 = vunpack.c.0.s8 %v975
    %v977 = vlaneseq
    %v978 = vshrl.u32 %v977, 7
    %v979 = vsub.s32 %v976, %v978
    %v980 = vrot.slane %v958, %v979
    %v982 = vunpack.c.l.s4 1983009808
    %v983 = vunpack.c.0.s8 %v982
    %v984 = vlaneseq
    %v985 = vshrl.u32 %v984, 7
    %v986 = vsub.s32 %v983, %v985
    %v987 = vrot.slane %v959, %v986
    %v988 = vcombine.low %v966, %v980
    %v989 = vcombine.high %v966, %v980
    %v990 = vcombine.low %v973, %v987
    %v991 = vcombine.high %v973, %v987
    %v992 = vcombine.low %v38, %v61
    %v993 = vcombine.low %v84, %v107
    %v995 = vunpack.c.l.s4 1983009808
    %v996 = vunpack.c.0.s8 %v995
    %v997 = vlaneseq
    %v998 = vshrl.u32 %v997, 7
    %v999 = vsub.s32 %v996, %v998
    %v1000 = vrot.slane %v992, %v999
    %v1002 = vunpack.c.l.s4 1983009808
    %v1003 = vunpack.c.0.s8 %v1002
    %v1004 = vlaneseq
    %v1005 = vshrl.u32 %v1004, 7
    %v1006 = vsub.s32 %v1003, %v1005
    %v1007 = vrot.slane %v993, %v1006
    %v1008 = vcombine.low %v1000, %v1007
    %v1009 = vcombine.high %v1000, %v1007
    %v1100 = vpack.c.bf16 %v232, %v232
    %v1101 = vpack.c.bf16 %v233, %v233
    %v1102 = vpack.c.bf16 %v234, %v234
    %v1103 = vpack.c.bf16 %v235, %v235
    %v1104 = vpack.c.bf16 %v268, %v268
    %v1105 = vpack.c.bf16 %v269, %v269
    %v1106 = vpack.c.bf16 %v270, %v270
    %v1107 = vpack.c.bf16 %v271, %v271
    %v1108 = vpack.c.bf16 %v304, %v304
    %v1109 = vpack.c.bf16 %v305, %v305
    %v1110 = vpack.c.bf16 %v306, %v306
    %v1111 = vpack.c.bf16 %v307, %v307
    %v1112 = vpack.c.bf16 %v340, %v340
    %v1113 = vpack.c.bf16 %v341, %v341
    %v1114 = vpack.c.bf16 %v342, %v342
    %v1115 = vpack.c.bf16 %v343, %v343
    %v1116 = vpack.c.bf16 %v376, %v376
    %v1117 = vpack.c.bf16 %v377, %v377
    %v1118 = vpack.c.bf16 %v378, %v378
    %v1119 = vpack.c.bf16 %v379, %v379
    %v1120 = vpack.c.bf16 %v412, %v412
    %v1121 = vpack.c.bf16 %v413, %v413
    %v1122 = vpack.c.bf16 %v414, %v414
    %v1123 = vpack.c.bf16 %v415, %v415
    %v1124 = vpack.c.bf16 %v448, %v448
    %v1125 = vpack.c.bf16 %v449, %v449
    %v1126 = vpack.c.bf16 %v450, %v450
    %v1127 = vpack.c.bf16 %v451, %v451
    %v1128 = vpack.c.bf16 %v484, %v484
    %v1129 = vpack.c.bf16 %v485, %v485
    %v1130 = vpack.c.bf16 %v486, %v486
    %v1131 = vpack.c.bf16 %v487, %v487
    %v1132 = vpack.c.bf16 %v520, %v520
    %v1133 = vpack.c.bf16 %v521, %v521
    %v1134 = vpack.c.bf16 %v522, %v522
    %v1135 = vpack.c.bf16 %v523, %v523
    %v1136 = vpack.c.bf16 %v556, %v556
    %v1137 = vpack.c.bf16 %v557, %v557
    %v1138 = vpack.c.bf16 %v558, %v558
    %v1139 = vpack.c.bf16 %v559, %v559
    %v1140 = vpack.c.bf16 %v592, %v592
    %v1141 = vpack.c.bf16 %v593, %v593
    %v1142 = vpack.c.bf16 %v594, %v594
    %v1143 = vpack.c.bf16 %v595, %v595
    %v1144 = vpack.c.bf16 %v628, %v628
    %v1145 = vpack.c.bf16 %v629, %v629
    %v1146 = vpack.c.bf16 %v630, %v630
    %v1147 = vpack.c.bf16 %v631, %v631
    %v1148 = vpack.c.bf16 %v664, %v664
    %v1149 = vpack.c.bf16 %v665, %v665
    %v1150 = vpack.c.bf16 %v666, %v666
    %v1151 = vpack.c.bf16 %v667, %v667
    %v1152 = vpack.c.bf16 %v700, %v700
    %v1153 = vpack.c.bf16 %v701, %v701
    %v1154 = vpack.c.bf16 %v702, %v702
    %v1155 = vpack.c.bf16 %v703, %v703
    %v1156 = vpack.c.bf16 %v736, %v736
    %v1157 = vpack.c.bf16 %v737, %v737
    %v1158 = vpack.c.bf16 %v738, %v738
    %v1159 = vpack.c.bf16 %v739, %v739
    %v1160 = vpack.c.bf16 %v772, %v772
    %v1161 = vpack.c.bf16 %v773, %v773
    %v1162 = vpack.c.bf16 %v774, %v774
    %v1163 = vpack.c.bf16 %v775, %v775
    %v1164 = vpack.c.bf16 %v808, %v808
    %v1165 = vpack.c.bf16 %v809, %v809
    %v1166 = vpack.c.bf16 %v810, %v810
    %v1167 = vpack.c.bf16 %v811, %v811
    %v1168 = vpack.c.bf16 %v844, %v844
    %v1169 = vpack.c.bf16 %v845, %v845
    %v1170 = vpack.c.bf16 %v846, %v846
    %v1171 = vpack.c.bf16 %v847, %v847
    %v1172 = vpack.c.bf16 %v880, %v880
    %v1173 = vpack.c.bf16 %v881, %v881
    %v1174 = vpack.c.bf16 %v882, %v882
    %v1175 = vpack.c.bf16 %v883, %v883
    %v1176 = vpack.c.bf16 %v916, %v916
    %v1177 = vpack.c.bf16 %v917, %v917
    %v1178 = vpack.c.bf16 %v918, %v918
    %v1179 = vpack.c.bf16 %v919, %v919
    %v1180 = vpack.c.bf16 %v952, %v952
    %v1181 = vpack.c.bf16 %v953, %v953
    %v1182 = vpack.c.bf16 %v954, %v954
    %v1183 = vpack.c.bf16 %v955, %v955
    %v1184 = vpack.c.bf16 %v988, %v988
    %v1185 = vpack.c.bf16 %v989, %v989
    %v1186 = vpack.c.bf16 %v990, %v990
    %v1187 = vpack.c.bf16 %v991, %v991
    %v1188 = vpack.c.bf16 %v1008, %v1008
    %v1189 = vpack.c.bf16 %v1009, %v1009
    %v1190 = vld [vmem:[%s1] sm:$0xff]
    %v1191 = vld [vmem:[%s1 + $0x8] sm:$0xff]
    %v1192 = vld [vmem:[%s1 + $0x10] sm:$0xff]
    %v1193 = vld [vmem:[%s1 + $0x18] sm:$0xff]
    %v1194 = vld [vmem:[%s1 + $0x20] sm:$0xff]
    %v1195 = vld [vmem:[%s1 + $0x28] sm:$0xff]
    %v1196 = vld [vmem:[%s1 + $0x30] sm:$0xff]
    %v1197 = vld [vmem:[%s1 + $0x38] sm:$0xff]
    %v1198 = vld [vmem:[%s1 + $0x40] sm:$0xff]
    %v1199 = vld [vmem:[%s1 + $0x48] sm:$0xff]
    %v1200 = vld [vmem:[%s1 + $0x50] sm:$0xff]
    %v1201 = vld [vmem:[%s1 + $0x58] sm:$0xff]
    %v1202 = vld [vmem:[%s1 + $0x60] sm:$0xff]
    %v1203 = vld [vmem:[%s1 + $0x68] sm:$0xff]
    %v1204 = vld [vmem:[%s1 + $0x70] sm:$0xff]
    %v1205 = vld [vmem:[%s1 + $0x78] sm:$0xff]
    %v1206 = vld [vmem:[%s1 + $0x80] sm:$0xff]
    %v1207 = vld [vmem:[%s1 + $0x88] sm:$0xff]
    %v1208 = vld [vmem:[%s1 + $0x90] sm:$0xff]
    %v1209 = vld [vmem:[%s1 + $0x98] sm:$0xff]
    %v1210 = vld [vmem:[%s1 + $0xa0] sm:$0xff]
    %v1211 = vld [vmem:[%s1 + $0xa8] sm:$0xff]
    %v1212 = vld [vmem:[%s1 + $0xb0] sm:$0xff]
    %v1213 = vld [vmem:[%s1 + $0xb8] sm:$0xff]
    %v1214 = vld [vmem:[%s1 + $0xc0] sm:$0xff]
    %v1215 = vld [vmem:[%s1 + $0xc8] sm:$0xff]
    %v1216 = vld [vmem:[%s1 + $0xd0] sm:$0xff]
    %v1217 = vld [vmem:[%s1 + $0xd8] sm:$0xff]
    %v1218 = vld [vmem:[%s1 + $0xe0] sm:$0xff]
    %v1219 = vld [vmem:[%s1 + $0xe8] sm:$0xff]
    %v1220 = vld [vmem:[%s1 + $0xf0] sm:$0xff]
    %v1221 = vld [vmem:[%s1 + $0xf8] sm:$0xff]
    %v1222 = vld [vmem:[%s1 + $0x100] sm:$0xff]
    %v1223 = vld [vmem:[%s1 + $0x108] sm:$0xff]
    %v1224 = vld [vmem:[%s1 + $0x110] sm:$0xff]
    %v1225 = vld [vmem:[%s1 + $0x118] sm:$0xff]
    %v1226 = vld [vmem:[%s1 + $0x120] sm:$0xff]
    %v1227 = vld [vmem:[%s1 + $0x128] sm:$0xff]
    %v1228 = vld [vmem:[%s1 + $0x130] sm:$0xff]
    %v1229 = vld [vmem:[%s1 + $0x138] sm:$0xff]
    %v1230 = vld [vmem:[%s1 + $0x140] sm:$0xff]
    %v1231 = vld [vmem:[%s1 + $0x148] sm:$0xff]
    %v1232 = vld [vmem:[%s1 + $0x150] sm:$0xff]
    %v1233 = vld [vmem:[%s1 + $0x158] sm:$0xff]
    %v1234 = vld [vmem:[%s1 + $0x160] sm:$0xff]
    %v1235 = vld [vmem:[%s1 + $0x168] sm:$0xff]
    %v1236 = vld [vmem:[%s1 + $0x170] sm:$0xff]
    %v1237 = vld [vmem:[%s1 + $0x178] sm:$0xff]
    %v1238 = vld [vmem:[%s1 + $0x180] sm:$0xff]
    %v1239 = vld [vmem:[%s1 + $0x188] sm:$0xff]
    %v1240 = vld [vmem:[%s1 + $0x190] sm:$0xff]
    %v1241 = vld [vmem:[%s1 + $0x198] sm:$0xff]
    %v1242 = vld [vmem:[%s1 + $0x1a0] sm:$0xff]
    %v1243 = vld [vmem:[%s1 + $0x1a8] sm:$0xff]
    %v1244 = vld [vmem:[%s1 + $0x1b0] sm:$0xff]
    %v1245 = vld [vmem:[%s1 + $0x1b8] sm:$0xff]
    %v1246 = vld [vmem:[%s1 + $0x1c0] sm:$0xff]
    %v1247 = vld [vmem:[%s1 + $0x1c8] sm:$0xff]
    %v1248 = vld [vmem:[%s1 + $0x1d0] sm:$0xff]
    %v1249 = vld [vmem:[%s1 + $0x1d8] sm:$0xff]
    %v1250 = vld [vmem:[%s1 + $0x1e0] sm:$0xff]
    %v1251 = vld [vmem:[%s1 + $0x1e8] sm:$0xff]
    %v1252 = vld [vmem:[%s1 + $0x1f0] sm:$0xff]
    %v1253 = vld [vmem:[%s1 + $0x1f8] sm:$0xff]
    %v1254 = vld [vmem:[%s1 + $0x200] sm:$0xff]
    %v1255 = vld [vmem:[%s1 + $0x208] sm:$0xff]
    %v1256 = vld [vmem:[%s1 + $0x210] sm:$0xff]
    %v1257 = vld [vmem:[%s1 + $0x218] sm:$0xff]
    %v1258 = vld [vmem:[%s1 + $0x220] sm:$0xff]
    %v1259 = vld [vmem:[%s1 + $0x228] sm:$0xff]
    %v1260 = vld [vmem:[%s1 + $0x230] sm:$0xff]
    %v1261 = vld [vmem:[%s1 + $0x238] sm:$0xff]
    %v1262 = vld [vmem:[%s1 + $0x240] sm:$0xff]
    %v1263 = vld [vmem:[%s1 + $0x248] sm:$0xff]
    %v1264 = vld [vmem:[%s1 + $0x250] sm:$0xff]
    %v1265 = vld [vmem:[%s1 + $0x258] sm:$0xff]
    %v1266 = vld [vmem:[%s1 + $0x260] sm:$0xff]
    %v1267 = vld [vmem:[%s1 + $0x268] sm:$0xff]
    %v1268 = vld [vmem:[%s1 + $0x270] sm:$0xff]
    %v1269 = vld [vmem:[%s1 + $0x278] sm:$0xff]
    %v1270 = vld [vmem:[%s1 + $0x280] sm:$0xff]
    %v1271 = vld [vmem:[%s1 + $0x288] sm:$0xff]
    %v1272 = vld [vmem:[%s1 + $0x290] sm:$0xff]
    %v1273 = vld [vmem:[%s1 + $0x298] sm:$0xff]
    %v1274 = vld [vmem:[%s1 + $0x2a0] sm:$0xff]
    %v1275 = vld [vmem:[%s1 + $0x2a8] sm:$0xff]
    %v1276 = vld [vmem:[%s1 + $0x2b0] sm:$0xff]
    %v1277 = vld [vmem:[%s1 + $0x2b8] sm:$0xff]
    %v1278 = vld [vmem:[%s1 + $0x2c0] sm:$0xff]
    %v1279 = vld [vmem:[%s1 + $0x2c8] sm:$0xff]
    %v1280 = vld [vmem:[%s1 + $0x2d0] sm:$0xff]
    %v1281 = vld [vmem:[%s1 + $0x2d8] sm:$0xff]
    %v1282 = vld [vmem:[%s1 + $0x2e0] sm:$0xff]
    %v1283 = vld [vmem:[%s1 + $0x2e8] sm:$0xff]
    %v1284 = vld [vmem:[%s1 + $0x2f0] sm:$0xff]
    %v1285 = vld [vmem:[%s1 + $0x2f8] sm:$0xff]
    %v1286 = vld [vmem:[%s1 + $0x300] sm:$0xff]
    %v1287 = vld [vmem:[%s1 + $0x308] sm:$0xff]
    %v1288 = vld [vmem:[%s1 + $0x310] sm:$0xff]
    %v1289 = vld [vmem:[%s1 + $0x318] sm:$0xff]
    %v1290 = vld [vmem:[%s1 + $0x320] sm:$0xff]
    %v1291 = vld [vmem:[%s1 + $0x328] sm:$0xff]
    %v1292 = vld [vmem:[%s1 + $0x330] sm:$0xff]
    %v1293 = vld [vmem:[%s1 + $0x338] sm:$0xff]
    %v1294 = vld [vmem:[%s1 + $0x340] sm:$0xff]
    %v1295 = vld [vmem:[%s1 + $0x348] sm:$0xff]
    %v1296 = vld [vmem:[%s1 + $0x350] sm:$0xff]
    %v1297 = vld [vmem:[%s1 + $0x358] sm:$0xff]
    %v1298 = vld [vmem:[%s1 + $0x360] sm:$0xff]
    %v1299 = vld [vmem:[%s1 + $0x368] sm:$0xff]
    %v1300 = vld [vmem:[%s1 + $0x370] sm:$0xff]
    %v1301 = vld [vmem:[%s1 + $0x378] sm:$0xff]
    %v1302 = vld [vmem:[%s1 + $0x380] sm:$0xff]
    %v1303 = vld [vmem:[%s1 + $0x388] sm:$0xff]
    %v1304 = vld [vmem:[%s1 + $0x390] sm:$0xff]
    %v1305 = vld [vmem:[%s1 + $0x398] sm:$0xff]
    %v1306 = vld [vmem:[%s1 + $0x3a0] sm:$0xff]
    %v1307 = vld [vmem:[%s1 + $0x3a8] sm:$0xff]
    %v1308 = vld [vmem:[%s1 + $0x3b0] sm:$0xff]
    %v1309 = vld [vmem:[%s1 + $0x3b8] sm:$0xff]
    %v1310 = vld [vmem:[%s1 + $0x3c0] sm:$0xff]
    %v1311 = vld [vmem:[%s1 + $0x3c8] sm:$0xff]
    %v1312 = vld [vmem:[%s1 + $0x3d0] sm:$0xff]
    %v1313 = vld [vmem:[%s1 + $0x3d8] sm:$0xff]
    %v1314 = vld [vmem:[%s1 + $0x3e0] sm:$0xff]
    %v1315 = vld [vmem:[%s1 + $0x3e8] sm:$0xff]
    %v1316 = vld [vmem:[%s1 + $0x3f0] sm:$0xff]
    %v1317 = vld [vmem:[%s1 + $0x3f8] sm:$0xff]
    %v1318 = vld [vmem:[%s1 + $0x400] sm:$0xff]
    %v1319 = vld [vmem:[%s1 + $0x408] sm:$0xff]
    %v1320 = vld [vmem:[%s1 + $0x410] sm:$0xff]
    %v1321 = vld [vmem:[%s1 + $0x418] sm:$0xff]
    %v1322 = vld [vmem:[%s1 + $0x420] sm:$0xff]
    %v1323 = vld [vmem:[%s1 + $0x428] sm:$0xff]
    %v1324 = vld [vmem:[%s1 + $0x430] sm:$0xff]
    %v1325 = vld [vmem:[%s1 + $0x438] sm:$0xff]
    %v1326 = vld [vmem:[%s1 + $0x440] sm:$0xff]
    %v1327 = vld [vmem:[%s1 + $0x448] sm:$0xff]
    %v1328 = vld [vmem:[%s1 + $0x450] sm:$0xff]
    %v1329 = vld [vmem:[%s1 + $0x458] sm:$0xff]
    %v1330 = vld [vmem:[%s1 + $0x460] sm:$0xff]
    %v1331 = vld [vmem:[%s1 + $0x468] sm:$0xff]
    %v1332 = vld [vmem:[%s1 + $0x470] sm:$0xff]
    %v1333 = vld [vmem:[%s1 + $0x478] sm:$0xff]
    %v1334 = vld [vmem:[%s1 + $0x480] sm:$0xff]
    %v1335 = vld [vmem:[%s1 + $0x488] sm:$0xff]
    %v1336 = vld [vmem:[%s1 + $0x490] sm:$0xff]
    %v1337 = vld [vmem:[%s1 + $0x498] sm:$0xff]
    %v1338 = vld [vmem:[%s1 + $0x4a0] sm:$0xff]
    %v1339 = vld [vmem:[%s1 + $0x4a8] sm:$0xff]
    %v1340 = vld [vmem:[%s1 + $0x4b0] sm:$0xff]
    %v1341 = vld [vmem:[%s1 + $0x4b8] sm:$0xff]
    %v1342 = vld [vmem:[%s1 + $0x4c0] sm:$0xff]
    %v1343 = vld [vmem:[%s1 + $0x4c8] sm:$0xff]
    %v1344 = vld [vmem:[%s1 + $0x4d0] sm:$0xff]
    %v1345 = vld [vmem:[%s1 + $0x4d8] sm:$0xff]
    %v1346 = vld [vmem:[%s1 + $0x4e0] sm:$0xff]
    %v1347 = vld [vmem:[%s1 + $0x4e8] sm:$0xff]
    %v1348 = vld [vmem:[%s1 + $0x4f0] sm:$0xff]
    %v1349 = vld [vmem:[%s1 + $0x4f8] sm:$0xff]
    %v1350 = vld [vmem:[%s1 + $0x500] sm:$0xff]
    %v1351 = vld [vmem:[%s1 + $0x508] sm:$0xff]
    %v1352 = vld [vmem:[%s1 + $0x510] sm:$0xff]
    %v1353 = vld [vmem:[%s1 + $0x518] sm:$0xff]
    %v1354 = vld [vmem:[%s1 + $0x520] sm:$0xff]
    %v1355 = vld [vmem:[%s1 + $0x528] sm:$0xff]
    %v1356 = vld [vmem:[%s1 + $0x530] sm:$0xff]
    %v1357 = vld [vmem:[%s1 + $0x538] sm:$0xff]
    %v1358 = vld [vmem:[%s1 + $0x540] sm:$0xff]
    %v1359 = vld [vmem:[%s1 + $0x548] sm:$0xff]
    %v1360 = vld [vmem:[%s1 + $0x550] sm:$0xff]
    %v1361 = vld [vmem:[%s1 + $0x558] sm:$0xff]
    %v1362 = vld [vmem:[%s1 + $0x560] sm:$0xff]
    %v1363 = vld [vmem:[%s1 + $0x568] sm:$0xff]
    %v1364 = vld [vmem:[%s1 + $0x570] sm:$0xff]
    %v1365 = vld [vmem:[%s1 + $0x578] sm:$0xff]
    %v1366 = vld [vmem:[%s1 + $0x580] sm:$0xff]
    %v1367 = vld [vmem:[%s1 + $0x588] sm:$0xff]
    %v1368 = vld [vmem:[%s1 + $0x590] sm:$0xff]
    %v1369 = vld [vmem:[%s1 + $0x598] sm:$0xff]
    %v1370 = vld [vmem:[%s1 + $0x5a0] sm:$0xff]
    %v1371 = vld [vmem:[%s1 + $0x5a8] sm:$0xff]
    %v1372 = vld [vmem:[%s1 + $0x5b0] sm:$0xff]
    %v1373 = vld [vmem:[%s1 + $0x5b8] sm:$0xff]
    %v1374 = vld [vmem:[%s1 + $0x5c0] sm:$0xff]
    %v1375 = vld [vmem:[%s1 + $0x5c8] sm:$0xff]
    %v1376 = vld [vmem:[%s1 + $0x5d0] sm:$0xff]
    %v1377 = vld [vmem:[%s1 + $0x5d8] sm:$0xff]
    %v1378 = vld [vmem:[%s1 + $0x5e0] sm:$0xff]
    %v1379 = vld [vmem:[%s1 + $0x5e8] sm:$0xff]
    %v1380 = vld [vmem:[%s1 + $0x5f0] sm:$0xff]
    %v1381 = vld [vmem:[%s1 + $0x5f8] sm:$0xff]
    %v1382 = vld [vmem:[%s1 + $0x600] sm:$0xff]
    %v1383 = vld [vmem:[%s1 + $0x608] sm:$0xff]
    %v1384 = vld [vmem:[%s1 + $0x610] sm:$0xff]
    %v1385 = vld [vmem:[%s1 + $0x618] sm:$0xff]
    %v1386 = vld [vmem:[%s1 + $0x620] sm:$0xff]
    %v1387 = vld [vmem:[%s1 + $0x628] sm:$0xff]
    %v1388 = vld [vmem:[%s1 + $0x630] sm:$0xff]
    %v1389 = vld [vmem:[%s1 + $0x638] sm:$0xff]
    %v1390 = vld [vmem:[%s1 + $0x640] sm:$0xff]
    %v1391 = vld [vmem:[%s1 + $0x648] sm:$0xff]
    %v1392 = vld [vmem:[%s1 + $0x650] sm:$0xff]
    %v1393 = vld [vmem:[%s1 + $0x658] sm:$0xff]
    %v1394 = vld [vmem:[%s1 + $0x660] sm:$0xff]
    %v1395 = vld [vmem:[%s1 + $0x668] sm:$0xff]
    %v1396 = vld [vmem:[%s1 + $0x670] sm:$0xff]
    %v1397 = vld [vmem:[%s1 + $0x678] sm:$0xff]
    %v1398 = vld [vmem:[%s1 + $0x680] sm:$0xff]
    %v1399 = vld [vmem:[%s1 + $0x688] sm:$0xff]
    %v1400 = vld [vmem:[%s1 + $0x690] sm:$0xff]
    %v1401 = vld [vmem:[%s1 + $0x698] sm:$0xff]
    %v1402 = vld [vmem:[%s1 + $0x6a0] sm:$0xff]
    %v1403 = vld [vmem:[%s1 + $0x6a8] sm:$0xff]
    %v1404 = vld [vmem:[%s1 + $0x6b0] sm:$0xff]
    %v1405 = vld [vmem:[%s1 + $0x6b8] sm:$0xff]
    %v1406 = vld [vmem:[%s1 + $0x6c0] sm:$0xff]
    %v1407 = vld [vmem:[%s1 + $0x6c8] sm:$0xff]
    %v1408 = vld [vmem:[%s1 + $0x6d0] sm:$0xff]
    %v1409 = vld [vmem:[%s1 + $0x6d8] sm:$0xff]
    %v1410 = vld [vmem:[%s1 + $0x6e0] sm:$0xff]
    %v1411 = vld [vmem:[%s1 + $0x6e8] sm:$0xff]
    %v1412 = vld [vmem:[%s1 + $0x6f0] sm:$0xff]
    %v1413 = vld [vmem:[%s1 + $0x6f8] sm:$0xff]
    %v1414 = vld [vmem:[%s1 + $0x700] sm:$0xff]
    %v1415 = vld [vmem:[%s1 + $0x708] sm:$0xff]
    %v1416 = vld [vmem:[%s1 + $0x710] sm:$0xff]
    %v1417 = vld [vmem:[%s1 + $0x718] sm:$0xff]
    %v1418 = vld [vmem:[%s1 + $0x720] sm:$0xff]
    %v1419 = vld [vmem:[%s1 + $0x728] sm:$0xff]
    %v1420 = vld [vmem:[%s1 + $0x730] sm:$0xff]
    %v1421 = vld [vmem:[%s1 + $0x738] sm:$0xff]
    %v1422 = vld [vmem:[%s1 + $0x740] sm:$0xff]
    %v1423 = vld [vmem:[%s1 + $0x748] sm:$0xff]
    %v1424 = vld [vmem:[%s1 + $0x750] sm:$0xff]
    %v1425 = vld [vmem:[%s1 + $0x758] sm:$0xff]
    %v1426 = vld [vmem:[%s1 + $0x760] sm:$0xff]
    %v1427 = vld [vmem:[%s1 + $0x768] sm:$0xff]
    %v1428 = vld [vmem:[%s1 + $0x770] sm:$0xff]
    %v1429 = vld [vmem:[%s1 + $0x778] sm:$0xff]
    %v1430 = vld [vmem:[%s1 + $0x780] sm:$0xff]
    %v1431 = vld [vmem:[%s1 + $0x788] sm:$0xff]
    %v1432 = vld [vmem:[%s1 + $0x790] sm:$0xff]
    %v1433 = vld [vmem:[%s1 + $0x798] sm:$0xff]
    %v1434 = vld [vmem:[%s1 + $0x7a0] sm:$0xff]
    %v1435 = vld [vmem:[%s1 + $0x7a8] sm:$0xff]
    %v1436 = vld [vmem:[%s1 + $0x7b0] sm:$0xff]
    %v1437 = vld [vmem:[%s1 + $0x7b8] sm:$0xff]
    %v1438 = vld [vmem:[%s1 + $0x7c0] sm:$0xff]
    %v1439 = vld [vmem:[%s1 + $0x7c8] sm:$0xff]
    %v1440 = vld [vmem:[%s1 + $0x7d0] sm:$0xff]
    %v1441 = vld [vmem:[%s1 + $0x7d8] sm:$0xff]
    %v1442 = vld [vmem:[%s1 + $0x7e0] sm:$0xff]
    %v1443 = vld [vmem:[%s1 + $0x7e8] sm:$0xff]
    %v1444 = vld [vmem:[%s1 + $0x7f0] sm:$0xff]
    %v1445 = vld [vmem:[%s1 + $0x7f8] sm:$0xff]
    %v1446 = vld [vmem:[%s1 + $0x800] sm:$0xff]
    %v1447 = vld [vmem:[%s1 + $0x808] sm:$0xff]
    %v1448 = vld [vmem:[%s1 + $0x810] sm:$0xff]
    %v1449 = vld [vmem:[%s1 + $0x818] sm:$0xff]
    %v1450 = vld [vmem:[%s1 + $0x820] sm:$0xff]
    %v1451 = vld [vmem:[%s1 + $0x828] sm:$0xff]
    %v1452 = vld [vmem:[%s1 + $0x830] sm:$0xff]
    %v1453 = vld [vmem:[%s1 + $0x838] sm:$0xff]
    %v1454 = vld [vmem:[%s1 + $0x840] sm:$0xff]
    %v1455 = vld [vmem:[%s1 + $0x848] sm:$0xff]
    %v1456 = vld [vmem:[%s1 + $0x850] sm:$0xff]
    %v1457 = vld [vmem:[%s1 + $0x858] sm:$0xff]
    %v1458 = vld [vmem:[%s1 + $0x860] sm:$0xff]
    %v1459 = vld [vmem:[%s1 + $0x868] sm:$0xff]
    %v1460 = vld [vmem:[%s1 + $0x870] sm:$0xff]
    %v1461 = vld [vmem:[%s1 + $0x878] sm:$0xff]
    %v1462 = vld [vmem:[%s1 + $0x880] sm:$0xff]
    %v1463 = vld [vmem:[%s1 + $0x888] sm:$0xff]
    %v1464 = vld [vmem:[%s1 + $0x890] sm:$0xff]
    %v1465 = vld [vmem:[%s1 + $0x898] sm:$0xff]
    %v1466 = vld [vmem:[%s1 + $0x8a0] sm:$0xff]
    %v1467 = vld [vmem:[%s1 + $0x8a8] sm:$0xff]
    %v1468 = vld [vmem:[%s1 + $0x8b0] sm:$0xff]
    %v1469 = vld [vmem:[%s1 + $0x8b8] sm:$0xff]
    %v1470 = vld [vmem:[%s1 + $0x8c0] sm:$0xff]
    %v1471 = vld [vmem:[%s1 + $0x8c8] sm:$0xff]
    %v1472 = vld [vmem:[%s1 + $0x8d0] sm:$0xff]
    %v1473 = vld [vmem:[%s1 + $0x8d8] sm:$0xff]
    %v1474 = vld [vmem:[%s1 + $0x8e0] sm:$0xff]
    %v1475 = vld [vmem:[%s1 + $0x8e8] sm:$0xff]
    %v1476 = vld [vmem:[%s1 + $0x8f0] sm:$0xff]
    %v1477 = vld [vmem:[%s1 + $0x8f8] sm:$0xff]
    %v1478 = vld [vmem:[%s1 + $0x900] sm:$0xff]
    %v1479 = vld [vmem:[%s1 + $0x908] sm:$0xff]
    %v1480 = vld [vmem:[%s1 + $0x910] sm:$0xff]
    %v1481 = vld [vmem:[%s1 + $0x918] sm:$0xff]
    %v1482 = vld [vmem:[%s1 + $0x920] sm:$0xff]
    %v1483 = vld [vmem:[%s1 + $0x928] sm:$0xff]
    %v1484 = vld [vmem:[%s1 + $0x930] sm:$0xff]
    %v1485 = vld [vmem:[%s1 + $0x938] sm:$0xff]
    %v1486 = vld [vmem:[%s1 + $0x940] sm:$0xff]
    %v1487 = vld [vmem:[%s1 + $0x948] sm:$0xff]
    %v1488 = vld [vmem:[%s1 + $0x950] sm:$0xff]
    %v1489 = vld [vmem:[%s1 + $0x958] sm:$0xff]
    %v1490 = vld [vmem:[%s1 + $0x960] sm:$0xff]
    %v1491 = vld [vmem:[%s1 + $0x968] sm:$0xff]
    %v1492 = vld [vmem:[%s1 + $0x970] sm:$0xff]
    %v1493 = vld [vmem:[%s1 + $0x978] sm:$0xff]
    %v1494 = vld [vmem:[%s1 + $0x980] sm:$0xff]
    %v1495 = vld [vmem:[%s1 + $0x988] sm:$0xff]
    %v1496 = vld [vmem:[%s1 + $0x990] sm:$0xff]
    %v1497 = vld [vmem:[%s1 + $0x998] sm:$0xff]
    %v1498 = vld [vmem:[%s1 + $0x9a0] sm:$0xff]
    %v1499 = vld [vmem:[%s1 + $0x9a8] sm:$0xff]
    %v1500 = vld [vmem:[%s1 + $0x9b0] sm:$0xff]
    %v1501 = vld [vmem:[%s1 + $0x9b8] sm:$0xff]
    %v1502 = vld [vmem:[%s1 + $0x9c0] sm:$0xff]
    %v1503 = vld [vmem:[%s1 + $0x9c8] sm:$0xff]
    %v1504 = vld [vmem:[%s1 + $0x9d0] sm:$0xff]
    %v1505 = vld [vmem:[%s1 + $0x9d8] sm:$0xff]
    %v1506 = vld [vmem:[%s1 + $0x9e0] sm:$0xff]
    %v1507 = vld [vmem:[%s1 + $0x9e8] sm:$0xff]
    %v1508 = vld [vmem:[%s1 + $0x9f0] sm:$0xff]
    %v1509 = vld [vmem:[%s1 + $0x9f8] sm:$0xff]
    %v1510 = vld [vmem:[%s1 + $0xa00] sm:$0xff]
    %v1511 = vld [vmem:[%s1 + $0xa08] sm:$0xff]
    %v1512 = vld [vmem:[%s1 + $0xa10] sm:$0xff]
    %v1513 = vld [vmem:[%s1 + $0xa18] sm:$0xff]
    %v1514 = vld [vmem:[%s1 + $0xa20] sm:$0xff]
    %v1515 = vld [vmem:[%s1 + $0xa28] sm:$0xff]
    %v1516 = vld [vmem:[%s1 + $0xa30] sm:$0xff]
    %v1517 = vld [vmem:[%s1 + $0xa38] sm:$0xff]
    %v1518 = vld [vmem:[%s1 + $0xa40] sm:$0xff]
    %v1519 = vld [vmem:[%s1 + $0xa48] sm:$0xff]
    %v1520 = vld [vmem:[%s1 + $0xa50] sm:$0xff]
    %v1521 = vld [vmem:[%s1 + $0xa58] sm:$0xff]
    %v1522 = vld [vmem:[%s1 + $0xa60] sm:$0xff]
    %v1523 = vld [vmem:[%s1 + $0xa68] sm:$0xff]
    %v1524 = vld [vmem:[%s1 + $0xa70] sm:$0xff]
    %v1525 = vld [vmem:[%s1 + $0xa78] sm:$0xff]
    %v1526 = vld [vmem:[%s1 + $0xa80] sm:$0xff]
    %v1527 = vld [vmem:[%s1 + $0xa88] sm:$0xff]
    %v1528 = vld [vmem:[%s1 + $0xa90] sm:$0xff]
    %v1529 = vld [vmem:[%s1 + $0xa98] sm:$0xff]
    %v1530 = vld [vmem:[%s1 + $0xaa0] sm:$0xff]
    %v1531 = vld [vmem:[%s1 + $0xaa8] sm:$0xff]
    %v1532 = vld [vmem:[%s1 + $0xab0] sm:$0xff]
    %v1533 = vld [vmem:[%s1 + $0xab8] sm:$0xff]
    %v1534 = vld [vmem:[%s1 + $0xac0] sm:$0xff]
    %v1535 = vld [vmem:[%s1 + $0xac8] sm:$0xff]
    %v1536 = vld [vmem:[%s1 + $0xad0] sm:$0xff]
    %v1537 = vld [vmem:[%s1 + $0xad8] sm:$0xff]
    %v1538 = vld [vmem:[%s1 + $0xae0] sm:$0xff]
    %v1539 = vld [vmem:[%s1 + $0xae8] sm:$0xff]
    %v1540 = vld [vmem:[%s1 + $0xaf0] sm:$0xff]
    %v1541 = vld [vmem:[%s1 + $0xaf8] sm:$0xff]
    %v1542 = vld [vmem:[%s1 + $0xb00] sm:$0xff]
    %v1543 = vld [vmem:[%s1 + $0xb08] sm:$0xff]
    %v1544 = vld [vmem:[%s1 + $0xb10] sm:$0xff]
    %v1545 = vld [vmem:[%s1 + $0xb18] sm:$0xff]
    %v1546 = vld [vmem:[%s1 + $0xb20] sm:$0xff]
    %v1547 = vld [vmem:[%s1 + $0xb28] sm:$0xff]
    %v1548 = vld [vmem:[%s1 + $0xb30] sm:$0xff]
    %v1549 = vld [vmem:[%s1 + $0xb38] sm:$0xff]
    %v1550 = vld [vmem:[%s1 + $0xb40] sm:$0xff]
    %v1551 = vld [vmem:[%s1 + $0xb48] sm:$0xff]
    %v1552 = vld [vmem:[%s1 + $0xb50] sm:$0xff]
    %v1553 = vld [vmem:[%s1 + $0xb58] sm:$0xff]
    %v1554 = vld [vmem:[%s1 + $0xb60] sm:$0xff]
    %v1555 = vld [vmem:[%s1 + $0xb68] sm:$0xff]
    %v1556 = vld [vmem:[%s1 + $0xb70] sm:$0xff]
    %v1557 = vld [vmem:[%s1 + $0xb78] sm:$0xff]
    %v1558 = vld [vmem:[%s1 + $0xb80] sm:$0xff]
    %v1559 = vld [vmem:[%s1 + $0xb88] sm:$0xff]
    %v1560 = vld [vmem:[%s1 + $0xb90] sm:$0xff]
    %v1561 = vld [vmem:[%s1 + $0xb98] sm:$0xff]
    %v1562 = vld [vmem:[%s1 + $0xba0] sm:$0xff]
    %v1563 = vld [vmem:[%s1 + $0xba8] sm:$0xff]
    %v1564 = vld [vmem:[%s1 + $0xbb0] sm:$0xff]
    %v1565 = vld [vmem:[%s1 + $0xbb8] sm:$0xff]
    %v1566 = vld [vmem:[%s1 + $0xbc0] sm:$0xff]
    %v1567 = vld [vmem:[%s1 + $0xbc8] sm:$0xff]
    %v1568 = vld [vmem:[%s1 + $0xbd0] sm:$0xff]
    %v1569 = vld [vmem:[%s1 + $0xbd8] sm:$0xff]
    %v1570 = vld [vmem:[%s1 + $0xbe0] sm:$0xff]
    %v1571 = vld [vmem:[%s1 + $0xbe8] sm:$0xff]
    %v1572 = vld [vmem:[%s1 + $0xbf0] sm:$0xff]
    %v1573 = vld [vmem:[%s1 + $0xbf8] sm:$0xff]
    %v1574 = vld [vmem:[%s1 + $0xc00] sm:$0xff]
    %v1575 = vld [vmem:[%s1 + $0xc08] sm:$0xff]
    %v1576 = vld [vmem:[%s1 + $0xc10] sm:$0xff]
    %v1577 = vld [vmem:[%s1 + $0xc18] sm:$0xff]
    %v1578 = vld [vmem:[%s1 + $0xc20] sm:$0xff]
    %v1579 = vld [vmem:[%s1 + $0xc28] sm:$0xff]
    %v1580 = vld [vmem:[%s1 + $0xc30] sm:$0xff]
    %v1581 = vld [vmem:[%s1 + $0xc38] sm:$0xff]
    %v1582 = vld [vmem:[%s1 + $0xc40] sm:$0xff]
    %v1583 = vld [vmem:[%s1 + $0xc48] sm:$0xff]
    %v1584 = vld [vmem:[%s1 + $0xc50] sm:$0xff]
    %v1585 = vld [vmem:[%s1 + $0xc58] sm:$0xff]
    %v1586 = vld [vmem:[%s1 + $0xc60] sm:$0xff]
    %v1587 = vld [vmem:[%s1 + $0xc68] sm:$0xff]
    %v1588 = vld [vmem:[%s1 + $0xc70] sm:$0xff]
    %v1589 = vld [vmem:[%s1 + $0xc78] sm:$0xff]
    %v1590 = vld [vmem:[%s1 + $0xc80] sm:$0xff]
    %v1591 = vld [vmem:[%s1 + $0xc88] sm:$0xff]
    %v1592 = vld [vmem:[%s1 + $0xc90] sm:$0xff]
    %v1593 = vld [vmem:[%s1 + $0xc98] sm:$0xff]
    %v1594 = vld [vmem:[%s1 + $0xca0] sm:$0xff]
    %v1595 = vld [vmem:[%s1 + $0xca8] sm:$0xff]
    %v1596 = vld [vmem:[%s1 + $0xcb0] sm:$0xff]
    %v1597 = vld [vmem:[%s1 + $0xcb8] sm:$0xff]
    %v1598 = vld [vmem:[%s1 + $0xcc0] sm:$0xff]
    %v1599 = vld [vmem:[%s1 + $0xcc8] sm:$0xff]
    %v1600 = vld [vmem:[%s1 + $0xcd0] sm:$0xff]
    %v1601 = vld [vmem:[%s1 + $0xcd8] sm:$0xff]
    %v1602 = vld [vmem:[%s1 + $0xce0] sm:$0xff]
    %v1603 = vld [vmem:[%s1 + $0xce8] sm:$0xff]
    %v1604 = vld [vmem:[%s1 + $0xcf0] sm:$0xff]
    %v1605 = vld [vmem:[%s1 + $0xcf8] sm:$0xff]
    %v1606 = vld [vmem:[%s1 + $0xd00] sm:$0xff]
    %v1607 = vld [vmem:[%s1 + $0xd08] sm:$0xff]
    %v1608 = vld [vmem:[%s1 + $0xd10] sm:$0xff]
    %v1609 = vld [vmem:[%s1 + $0xd18] sm:$0xff]
    %v1610 = vld [vmem:[%s1 + $0xd20] sm:$0xff]
    %v1611 = vld [vmem:[%s1 + $0xd28] sm:$0xff]
    %v1612 = vld [vmem:[%s1 + $0xd30] sm:$0xff]
    %v1613 = vld [vmem:[%s1 + $0xd38] sm:$0xff]
    %v1614 = vld [vmem:[%s1 + $0xd40] sm:$0xff]
    %v1615 = vld [vmem:[%s1 + $0xd48] sm:$0xff]
    %v1616 = vld [vmem:[%s1 + $0xd50] sm:$0xff]
    %v1617 = vld [vmem:[%s1 + $0xd58] sm:$0xff]
    %v1618 = vld [vmem:[%s1 + $0xd60] sm:$0xff]
    %v1619 = vld [vmem:[%s1 + $0xd68] sm:$0xff]
    %v1620 = vld [vmem:[%s1 + $0xd70] sm:$0xff]
    %v1621 = vld [vmem:[%s1 + $0xd78] sm:$0xff]
    %v1622 = vld [vmem:[%s1 + $0xd80] sm:$0xff]
    %v1623 = vld [vmem:[%s1 + $0xd88] sm:$0xff]
    %v1624 = vld [vmem:[%s1 + $0xd90] sm:$0xff]
    %v1625 = vld [vmem:[%s1 + $0xd98] sm:$0xff]
    %v1626 = vld [vmem:[%s1 + $0xda0] sm:$0xff]
    %v1627 = vld [vmem:[%s1 + $0xda8] sm:$0xff]
    %v1628 = vld [vmem:[%s1 + $0xdb0] sm:$0xff]
    %v1629 = vld [vmem:[%s1 + $0xdb8] sm:$0xff]
    %v1630 = vld [vmem:[%s1 + $0xdc0] sm:$0xff]
    %v1631 = vld [vmem:[%s1 + $0xdc8] sm:$0xff]
    %v1632 = vld [vmem:[%s1 + $0xdd0] sm:$0xff]
    %v1633 = vld [vmem:[%s1 + $0xdd8] sm:$0xff]
    %v1634 = vld [vmem:[%s1 + $0xde0] sm:$0xff]
    %v1635 = vld [vmem:[%s1 + $0xde8] sm:$0xff]
    %v1636 = vld [vmem:[%s1 + $0xdf0] sm:$0xff]
    %v1637 = vld [vmem:[%s1 + $0xdf8] sm:$0xff]
    %v1638 = vld [vmem:[%s1 + $0xe00] sm:$0xff]
    %v1639 = vld [vmem:[%s1 + $0xe08] sm:$0xff]
    %v1640 = vld [vmem:[%s1 + $0xe10] sm:$0xff]
    %v1641 = vld [vmem:[%s1 + $0xe18] sm:$0xff]
    %v1642 = vld [vmem:[%s1 + $0xe20] sm:$0xff]
    %v1643 = vld [vmem:[%s1 + $0xe28] sm:$0xff]
    %v1644 = vld [vmem:[%s1 + $0xe30] sm:$0xff]
    %v1645 = vld [vmem:[%s1 + $0xe38] sm:$0xff]
    %v1646 = vld [vmem:[%s1 + $0xe40] sm:$0xff]
    %v1647 = vld [vmem:[%s1 + $0xe48] sm:$0xff]
    %v1648 = vld [vmem:[%s1 + $0xe50] sm:$0xff]
    %v1649 = vld [vmem:[%s1 + $0xe58] sm:$0xff]
    %v1650 = vld [vmem:[%s1 + $0xe60] sm:$0xff]
    %v1651 = vld [vmem:[%s1 + $0xe68] sm:$0xff]
    %v1652 = vld [vmem:[%s1 + $0xe70] sm:$0xff]
    %v1653 = vld [vmem:[%s1 + $0xe78] sm:$0xff]
    %v1654 = vld [vmem:[%s1 + $0xe80] sm:$0xff]
    %v1655 = vld [vmem:[%s1 + $0xe88] sm:$0xff]
    %v1656 = vld [vmem:[%s1 + $0xe90] sm:$0xff]
    %v1657 = vld [vmem:[%s1 + $0xe98] sm:$0xff]
    %v1658 = vld [vmem:[%s1 + $0xea0] sm:$0xff]
    %v1659 = vld [vmem:[%s1 + $0xea8] sm:$0xff]
    %v1660 = vld [vmem:[%s1 + $0xeb0] sm:$0xff]
    %v1661 = vld [vmem:[%s1 + $0xeb8] sm:$0xff]
    %v1662 = vld [vmem:[%s1 + $0xec0] sm:$0xff]
    %v1663 = vld [vmem:[%s1 + $0xec8] sm:$0xff]
    %v1664 = vld [vmem:[%s1 + $0xed0] sm:$0xff]
    %v1665 = vld [vmem:[%s1 + $0xed8] sm:$0xff]
    %v1666 = vld [vmem:[%s1 + $0xee0] sm:$0xff]
    %v1667 = vld [vmem:[%s1 + $0xee8] sm:$0xff]
    %v1668 = vld [vmem:[%s1 + $0xef0] sm:$0xff]
    %v1669 = vld [vmem:[%s1 + $0xef8] sm:$0xff]
    %v1670 = vld [vmem:[%s1 + $0xf00] sm:$0xff]
    %v1671 = vld [vmem:[%s1 + $0xf08] sm:$0xff]
    %v1672 = vld [vmem:[%s1 + $0xf10] sm:$0xff]
    %v1673 = vld [vmem:[%s1 + $0xf18] sm:$0xff]
    %v1674 = vld [vmem:[%s1 + $0xf20] sm:$0xff]
    %v1675 = vld [vmem:[%s1 + $0xf28] sm:$0xff]
    %v1676 = vld [vmem:[%s1 + $0xf30] sm:$0xff]
    %v1677 = vld [vmem:[%s1 + $0xf38] sm:$0xff]
    %v1678 = vld [vmem:[%s1 + $0xf40] sm:$0xff]
    %v1679 = vld [vmem:[%s1 + $0xf48] sm:$0xff]
    %v1680 = vld [vmem:[%s1 + $0xf50] sm:$0xff]
    %v1681 = vld [vmem:[%s1 + $0xf58] sm:$0xff]
    %v1682 = vld [vmem:[%s1 + $0xf60] sm:$0xff]
    %v1683 = vld [vmem:[%s1 + $0xf68] sm:$0xff]
    %v1684 = vld [vmem:[%s1 + $0xf70] sm:$0xff]
    %v1685 = vld [vmem:[%s1 + $0xf78] sm:$0xff]
    %v1686 = vld [vmem:[%s1 + $0xf80] sm:$0xff]
    %v1687 = vld [vmem:[%s1 + $0xf88] sm:$0xff]
    %v1688 = vld [vmem:[%s1 + $0xf90] sm:$0xff]
    %v1689 = vld [vmem:[%s1 + $0xf98] sm:$0xff]
    %v1690 = vld [vmem:[%s1 + $0xfa0] sm:$0xff]
    %v1691 = vld [vmem:[%s1 + $0xfa8] sm:$0xff]
    %v1692 = vld [vmem:[%s1 + $0xfb0] sm:$0xff]
    %v1693 = vld [vmem:[%s1 + $0xfb8] sm:$0xff]
    %v1694 = vld [vmem:[%s1 + $0xfc0] sm:$0xff]
    %v1695 = vld [vmem:[%s1 + $0xfc8] sm:$0xff]
    %v1696 = vld [vmem:[%s1 + $0xfd0] sm:$0xff]
    %v1697 = vld [vmem:[%s1 + $0xfd8] sm:$0xff]
    %v1698 = vld [vmem:[%s1 + $0xfe0] sm:$0xff]
    %v1699 = vld [vmem:[%s1 + $0xfe8] sm:$0xff]
    %v1700 = vld [vmem:[%s1 + $0xff0] sm:$0xff]
    %v1701 = vld [vmem:[%s1 + $0xff8] sm:$0xff]
    %v1702 = vld [vmem:[%s1 + $0x1000] sm:$0xff]
    %v1703 = vld [vmem:[%s1 + $0x1008] sm:$0xff]
    %v1704 = vld [vmem:[%s1 + $0x1010] sm:$0xff]
    %v1705 = vld [vmem:[%s1 + $0x1018] sm:$0xff]
    %v1706 = vld [vmem:[%s1 + $0x1020] sm:$0xff]
    %v1707 = vld [vmem:[%s1 + $0x1028] sm:$0xff]
    %v1708 = vld [vmem:[%s1 + $0x1030] sm:$0xff]
    %v1709 = vld [vmem:[%s1 + $0x1038] sm:$0xff]
    %v1710 = vld [vmem:[%s1 + $0x1040] sm:$0xff]
    %v1711 = vld [vmem:[%s1 + $0x1048] sm:$0xff]
    %v1712 = vld [vmem:[%s1 + $0x1050] sm:$0xff]
    %v1713 = vld [vmem:[%s1 + $0x1058] sm:$0xff]
    %v1714 = vld [vmem:[%s1 + $0x1060] sm:$0xff]
    %v1715 = vld [vmem:[%s1 + $0x1068] sm:$0xff]
    %v1716 = vld [vmem:[%s1 + $0x1070] sm:$0xff]
    %v1717 = vld [vmem:[%s1 + $0x1078] sm:$0xff]
    %v1718 = vld [vmem:[%s1 + $0x1080] sm:$0xff]
    %v1719 = vld [vmem:[%s1 + $0x1088] sm:$0xff]
    %v1720 = vld [vmem:[%s1 + $0x1090] sm:$0xff]
    %v1721 = vld [vmem:[%s1 + $0x1098] sm:$0xff]
    %v1722 = vld [vmem:[%s1 + $0x10a0] sm:$0xff]
    %v1723 = vld [vmem:[%s1 + $0x10a8] sm:$0xff]
    %v1724 = vld [vmem:[%s1 + $0x10b0] sm:$0xff]
    %v1725 = vld [vmem:[%s1 + $0x10b8] sm:$0xff]
    %v1726 = vld [vmem:[%s1 + $0x10c0] sm:$0xff]
    %v1727 = vld [vmem:[%s1 + $0x10c8] sm:$0xff]
    %v1728 = vld [vmem:[%s1 + $0x10d0] sm:$0xff]
    %v1729 = vld [vmem:[%s1 + $0x10d8] sm:$0xff]
    %v1730 = vld [vmem:[%s1 + $0x10e0] sm:$0xff]
    %v1731 = vld [vmem:[%s1 + $0x10e8] sm:$0xff]
    %v1732 = vld [vmem:[%s1 + $0x10f0] sm:$0xff]
    %v1733 = vld [vmem:[%s1 + $0x10f8] sm:$0xff]
    %v1734 = vld [vmem:[%s1 + $0x1100] sm:$0xff]
    %v1735 = vld [vmem:[%s1 + $0x1108] sm:$0xff]
    %v1736 = vld [vmem:[%s1 + $0x1110] sm:$0xff]
    %v1737 = vld [vmem:[%s1 + $0x1118] sm:$0xff]
    %v1738 = vld [vmem:[%s1 + $0x1120] sm:$0xff]
    %v1739 = vld [vmem:[%s1 + $0x1128] sm:$0xff]
    %v1740 = vld [vmem:[%s1 + $0x1130] sm:$0xff]
    %v1741 = vld [vmem:[%s1 + $0x1138] sm:$0xff]
    %v1742 = vld [vmem:[%s1 + $0x1140] sm:$0xff]
    %v1743 = vld [vmem:[%s1 + $0x1148] sm:$0xff]
    %v1744 = vld [vmem:[%s1 + $0x1150] sm:$0xff]
    %v1745 = vld [vmem:[%s1 + $0x1158] sm:$0xff]
    %v1746 = vld [vmem:[%s1 + $0x1160] sm:$0xff]
    %v1747 = vld [vmem:[%s1 + $0x1168] sm:$0xff]
    %v1748 = vld [vmem:[%s1 + $0x1170] sm:$0xff]
    %v1749 = vld [vmem:[%s1 + $0x1178] sm:$0xff]
    %v1750 = vld [vmem:[%s1 + $0x1180] sm:$0xff]
    %v1751 = vld [vmem:[%s1 + $0x1188] sm:$0xff]
    %v1752 = vld [vmem:[%s1 + $0x1190] sm:$0xff]
    %v1753 = vld [vmem:[%s1 + $0x1198] sm:$0xff]
    %v1754 = vld [vmem:[%s1 + $0x11a0] sm:$0xff]
    %v1755 = vld [vmem:[%s1 + $0x11a8] sm:$0xff]
    %v1756 = vld [vmem:[%s1 + $0x11b0] sm:$0xff]
    %v1757 = vld [vmem:[%s1 + $0x11b8] sm:$0xff]
    %v1758 = vld [vmem:[%s1 + $0x11c0] sm:$0xff]
    %v1759 = vld [vmem:[%s1 + $0x11c8] sm:$0xff]
    %v1760 = vld [vmem:[%s1 + $0x11d0] sm:$0xff]
    %v1761 = vld [vmem:[%s1 + $0x11d8] sm:$0xff]
    %v1762 = vld [vmem:[%s1 + $0x11e0] sm:$0xff]
    %v1763 = vld [vmem:[%s1 + $0x11e8] sm:$0xff]
    %v1764 = vld [vmem:[%s1 + $0x11f0] sm:$0xff]
    %v1765 = vld [vmem:[%s1 + $0x11f8] sm:$0xff]
    %v1766 = vld [vmem:[%s1 + $0x1200] sm:$0xff]
    %v1767 = vld [vmem:[%s1 + $0x1208] sm:$0xff]
    %v1768 = vld [vmem:[%s1 + $0x1210] sm:$0xff]
    %v1769 = vld [vmem:[%s1 + $0x1218] sm:$0xff]
    %v1770 = vld [vmem:[%s1 + $0x1220] sm:$0xff]
    %v1771 = vld [vmem:[%s1 + $0x1228] sm:$0xff]
    %v1772 = vld [vmem:[%s1 + $0x1230] sm:$0xff]
    %v1773 = vld [vmem:[%s1 + $0x1238] sm:$0xff]
    %v1774 = vld [vmem:[%s1 + $0x1240] sm:$0xff]
    %v1775 = vld [vmem:[%s1 + $0x1248] sm:$0xff]
    %v1776 = vld [vmem:[%s1 + $0x1250] sm:$0xff]
    %v1777 = vld [vmem:[%s1 + $0x1258] sm:$0xff]
    %v1778 = vld [vmem:[%s1 + $0x1260] sm:$0xff]
    %v1779 = vld [vmem:[%s1 + $0x1268] sm:$0xff]
    %v1780 = vld [vmem:[%s1 + $0x1270] sm:$0xff]
    %v1781 = vld [vmem:[%s1 + $0x1278] sm:$0xff]
    %v1782 = vld [vmem:[%s1 + $0x1280] sm:$0xff]
    %v1783 = vld [vmem:[%s1 + $0x1288] sm:$0xff]
    %v1784 = vld [vmem:[%s1 + $0x1290] sm:$0xff]
    %v1785 = vld [vmem:[%s1 + $0x1298] sm:$0xff]
    %v1786 = vld [vmem:[%s1 + $0x12a0] sm:$0xff]
    %v1787 = vld [vmem:[%s1 + $0x12a8] sm:$0xff]
    %v1788 = vld [vmem:[%s1 + $0x12b0] sm:$0xff]
    %v1789 = vld [vmem:[%s1 + $0x12b8] sm:$0xff]
    %v1790 = vld [vmem:[%s1 + $0x12c0] sm:$0xff]
    %v1791 = vld [vmem:[%s1 + $0x12c8] sm:$0xff]
    %v1792 = vld [vmem:[%s1 + $0x12d0] sm:$0xff]
    %v1793 = vld [vmem:[%s1 + $0x12d8] sm:$0xff]
    %v1794 = vld [vmem:[%s1 + $0x12e0] sm:$0xff]
    %v1795 = vld [vmem:[%s1 + $0x12e8] sm:$0xff]
    %v1796 = vld [vmem:[%s1 + $0x12f0] sm:$0xff]
    %v1797 = vld [vmem:[%s1 + $0x12f8] sm:$0xff]
    %v1798 = vld [vmem:[%s1 + $0x1300] sm:$0xff]
    %v1799 = vld [vmem:[%s1 + $0x1308] sm:$0xff]
    %v1800 = vld [vmem:[%s1 + $0x1310] sm:$0xff]
    %v1801 = vld [vmem:[%s1 + $0x1318] sm:$0xff]
    %v1802 = vld [vmem:[%s1 + $0x1320] sm:$0xff]
    %v1803 = vld [vmem:[%s1 + $0x1328] sm:$0xff]
    %v1804 = vld [vmem:[%s1 + $0x1330] sm:$0xff]
    %v1805 = vld [vmem:[%s1 + $0x1338] sm:$0xff]
    %v1806 = vld [vmem:[%s1 + $0x1340] sm:$0xff]
    %v1807 = vld [vmem:[%s1 + $0x1348] sm:$0xff]
    %v1808 = vld [vmem:[%s1 + $0x1350] sm:$0xff]
    %v1809 = vld [vmem:[%s1 + $0x1358] sm:$0xff]
    %v1810 = vld [vmem:[%s1 + $0x1360] sm:$0xff]
    %v1811 = vld [vmem:[%s1 + $0x1368] sm:$0xff]
    %v1812 = vld [vmem:[%s1 + $0x1370] sm:$0xff]
    %v1813 = vld [vmem:[%s1 + $0x1378] sm:$0xff]
    %v1814 = vld [vmem:[%s1 + $0x1380] sm:$0xff]
    %v1815 = vld [vmem:[%s1 + $0x1388] sm:$0xff]
    %v1816 = vld [vmem:[%s1 + $0x1390] sm:$0xff]
    %v1817 = vld [vmem:[%s1 + $0x1398] sm:$0xff]
    %v1818 = vld [vmem:[%s1 + $0x13a0] sm:$0xff]
    %v1819 = vld [vmem:[%s1 + $0x13a8] sm:$0xff]
    %v1820 = vld [vmem:[%s1 + $0x13b0] sm:$0xff]
    %v1821 = vld [vmem:[%s1 + $0x13b8] sm:$0xff]
    %v1822 = vld [vmem:[%s1 + $0x13c0] sm:$0xff]
    %v1823 = vld [vmem:[%s1 + $0x13c8] sm:$0xff]
    %v1824 = vld [vmem:[%s1 + $0x13d0] sm:$0xff]
    %v1825 = vld [vmem:[%s1 + $0x13d8] sm:$0xff]
    %v1826 = vld [vmem:[%s1 + $0x13e0] sm:$0xff]
    %v1827 = vld [vmem:[%s1 + $0x13e8] sm:$0xff]
    %v1828 = vld [vmem:[%s1 + $0x13f0] sm:$0xff]
    %v1829 = vld [vmem:[%s1 + $0x13f8] sm:$0xff]
    %v1830 = vld [vmem:[%s1 + $0x1400] sm:$0xff]
    %v1831 = vld [vmem:[%s1 + $0x1408] sm:$0xff]
    %v1832 = vld [vmem:[%s1 + $0x1410] sm:$0xff]
    %v1833 = vld [vmem:[%s1 + $0x1418] sm:$0xff]
    %v1834 = vld [vmem:[%s1 + $0x1420] sm:$0xff]
    %v1835 = vld [vmem:[%s1 + $0x1428] sm:$0xff]
    %v1836 = vld [vmem:[%s1 + $0x1430] sm:$0xff]
    %v1837 = vld [vmem:[%s1 + $0x1438] sm:$0xff]
    %v1838 = vld [vmem:[%s1 + $0x1440] sm:$0xff]
    %v1839 = vld [vmem:[%s1 + $0x1448] sm:$0xff]
    %v1840 = vld [vmem:[%s1 + $0x1450] sm:$0xff]
    %v1841 = vld [vmem:[%s1 + $0x1458] sm:$0xff]
    %v1842 = vld [vmem:[%s1 + $0x1460] sm:$0xff]
    %v1843 = vld [vmem:[%s1 + $0x1468] sm:$0xff]
    %v1844 = vld [vmem:[%s1 + $0x1470] sm:$0xff]
    %v1845 = vld [vmem:[%s1 + $0x1478] sm:$0xff]
    %v1846 = vld [vmem:[%s1 + $0x1480] sm:$0xff]
    %v1847 = vld [vmem:[%s1 + $0x1488] sm:$0xff]
    %v1848 = vld [vmem:[%s1 + $0x1490] sm:$0xff]
    %v1849 = vld [vmem:[%s1 + $0x1498] sm:$0xff]
    %v1850 = vld [vmem:[%s1 + $0x14a0] sm:$0xff]
    %v1851 = vld [vmem:[%s1 + $0x14a8] sm:$0xff]
    %v1852 = vld [vmem:[%s1 + $0x14b0] sm:$0xff]
    %v1853 = vld [vmem:[%s1 + $0x14b8] sm:$0xff]
    %v1854 = vld [vmem:[%s1 + $0x14c0] sm:$0xff]
    %v1855 = vld [vmem:[%s1 + $0x14c8] sm:$0xff]
    %v1856 = vld [vmem:[%s1 + $0x14d0] sm:$0xff]
    %v1857 = vld [vmem:[%s1 + $0x14d8] sm:$0xff]
    %v1858 = vld [vmem:[%s1 + $0x14e0] sm:$0xff]
    %v1859 = vld [vmem:[%s1 + $0x14e8] sm:$0xff]
    %v1860 = vld [vmem:[%s1 + $0x14f0] sm:$0xff]
    %v1861 = vld [vmem:[%s1 + $0x14f8] sm:$0xff]
    %v1862 = vld [vmem:[%s1 + $0x1500] sm:$0xff]
    %v1863 = vld [vmem:[%s1 + $0x1508] sm:$0xff]
    %v1864 = vld [vmem:[%s1 + $0x1510] sm:$0xff]
    %v1865 = vld [vmem:[%s1 + $0x1518] sm:$0xff]
    %v1866 = vld [vmem:[%s1 + $0x1520] sm:$0xff]
    %v1867 = vld [vmem:[%s1 + $0x1528] sm:$0xff]
    %v1868 = vld [vmem:[%s1 + $0x1530] sm:$0xff]
    %v1869 = vld [vmem:[%s1 + $0x1538] sm:$0xff]
    %v1870 = vld [vmem:[%s1 + $0x1540] sm:$0xff]
    %v1871 = vld [vmem:[%s1 + $0x1548] sm:$0xff]
    %v1872 = vld [vmem:[%s1 + $0x1550] sm:$0xff]
    %v1873 = vld [vmem:[%s1 + $0x1558] sm:$0xff]
    %v1874 = vld [vmem:[%s1 + $0x1560] sm:$0xff]
    %v1875 = vld [vmem:[%s1 + $0x1568] sm:$0xff]
    %v1876 = vld [vmem:[%s1 + $0x1570] sm:$0xff]
    %v1877 = vld [vmem:[%s1 + $0x1578] sm:$0xff]
    %v1878 = vld [vmem:[%s1 + $0x1580] sm:$0xff]
    %v1879 = vld [vmem:[%s1 + $0x1588] sm:$0xff]
    %v1880 = vld [vmem:[%s1 + $0x1590] sm:$0xff]
    %v1881 = vld [vmem:[%s1 + $0x1598] sm:$0xff]
    %v1882 = vld [vmem:[%s1 + $0x15a0] sm:$0xff]
    %v1883 = vld [vmem:[%s1 + $0x15a8] sm:$0xff]
    %v1884 = vld [vmem:[%s1 + $0x15b0] sm:$0xff]
    %v1885 = vld [vmem:[%s1 + $0x15b8] sm:$0xff]
    %v1886 = vld [vmem:[%s1 + $0x15c0] sm:$0xff]
    %v1887 = vld [vmem:[%s1 + $0x15c8] sm:$0xff]
    %v1888 = vld [vmem:[%s1 + $0x15d0] sm:$0xff]
    %v1889 = vld [vmem:[%s1 + $0x15d8] sm:$0xff]
    %v1890 = vld [vmem:[%s1 + $0x15e0] sm:$0xff]
    %v1891 = vld [vmem:[%s1 + $0x15e8] sm:$0xff]
    %v1892 = vld [vmem:[%s1 + $0x15f0] sm:$0xff]
    %v1893 = vld [vmem:[%s1 + $0x15f8] sm:$0xff]
    %v1894 = vld [vmem:[%s1 + $0x1600] sm:$0xff]
    %v1895 = vld [vmem:[%s1 + $0x1608] sm:$0xff]
    %v1896 = vld [vmem:[%s1 + $0x1610] sm:$0xff]
    %v1897 = vld [vmem:[%s1 + $0x1618] sm:$0xff]
    %v1898 = vld [vmem:[%s1 + $0x1620] sm:$0xff]
    %v1899 = vld [vmem:[%s1 + $0x1628] sm:$0xff]
    %v1900 = vld [vmem:[%s1 + $0x1630] sm:$0xff]
    %v1901 = vld [vmem:[%s1 + $0x1638] sm:$0xff]
    %v1902 = vld [vmem:[%s1 + $0x1640] sm:$0xff]
    %v1903 = vld [vmem:[%s1 + $0x1648] sm:$0xff]
    %v1904 = vld [vmem:[%s1 + $0x1650] sm:$0xff]
    %v1905 = vld [vmem:[%s1 + $0x1658] sm:$0xff]
    %v1906 = vld [vmem:[%s1 + $0x1660] sm:$0xff]
    %v1907 = vld [vmem:[%s1 + $0x1668] sm:$0xff]
    %v1908 = vld [vmem:[%s1 + $0x1670] sm:$0xff]
    %v1909 = vld [vmem:[%s1 + $0x1678] sm:$0xff]
    %v1910 = vld [vmem:[%s2] sm:$0x1]
    %v1912 = vlaneseq
    %v1913 = vshrl.u32 %v1912, 7
    %v1914 = vsub.s32 0, %v1913
    %v1915 = vrot.slane %v1910, %v1914
    %v2637 = vunpack.c.l.b16 %v1190
    %v2638 = vunpack.c.h.b16 %v1190
    %v2639 = vunpack.c.l.b16 %v1191
    %v2640 = vunpack.c.h.b16 %v1191
    %v2641 = vunpack.c.l.b16 %v1192
    %v2642 = vunpack.c.h.b16 %v1192
    %v2643 = vunpack.c.l.b16 %v1193
    %v2644 = vunpack.c.h.b16 %v1193
    %v2645 = vunpack.c.l.b16 %v1194
    %v2646 = vunpack.c.h.b16 %v1194
    %v2647 = vunpack.c.l.b16 %v1195
    %v2648 = vunpack.c.h.b16 %v1195
    %v2649 = vunpack.c.l.b16 %v1196
    %v2650 = vunpack.c.h.b16 %v1196
    %v2651 = vunpack.c.l.b16 %v1197
    %v2652 = vunpack.c.h.b16 %v1197
    %v2653 = vunpack.c.l.b16 %v1198
    %v2654 = vunpack.c.h.b16 %v1198
    %v2655 = vunpack.c.l.b16 %v1199
    %v2656 = vunpack.c.h.b16 %v1199
    %v2657 = vunpack.c.l.b16 %v1200
    %v2658 = vunpack.c.h.b16 %v1200
    %v2659 = vunpack.c.l.b16 %v1201
    %v2660 = vunpack.c.h.b16 %v1201
    %v2661 = vunpack.c.l.b16 %v1202
    %v2662 = vunpack.c.h.b16 %v1202
    %v2663 = vunpack.c.l.b16 %v1203
    %v2664 = vunpack.c.h.b16 %v1203
    %v2665 = vunpack.c.l.b16 %v1204
    %v2666 = vunpack.c.h.b16 %v1204
    %v2667 = vunpack.c.l.b16 %v1205
    %v2668 = vunpack.c.h.b16 %v1205
    %v2669 = vunpack.c.l.b16 %v1206
    %v2670 = vunpack.c.h.b16 %v1206
    %v2671 = vunpack.c.l.b16 %v1207
    %v2672 = vunpack.c.h.b16 %v1207
    %v2673 = vunpack.c.l.b16 %v1208
    %v2674 = vunpack.c.h.b16 %v1208
    %v2675 = vunpack.c.l.b16 %v1209
    %v2676 = vunpack.c.h.b16 %v1209
    %v2677 = vunpack.c.l.b16 %v1210
    %v2678 = vunpack.c.h.b16 %v1210
    %v2679 = vunpack.c.l.b16 %v1211
    %v2680 = vunpack.c.h.b16 %v1211
    %v2681 = vunpack.c.l.b16 %v1212
    %v2682 = vunpack.c.h.b16 %v1212
    %v2683 = vunpack.c.l.b16 %v1213
    %v2684 = vunpack.c.h.b16 %v1213
    %v2685 = vunpack.c.l.b16 %v1214
    %v2686 = vunpack.c.h.b16 %v1214
    %v2687 = vunpack.c.l.b16 %v1215
    %v2688 = vunpack.c.h.b16 %v1215
    %v2689 = vunpack.c.l.b16 %v1216
    %v2690 = vunpack.c.h.b16 %v1216
    %v2691 = vunpack.c.l.b16 %v1217
    %v2692 = vunpack.c.h.b16 %v1217
    %v2693 = vunpack.c.l.b16 %v1218
    %v2694 = vunpack.c.h.b16 %v1218
    %v2695 = vunpack.c.l.b16 %v1219
    %v2696 = vunpack.c.h.b16 %v1219
    %v2697 = vunpack.c.l.b16 %v1220
    %v2698 = vunpack.c.h.b16 %v1220
    %v2699 = vunpack.c.l.b16 %v1221
    %v2700 = vunpack.c.h.b16 %v1221
    %v2701 = vunpack.c.l.b16 %v1222
    %v2702 = vunpack.c.h.b16 %v1222
    %v2703 = vunpack.c.l.b16 %v1223
    %v2704 = vunpack.c.h.b16 %v1223
    %v2705 = vunpack.c.l.b16 %v1224
    %v2706 = vunpack.c.h.b16 %v1224
    %v2707 = vunpack.c.l.b16 %v1225
    %v2708 = vunpack.c.h.b16 %v1225
    %v2709 = vunpack.c.l.b16 %v1226
    %v2710 = vunpack.c.h.b16 %v1226
    %v2711 = vunpack.c.l.b16 %v1227
    %v2712 = vunpack.c.h.b16 %v1227
    %v2713 = vunpack.c.l.b16 %v1228
    %v2714 = vunpack.c.h.b16 %v1228
    %v2715 = vunpack.c.l.b16 %v1229
    %v2716 = vunpack.c.h.b16 %v1229
    %v2717 = vunpack.c.l.b16 %v1230
    %v2718 = vunpack.c.h.b16 %v1230
    %v2719 = vunpack.c.l.b16 %v1231
    %v2720 = vunpack.c.h.b16 %v1231
    %v2721 = vunpack.c.l.b16 %v1232
    %v2722 = vunpack.c.h.b16 %v1232
    %v2723 = vunpack.c.l.b16 %v1233
    %v2724 = vunpack.c.h.b16 %v1233
    %v2725 = vunpack.c.l.b16 %v1234
    %v2726 = vunpack.c.h.b16 %v1234
    %v2727 = vunpack.c.l.b16 %v1235
    %v2728 = vunpack.c.h.b16 %v1235
    %v2729 = vunpack.c.l.b16 %v1236
    %v2730 = vunpack.c.h.b16 %v1236
    %v2731 = vunpack.c.l.b16 %v1237
    %v2732 = vunpack.c.h.b16 %v1237
    %v2733 = vunpack.c.l.b16 %v1238
    %v2734 = vunpack.c.h.b16 %v1238
    %v2735 = vunpack.c.l.b16 %v1239
    %v2736 = vunpack.c.h.b16 %v1239
    %v2737 = vunpack.c.l.b16 %v1240
    %v2738 = vunpack.c.h.b16 %v1240
    %v2739 = vunpack.c.l.b16 %v1241
    %v2740 = vunpack.c.h.b16 %v1241
    %v2741 = vunpack.c.l.b16 %v1242
    %v2742 = vunpack.c.h.b16 %v1242
    %v2743 = vunpack.c.l.b16 %v1243
    %v2744 = vunpack.c.h.b16 %v1243
    %v2745 = vunpack.c.l.b16 %v1244
    %v2746 = vunpack.c.h.b16 %v1244
    %v2747 = vunpack.c.l.b16 %v1245
    %v2748 = vunpack.c.h.b16 %v1245
    %v2749 = vunpack.c.l.b16 %v1246
    %v2750 = vunpack.c.h.b16 %v1246
    %v2751 = vunpack.c.l.b16 %v1247
    %v2752 = vunpack.c.h.b16 %v1247
    %v2753 = vunpack.c.l.b16 %v1248
    %v2754 = vunpack.c.h.b16 %v1248
    %v2755 = vunpack.c.l.b16 %v1249
    %v2756 = vunpack.c.h.b16 %v1249
    %v2757 = vunpack.c.l.b16 %v1250
    %v2758 = vunpack.c.h.b16 %v1250
    %v2759 = vunpack.c.l.b16 %v1251
    %v2760 = vunpack.c.h.b16 %v1251
    %v2761 = vunpack.c.l.b16 %v1252
    %v2762 = vunpack.c.h.b16 %v1252
    %v2763 = vunpack.c.l.b16 %v1253
    %v2764 = vunpack.c.h.b16 %v1253
    %v2765 = vunpack.c.l.b16 %v1254
    %v2766 = vunpack.c.h.b16 %v1254
    %v2767 = vunpack.c.l.b16 %v1255
    %v2768 = vunpack.c.h.b16 %v1255
    %v2769 = vunpack.c.l.b16 %v1256
    %v2770 = vunpack.c.h.b16 %v1256
    %v2771 = vunpack.c.l.b16 %v1257
    %v2772 = vunpack.c.h.b16 %v1257
    %v2773 = vunpack.c.l.b16 %v1258
    %v2774 = vunpack.c.h.b16 %v1258
    %v2775 = vunpack.c.l.b16 %v1259
    %v2776 = vunpack.c.h.b16 %v1259
    %v2777 = vunpack.c.l.b16 %v1260
    %v2778 = vunpack.c.h.b16 %v1260
    %v2779 = vunpack.c.l.b16 %v1261
    %v2780 = vunpack.c.h.b16 %v1261
    %v2781 = vunpack.c.l.b16 %v1262
    %v2782 = vunpack.c.h.b16 %v1262
    %v2783 = vunpack.c.l.b16 %v1263
    %v2784 = vunpack.c.h.b16 %v1263
    %v2785 = vunpack.c.l.b16 %v1264
    %v2786 = vunpack.c.h.b16 %v1264
    %v2787 = vunpack.c.l.b16 %v1265
    %v2788 = vunpack.c.h.b16 %v1265
    %v2789 = vunpack.c.l.b16 %v1266
    %v2790 = vunpack.c.h.b16 %v1266
    %v2791 = vunpack.c.l.b16 %v1267
    %v2792 = vunpack.c.h.b16 %v1267
    %v2793 = vunpack.c.l.b16 %v1268
    %v2794 = vunpack.c.h.b16 %v1268
    %v2795 = vunpack.c.l.b16 %v1269
    %v2796 = vunpack.c.h.b16 %v1269
    %v2797 = vunpack.c.l.b16 %v1270
    %v2798 = vunpack.c.h.b16 %v1270
    %v2799 = vunpack.c.l.b16 %v1271
    %v2800 = vunpack.c.h.b16 %v1271
    %v2801 = vunpack.c.l.b16 %v1272
    %v2802 = vunpack.c.h.b16 %v1272
    %v2803 = vunpack.c.l.b16 %v1273
    %v2804 = vunpack.c.h.b16 %v1273
    %v2805 = vunpack.c.l.b16 %v1274
    %v2806 = vunpack.c.h.b16 %v1274
    %v2807 = vunpack.c.l.b16 %v1275
    %v2808 = vunpack.c.h.b16 %v1275
    %v2809 = vunpack.c.l.b16 %v1276
    %v2810 = vunpack.c.h.b16 %v1276
    %v2811 = vunpack.c.l.b16 %v1277
    %v2812 = vunpack.c.h.b16 %v1277
    %v2813 = vunpack.c.l.b16 %v1278
    %v2814 = vunpack.c.h.b16 %v1278
    %v2815 = vunpack.c.l.b16 %v1279
    %v2816 = vunpack.c.h.b16 %v1279
    %v2817 = vunpack.c.l.b16 %v1280
    %v2818 = vunpack.c.h.b16 %v1280
    %v2819 = vunpack.c.l.b16 %v1281
    %v2820 = vunpack.c.h.b16 %v1281
    %v2821 = vunpack.c.l.b16 %v1282
    %v2822 = vunpack.c.h.b16 %v1282
    %v2823 = vunpack.c.l.b16 %v1283
    %v2824 = vunpack.c.h.b16 %v1283
    %v2825 = vunpack.c.l.b16 %v1284
    %v2826 = vunpack.c.h.b16 %v1284
    %v2827 = vunpack.c.l.b16 %v1285
    %v2828 = vunpack.c.h.b16 %v1285
    %v2829 = vunpack.c.l.b16 %v1286
    %v2830 = vunpack.c.h.b16 %v1286
    %v2831 = vunpack.c.l.b16 %v1287
    %v2832 = vunpack.c.h.b16 %v1287
    %v2833 = vunpack.c.l.b16 %v1288
    %v2834 = vunpack.c.h.b16 %v1288
    %v2835 = vunpack.c.l.b16 %v1289
    %v2836 = vunpack.c.h.b16 %v1289
    %v2837 = vunpack.c.l.b16 %v1290
    %v2838 = vunpack.c.h.b16 %v1290
    %v2839 = vunpack.c.l.b16 %v1291
    %v2840 = vunpack.c.h.b16 %v1291
    %v2841 = vunpack.c.l.b16 %v1292
    %v2842 = vunpack.c.h.b16 %v1292
    %v2843 = vunpack.c.l.b16 %v1293
    %v2844 = vunpack.c.h.b16 %v1293
    %v2845 = vunpack.c.l.b16 %v1294
    %v2846 = vunpack.c.h.b16 %v1294
    %v2847 = vunpack.c.l.b16 %v1295
    %v2848 = vunpack.c.h.b16 %v1295
    %v2849 = vunpack.c.l.b16 %v1296
    %v2850 = vunpack.c.h.b16 %v1296
    %v2851 = vunpack.c.l.b16 %v1297
    %v2852 = vunpack.c.h.b16 %v1297
    %v2853 = vunpack.c.l.b16 %v1298
    %v2854 = vunpack.c.h.b16 %v1298
    %v2855 = vunpack.c.l.b16 %v1299
    %v2856 = vunpack.c.h.b16 %v1299
    %v2857 = vunpack.c.l.b16 %v1300
    %v2858 = vunpack.c.h.b16 %v1300
    %v2859 = vunpack.c.l.b16 %v1301
    %v2860 = vunpack.c.h.b16 %v1301
    %v2861 = vunpack.c.l.b16 %v1302
    %v2862 = vunpack.c.h.b16 %v1302
    %v2863 = vunpack.c.l.b16 %v1303
    %v2864 = vunpack.c.h.b16 %v1303
    %v2865 = vunpack.c.l.b16 %v1304
    %v2866 = vunpack.c.h.b16 %v1304
    %v2867 = vunpack.c.l.b16 %v1305
    %v2868 = vunpack.c.h.b16 %v1305
    %v2869 = vunpack.c.l.b16 %v1306
    %v2870 = vunpack.c.h.b16 %v1306
    %v2871 = vunpack.c.l.b16 %v1307
    %v2872 = vunpack.c.h.b16 %v1307
    %v2873 = vunpack.c.l.b16 %v1308
    %v2874 = vunpack.c.h.b16 %v1308
    %v2875 = vunpack.c.l.b16 %v1309
    %v2876 = vunpack.c.h.b16 %v1309
    %v2877 = vunpack.c.l.b16 %v1310
    %v2878 = vunpack.c.h.b16 %v1310
    %v2879 = vunpack.c.l.b16 %v1311
    %v2880 = vunpack.c.h.b16 %v1311
    %v2881 = vunpack.c.l.b16 %v1312
    %v2882 = vunpack.c.h.b16 %v1312
    %v2883 = vunpack.c.l.b16 %v1313
    %v2884 = vunpack.c.h.b16 %v1313
    %v2885 = vunpack.c.l.b16 %v1314
    %v2886 = vunpack.c.h.b16 %v1314
    %v2887 = vunpack.c.l.b16 %v1315
    %v2888 = vunpack.c.h.b16 %v1315
    %v2889 = vunpack.c.l.b16 %v1316
    %v2890 = vunpack.c.h.b16 %v1316
    %v2891 = vunpack.c.l.b16 %v1317
    %v2892 = vunpack.c.h.b16 %v1317
    %v2893 = vunpack.c.l.b16 %v1318
    %v2894 = vunpack.c.h.b16 %v1318
    %v2895 = vunpack.c.l.b16 %v1319
    %v2896 = vunpack.c.h.b16 %v1319
    %v2897 = vunpack.c.l.b16 %v1320
    %v2898 = vunpack.c.h.b16 %v1320
    %v2899 = vunpack.c.l.b16 %v1321
    %v2900 = vunpack.c.h.b16 %v1321
    %v2901 = vunpack.c.l.b16 %v1322
    %v2902 = vunpack.c.h.b16 %v1322
    %v2903 = vunpack.c.l.b16 %v1323
    %v2904 = vunpack.c.h.b16 %v1323
    %v2905 = vunpack.c.l.b16 %v1324
    %v2906 = vunpack.c.h.b16 %v1324
    %v2907 = vunpack.c.l.b16 %v1325
    %v2908 = vunpack.c.h.b16 %v1325
    %v2909 = vunpack.c.l.b16 %v1326
    %v2910 = vunpack.c.h.b16 %v1326
    %v2911 = vunpack.c.l.b16 %v1327
    %v2912 = vunpack.c.h.b16 %v1327
    %v2913 = vunpack.c.l.b16 %v1328
    %v2914 = vunpack.c.h.b16 %v1328
    %v2915 = vunpack.c.l.b16 %v1329
    %v2916 = vunpack.c.h.b16 %v1329
    %v2917 = vunpack.c.l.b16 %v1330
    %v2918 = vunpack.c.h.b16 %v1330
    %v2919 = vunpack.c.l.b16 %v1331
    %v2920 = vunpack.c.h.b16 %v1331
    %v2921 = vunpack.c.l.b16 %v1332
    %v2922 = vunpack.c.h.b16 %v1332
    %v2923 = vunpack.c.l.b16 %v1333
    %v2924 = vunpack.c.h.b16 %v1333
    %v2925 = vunpack.c.l.b16 %v1334
    %v2926 = vunpack.c.h.b16 %v1334
    %v2927 = vunpack.c.l.b16 %v1335
    %v2928 = vunpack.c.h.b16 %v1335
    %v2929 = vunpack.c.l.b16 %v1336
    %v2930 = vunpack.c.h.b16 %v1336
    %v2931 = vunpack.c.l.b16 %v1337
    %v2932 = vunpack.c.h.b16 %v1337
    %v2933 = vunpack.c.l.b16 %v1338
    %v2934 = vunpack.c.h.b16 %v1338
    %v2935 = vunpack.c.l.b16 %v1339
    %v2936 = vunpack.c.h.b16 %v1339
    %v2937 = vunpack.c.l.b16 %v1340
    %v2938 = vunpack.c.h.b16 %v1340
    %v2939 = vunpack.c.l.b16 %v1341
    %v2940 = vunpack.c.h.b16 %v1341
    %v2941 = vunpack.c.l.b16 %v1342
    %v2942 = vunpack.c.h.b16 %v1342
    %v2943 = vunpack.c.l.b16 %v1343
    %v2944 = vunpack.c.h.b16 %v1343
    %v2945 = vunpack.c.l.b16 %v1344
    %v2946 = vunpack.c.h.b16 %v1344
    %v2947 = vunpack.c.l.b16 %v1345
    %v2948 = vunpack.c.h.b16 %v1345
    %v2949 = vunpack.c.l.b16 %v1346
    %v2950 = vunpack.c.h.b16 %v1346
    %v2951 = vunpack.c.l.b16 %v1347
    %v2952 = vunpack.c.h.b16 %v1347
    %v2953 = vunpack.c.l.b16 %v1348
    %v2954 = vunpack.c.h.b16 %v1348
    %v2955 = vunpack.c.l.b16 %v1349
    %v2956 = vunpack.c.h.b16 %v1349
    %v2957 = vunpack.c.l.b16 %v1350
    %v2958 = vunpack.c.h.b16 %v1350
    %v2959 = vunpack.c.l.b16 %v1351
    %v2960 = vunpack.c.h.b16 %v1351
    %v2961 = vunpack.c.l.b16 %v1352
    %v2962 = vunpack.c.h.b16 %v1352
    %v2963 = vunpack.c.l.b16 %v1353
    %v2964 = vunpack.c.h.b16 %v1353
    %v2965 = vunpack.c.l.b16 %v1354
    %v2966 = vunpack.c.h.b16 %v1354
    %v2967 = vunpack.c.l.b16 %v1355
    %v2968 = vunpack.c.h.b16 %v1355
    %v2969 = vunpack.c.l.b16 %v1356
    %v2970 = vunpack.c.h.b16 %v1356
    %v2971 = vunpack.c.l.b16 %v1357
    %v2972 = vunpack.c.h.b16 %v1357
    %v2973 = vunpack.c.l.b16 %v1358
    %v2974 = vunpack.c.h.b16 %v1358
    %v2975 = vunpack.c.l.b16 %v1359
    %v2976 = vunpack.c.h.b16 %v1359
    %v2977 = vunpack.c.l.b16 %v1360
    %v2978 = vunpack.c.h.b16 %v1360
    %v2979 = vunpack.c.l.b16 %v1361
    %v2980 = vunpack.c.h.b16 %v1361
    %v2981 = vunpack.c.l.b16 %v1362
    %v2982 = vunpack.c.h.b16 %v1362
    %v2983 = vunpack.c.l.b16 %v1363
    %v2984 = vunpack.c.h.b16 %v1363
    %v2985 = vunpack.c.l.b16 %v1364
    %v2986 = vunpack.c.h.b16 %v1364
    %v2987 = vunpack.c.l.b16 %v1365
    %v2988 = vunpack.c.h.b16 %v1365
    %v2989 = vunpack.c.l.b16 %v1366
    %v2990 = vunpack.c.h.b16 %v1366
    %v2991 = vunpack.c.l.b16 %v1367
    %v2992 = vunpack.c.h.b16 %v1367
    %v2993 = vunpack.c.l.b16 %v1368
    %v2994 = vunpack.c.h.b16 %v1368
    %v2995 = vunpack.c.l.b16 %v1369
    %v2996 = vunpack.c.h.b16 %v1369
    %v2997 = vunpack.c.l.b16 %v1370
    %v2998 = vunpack.c.h.b16 %v1370
    %v2999 = vunpack.c.l.b16 %v1371
    %v3000 = vunpack.c.h.b16 %v1371
    %v3001 = vunpack.c.l.b16 %v1372
    %v3002 = vunpack.c.h.b16 %v1372
    %v3003 = vunpack.c.l.b16 %v1373
    %v3004 = vunpack.c.h.b16 %v1373
    %v3005 = vunpack.c.l.b16 %v1374
    %v3006 = vunpack.c.h.b16 %v1374
    %v3007 = vunpack.c.l.b16 %v1375
    %v3008 = vunpack.c.h.b16 %v1375
    %v3009 = vunpack.c.l.b16 %v1376
    %v3010 = vunpack.c.h.b16 %v1376
    %v3011 = vunpack.c.l.b16 %v1377
    %v3012 = vunpack.c.h.b16 %v1377
    %v3013 = vunpack.c.l.b16 %v1378
    %v3014 = vunpack.c.h.b16 %v1378
    %v3015 = vunpack.c.l.b16 %v1379
    %v3016 = vunpack.c.h.b16 %v1379
    %v3017 = vunpack.c.l.b16 %v1380
    %v3018 = vunpack.c.h.b16 %v1380
    %v3019 = vunpack.c.l.b16 %v1381
    %v3020 = vunpack.c.h.b16 %v1381
    %v3021 = vunpack.c.l.b16 %v1382
    %v3022 = vunpack.c.h.b16 %v1382
    %v3023 = vunpack.c.l.b16 %v1383
    %v3024 = vunpack.c.h.b16 %v1383
    %v3025 = vunpack.c.l.b16 %v1384
    %v3026 = vunpack.c.h.b16 %v1384
    %v3027 = vunpack.c.l.b16 %v1385
    %v3028 = vunpack.c.h.b16 %v1385
    %v3029 = vunpack.c.l.b16 %v1386
    %v3030 = vunpack.c.h.b16 %v1386
    %v3031 = vunpack.c.l.b16 %v1387
    %v3032 = vunpack.c.h.b16 %v1387
    %v3033 = vunpack.c.l.b16 %v1388
    %v3034 = vunpack.c.h.b16 %v1388
    %v3035 = vunpack.c.l.b16 %v1389
    %v3036 = vunpack.c.h.b16 %v1389
    %v3037 = vunpack.c.l.b16 %v1390
    %v3038 = vunpack.c.h.b16 %v1390
    %v3039 = vunpack.c.l.b16 %v1391
    %v3040 = vunpack.c.h.b16 %v1391
    %v3041 = vunpack.c.l.b16 %v1392
    %v3042 = vunpack.c.h.b16 %v1392
    %v3043 = vunpack.c.l.b16 %v1393
    %v3044 = vunpack.c.h.b16 %v1393
    %v3045 = vunpack.c.l.b16 %v1394
    %v3046 = vunpack.c.h.b16 %v1394
    %v3047 = vunpack.c.l.b16 %v1395
    %v3048 = vunpack.c.h.b16 %v1395
    %v3049 = vunpack.c.l.b16 %v1396
    %v3050 = vunpack.c.h.b16 %v1396
    %v3051 = vunpack.c.l.b16 %v1397
    %v3052 = vunpack.c.h.b16 %v1397
    %v3053 = vunpack.c.l.b16 %v1398
    %v3054 = vunpack.c.h.b16 %v1398
    %v3055 = vunpack.c.l.b16 %v1399
    %v3056 = vunpack.c.h.b16 %v1399
    %v3057 = vunpack.c.l.b16 %v1400
    %v3058 = vunpack.c.h.b16 %v1400
    %v3059 = vunpack.c.l.b16 %v1401
    %v3060 = vunpack.c.h.b16 %v1401
    %v3061 = vunpack.c.l.b16 %v1402
    %v3062 = vunpack.c.h.b16 %v1402
    %v3063 = vunpack.c.l.b16 %v1403
    %v3064 = vunpack.c.h.b16 %v1403
    %v3065 = vunpack.c.l.b16 %v1404
    %v3066 = vunpack.c.h.b16 %v1404
    %v3067 = vunpack.c.l.b16 %v1405
    %v3068 = vunpack.c.h.b16 %v1405
    %v3069 = vunpack.c.l.b16 %v1406
    %v3070 = vunpack.c.h.b16 %v1406
    %v3071 = vunpack.c.l.b16 %v1407
    %v3072 = vunpack.c.h.b16 %v1407
    %v3073 = vunpack.c.l.b16 %v1408
    %v3074 = vunpack.c.h.b16 %v1408
    %v3075 = vunpack.c.l.b16 %v1409
    %v3076 = vunpack.c.h.b16 %v1409
    %v3077 = vunpack.c.l.b16 %v1410
    %v3078 = vunpack.c.h.b16 %v1410
    %v3079 = vunpack.c.l.b16 %v1411
    %v3080 = vunpack.c.h.b16 %v1411
    %v3081 = vunpack.c.l.b16 %v1412
    %v3082 = vunpack.c.h.b16 %v1412
    %v3083 = vunpack.c.l.b16 %v1413
    %v3084 = vunpack.c.h.b16 %v1413
    %v3085 = vunpack.c.l.b16 %v1414
    %v3086 = vunpack.c.h.b16 %v1414
    %v3087 = vunpack.c.l.b16 %v1415
    %v3088 = vunpack.c.h.b16 %v1415
    %v3089 = vunpack.c.l.b16 %v1416
    %v3090 = vunpack.c.h.b16 %v1416
    %v3091 = vunpack.c.l.b16 %v1417
    %v3092 = vunpack.c.h.b16 %v1417
    %v3093 = vunpack.c.l.b16 %v1418
    %v3094 = vunpack.c.h.b16 %v1418
    %v3095 = vunpack.c.l.b16 %v1419
    %v3096 = vunpack.c.h.b16 %v1419
    %v3097 = vunpack.c.l.b16 %v1420
    %v3098 = vunpack.c.h.b16 %v1420
    %v3099 = vunpack.c.l.b16 %v1421
    %v3100 = vunpack.c.h.b16 %v1421
    %v3101 = vunpack.c.l.b16 %v1422
    %v3102 = vunpack.c.h.b16 %v1422
    %v3103 = vunpack.c.l.b16 %v1423
    %v3104 = vunpack.c.h.b16 %v1423
    %v3105 = vunpack.c.l.b16 %v1424
    %v3106 = vunpack.c.h.b16 %v1424
    %v3107 = vunpack.c.l.b16 %v1425
    %v3108 = vunpack.c.h.b16 %v1425
    %v3109 = vunpack.c.l.b16 %v1426
    %v3110 = vunpack.c.h.b16 %v1426
    %v3111 = vunpack.c.l.b16 %v1427
    %v3112 = vunpack.c.h.b16 %v1427
    %v3113 = vunpack.c.l.b16 %v1428
    %v3114 = vunpack.c.h.b16 %v1428
    %v3115 = vunpack.c.l.b16 %v1429
    %v3116 = vunpack.c.h.b16 %v1429
    %v3117 = vunpack.c.l.b16 %v1430
    %v3118 = vunpack.c.h.b16 %v1430
    %v3119 = vunpack.c.l.b16 %v1431
    %v3120 = vunpack.c.h.b16 %v1431
    %v3121 = vunpack.c.l.b16 %v1432
    %v3122 = vunpack.c.h.b16 %v1432
    %v3123 = vunpack.c.l.b16 %v1433
    %v3124 = vunpack.c.h.b16 %v1433
    %v3125 = vunpack.c.l.b16 %v1434
    %v3126 = vunpack.c.h.b16 %v1434
    %v3127 = vunpack.c.l.b16 %v1435
    %v3128 = vunpack.c.h.b16 %v1435
    %v3129 = vunpack.c.l.b16 %v1436
    %v3130 = vunpack.c.h.b16 %v1436
    %v3131 = vunpack.c.l.b16 %v1437
    %v3132 = vunpack.c.h.b16 %v1437
    %v3133 = vunpack.c.l.b16 %v1438
    %v3134 = vunpack.c.h.b16 %v1438
    %v3135 = vunpack.c.l.b16 %v1439
    %v3136 = vunpack.c.h.b16 %v1439
    %v3137 = vunpack.c.l.b16 %v1440
    %v3138 = vunpack.c.h.b16 %v1440
    %v3139 = vunpack.c.l.b16 %v1441
    %v3140 = vunpack.c.h.b16 %v1441
    %v3141 = vunpack.c.l.b16 %v1442
    %v3142 = vunpack.c.h.b16 %v1442
    %v3143 = vunpack.c.l.b16 %v1443
    %v3144 = vunpack.c.h.b16 %v1443
    %v3145 = vunpack.c.l.b16 %v1444
    %v3146 = vunpack.c.h.b16 %v1444
    %v3147 = vunpack.c.l.b16 %v1445
    %v3148 = vunpack.c.h.b16 %v1445
    %v3149 = vunpack.c.l.b16 %v1446
    %v3150 = vunpack.c.h.b16 %v1446
    %v3151 = vunpack.c.l.b16 %v1447
    %v3152 = vunpack.c.h.b16 %v1447
    %v3153 = vunpack.c.l.b16 %v1448
    %v3154 = vunpack.c.h.b16 %v1448
    %v3155 = vunpack.c.l.b16 %v1449
    %v3156 = vunpack.c.h.b16 %v1449
    %v3157 = vunpack.c.l.b16 %v1450
    %v3158 = vunpack.c.h.b16 %v1450
    %v3159 = vunpack.c.l.b16 %v1451
    %v3160 = vunpack.c.h.b16 %v1451
    %v3161 = vunpack.c.l.b16 %v1452
    %v3162 = vunpack.c.h.b16 %v1452
    %v3163 = vunpack.c.l.b16 %v1453
    %v3164 = vunpack.c.h.b16 %v1453
    %v3165 = vunpack.c.l.b16 %v1454
    %v3166 = vunpack.c.h.b16 %v1454
    %v3167 = vunpack.c.l.b16 %v1455
    %v3168 = vunpack.c.h.b16 %v1455
    %v3169 = vunpack.c.l.b16 %v1456
    %v3170 = vunpack.c.h.b16 %v1456
    %v3171 = vunpack.c.l.b16 %v1457
    %v3172 = vunpack.c.h.b16 %v1457
    %v3173 = vunpack.c.l.b16 %v1458
    %v3174 = vunpack.c.h.b16 %v1458
    %v3175 = vunpack.c.l.b16 %v1459
    %v3176 = vunpack.c.h.b16 %v1459
    %v3177 = vunpack.c.l.b16 %v1460
    %v3178 = vunpack.c.h.b16 %v1460
    %v3179 = vunpack.c.l.b16 %v1461
    %v3180 = vunpack.c.h.b16 %v1461
    %v3181 = vunpack.c.l.b16 %v1462
    %v3182 = vunpack.c.h.b16 %v1462
    %v3183 = vunpack.c.l.b16 %v1463
    %v3184 = vunpack.c.h.b16 %v1463
    %v3185 = vunpack.c.l.b16 %v1464
    %v3186 = vunpack.c.h.b16 %v1464
    %v3187 = vunpack.c.l.b16 %v1465
    %v3188 = vunpack.c.h.b16 %v1465
    %v3189 = vunpack.c.l.b16 %v1466
    %v3190 = vunpack.c.h.b16 %v1466
    %v3191 = vunpack.c.l.b16 %v1467
    %v3192 = vunpack.c.h.b16 %v1467
    %v3193 = vunpack.c.l.b16 %v1468
    %v3194 = vunpack.c.h.b16 %v1468
    %v3195 = vunpack.c.l.b16 %v1469
    %v3196 = vunpack.c.h.b16 %v1469
    %v3197 = vunpack.c.l.b16 %v1470
    %v3198 = vunpack.c.h.b16 %v1470
    %v3199 = vunpack.c.l.b16 %v1471
    %v3200 = vunpack.c.h.b16 %v1471
    %v3201 = vunpack.c.l.b16 %v1472
    %v3202 = vunpack.c.h.b16 %v1472
    %v3203 = vunpack.c.l.b16 %v1473
    %v3204 = vunpack.c.h.b16 %v1473
    %v3205 = vunpack.c.l.b16 %v1474
    %v3206 = vunpack.c.h.b16 %v1474
    %v3207 = vunpack.c.l.b16 %v1475
    %v3208 = vunpack.c.h.b16 %v1475
    %v3209 = vunpack.c.l.b16 %v1476
    %v3210 = vunpack.c.h.b16 %v1476
    %v3211 = vunpack.c.l.b16 %v1477
    %v3212 = vunpack.c.h.b16 %v1477
    %v3213 = vunpack.c.l.b16 %v1478
    %v3214 = vunpack.c.h.b16 %v1478
    %v3215 = vunpack.c.l.b16 %v1479
    %v3216 = vunpack.c.h.b16 %v1479
    %v3217 = vunpack.c.l.b16 %v1480
    %v3218 = vunpack.c.h.b16 %v1480
    %v3219 = vunpack.c.l.b16 %v1481
    %v3220 = vunpack.c.h.b16 %v1481
    %v3221 = vunpack.c.l.b16 %v1482
    %v3222 = vunpack.c.h.b16 %v1482
    %v3223 = vunpack.c.l.b16 %v1483
    %v3224 = vunpack.c.h.b16 %v1483
    %v3225 = vunpack.c.l.b16 %v1484
    %v3226 = vunpack.c.h.b16 %v1484
    %v3227 = vunpack.c.l.b16 %v1485
    %v3228 = vunpack.c.h.b16 %v1485
    %v3229 = vunpack.c.l.b16 %v1486
    %v3230 = vunpack.c.h.b16 %v1486
    %v3231 = vunpack.c.l.b16 %v1487
    %v3232 = vunpack.c.h.b16 %v1487
    %v3233 = vunpack.c.l.b16 %v1488
    %v3234 = vunpack.c.h.b16 %v1488
    %v3235 = vunpack.c.l.b16 %v1489
    %v3236 = vunpack.c.h.b16 %v1489
    %v3237 = vunpack.c.l.b16 %v1490
    %v3238 = vunpack.c.h.b16 %v1490
    %v3239 = vunpack.c.l.b16 %v1491
    %v3240 = vunpack.c.h.b16 %v1491
    %v3241 = vunpack.c.l.b16 %v1492
    %v3242 = vunpack.c.h.b16 %v1492
    %v3243 = vunpack.c.l.b16 %v1493
    %v3244 = vunpack.c.h.b16 %v1493
    %v3245 = vunpack.c.l.b16 %v1494
    %v3246 = vunpack.c.h.b16 %v1494
    %v3247 = vunpack.c.l.b16 %v1495
    %v3248 = vunpack.c.h.b16 %v1495
    %v3249 = vunpack.c.l.b16 %v1496
    %v3250 = vunpack.c.h.b16 %v1496
    %v3251 = vunpack.c.l.b16 %v1497
    %v3252 = vunpack.c.h.b16 %v1497
    %v3253 = vunpack.c.l.b16 %v1498
    %v3254 = vunpack.c.h.b16 %v1498
    %v3255 = vunpack.c.l.b16 %v1499
    %v3256 = vunpack.c.h.b16 %v1499
    %v3257 = vunpack.c.l.b16 %v1500
    %v3258 = vunpack.c.h.b16 %v1500
    %v3259 = vunpack.c.l.b16 %v1501
    %v3260 = vunpack.c.h.b16 %v1501
    %v3261 = vunpack.c.l.b16 %v1502
    %v3262 = vunpack.c.h.b16 %v1502
    %v3263 = vunpack.c.l.b16 %v1503
    %v3264 = vunpack.c.h.b16 %v1503
    %v3265 = vunpack.c.l.b16 %v1504
    %v3266 = vunpack.c.h.b16 %v1504
    %v3267 = vunpack.c.l.b16 %v1505
    %v3268 = vunpack.c.h.b16 %v1505
    %v3269 = vunpack.c.l.b16 %v1506
    %v3270 = vunpack.c.h.b16 %v1506
    %v3271 = vunpack.c.l.b16 %v1507
    %v3272 = vunpack.c.h.b16 %v1507
    %v3273 = vunpack.c.l.b16 %v1508
    %v3274 = vunpack.c.h.b16 %v1508
    %v3275 = vunpack.c.l.b16 %v1509
    %v3276 = vunpack.c.h.b16 %v1509
    %v3277 = vunpack.c.l.b16 %v1510
    %v3278 = vunpack.c.h.b16 %v1510
    %v3279 = vunpack.c.l.b16 %v1511
    %v3280 = vunpack.c.h.b16 %v1511
    %v3281 = vunpack.c.l.b16 %v1512
    %v3282 = vunpack.c.h.b16 %v1512
    %v3283 = vunpack.c.l.b16 %v1513
    %v3284 = vunpack.c.h.b16 %v1513
    %v3285 = vunpack.c.l.b16 %v1514
    %v3286 = vunpack.c.h.b16 %v1514
    %v3287 = vunpack.c.l.b16 %v1515
    %v3288 = vunpack.c.h.b16 %v1515
    %v3289 = vunpack.c.l.b16 %v1516
    %v3290 = vunpack.c.h.b16 %v1516
    %v3291 = vunpack.c.l.b16 %v1517
    %v3292 = vunpack.c.h.b16 %v1517
    %v3293 = vunpack.c.l.b16 %v1518
    %v3294 = vunpack.c.h.b16 %v1518
    %v3295 = vunpack.c.l.b16 %v1519
    %v3296 = vunpack.c.h.b16 %v1519
    %v3297 = vunpack.c.l.b16 %v1520
    %v3298 = vunpack.c.h.b16 %v1520
    %v3299 = vunpack.c.l.b16 %v1521
    %v3300 = vunpack.c.h.b16 %v1521
    %v3301 = vunpack.c.l.b16 %v1522
    %v3302 = vunpack.c.h.b16 %v1522
    %v3303 = vunpack.c.l.b16 %v1523
    %v3304 = vunpack.c.h.b16 %v1523
    %v3305 = vunpack.c.l.b16 %v1524
    %v3306 = vunpack.c.h.b16 %v1524
    %v3307 = vunpack.c.l.b16 %v1525
    %v3308 = vunpack.c.h.b16 %v1525
    %v3309 = vunpack.c.l.b16 %v1526
    %v3310 = vunpack.c.h.b16 %v1526
    %v3311 = vunpack.c.l.b16 %v1527
    %v3312 = vunpack.c.h.b16 %v1527
    %v3313 = vunpack.c.l.b16 %v1528
    %v3314 = vunpack.c.h.b16 %v1528
    %v3315 = vunpack.c.l.b16 %v1529
    %v3316 = vunpack.c.h.b16 %v1529
    %v3317 = vunpack.c.l.b16 %v1530
    %v3318 = vunpack.c.h.b16 %v1530
    %v3319 = vunpack.c.l.b16 %v1531
    %v3320 = vunpack.c.h.b16 %v1531
    %v3321 = vunpack.c.l.b16 %v1532
    %v3322 = vunpack.c.h.b16 %v1532
    %v3323 = vunpack.c.l.b16 %v1533
    %v3324 = vunpack.c.h.b16 %v1533
    %v3325 = vunpack.c.l.b16 %v1534
    %v3326 = vunpack.c.h.b16 %v1534
    %v3327 = vunpack.c.l.b16 %v1535
    %v3328 = vunpack.c.h.b16 %v1535
    %v3329 = vunpack.c.l.b16 %v1536
    %v3330 = vunpack.c.h.b16 %v1536
    %v3331 = vunpack.c.l.b16 %v1537
    %v3332 = vunpack.c.h.b16 %v1537
    %v3333 = vunpack.c.l.b16 %v1538
    %v3334 = vunpack.c.h.b16 %v1538
    %v3335 = vunpack.c.l.b16 %v1539
    %v3336 = vunpack.c.h.b16 %v1539
    %v3337 = vunpack.c.l.b16 %v1540
    %v3338 = vunpack.c.h.b16 %v1540
    %v3339 = vunpack.c.l.b16 %v1541
    %v3340 = vunpack.c.h.b16 %v1541
    %v3341 = vunpack.c.l.b16 %v1542
    %v3342 = vunpack.c.h.b16 %v1542
    %v3343 = vunpack.c.l.b16 %v1543
    %v3344 = vunpack.c.h.b16 %v1543
    %v3345 = vunpack.c.l.b16 %v1544
    %v3346 = vunpack.c.h.b16 %v1544
    %v3347 = vunpack.c.l.b16 %v1545
    %v3348 = vunpack.c.h.b16 %v1545
    %v3349 = vunpack.c.l.b16 %v1546
    %v3350 = vunpack.c.h.b16 %v1546
    %v3351 = vunpack.c.l.b16 %v1547
    %v3352 = vunpack.c.h.b16 %v1547
    %v3353 = vunpack.c.l.b16 %v1548
    %v3354 = vunpack.c.h.b16 %v1548
    %v3355 = vunpack.c.l.b16 %v1549
    %v3356 = vunpack.c.h.b16 %v1549
    %v3357 = vunpack.c.l.b16 %v1550
    %v3358 = vunpack.c.h.b16 %v1550
    %v3359 = vunpack.c.l.b16 %v1551
    %v3360 = vunpack.c.h.b16 %v1551
    %v3361 = vunpack.c.l.b16 %v1552
    %v3362 = vunpack.c.h.b16 %v1552
    %v3363 = vunpack.c.l.b16 %v1553
    %v3364 = vunpack.c.h.b16 %v1553
    %v3365 = vunpack.c.l.b16 %v1554
    %v3366 = vunpack.c.h.b16 %v1554
    %v3367 = vunpack.c.l.b16 %v1555
    %v3368 = vunpack.c.h.b16 %v1555
    %v3369 = vunpack.c.l.b16 %v1556
    %v3370 = vunpack.c.h.b16 %v1556
    %v3371 = vunpack.c.l.b16 %v1557
    %v3372 = vunpack.c.h.b16 %v1557
    %v3373 = vunpack.c.l.b16 %v1558
    %v3374 = vunpack.c.h.b16 %v1558
    %v3375 = vunpack.c.l.b16 %v1559
    %v3376 = vunpack.c.h.b16 %v1559
    %v3377 = vunpack.c.l.b16 %v1560
    %v3378 = vunpack.c.h.b16 %v1560
    %v3379 = vunpack.c.l.b16 %v1561
    %v3380 = vunpack.c.h.b16 %v1561
    %v3381 = vunpack.c.l.b16 %v1562
    %v3382 = vunpack.c.h.b16 %v1562
    %v3383 = vunpack.c.l.b16 %v1563
    %v3384 = vunpack.c.h.b16 %v1563
    %v3385 = vunpack.c.l.b16 %v1564
    %v3386 = vunpack.c.h.b16 %v1564
    %v3387 = vunpack.c.l.b16 %v1565
    %v3388 = vunpack.c.h.b16 %v1565
    %v3389 = vunpack.c.l.b16 %v1566
    %v3390 = vunpack.c.h.b16 %v1566
    %v3391 = vunpack.c.l.b16 %v1567
    %v3392 = vunpack.c.h.b16 %v1567
    %v3393 = vunpack.c.l.b16 %v1568
    %v3394 = vunpack.c.h.b16 %v1568
    %v3395 = vunpack.c.l.b16 %v1569
    %v3396 = vunpack.c.h.b16 %v1569
    %v3397 = vunpack.c.l.b16 %v1570
    %v3398 = vunpack.c.h.b16 %v1570
    %v3399 = vunpack.c.l.b16 %v1571
    %v3400 = vunpack.c.h.b16 %v1571
    %v3401 = vunpack.c.l.b16 %v1572
    %v3402 = vunpack.c.h.b16 %v1572
    %v3403 = vunpack.c.l.b16 %v1573
    %v3404 = vunpack.c.h.b16 %v1573
    %v3405 = vunpack.c.l.b16 %v1574
    %v3406 = vunpack.c.h.b16 %v1574
    %v3407 = vunpack.c.l.b16 %v1575
    %v3408 = vunpack.c.h.b16 %v1575
    %v3409 = vunpack.c.l.b16 %v1576
    %v3410 = vunpack.c.h.b16 %v1576
    %v3411 = vunpack.c.l.b16 %v1577
    %v3412 = vunpack.c.h.b16 %v1577
    %v3413 = vunpack.c.l.b16 %v1578
    %v3414 = vunpack.c.h.b16 %v1578
    %v3415 = vunpack.c.l.b16 %v1579
    %v3416 = vunpack.c.h.b16 %v1579
    %v3417 = vunpack.c.l.b16 %v1580
    %v3418 = vunpack.c.h.b16 %v1580
    %v3419 = vunpack.c.l.b16 %v1581
    %v3420 = vunpack.c.h.b16 %v1581
    %v3421 = vunpack.c.l.b16 %v1582
    %v3422 = vunpack.c.h.b16 %v1582
    %v3423 = vunpack.c.l.b16 %v1583
    %v3424 = vunpack.c.h.b16 %v1583
    %v3425 = vunpack.c.l.b16 %v1584
    %v3426 = vunpack.c.h.b16 %v1584
    %v3427 = vunpack.c.l.b16 %v1585
    %v3428 = vunpack.c.h.b16 %v1585
    %v3429 = vunpack.c.l.b16 %v1586
    %v3430 = vunpack.c.h.b16 %v1586
    %v3431 = vunpack.c.l.b16 %v1587
    %v3432 = vunpack.c.h.b16 %v1587
    %v3433 = vunpack.c.l.b16 %v1588
    %v3434 = vunpack.c.h.b16 %v1588
    %v3435 = vunpack.c.l.b16 %v1589
    %v3436 = vunpack.c.h.b16 %v1589
    %v3437 = vunpack.c.l.b16 %v1590
    %v3438 = vunpack.c.h.b16 %v1590
    %v3439 = vunpack.c.l.b16 %v1591
    %v3440 = vunpack.c.h.b16 %v1591
    %v3441 = vunpack.c.l.b16 %v1592
    %v3442 = vunpack.c.h.b16 %v1592
    %v3443 = vunpack.c.l.b16 %v1593
    %v3444 = vunpack.c.h.b16 %v1593
    %v3445 = vunpack.c.l.b16 %v1594
    %v3446 = vunpack.c.h.b16 %v1594
    %v3447 = vunpack.c.l.b16 %v1595
    %v3448 = vunpack.c.h.b16 %v1595
    %v3449 = vunpack.c.l.b16 %v1596
    %v3450 = vunpack.c.h.b16 %v1596
    %v3451 = vunpack.c.l.b16 %v1597
    %v3452 = vunpack.c.h.b16 %v1597
    %v3453 = vunpack.c.l.b16 %v1598
    %v3454 = vunpack.c.h.b16 %v1598
    %v3455 = vunpack.c.l.b16 %v1599
    %v3456 = vunpack.c.h.b16 %v1599
    %v3457 = vunpack.c.l.b16 %v1600
    %v3458 = vunpack.c.h.b16 %v1600
    %v3459 = vunpack.c.l.b16 %v1601
    %v3460 = vunpack.c.h.b16 %v1601
    %v3461 = vunpack.c.l.b16 %v1602
    %v3462 = vunpack.c.h.b16 %v1602
    %v3463 = vunpack.c.l.b16 %v1603
    %v3464 = vunpack.c.h.b16 %v1603
    %v3465 = vunpack.c.l.b16 %v1604
    %v3466 = vunpack.c.h.b16 %v1604
    %v3467 = vunpack.c.l.b16 %v1605
    %v3468 = vunpack.c.h.b16 %v1605
    %v3469 = vunpack.c.l.b16 %v1606
    %v3470 = vunpack.c.h.b16 %v1606
    %v3471 = vunpack.c.l.b16 %v1607
    %v3472 = vunpack.c.h.b16 %v1607
    %v3473 = vunpack.c.l.b16 %v1608
    %v3474 = vunpack.c.h.b16 %v1608
    %v3475 = vunpack.c.l.b16 %v1609
    %v3476 = vunpack.c.h.b16 %v1609
    %v3477 = vunpack.c.l.b16 %v1610
    %v3478 = vunpack.c.h.b16 %v1610
    %v3479 = vunpack.c.l.b16 %v1611
    %v3480 = vunpack.c.h.b16 %v1611
    %v3481 = vunpack.c.l.b16 %v1612
    %v3482 = vunpack.c.h.b16 %v1612
    %v3483 = vunpack.c.l.b16 %v1613
    %v3484 = vunpack.c.h.b16 %v1613
    %v3485 = vunpack.c.l.b16 %v1614
    %v3486 = vunpack.c.h.b16 %v1614
    %v3487 = vunpack.c.l.b16 %v1615
    %v3488 = vunpack.c.h.b16 %v1615
    %v3489 = vunpack.c.l.b16 %v1616
    %v3490 = vunpack.c.h.b16 %v1616
    %v3491 = vunpack.c.l.b16 %v1617
    %v3492 = vunpack.c.h.b16 %v1617
    %v3493 = vunpack.c.l.b16 %v1618
    %v3494 = vunpack.c.h.b16 %v1618
    %v3495 = vunpack.c.l.b16 %v1619
    %v3496 = vunpack.c.h.b16 %v1619
    %v3497 = vunpack.c.l.b16 %v1620
    %v3498 = vunpack.c.h.b16 %v1620
    %v3499 = vunpack.c.l.b16 %v1621
    %v3500 = vunpack.c.h.b16 %v1621
    %v3501 = vunpack.c.l.b16 %v1622
    %v3502 = vunpack.c.h.b16 %v1622
    %v3503 = vunpack.c.l.b16 %v1623
    %v3504 = vunpack.c.h.b16 %v1623
    %v3505 = vunpack.c.l.b16 %v1624
    %v3506 = vunpack.c.h.b16 %v1624
    %v3507 = vunpack.c.l.b16 %v1625
    %v3508 = vunpack.c.h.b16 %v1625
    %v3509 = vunpack.c.l.b16 %v1626
    %v3510 = vunpack.c.h.b16 %v1626
    %v3511 = vunpack.c.l.b16 %v1627
    %v3512 = vunpack.c.h.b16 %v1627
    %v3513 = vunpack.c.l.b16 %v1628
    %v3514 = vunpack.c.h.b16 %v1628
    %v3515 = vunpack.c.l.b16 %v1629
    %v3516 = vunpack.c.h.b16 %v1629
    %v3517 = vunpack.c.l.b16 %v1630
    %v3518 = vunpack.c.h.b16 %v1630
    %v3519 = vunpack.c.l.b16 %v1631
    %v3520 = vunpack.c.h.b16 %v1631
    %v3521 = vunpack.c.l.b16 %v1632
    %v3522 = vunpack.c.h.b16 %v1632
    %v3523 = vunpack.c.l.b16 %v1633
    %v3524 = vunpack.c.h.b16 %v1633
    %v3525 = vunpack.c.l.b16 %v1634
    %v3526 = vunpack.c.h.b16 %v1634
    %v3527 = vunpack.c.l.b16 %v1635
    %v3528 = vunpack.c.h.b16 %v1635
    %v3529 = vunpack.c.l.b16 %v1636
    %v3530 = vunpack.c.h.b16 %v1636
    %v3531 = vunpack.c.l.b16 %v1637
    %v3532 = vunpack.c.h.b16 %v1637
    %v3533 = vunpack.c.l.b16 %v1638
    %v3534 = vunpack.c.h.b16 %v1638
    %v3535 = vunpack.c.l.b16 %v1639
    %v3536 = vunpack.c.h.b16 %v1639
    %v3537 = vunpack.c.l.b16 %v1640
    %v3538 = vunpack.c.h.b16 %v1640
    %v3539 = vunpack.c.l.b16 %v1641
    %v3540 = vunpack.c.h.b16 %v1641
    %v3541 = vunpack.c.l.b16 %v1642
    %v3542 = vunpack.c.h.b16 %v1642
    %v3543 = vunpack.c.l.b16 %v1643
    %v3544 = vunpack.c.h.b16 %v1643
    %v3545 = vunpack.c.l.b16 %v1644
    %v3546 = vunpack.c.h.b16 %v1644
    %v3547 = vunpack.c.l.b16 %v1645
    %v3548 = vunpack.c.h.b16 %v1645
    %v3549 = vunpack.c.l.b16 %v1646
    %v3550 = vunpack.c.h.b16 %v1646
    %v3551 = vunpack.c.l.b16 %v1647
    %v3552 = vunpack.c.h.b16 %v1647
    %v3553 = vunpack.c.l.b16 %v1648
    %v3554 = vunpack.c.h.b16 %v1648
    %v3555 = vunpack.c.l.b16 %v1649
    %v3556 = vunpack.c.h.b16 %v1649
    %v3557 = vunpack.c.l.b16 %v1650
    %v3558 = vunpack.c.h.b16 %v1650
    %v3559 = vunpack.c.l.b16 %v1651
    %v3560 = vunpack.c.h.b16 %v1651
    %v3561 = vunpack.c.l.b16 %v1652
    %v3562 = vunpack.c.h.b16 %v1652
    %v3563 = vunpack.c.l.b16 %v1653
    %v3564 = vunpack.c.h.b16 %v1653
    %v3565 = vunpack.c.l.b16 %v1654
    %v3566 = vunpack.c.h.b16 %v1654
    %v3567 = vunpack.c.l.b16 %v1655
    %v3568 = vunpack.c.h.b16 %v1655
    %v3569 = vunpack.c.l.b16 %v1656
    %v3570 = vunpack.c.h.b16 %v1656
    %v3571 = vunpack.c.l.b16 %v1657
    %v3572 = vunpack.c.h.b16 %v1657
    %v3573 = vunpack.c.l.b16 %v1658
    %v3574 = vunpack.c.h.b16 %v1658
    %v3575 = vunpack.c.l.b16 %v1659
    %v3576 = vunpack.c.h.b16 %v1659
    %v3577 = vunpack.c.l.b16 %v1660
    %v3578 = vunpack.c.h.b16 %v1660
    %v3579 = vunpack.c.l.b16 %v1661
    %v3580 = vunpack.c.h.b16 %v1661
    %v3581 = vunpack.c.l.b16 %v1662
    %v3582 = vunpack.c.h.b16 %v1662
    %v3583 = vunpack.c.l.b16 %v1663
    %v3584 = vunpack.c.h.b16 %v1663
    %v3585 = vunpack.c.l.b16 %v1664
    %v3586 = vunpack.c.h.b16 %v1664
    %v3587 = vunpack.c.l.b16 %v1665
    %v3588 = vunpack.c.h.b16 %v1665
    %v3589 = vunpack.c.l.b16 %v1666
    %v3590 = vunpack.c.h.b16 %v1666
    %v3591 = vunpack.c.l.b16 %v1667
    %v3592 = vunpack.c.h.b16 %v1667
    %v3593 = vunpack.c.l.b16 %v1668
    %v3594 = vunpack.c.h.b16 %v1668
    %v3595 = vunpack.c.l.b16 %v1669
    %v3596 = vunpack.c.h.b16 %v1669
    %v3597 = vunpack.c.l.b16 %v1670
    %v3598 = vunpack.c.h.b16 %v1670
    %v3599 = vunpack.c.l.b16 %v1671
    %v3600 = vunpack.c.h.b16 %v1671
    %v3601 = vunpack.c.l.b16 %v1672
    %v3602 = vunpack.c.h.b16 %v1672
    %v3603 = vunpack.c.l.b16 %v1673
    %v3604 = vunpack.c.h.b16 %v1673
    %v3605 = vunpack.c.l.b16 %v1674
    %v3606 = vunpack.c.h.b16 %v1674
    %v3607 = vunpack.c.l.b16 %v1675
    %v3608 = vunpack.c.h.b16 %v1675
    %v3609 = vunpack.c.l.b16 %v1676
    %v3610 = vunpack.c.h.b16 %v1676
    %v3611 = vunpack.c.l.b16 %v1677
    %v3612 = vunpack.c.h.b16 %v1677
    %v3613 = vunpack.c.l.b16 %v1678
    %v3614 = vunpack.c.h.b16 %v1678
    %v3615 = vunpack.c.l.b16 %v1679
    %v3616 = vunpack.c.h.b16 %v1679
    %v3617 = vunpack.c.l.b16 %v1680
    %v3618 = vunpack.c.h.b16 %v1680
    %v3619 = vunpack.c.l.b16 %v1681
    %v3620 = vunpack.c.h.b16 %v1681
    %v3621 = vunpack.c.l.b16 %v1682
    %v3622 = vunpack.c.h.b16 %v1682
    %v3623 = vunpack.c.l.b16 %v1683
    %v3624 = vunpack.c.h.b16 %v1683
    %v3625 = vunpack.c.l.b16 %v1684
    %v3626 = vunpack.c.h.b16 %v1684
    %v3627 = vunpack.c.l.b16 %v1685
    %v3628 = vunpack.c.h.b16 %v1685
    %v3629 = vunpack.c.l.b16 %v1686
    %v3630 = vunpack.c.h.b16 %v1686
    %v3631 = vunpack.c.l.b16 %v1687
    %v3632 = vunpack.c.h.b16 %v1687
    %v3633 = vunpack.c.l.b16 %v1688
    %v3634 = vunpack.c.h.b16 %v1688
    %v3635 = vunpack.c.l.b16 %v1689
    %v3636 = vunpack.c.h.b16 %v1689
    %v3637 = vunpack.c.l.b16 %v1690
    %v3638 = vunpack.c.h.b16 %v1690
    %v3639 = vunpack.c.l.b16 %v1691
    %v3640 = vunpack.c.h.b16 %v1691
    %v3641 = vunpack.c.l.b16 %v1692
    %v3642 = vunpack.c.h.b16 %v1692
    %v3643 = vunpack.c.l.b16 %v1693
    %v3644 = vunpack.c.h.b16 %v1693
    %v3645 = vunpack.c.l.b16 %v1694
    %v3646 = vunpack.c.h.b16 %v1694
    %v3647 = vunpack.c.l.b16 %v1695
    %v3648 = vunpack.c.h.b16 %v1695
    %v3649 = vunpack.c.l.b16 %v1696
    %v3650 = vunpack.c.h.b16 %v1696
    %v3651 = vunpack.c.l.b16 %v1697
    %v3652 = vunpack.c.h.b16 %v1697
    %v3653 = vunpack.c.l.b16 %v1698
    %v3654 = vunpack.c.h.b16 %v1698
    %v3655 = vunpack.c.l.b16 %v1699
    %v3656 = vunpack.c.h.b16 %v1699
    %v3657 = vunpack.c.l.b16 %v1700
    %v3658 = vunpack.c.h.b16 %v1700
    %v3659 = vunpack.c.l.b16 %v1701
    %v3660 = vunpack.c.h.b16 %v1701
    %v3661 = vunpack.c.l.b16 %v1702
    %v3662 = vunpack.c.h.b16 %v1702
    %v3663 = vunpack.c.l.b16 %v1703
    %v3664 = vunpack.c.h.b16 %v1703
    %v3665 = vunpack.c.l.b16 %v1704
    %v3666 = vunpack.c.h.b16 %v1704
    %v3667 = vunpack.c.l.b16 %v1705
    %v3668 = vunpack.c.h.b16 %v1705
    %v3669 = vunpack.c.l.b16 %v1706
    %v3670 = vunpack.c.h.b16 %v1706
    %v3671 = vunpack.c.l.b16 %v1707
    %v3672 = vunpack.c.h.b16 %v1707
    %v3673 = vunpack.c.l.b16 %v1708
    %v3674 = vunpack.c.h.b16 %v1708
    %v3675 = vunpack.c.l.b16 %v1709
    %v3676 = vunpack.c.h.b16 %v1709
    %v3677 = vunpack.c.l.b16 %v1710
    %v3678 = vunpack.c.h.b16 %v1710
    %v3679 = vunpack.c.l.b16 %v1711
    %v3680 = vunpack.c.h.b16 %v1711
    %v3681 = vunpack.c.l.b16 %v1712
    %v3682 = vunpack.c.h.b16 %v1712
    %v3683 = vunpack.c.l.b16 %v1713
    %v3684 = vunpack.c.h.b16 %v1713
    %v3685 = vunpack.c.l.b16 %v1714
    %v3686 = vunpack.c.h.b16 %v1714
    %v3687 = vunpack.c.l.b16 %v1715
    %v3688 = vunpack.c.h.b16 %v1715
    %v3689 = vunpack.c.l.b16 %v1716
    %v3690 = vunpack.c.h.b16 %v1716
    %v3691 = vunpack.c.l.b16 %v1717
    %v3692 = vunpack.c.h.b16 %v1717
    %v3693 = vunpack.c.l.b16 %v1718
    %v3694 = vunpack.c.h.b16 %v1718
    %v3695 = vunpack.c.l.b16 %v1719
    %v3696 = vunpack.c.h.b16 %v1719
    %v3697 = vunpack.c.l.b16 %v1720
    %v3698 = vunpack.c.h.b16 %v1720
    %v3699 = vunpack.c.l.b16 %v1721
    %v3700 = vunpack.c.h.b16 %v1721
    %v3701 = vunpack.c.l.b16 %v1722
    %v3702 = vunpack.c.h.b16 %v1722
    %v3703 = vunpack.c.l.b16 %v1723
    %v3704 = vunpack.c.h.b16 %v1723
    %v3705 = vunpack.c.l.b16 %v1724
    %v3706 = vunpack.c.h.b16 %v1724
    %v3707 = vunpack.c.l.b16 %v1725
    %v3708 = vunpack.c.h.b16 %v1725
    %v3709 = vunpack.c.l.b16 %v1726
    %v3710 = vunpack.c.h.b16 %v1726
    %v3711 = vunpack.c.l.b16 %v1727
    %v3712 = vunpack.c.h.b16 %v1727
    %v3713 = vunpack.c.l.b16 %v1728
    %v3714 = vunpack.c.h.b16 %v1728
    %v3715 = vunpack.c.l.b16 %v1729
    %v3716 = vunpack.c.h.b16 %v1729
    %v3717 = vunpack.c.l.b16 %v1730
    %v3718 = vunpack.c.h.b16 %v1730
    %v3719 = vunpack.c.l.b16 %v1731
    %v3720 = vunpack.c.h.b16 %v1731
    %v3721 = vunpack.c.l.b16 %v1732
    %v3722 = vunpack.c.h.b16 %v1732
    %v3723 = vunpack.c.l.b16 %v1733
    %v3724 = vunpack.c.h.b16 %v1733
    %v3725 = vunpack.c.l.b16 %v1734
    %v3726 = vunpack.c.h.b16 %v1734
    %v3727 = vunpack.c.l.b16 %v1735
    %v3728 = vunpack.c.h.b16 %v1735
    %v3729 = vunpack.c.l.b16 %v1736
    %v3730 = vunpack.c.h.b16 %v1736
    %v3731 = vunpack.c.l.b16 %v1737
    %v3732 = vunpack.c.h.b16 %v1737
    %v3733 = vunpack.c.l.b16 %v1738
    %v3734 = vunpack.c.h.b16 %v1738
    %v3735 = vunpack.c.l.b16 %v1739
    %v3736 = vunpack.c.h.b16 %v1739
    %v3737 = vunpack.c.l.b16 %v1740
    %v3738 = vunpack.c.h.b16 %v1740
    %v3739 = vunpack.c.l.b16 %v1741
    %v3740 = vunpack.c.h.b16 %v1741
    %v3741 = vunpack.c.l.b16 %v1742
    %v3742 = vunpack.c.h.b16 %v1742
    %v3743 = vunpack.c.l.b16 %v1743
    %v3744 = vunpack.c.h.b16 %v1743
    %v3745 = vunpack.c.l.b16 %v1744
    %v3746 = vunpack.c.h.b16 %v1744
    %v3747 = vunpack.c.l.b16 %v1745
    %v3748 = vunpack.c.h.b16 %v1745
    %v3749 = vunpack.c.l.b16 %v1746
    %v3750 = vunpack.c.h.b16 %v1746
    %v3751 = vunpack.c.l.b16 %v1747
    %v3752 = vunpack.c.h.b16 %v1747
    %v3753 = vunpack.c.l.b16 %v1748
    %v3754 = vunpack.c.h.b16 %v1748
    %v3755 = vunpack.c.l.b16 %v1749
    %v3756 = vunpack.c.h.b16 %v1749
    %v3757 = vunpack.c.l.b16 %v1750
    %v3758 = vunpack.c.h.b16 %v1750
    %v3759 = vunpack.c.l.b16 %v1751
    %v3760 = vunpack.c.h.b16 %v1751
    %v3761 = vunpack.c.l.b16 %v1752
    %v3762 = vunpack.c.h.b16 %v1752
    %v3763 = vunpack.c.l.b16 %v1753
    %v3764 = vunpack.c.h.b16 %v1753
    %v3765 = vunpack.c.l.b16 %v1754
    %v3766 = vunpack.c.h.b16 %v1754
    %v3767 = vunpack.c.l.b16 %v1755
    %v3768 = vunpack.c.h.b16 %v1755
    %v3769 = vunpack.c.l.b16 %v1756
    %v3770 = vunpack.c.h.b16 %v1756
    %v3771 = vunpack.c.l.b16 %v1757
    %v3772 = vunpack.c.h.b16 %v1757
    %v3773 = vunpack.c.l.b16 %v1758
    %v3774 = vunpack.c.h.b16 %v1758
    %v3775 = vunpack.c.l.b16 %v1759
    %v3776 = vunpack.c.h.b16 %v1759
    %v3777 = vunpack.c.l.b16 %v1760
    %v3778 = vunpack.c.h.b16 %v1760
    %v3779 = vunpack.c.l.b16 %v1761
    %v3780 = vunpack.c.h.b16 %v1761
    %v3781 = vunpack.c.l.b16 %v1762
    %v3782 = vunpack.c.h.b16 %v1762
    %v3783 = vunpack.c.l.b16 %v1763
    %v3784 = vunpack.c.h.b16 %v1763
    %v3785 = vunpack.c.l.b16 %v1764
    %v3786 = vunpack.c.h.b16 %v1764
    %v3787 = vunpack.c.l.b16 %v1765
    %v3788 = vunpack.c.h.b16 %v1765
    %v3789 = vunpack.c.l.b16 %v1766
    %v3790 = vunpack.c.h.b16 %v1766
    %v3791 = vunpack.c.l.b16 %v1767
    %v3792 = vunpack.c.h.b16 %v1767
    %v3793 = vunpack.c.l.b16 %v1768
    %v3794 = vunpack.c.h.b16 %v1768
    %v3795 = vunpack.c.l.b16 %v1769
    %v3796 = vunpack.c.h.b16 %v1769
    %v3797 = vunpack.c.l.b16 %v1770
    %v3798 = vunpack.c.h.b16 %v1770
    %v3799 = vunpack.c.l.b16 %v1771
    %v3800 = vunpack.c.h.b16 %v1771
    %v3801 = vunpack.c.l.b16 %v1772
    %v3802 = vunpack.c.h.b16 %v1772
    %v3803 = vunpack.c.l.b16 %v1773
    %v3804 = vunpack.c.h.b16 %v1773
    %v3805 = vunpack.c.l.b16 %v1774
    %v3806 = vunpack.c.h.b16 %v1774
    %v3807 = vunpack.c.l.b16 %v1775
    %v3808 = vunpack.c.h.b16 %v1775
    %v3809 = vunpack.c.l.b16 %v1776
    %v3810 = vunpack.c.h.b16 %v1776
    %v3811 = vunpack.c.l.b16 %v1777
    %v3812 = vunpack.c.h.b16 %v1777
    %v3813 = vunpack.c.l.b16 %v1778
    %v3814 = vunpack.c.h.b16 %v1778
    %v3815 = vunpack.c.l.b16 %v1779
    %v3816 = vunpack.c.h.b16 %v1779
    %v3817 = vunpack.c.l.b16 %v1780
    %v3818 = vunpack.c.h.b16 %v1780
    %v3819 = vunpack.c.l.b16 %v1781
    %v3820 = vunpack.c.h.b16 %v1781
    %v3821 = vunpack.c.l.b16 %v1782
    %v3822 = vunpack.c.h.b16 %v1782
    %v3823 = vunpack.c.l.b16 %v1783
    %v3824 = vunpack.c.h.b16 %v1783
    %v3825 = vunpack.c.l.b16 %v1784
    %v3826 = vunpack.c.h.b16 %v1784
    %v3827 = vunpack.c.l.b16 %v1785
    %v3828 = vunpack.c.h.b16 %v1785
    %v3829 = vunpack.c.l.b16 %v1786
    %v3830 = vunpack.c.h.b16 %v1786
    %v3831 = vunpack.c.l.b16 %v1787
    %v3832 = vunpack.c.h.b16 %v1787
    %v3833 = vunpack.c.l.b16 %v1788
    %v3834 = vunpack.c.h.b16 %v1788
    %v3835 = vunpack.c.l.b16 %v1789
    %v3836 = vunpack.c.h.b16 %v1789
    %v3837 = vunpack.c.l.b16 %v1790
    %v3838 = vunpack.c.h.b16 %v1790
    %v3839 = vunpack.c.l.b16 %v1791
    %v3840 = vunpack.c.h.b16 %v1791
    %v3841 = vunpack.c.l.b16 %v1792
    %v3842 = vunpack.c.h.b16 %v1792
    %v3843 = vunpack.c.l.b16 %v1793
    %v3844 = vunpack.c.h.b16 %v1793
    %v3845 = vunpack.c.l.b16 %v1794
    %v3846 = vunpack.c.h.b16 %v1794
    %v3847 = vunpack.c.l.b16 %v1795
    %v3848 = vunpack.c.h.b16 %v1795
    %v3849 = vunpack.c.l.b16 %v1796
    %v3850 = vunpack.c.h.b16 %v1796
    %v3851 = vunpack.c.l.b16 %v1797
    %v3852 = vunpack.c.h.b16 %v1797
    %v3853 = vunpack.c.l.b16 %v1798
    %v3854 = vunpack.c.h.b16 %v1798
    %v3855 = vunpack.c.l.b16 %v1799
    %v3856 = vunpack.c.h.b16 %v1799
    %v3857 = vunpack.c.l.b16 %v1800
    %v3858 = vunpack.c.h.b16 %v1800
    %v3859 = vunpack.c.l.b16 %v1801
    %v3860 = vunpack.c.h.b16 %v1801
    %v3861 = vunpack.c.l.b16 %v1802
    %v3862 = vunpack.c.h.b16 %v1802
    %v3863 = vunpack.c.l.b16 %v1803
    %v3864 = vunpack.c.h.b16 %v1803
    %v3865 = vunpack.c.l.b16 %v1804
    %v3866 = vunpack.c.h.b16 %v1804
    %v3867 = vunpack.c.l.b16 %v1805
    %v3868 = vunpack.c.h.b16 %v1805
    %v3869 = vunpack.c.l.b16 %v1806
    %v3870 = vunpack.c.h.b16 %v1806
    %v3871 = vunpack.c.l.b16 %v1807
    %v3872 = vunpack.c.h.b16 %v1807
    %v3873 = vunpack.c.l.b16 %v1808
    %v3874 = vunpack.c.h.b16 %v1808
    %v3875 = vunpack.c.l.b16 %v1809
    %v3876 = vunpack.c.h.b16 %v1809
    %v3877 = vunpack.c.l.b16 %v1810
    %v3878 = vunpack.c.h.b16 %v1810
    %v3879 = vunpack.c.l.b16 %v1811
    %v3880 = vunpack.c.h.b16 %v1811
    %v3881 = vunpack.c.l.b16 %v1812
    %v3882 = vunpack.c.h.b16 %v1812
    %v3883 = vunpack.c.l.b16 %v1813
    %v3884 = vunpack.c.h.b16 %v1813
    %v3885 = vunpack.c.l.b16 %v1814
    %v3886 = vunpack.c.h.b16 %v1814
    %v3887 = vunpack.c.l.b16 %v1815
    %v3888 = vunpack.c.h.b16 %v1815
    %v3889 = vunpack.c.l.b16 %v1816
    %v3890 = vunpack.c.h.b16 %v1816
    %v3891 = vunpack.c.l.b16 %v1817
    %v3892 = vunpack.c.h.b16 %v1817
    %v3893 = vunpack.c.l.b16 %v1818
    %v3894 = vunpack.c.h.b16 %v1818
    %v3895 = vunpack.c.l.b16 %v1819
    %v3896 = vunpack.c.h.b16 %v1819
    %v3897 = vunpack.c.l.b16 %v1820
    %v3898 = vunpack.c.h.b16 %v1820
    %v3899 = vunpack.c.l.b16 %v1821
    %v3900 = vunpack.c.h.b16 %v1821
    %v3901 = vunpack.c.l.b16 %v1822
    %v3902 = vunpack.c.h.b16 %v1822
    %v3903 = vunpack.c.l.b16 %v1823
    %v3904 = vunpack.c.h.b16 %v1823
    %v3905 = vunpack.c.l.b16 %v1824
    %v3906 = vunpack.c.h.b16 %v1824
    %v3907 = vunpack.c.l.b16 %v1825
    %v3908 = vunpack.c.h.b16 %v1825
    %v3909 = vunpack.c.l.b16 %v1826
    %v3910 = vunpack.c.h.b16 %v1826
    %v3911 = vunpack.c.l.b16 %v1827
    %v3912 = vunpack.c.h.b16 %v1827
    %v3913 = vunpack.c.l.b16 %v1828
    %v3914 = vunpack.c.h.b16 %v1828
    %v3915 = vunpack.c.l.b16 %v1829
    %v3916 = vunpack.c.h.b16 %v1829
    %v3917 = vunpack.c.l.b16 %v1830
    %v3918 = vunpack.c.h.b16 %v1830
    %v3919 = vunpack.c.l.b16 %v1831
    %v3920 = vunpack.c.h.b16 %v1831
    %v3921 = vunpack.c.l.b16 %v1832
    %v3922 = vunpack.c.h.b16 %v1832
    %v3923 = vunpack.c.l.b16 %v1833
    %v3924 = vunpack.c.h.b16 %v1833
    %v3925 = vunpack.c.l.b16 %v1834
    %v3926 = vunpack.c.h.b16 %v1834
    %v3927 = vunpack.c.l.b16 %v1835
    %v3928 = vunpack.c.h.b16 %v1835
    %v3929 = vunpack.c.l.b16 %v1836
    %v3930 = vunpack.c.h.b16 %v1836
    %v3931 = vunpack.c.l.b16 %v1837
    %v3932 = vunpack.c.h.b16 %v1837
    %v3933 = vunpack.c.l.b16 %v1838
    %v3934 = vunpack.c.h.b16 %v1838
    %v3935 = vunpack.c.l.b16 %v1839
    %v3936 = vunpack.c.h.b16 %v1839
    %v3937 = vunpack.c.l.b16 %v1840
    %v3938 = vunpack.c.h.b16 %v1840
    %v3939 = vunpack.c.l.b16 %v1841
    %v3940 = vunpack.c.h.b16 %v1841
    %v3941 = vunpack.c.l.b16 %v1842
    %v3942 = vunpack.c.h.b16 %v1842
    %v3943 = vunpack.c.l.b16 %v1843
    %v3944 = vunpack.c.h.b16 %v1843
    %v3945 = vunpack.c.l.b16 %v1844
    %v3946 = vunpack.c.h.b16 %v1844
    %v3947 = vunpack.c.l.b16 %v1845
    %v3948 = vunpack.c.h.b16 %v1845
    %v3949 = vunpack.c.l.b16 %v1846
    %v3950 = vunpack.c.h.b16 %v1846
    %v3951 = vunpack.c.l.b16 %v1847
    %v3952 = vunpack.c.h.b16 %v1847
    %v3953 = vunpack.c.l.b16 %v1848
    %v3954 = vunpack.c.h.b16 %v1848
    %v3955 = vunpack.c.l.b16 %v1849
    %v3956 = vunpack.c.h.b16 %v1849
    %v3957 = vunpack.c.l.b16 %v1850
    %v3958 = vunpack.c.h.b16 %v1850
    %v3959 = vunpack.c.l.b16 %v1851
    %v3960 = vunpack.c.h.b16 %v1851
    %v3961 = vunpack.c.l.b16 %v1852
    %v3962 = vunpack.c.h.b16 %v1852
    %v3963 = vunpack.c.l.b16 %v1853
    %v3964 = vunpack.c.h.b16 %v1853
    %v3965 = vunpack.c.l.b16 %v1854
    %v3966 = vunpack.c.h.b16 %v1854
    %v3967 = vunpack.c.l.b16 %v1855
    %v3968 = vunpack.c.h.b16 %v1855
    %v3969 = vunpack.c.l.b16 %v1856
    %v3970 = vunpack.c.h.b16 %v1856
    %v3971 = vunpack.c.l.b16 %v1857
    %v3972 = vunpack.c.h.b16 %v1857
    %v3973 = vunpack.c.l.b16 %v1858
    %v3974 = vunpack.c.h.b16 %v1858
    %v3975 = vunpack.c.l.b16 %v1859
    %v3976 = vunpack.c.h.b16 %v1859
    %v3977 = vunpack.c.l.b16 %v1860
    %v3978 = vunpack.c.h.b16 %v1860
    %v3979 = vunpack.c.l.b16 %v1861
    %v3980 = vunpack.c.h.b16 %v1861
    %v3981 = vunpack.c.l.b16 %v1862
    %v3982 = vunpack.c.h.b16 %v1862
    %v3983 = vunpack.c.l.b16 %v1863
    %v3984 = vunpack.c.h.b16 %v1863
    %v3985 = vunpack.c.l.b16 %v1864
    %v3986 = vunpack.c.h.b16 %v1864
    %v3987 = vunpack.c.l.b16 %v1865
    %v3988 = vunpack.c.h.b16 %v1865
    %v3989 = vunpack.c.l.b16 %v1866
    %v3990 = vunpack.c.h.b16 %v1866
    %v3991 = vunpack.c.l.b16 %v1867
    %v3992 = vunpack.c.h.b16 %v1867
    %v3993 = vunpack.c.l.b16 %v1868
    %v3994 = vunpack.c.h.b16 %v1868
    %v3995 = vunpack.c.l.b16 %v1869
    %v3996 = vunpack.c.h.b16 %v1869
    %v3997 = vunpack.c.l.b16 %v1870
    %v3998 = vunpack.c.h.b16 %v1870
    %v3999 = vunpack.c.l.b16 %v1871
    %v4000 = vunpack.c.h.b16 %v1871
    %v4001 = vunpack.c.l.b16 %v1872
    %v4002 = vunpack.c.h.b16 %v1872
    %v4003 = vunpack.c.l.b16 %v1873
    %v4004 = vunpack.c.h.b16 %v1873
    %v4005 = vunpack.c.l.b16 %v1874
    %v4006 = vunpack.c.h.b16 %v1874
    %v4007 = vunpack.c.l.b16 %v1875
    %v4008 = vunpack.c.h.b16 %v1875
    %v4009 = vunpack.c.l.b16 %v1876
    %v4010 = vunpack.c.h.b16 %v1876
    %v4011 = vunpack.c.l.b16 %v1877
    %v4012 = vunpack.c.h.b16 %v1877
    %v4013 = vunpack.c.l.b16 %v1878
    %v4014 = vunpack.c.h.b16 %v1878
    %v4015 = vunpack.c.l.b16 %v1879
    %v4016 = vunpack.c.h.b16 %v1879
    %v4017 = vunpack.c.l.b16 %v1880
    %v4018 = vunpack.c.h.b16 %v1880
    %v4019 = vunpack.c.l.b16 %v1881
    %v4020 = vunpack.c.h.b16 %v1881
    %v4021 = vunpack.c.l.b16 %v1882
    %v4022 = vunpack.c.h.b16 %v1882
    %v4023 = vunpack.c.l.b16 %v1883
    %v4024 = vunpack.c.h.b16 %v1883
    %v4025 = vunpack.c.l.b16 %v1884
    %v4026 = vunpack.c.h.b16 %v1884
    %v4027 = vunpack.c.l.b16 %v1885
    %v4028 = vunpack.c.h.b16 %v1885
    %v4029 = vunpack.c.l.b16 %v1886
    %v4030 = vunpack.c.h.b16 %v1886
    %v4031 = vunpack.c.l.b16 %v1887
    %v4032 = vunpack.c.h.b16 %v1887
    %v4033 = vunpack.c.l.b16 %v1888
    %v4034 = vunpack.c.h.b16 %v1888
    %v4035 = vunpack.c.l.b16 %v1889
    %v4036 = vunpack.c.h.b16 %v1889
    %v4037 = vunpack.c.l.b16 %v1890
    %v4038 = vunpack.c.h.b16 %v1890
    %v4039 = vunpack.c.l.b16 %v1891
    %v4040 = vunpack.c.h.b16 %v1891
    %v4041 = vunpack.c.l.b16 %v1892
    %v4042 = vunpack.c.h.b16 %v1892
    %v4043 = vunpack.c.l.b16 %v1893
    %v4044 = vunpack.c.h.b16 %v1893
    %v4045 = vunpack.c.l.b16 %v1894
    %v4046 = vunpack.c.h.b16 %v1894
    %v4047 = vunpack.c.l.b16 %v1895
    %v4048 = vunpack.c.h.b16 %v1895
    %v4049 = vunpack.c.l.b16 %v1896
    %v4050 = vunpack.c.h.b16 %v1896
    %v4051 = vunpack.c.l.b16 %v1897
    %v4052 = vunpack.c.h.b16 %v1897
    %v4053 = vunpack.c.l.b16 %v1898
    %v4054 = vunpack.c.h.b16 %v1898
    %v4055 = vunpack.c.l.b16 %v1899
    %v4056 = vunpack.c.h.b16 %v1899
    %v4057 = vunpack.c.l.b16 %v1900
    %v4058 = vunpack.c.h.b16 %v1900
    %v4059 = vunpack.c.l.b16 %v1901
    %v4060 = vunpack.c.h.b16 %v1901
    %v4061 = vunpack.c.l.b16 %v1902
    %v4062 = vunpack.c.h.b16 %v1902
    %v4063 = vunpack.c.l.b16 %v1903
    %v4064 = vunpack.c.h.b16 %v1903
    %v4065 = vunpack.c.l.b16 %v1904
    %v4066 = vunpack.c.h.b16 %v1904
    %v4067 = vunpack.c.l.b16 %v1905
    %v4068 = vunpack.c.h.b16 %v1905
    %v4069 = vunpack.c.l.b16 %v1906
    %v4070 = vunpack.c.h.b16 %v1906
    %v4071 = vunpack.c.l.b16 %v1907
    %v4072 = vunpack.c.h.b16 %v1907
    %v4073 = vunpack.c.l.b16 %v1908
    %v4074 = vunpack.c.h.b16 %v1908
    %v4075 = vunpack.c.l.b16 %v1909
    %v4076 = vunpack.c.h.b16 %v1909
    %v4077 = vpack.c.b16 %v2727, %v2637
    %v4078 = vpack.c.b16 %v2728, %v2638
    %v4079 = vpack.c.b16 %v2729, %v2639
    %v4080 = vpack.c.b16 %v2730, %v2640
    %v4081 = vpack.c.b16 %v2731, %v2641
    %v4082 = vpack.c.b16 %v2732, %v2642
    %v4083 = vpack.c.b16 %v2733, %v2643
    %v4084 = vpack.c.b16 %v2734, %v2644
    %v4085 = vpack.c.b16 %v2735, %v2645
    %v4086 = vpack.c.b16 %v2736, %v2646
    %v4087 = vpack.c.b16 %v2737, %v2647
    %v4088 = vpack.c.b16 %v2738, %v2648
    %v4089 = vpack.c.b16 %v2739, %v2649
    %v4090 = vpack.c.b16 %v2740, %v2650
    %v4091 = vpack.c.b16 %v2741, %v2651
    %v4092 = vpack.c.b16 %v2742, %v2652
    %v4093 = vpack.c.b16 %v2743, %v2653
    %v4094 = vpack.c.b16 %v2744, %v2654
    %v4095 = vpack.c.b16 %v2745, %v2655
    %v4096 = vpack.c.b16 %v2746, %v2656
    %v4097 = vpack.c.b16 %v2747, %v2657
    %v4098 = vpack.c.b16 %v2748, %v2658
    %v4099 = vpack.c.b16 %v2749, %v2659
    %v4100 = vpack.c.b16 %v2750, %v2660
    %v4101 = vpack.c.b16 %v2751, %v2661
    %v4102 = vpack.c.b16 %v2752, %v2662
    %v4103 = vpack.c.b16 %v2753, %v2663
    %v4104 = vpack.c.b16 %v2754, %v2664
    %v4105 = vpack.c.b16 %v2755, %v2665
    %v4106 = vpack.c.b16 %v2756, %v2666
    %v4107 = vpack.c.b16 %v2757, %v2667
    %v4108 = vpack.c.b16 %v2758, %v2668
    %v4109 = vpack.c.b16 %v2759, %v2669
    %v4110 = vpack.c.b16 %v2760, %v2670
    %v4111 = vpack.c.b16 %v2761, %v2671
    %v4112 = vpack.c.b16 %v2762, %v2672
    %v4113 = vpack.c.b16 %v2763, %v2673
    %v4114 = vpack.c.b16 %v2764, %v2674
    %v4115 = vpack.c.b16 %v2765, %v2675
    %v4116 = vpack.c.b16 %v2766, %v2676
    %v4117 = vpack.c.b16 %v2767, %v2677
    %v4118 = vpack.c.b16 %v2768, %v2678
    %v4119 = vpack.c.b16 %v2769, %v2679
    %v4120 = vpack.c.b16 %v2770, %v2680
    %v4121 = vpack.c.b16 %v2771, %v2681
    %v4122 = vpack.c.b16 %v2772, %v2682
    %v4123 = vpack.c.b16 %v2773, %v2683
    %v4124 = vpack.c.b16 %v2774, %v2684
    %v4125 = vpack.c.b16 %v2775, %v2685
    %v4126 = vpack.c.b16 %v2776, %v2686
    %v4127 = vpack.c.b16 %v2777, %v2687
    %v4128 = vpack.c.b16 %v2778, %v2688
    %v4129 = vpack.c.b16 %v2779, %v2689
    %v4130 = vpack.c.b16 %v2780, %v2690
    %v4131 = vpack.c.b16 %v2781, %v2691
    %v4132 = vpack.c.b16 %v2782, %v2692
    %v4133 = vpack.c.b16 %v2783, %v2693
    %v4134 = vpack.c.b16 %v2784, %v2694
    %v4135 = vpack.c.b16 %v2785, %v2695
    %v4136 = vpack.c.b16 %v2786, %v2696
    %v4137 = vpack.c.b16 %v2787, %v2697
    %v4138 = vpack.c.b16 %v2788, %v2698
    %v4139 = vpack.c.b16 %v2789, %v2699
    %v4140 = vpack.c.b16 %v2790, %v2700
    %v4141 = vpack.c.b16 %v2791, %v2701
    %v4142 = vpack.c.b16 %v2792, %v2702
    %v4143 = vpack.c.b16 %v2793, %v2703
    %v4144 = vpack.c.b16 %v2794, %v2704
    %v4145 = vpack.c.b16 %v2795, %v2705
    %v4146 = vpack.c.b16 %v2796, %v2706
    %v4147 = vpack.c.b16 %v2797, %v2707
    %v4148 = vpack.c.b16 %v2798, %v2708
    %v4149 = vpack.c.b16 %v2799, %v2709
    %v4150 = vpack.c.b16 %v2800, %v2710
    %v4151 = vpack.c.b16 %v2801, %v2711
    %v4152 = vpack.c.b16 %v2802, %v2712
    %v4153 = vpack.c.b16 %v2803, %v2713
    %v4154 = vpack.c.b16 %v2804, %v2714
    %v4155 = vpack.c.b16 %v2805, %v2715
    %v4156 = vpack.c.b16 %v2806, %v2716
    %v4157 = vpack.c.b16 %v2807, %v2717
    %v4158 = vpack.c.b16 %v2808, %v2718
    %v4159 = vpack.c.b16 %v2809, %v2719
    %v4160 = vpack.c.b16 %v2810, %v2720
    %v4161 = vpack.c.b16 %v2811, %v2721
    %v4162 = vpack.c.b16 %v2812, %v2722
    %v4163 = vpack.c.b16 %v2813, %v2723
    %v4164 = vpack.c.b16 %v2814, %v2724
    %v4165 = vpack.c.b16 %v2815, %v2725
    %v4166 = vpack.c.b16 %v2816, %v2726
    %v4167 = vpack.c.b16 %v2907, %v2817
    %v4168 = vpack.c.b16 %v2908, %v2818
    %v4169 = vpack.c.b16 %v2909, %v2819
    %v4170 = vpack.c.b16 %v2910, %v2820
    %v4171 = vpack.c.b16 %v2911, %v2821
    %v4172 = vpack.c.b16 %v2912, %v2822
    %v4173 = vpack.c.b16 %v2913, %v2823
    %v4174 = vpack.c.b16 %v2914, %v2824
    %v4175 = vpack.c.b16 %v2915, %v2825
    %v4176 = vpack.c.b16 %v2916, %v2826
    %v4177 = vpack.c.b16 %v2917, %v2827
    %v4178 = vpack.c.b16 %v2918, %v2828
    %v4179 = vpack.c.b16 %v2919, %v2829
    %v4180 = vpack.c.b16 %v2920, %v2830
    %v4181 = vpack.c.b16 %v2921, %v2831
    %v4182 = vpack.c.b16 %v2922, %v2832
    %v4183 = vpack.c.b16 %v2923, %v2833
    %v4184 = vpack.c.b16 %v2924, %v2834
    %v4185 = vpack.c.b16 %v2925, %v2835
    %v4186 = vpack.c.b16 %v2926, %v2836
    %v4187 = vpack.c.b16 %v2927, %v2837
    %v4188 = vpack.c.b16 %v2928, %v2838
    %v4189 = vpack.c.b16 %v2929, %v2839
    %v4190 = vpack.c.b16 %v2930, %v2840
    %v4191 = vpack.c.b16 %v2931, %v2841
    %v4192 = vpack.c.b16 %v2932, %v2842
    %v4193 = vpack.c.b16 %v2933, %v2843
    %v4194 = vpack.c.b16 %v2934, %v2844
    %v4195 = vpack.c.b16 %v2935, %v2845
    %v4196 = vpack.c.b16 %v2936, %v2846
    %v4197 = vpack.c.b16 %v2937, %v2847
    %v4198 = vpack.c.b16 %v2938, %v2848
    %v4199 = vpack.c.b16 %v2939, %v2849
    %v4200 = vpack.c.b16 %v2940, %v2850
    %v4201 = vpack.c.b16 %v2941, %v2851
    %v4202 = vpack.c.b16 %v2942, %v2852
    %v4203 = vpack.c.b16 %v2943, %v2853
    %v4204 = vpack.c.b16 %v2944, %v2854
    %v4205 = vpack.c.b16 %v2945, %v2855
    %v4206 = vpack.c.b16 %v2946, %v2856
    %v4207 = vpack.c.b16 %v2947, %v2857
    %v4208 = vpack.c.b16 %v2948, %v2858
    %v4209 = vpack.c.b16 %v2949, %v2859
    %v4210 = vpack.c.b16 %v2950, %v2860
    %v4211 = vpack.c.b16 %v2951, %v2861
    %v4212 = vpack.c.b16 %v2952, %v2862
    %v4213 = vpack.c.b16 %v2953, %v2863
    %v4214 = vpack.c.b16 %v2954, %v2864
    %v4215 = vpack.c.b16 %v2955, %v2865
    %v4216 = vpack.c.b16 %v2956, %v2866
    %v4217 = vpack.c.b16 %v2957, %v2867
    %v4218 = vpack.c.b16 %v2958, %v2868
    %v4219 = vpack.c.b16 %v2959, %v2869
    %v4220 = vpack.c.b16 %v2960, %v2870
    %v4221 = vpack.c.b16 %v2961, %v2871
    %v4222 = vpack.c.b16 %v2962, %v2872
    %v4223 = vpack.c.b16 %v2963, %v2873
    %v4224 = vpack.c.b16 %v2964, %v2874
    %v4225 = vpack.c.b16 %v2965, %v2875
    %v4226 = vpack.c.b16 %v2966, %v2876
    %v4227 = vpack.c.b16 %v2967, %v2877
    %v4228 = vpack.c.b16 %v2968, %v2878
    %v4229 = vpack.c.b16 %v2969, %v2879
    %v4230 = vpack.c.b16 %v2970, %v2880
    %v4231 = vpack.c.b16 %v2971, %v2881
    %v4232 = vpack.c.b16 %v2972, %v2882
    %v4233 = vpack.c.b16 %v2973, %v2883
    %v4234 = vpack.c.b16 %v2974, %v2884
    %v4235 = vpack.c.b16 %v2975, %v2885
    %v4236 = vpack.c.b16 %v2976, %v2886
    %v4237 = vpack.c.b16 %v2977, %v2887
    %v4238 = vpack.c.b16 %v2978, %v2888
    %v4239 = vpack.c.b16 %v2979, %v2889
    %v4240 = vpack.c.b16 %v2980, %v2890
    %v4241 = vpack.c.b16 %v2981, %v2891
    %v4242 = vpack.c.b16 %v2982, %v2892
    %v4243 = vpack.c.b16 %v2983, %v2893
    %v4244 = vpack.c.b16 %v2984, %v2894
    %v4245 = vpack.c.b16 %v2985, %v2895
    %v4246 = vpack.c.b16 %v2986, %v2896
    %v4247 = vpack.c.b16 %v2987, %v2897
    %v4248 = vpack.c.b16 %v2988, %v2898
    %v4249 = vpack.c.b16 %v2989, %v2899
    %v4250 = vpack.c.b16 %v2990, %v2900
    %v4251 = vpack.c.b16 %v2991, %v2901
    %v4252 = vpack.c.b16 %v2992, %v2902
    %v4253 = vpack.c.b16 %v2993, %v2903
    %v4254 = vpack.c.b16 %v2994, %v2904
    %v4255 = vpack.c.b16 %v2995, %v2905
    %v4256 = vpack.c.b16 %v2996, %v2906
    %v4257 = vpack.c.b16 %v3087, %v2997
    %v4258 = vpack.c.b16 %v3088, %v2998
    %v4259 = vpack.c.b16 %v3089, %v2999
    %v4260 = vpack.c.b16 %v3090, %v3000
    %v4261 = vpack.c.b16 %v3091, %v3001
    %v4262 = vpack.c.b16 %v3092, %v3002
    %v4263 = vpack.c.b16 %v3093, %v3003
    %v4264 = vpack.c.b16 %v3094, %v3004
    %v4265 = vpack.c.b16 %v3095, %v3005
    %v4266 = vpack.c.b16 %v3096, %v3006
    %v4267 = vpack.c.b16 %v3097, %v3007
    %v4268 = vpack.c.b16 %v3098, %v3008
    %v4269 = vpack.c.b16 %v3099, %v3009
    %v4270 = vpack.c.b16 %v3100, %v3010
    %v4271 = vpack.c.b16 %v3101, %v3011
    %v4272 = vpack.c.b16 %v3102, %v3012
    %v4273 = vpack.c.b16 %v3103, %v3013
    %v4274 = vpack.c.b16 %v3104, %v3014
    %v4275 = vpack.c.b16 %v3105, %v3015
    %v4276 = vpack.c.b16 %v3106, %v3016
    %v4277 = vpack.c.b16 %v3107, %v3017
    %v4278 = vpack.c.b16 %v3108, %v3018
    %v4279 = vpack.c.b16 %v3109, %v3019
    %v4280 = vpack.c.b16 %v3110, %v3020
    %v4281 = vpack.c.b16 %v3111, %v3021
    %v4282 = vpack.c.b16 %v3112, %v3022
    %v4283 = vpack.c.b16 %v3113, %v3023
    %v4284 = vpack.c.b16 %v3114, %v3024
    %v4285 = vpack.c.b16 %v3115, %v3025
    %v4286 = vpack.c.b16 %v3116, %v3026
    %v4287 = vpack.c.b16 %v3117, %v3027
    %v4288 = vpack.c.b16 %v3118, %v3028
    %v4289 = vpack.c.b16 %v3119, %v3029
    %v4290 = vpack.c.b16 %v3120, %v3030
    %v4291 = vpack.c.b16 %v3121, %v3031
    %v4292 = vpack.c.b16 %v3122, %v3032
    %v4293 = vpack.c.b16 %v3123, %v3033
    %v4294 = vpack.c.b16 %v3124, %v3034
    %v4295 = vpack.c.b16 %v3125, %v3035
    %v4296 = vpack.c.b16 %v3126, %v3036
    %v4297 = vpack.c.b16 %v3127, %v3037
    %v4298 = vpack.c.b16 %v3128, %v3038
    %v4299 = vpack.c.b16 %v3129, %v3039
    %v4300 = vpack.c.b16 %v3130, %v3040
    %v4301 = vpack.c.b16 %v3131, %v3041
    %v4302 = vpack.c.b16 %v3132, %v3042
    %v4303 = vpack.c.b16 %v3133, %v3043
    %v4304 = vpack.c.b16 %v3134, %v3044
    %v4305 = vpack.c.b16 %v3135, %v3045
    %v4306 = vpack.c.b16 %v3136, %v3046
    %v4307 = vpack.c.b16 %v3137, %v3047
    %v4308 = vpack.c.b16 %v3138, %v3048
    %v4309 = vpack.c.b16 %v3139, %v3049
    %v4310 = vpack.c.b16 %v3140, %v3050
    %v4311 = vpack.c.b16 %v3141, %v3051
    %v4312 = vpack.c.b16 %v3142, %v3052
    %v4313 = vpack.c.b16 %v3143, %v3053
    %v4314 = vpack.c.b16 %v3144, %v3054
    %v4315 = vpack.c.b16 %v3145, %v3055
    %v4316 = vpack.c.b16 %v3146, %v3056
    %v4317 = vpack.c.b16 %v3147, %v3057
    %v4318 = vpack.c.b16 %v3148, %v3058
    %v4319 = vpack.c.b16 %v3149, %v3059
    %v4320 = vpack.c.b16 %v3150, %v3060
    %v4321 = vpack.c.b16 %v3151, %v3061
    %v4322 = vpack.c.b16 %v3152, %v3062
    %v4323 = vpack.c.b16 %v3153, %v3063
    %v4324 = vpack.c.b16 %v3154, %v3064
    %v4325 = vpack.c.b16 %v3155, %v3065
    %v4326 = vpack.c.b16 %v3156, %v3066
    %v4327 = vpack.c.b16 %v3157, %v3067
    %v4328 = vpack.c.b16 %v3158, %v3068
    %v4329 = vpack.c.b16 %v3159, %v3069
    %v4330 = vpack.c.b16 %v3160, %v3070
    %v4331 = vpack.c.b16 %v3161, %v3071
    %v4332 = vpack.c.b16 %v3162, %v3072
    %v4333 = vpack.c.b16 %v3163, %v3073
    %v4334 = vpack.c.b16 %v3164, %v3074
    %v4335 = vpack.c.b16 %v3165, %v3075
    %v4336 = vpack.c.b16 %v3166, %v3076
    %v4337 = vpack.c.b16 %v3167, %v3077
    %v4338 = vpack.c.b16 %v3168, %v3078
    %v4339 = vpack.c.b16 %v3169, %v3079
    %v4340 = vpack.c.b16 %v3170, %v3080
    %v4341 = vpack.c.b16 %v3171, %v3081
    %v4342 = vpack.c.b16 %v3172, %v3082
    %v4343 = vpack.c.b16 %v3173, %v3083
    %v4344 = vpack.c.b16 %v3174, %v3084
    %v4345 = vpack.c.b16 %v3175, %v3085
    %v4346 = vpack.c.b16 %v3176, %v3086
    %v4347 = vpack.c.b16 %v3267, %v3177
    %v4348 = vpack.c.b16 %v3268, %v3178
    %v4349 = vpack.c.b16 %v3269, %v3179
    %v4350 = vpack.c.b16 %v3270, %v3180
    %v4351 = vpack.c.b16 %v3271, %v3181
    %v4352 = vpack.c.b16 %v3272, %v3182
    %v4353 = vpack.c.b16 %v3273, %v3183
    %v4354 = vpack.c.b16 %v3274, %v3184
    %v4355 = vpack.c.b16 %v3275, %v3185
    %v4356 = vpack.c.b16 %v3276, %v3186
    %v4357 = vpack.c.b16 %v3277, %v3187
    %v4358 = vpack.c.b16 %v3278, %v3188
    %v4359 = vpack.c.b16 %v3279, %v3189
    %v4360 = vpack.c.b16 %v3280, %v3190
    %v4361 = vpack.c.b16 %v3281, %v3191
    %v4362 = vpack.c.b16 %v3282, %v3192
    %v4363 = vpack.c.b16 %v3283, %v3193
    %v4364 = vpack.c.b16 %v3284, %v3194
    %v4365 = vpack.c.b16 %v3285, %v3195
    %v4366 = vpack.c.b16 %v3286, %v3196
    %v4367 = vpack.c.b16 %v3287, %v3197
    %v4368 = vpack.c.b16 %v3288, %v3198
    %v4369 = vpack.c.b16 %v3289, %v3199
    %v4370 = vpack.c.b16 %v3290, %v3200
    %v4371 = vpack.c.b16 %v3291, %v3201
    %v4372 = vpack.c.b16 %v3292, %v3202
    %v4373 = vpack.c.b16 %v3293, %v3203
    %v4374 = vpack.c.b16 %v3294, %v3204
    %v4375 = vpack.c.b16 %v3295, %v3205
    %v4376 = vpack.c.b16 %v3296, %v3206
    %v4377 = vpack.c.b16 %v3297, %v3207
    %v4378 = vpack.c.b16 %v3298, %v3208
    %v4379 = vpack.c.b16 %v3299, %v3209
    %v4380 = vpack.c.b16 %v3300, %v3210
    %v4381 = vpack.c.b16 %v3301, %v3211
    %v4382 = vpack.c.b16 %v3302, %v3212
    %v4383 = vpack.c.b16 %v3303, %v3213
    %v4384 = vpack.c.b16 %v3304, %v3214
    %v4385 = vpack.c.b16 %v3305, %v3215
    %v4386 = vpack.c.b16 %v3306, %v3216
    %v4387 = vpack.c.b16 %v3307, %v3217
    %v4388 = vpack.c.b16 %v3308, %v3218
    %v4389 = vpack.c.b16 %v3309, %v3219
    %v4390 = vpack.c.b16 %v3310, %v3220
    %v4391 = vpack.c.b16 %v3311, %v3221
    %v4392 = vpack.c.b16 %v3312, %v3222
    %v4393 = vpack.c.b16 %v3313, %v3223
    %v4394 = vpack.c.b16 %v3314, %v3224
    %v4395 = vpack.c.b16 %v3315, %v3225
    %v4396 = vpack.c.b16 %v3316, %v3226
    %v4397 = vpack.c.b16 %v3317, %v3227
    %v4398 = vpack.c.b16 %v3318, %v3228
    %v4399 = vpack.c.b16 %v3319, %v3229
    %v4400 = vpack.c.b16 %v3320, %v3230
    %v4401 = vpack.c.b16 %v3321, %v3231
    %v4402 = vpack.c.b16 %v3322, %v3232
    %v4403 = vpack.c.b16 %v3323, %v3233
    %v4404 = vpack.c.b16 %v3324, %v3234
    %v4405 = vpack.c.b16 %v3325, %v3235
    %v4406 = vpack.c.b16 %v3326, %v3236
    %v4407 = vpack.c.b16 %v3327, %v3237
    %v4408 = vpack.c.b16 %v3328, %v3238
    %v4409 = vpack.c.b16 %v3329, %v3239
    %v4410 = vpack.c.b16 %v3330, %v3240
    %v4411 = vpack.c.b16 %v3331, %v3241
    %v4412 = vpack.c.b16 %v3332, %v3242
    %v4413 = vpack.c.b16 %v3333, %v3243
    %v4414 = vpack.c.b16 %v3334, %v3244
    %v4415 = vpack.c.b16 %v3335, %v3245
    %v4416 = vpack.c.b16 %v3336, %v3246
    %v4417 = vpack.c.b16 %v3337, %v3247
    %v4418 = vpack.c.b16 %v3338, %v3248
    %v4419 = vpack.c.b16 %v3339, %v3249
    %v4420 = vpack.c.b16 %v3340, %v3250
    %v4421 = vpack.c.b16 %v3341, %v3251
    %v4422 = vpack.c.b16 %v3342, %v3252
    %v4423 = vpack.c.b16 %v3343, %v3253
    %v4424 = vpack.c.b16 %v3344, %v3254
    %v4425 = vpack.c.b16 %v3345, %v3255
    %v4426 = vpack.c.b16 %v3346, %v3256
    %v4427 = vpack.c.b16 %v3347, %v3257
    %v4428 = vpack.c.b16 %v3348, %v3258
    %v4429 = vpack.c.b16 %v3349, %v3259
    %v4430 = vpack.c.b16 %v3350, %v3260
    %v4431 = vpack.c.b16 %v3351, %v3261
    %v4432 = vpack.c.b16 %v3352, %v3262
    %v4433 = vpack.c.b16 %v3353, %v3263
    %v4434 = vpack.c.b16 %v3354, %v3264
    %v4435 = vpack.c.b16 %v3355, %v3265
    %v4436 = vpack.c.b16 %v3356, %v3266
    %v4437 = vpack.c.b16 %v3447, %v3357
    %v4438 = vpack.c.b16 %v3448, %v3358
    %v4439 = vpack.c.b16 %v3449, %v3359
    %v4440 = vpack.c.b16 %v3450, %v3360
    %v4441 = vpack.c.b16 %v3451, %v3361
    %v4442 = vpack.c.b16 %v3452, %v3362
    %v4443 = vpack.c.b16 %v3453, %v3363
    %v4444 = vpack.c.b16 %v3454, %v3364
    %v4445 = vpack.c.b16 %v3455, %v3365
    %v4446 = vpack.c.b16 %v3456, %v3366
    %v4447 = vpack.c.b16 %v3457, %v3367
    %v4448 = vpack.c.b16 %v3458, %v3368
    %v4449 = vpack.c.b16 %v3459, %v3369
    %v4450 = vpack.c.b16 %v3460, %v3370
    %v4451 = vpack.c.b16 %v3461, %v3371
    %v4452 = vpack.c.b16 %v3462, %v3372
    %v4453 = vpack.c.b16 %v3463, %v3373
    %v4454 = vpack.c.b16 %v3464, %v3374
    %v4455 = vpack.c.b16 %v3465, %v3375
    %v4456 = vpack.c.b16 %v3466, %v3376
    %v4457 = vpack.c.b16 %v3467, %v3377
    %v4458 = vpack.c.b16 %v3468, %v3378
    %v4459 = vpack.c.b16 %v3469, %v3379
    %v4460 = vpack.c.b16 %v3470, %v3380
    %v4461 = vpack.c.b16 %v3471, %v3381
    %v4462 = vpack.c.b16 %v3472, %v3382
    %v4463 = vpack.c.b16 %v3473, %v3383
    %v4464 = vpack.c.b16 %v3474, %v3384
    %v4465 = vpack.c.b16 %v3475, %v3385
    %v4466 = vpack.c.b16 %v3476, %v3386
    %v4467 = vpack.c.b16 %v3477, %v3387
    %v4468 = vpack.c.b16 %v3478, %v3388
    %v4469 = vpack.c.b16 %v3479, %v3389
    %v4470 = vpack.c.b16 %v3480, %v3390
    %v4471 = vpack.c.b16 %v3481, %v3391
    %v4472 = vpack.c.b16 %v3482, %v3392
    %v4473 = vpack.c.b16 %v3483, %v3393
    %v4474 = vpack.c.b16 %v3484, %v3394
    %v4475 = vpack.c.b16 %v3485, %v3395
    %v4476 = vpack.c.b16 %v3486, %v3396
    %v4477 = vpack.c.b16 %v3487, %v3397
    %v4478 = vpack.c.b16 %v3488, %v3398
    %v4479 = vpack.c.b16 %v3489, %v3399
    %v4480 = vpack.c.b16 %v3490, %v3400
    %v4481 = vpack.c.b16 %v3491, %v3401
    %v4482 = vpack.c.b16 %v3492, %v3402
    %v4483 = vpack.c.b16 %v3493, %v3403
    %v4484 = vpack.c.b16 %v3494, %v3404
    %v4485 = vpack.c.b16 %v3495, %v3405
    %v4486 = vpack.c.b16 %v3496, %v3406
    %v4487 = vpack.c.b16 %v3497, %v3407
    %v4488 = vpack.c.b16 %v3498, %v3408
    %v4489 = vpack.c.b16 %v3499, %v3409
    %v4490 = vpack.c.b16 %v3500, %v3410
    %v4491 = vpack.c.b16 %v3501, %v3411
    %v4492 = vpack.c.b16 %v3502, %v3412
    %v4493 = vpack.c.b16 %v3503, %v3413
    %v4494 = vpack.c.b16 %v3504, %v3414
    %v4495 = vpack.c.b16 %v3505, %v3415
    %v4496 = vpack.c.b16 %v3506, %v3416
    %v4497 = vpack.c.b16 %v3507, %v3417
    %v4498 = vpack.c.b16 %v3508, %v3418
    %v4499 = vpack.c.b16 %v3509, %v3419
    %v4500 = vpack.c.b16 %v3510, %v3420
    %v4501 = vpack.c.b16 %v3511, %v3421
    %v4502 = vpack.c.b16 %v3512, %v3422
    %v4503 = vpack.c.b16 %v3513, %v3423
    %v4504 = vpack.c.b16 %v3514, %v3424
    %v4505 = vpack.c.b16 %v3515, %v3425
    %v4506 = vpack.c.b16 %v3516, %v3426
    %v4507 = vpack.c.b16 %v3517, %v3427
    %v4508 = vpack.c.b16 %v3518, %v3428
    %v4509 = vpack.c.b16 %v3519, %v3429
    %v4510 = vpack.c.b16 %v3520, %v3430
    %v4511 = vpack.c.b16 %v3521, %v3431
    %v4512 = vpack.c.b16 %v3522, %v3432
    %v4513 = vpack.c.b16 %v3523, %v3433
    %v4514 = vpack.c.b16 %v3524, %v3434
    %v4515 = vpack.c.b16 %v3525, %v3435
    %v4516 = vpack.c.b16 %v3526, %v3436
    %v4517 = vpack.c.b16 %v3527, %v3437
    %v4518 = vpack.c.b16 %v3528, %v3438
    %v4519 = vpack.c.b16 %v3529, %v3439
    %v4520 = vpack.c.b16 %v3530, %v3440
    %v4521 = vpack.c.b16 %v3531, %v3441
    %v4522 = vpack.c.b16 %v3532, %v3442
    %v4523 = vpack.c.b16 %v3533, %v3443
    %v4524 = vpack.c.b16 %v3534, %v3444
    %v4525 = vpack.c.b16 %v3535, %v3445
    %v4526 = vpack.c.b16 %v3536, %v3446
    %v4527 = vpack.c.b16 %v3627, %v3537
    %v4528 = vpack.c.b16 %v3628, %v3538
    %v4529 = vpack.c.b16 %v3629, %v3539
    %v4530 = vpack.c.b16 %v3630, %v3540
    %v4531 = vpack.c.b16 %v3631, %v3541
    %v4532 = vpack.c.b16 %v3632, %v3542
    %v4533 = vpack.c.b16 %v3633, %v3543
    %v4534 = vpack.c.b16 %v3634, %v3544
    %v4535 = vpack.c.b16 %v3635, %v3545
    %v4536 = vpack.c.b16 %v3636, %v3546
    %v4537 = vpack.c.b16 %v3637, %v3547
    %v4538 = vpack.c.b16 %v3638, %v3548
    %v4539 = vpack.c.b16 %v3639, %v3549
    %v4540 = vpack.c.b16 %v3640, %v3550
    %v4541 = vpack.c.b16 %v3641, %v3551
    %v4542 = vpack.c.b16 %v3642, %v3552
    %v4543 = vpack.c.b16 %v3643, %v3553
    %v4544 = vpack.c.b16 %v3644, %v3554
    %v4545 = vpack.c.b16 %v3645, %v3555
    %v4546 = vpack.c.b16 %v3646, %v3556
    %v4547 = vpack.c.b16 %v3647, %v3557
    %v4548 = vpack.c.b16 %v3648, %v3558
    %v4549 = vpack.c.b16 %v3649, %v3559
    %v4550 = vpack.c.b16 %v3650, %v3560
    %v4551 = vpack.c.b16 %v3651, %v3561
    %v4552 = vpack.c.b16 %v3652, %v3562
    %v4553 = vpack.c.b16 %v3653, %v3563
    %v4554 = vpack.c.b16 %v3654, %v3564
    %v4555 = vpack.c.b16 %v3655, %v3565
    %v4556 = vpack.c.b16 %v3656, %v3566
    %v4557 = vpack.c.b16 %v3657, %v3567
    %v4558 = vpack.c.b16 %v3658, %v3568
    %v4559 = vpack.c.b16 %v3659, %v3569
    %v4560 = vpack.c.b16 %v3660, %v3570
    %v4561 = vpack.c.b16 %v3661, %v3571
    %v4562 = vpack.c.b16 %v3662, %v3572
    %v4563 = vpack.c.b16 %v3663, %v3573
    %v4564 = vpack.c.b16 %v3664, %v3574
    %v4565 = vpack.c.b16 %v3665, %v3575
    %v4566 = vpack.c.b16 %v3666, %v3576
    %v4567 = vpack.c.b16 %v3667, %v3577
    %v4568 = vpack.c.b16 %v3668, %v3578
    %v4569 = vpack.c.b16 %v3669, %v3579
    %v4570 = vpack.c.b16 %v3670, %v3580
    %v4571 = vpack.c.b16 %v3671, %v3581
    %v4572 = vpack.c.b16 %v3672, %v3582
    %v4573 = vpack.c.b16 %v3673, %v3583
    %v4574 = vpack.c.b16 %v3674, %v3584
    %v4575 = vpack.c.b16 %v3675, %v3585
    %v4576 = vpack.c.b16 %v3676, %v3586
    %v4577 = vpack.c.b16 %v3677, %v3587
    %v4578 = vpack.c.b16 %v3678, %v3588
    %v4579 = vpack.c.b16 %v3679, %v3589
    %v4580 = vpack.c.b16 %v3680, %v3590
    %v4581 = vpack.c.b16 %v3681, %v3591
    %v4582 = vpack.c.b16 %v3682, %v3592
    %v4583 = vpack.c.b16 %v3683, %v3593
    %v4584 = vpack.c.b16 %v3684, %v3594
    %v4585 = vpack.c.b16 %v3685, %v3595
    %v4586 = vpack.c.b16 %v3686, %v3596
    %v4587 = vpack.c.b16 %v3687, %v3597
    %v4588 = vpack.c.b16 %v3688, %v3598
    %v4589 = vpack.c.b16 %v3689, %v3599
    %v4590 = vpack.c.b16 %v3690, %v3600
    %v4591 = vpack.c.b16 %v3691, %v3601
    %v4592 = vpack.c.b16 %v3692, %v3602
    %v4593 = vpack.c.b16 %v3693, %v3603
    %v4594 = vpack.c.b16 %v3694, %v3604
    %v4595 = vpack.c.b16 %v3695, %v3605
    %v4596 = vpack.c.b16 %v3696, %v3606
    %v4597 = vpack.c.b16 %v3697, %v3607
    %v4598 = vpack.c.b16 %v3698, %v3608
    %v4599 = vpack.c.b16 %v3699, %v3609
    %v4600 = vpack.c.b16 %v3700, %v3610
    %v4601 = vpack.c.b16 %v3701, %v3611
    %v4602 = vpack.c.b16 %v3702, %v3612
    %v4603 = vpack.c.b16 %v3703, %v3613
    %v4604 = vpack.c.b16 %v3704, %v3614
    %v4605 = vpack.c.b16 %v3705, %v3615
    %v4606 = vpack.c.b16 %v3706, %v3616
    %v4607 = vpack.c.b16 %v3707, %v3617
    %v4608 = vpack.c.b16 %v3708, %v3618
    %v4609 = vpack.c.b16 %v3709, %v3619
    %v4610 = vpack.c.b16 %v3710, %v3620
    %v4611 = vpack.c.b16 %v3711, %v3621
    %v4612 = vpack.c.b16 %v3712, %v3622
    %v4613 = vpack.c.b16 %v3713, %v3623
    %v4614 = vpack.c.b16 %v3714, %v3624
    %v4615 = vpack.c.b16 %v3715, %v3625
    %v4616 = vpack.c.b16 %v3716, %v3626
    %v4617 = vpack.c.b16 %v3807, %v3717
    %v4618 = vpack.c.b16 %v3808, %v3718
    %v4619 = vpack.c.b16 %v3809, %v3719
    %v4620 = vpack.c.b16 %v3810, %v3720
    %v4621 = vpack.c.b16 %v3811, %v3721
    %v4622 = vpack.c.b16 %v3812, %v3722
    %v4623 = vpack.c.b16 %v3813, %v3723
    %v4624 = vpack.c.b16 %v3814, %v3724
    %v4625 = vpack.c.b16 %v3815, %v3725
    %v4626 = vpack.c.b16 %v3816, %v3726
    %v4627 = vpack.c.b16 %v3817, %v3727
    %v4628 = vpack.c.b16 %v3818, %v3728
    %v4629 = vpack.c.b16 %v3819, %v3729
    %v4630 = vpack.c.b16 %v3820, %v3730
    %v4631 = vpack.c.b16 %v3821, %v3731
    %v4632 = vpack.c.b16 %v3822, %v3732
    %v4633 = vpack.c.b16 %v3823, %v3733
    %v4634 = vpack.c.b16 %v3824, %v3734
    %v4635 = vpack.c.b16 %v3825, %v3735
    %v4636 = vpack.c.b16 %v3826, %v3736
    %v4637 = vpack.c.b16 %v3827, %v3737
    %v4638 = vpack.c.b16 %v3828, %v3738
    %v4639 = vpack.c.b16 %v3829, %v3739
    %v4640 = vpack.c.b16 %v3830, %v3740
    %v4641 = vpack.c.b16 %v3831, %v3741
    %v4642 = vpack.c.b16 %v3832, %v3742
    %v4643 = vpack.c.b16 %v3833, %v3743
    %v4644 = vpack.c.b16 %v3834, %v3744
    %v4645 = vpack.c.b16 %v3835, %v3745
    %v4646 = vpack.c.b16 %v3836, %v3746
    %v4647 = vpack.c.b16 %v3837, %v3747
    %v4648 = vpack.c.b16 %v3838, %v3748
    %v4649 = vpack.c.b16 %v3839, %v3749
    %v4650 = vpack.c.b16 %v3840, %v3750
    %v4651 = vpack.c.b16 %v3841, %v3751
    %v4652 = vpack.c.b16 %v3842, %v3752
    %v4653 = vpack.c.b16 %v3843, %v3753
    %v4654 = vpack.c.b16 %v3844, %v3754
    %v4655 = vpack.c.b16 %v3845, %v3755
    %v4656 = vpack.c.b16 %v3846, %v3756
    %v4657 = vpack.c.b16 %v3847, %v3757
    %v4658 = vpack.c.b16 %v3848, %v3758
    %v4659 = vpack.c.b16 %v3849, %v3759
    %v4660 = vpack.c.b16 %v3850, %v3760
    %v4661 = vpack.c.b16 %v3851, %v3761
    %v4662 = vpack.c.b16 %v3852, %v3762
    %v4663 = vpack.c.b16 %v3853, %v3763
    %v4664 = vpack.c.b16 %v3854, %v3764
    %v4665 = vpack.c.b16 %v3855, %v3765
    %v4666 = vpack.c.b16 %v3856, %v3766
    %v4667 = vpack.c.b16 %v3857, %v3767
    %v4668 = vpack.c.b16 %v3858, %v3768
    %v4669 = vpack.c.b16 %v3859, %v3769
    %v4670 = vpack.c.b16 %v3860, %v3770
    %v4671 = vpack.c.b16 %v3861, %v3771
    %v4672 = vpack.c.b16 %v3862, %v3772
    %v4673 = vpack.c.b16 %v3863, %v3773
    %v4674 = vpack.c.b16 %v3864, %v3774
    %v4675 = vpack.c.b16 %v3865, %v3775
    %v4676 = vpack.c.b16 %v3866, %v3776
    %v4677 = vpack.c.b16 %v3867, %v3777
    %v4678 = vpack.c.b16 %v3868, %v3778
    %v4679 = vpack.c.b16 %v3869, %v3779
    %v4680 = vpack.c.b16 %v3870, %v3780
    %v4681 = vpack.c.b16 %v3871, %v3781
    %v4682 = vpack.c.b16 %v3872, %v3782
    %v4683 = vpack.c.b16 %v3873, %v3783
    %v4684 = vpack.c.b16 %v3874, %v3784
    %v4685 = vpack.c.b16 %v3875, %v3785
    %v4686 = vpack.c.b16 %v3876, %v3786
    %v4687 = vpack.c.b16 %v3877, %v3787
    %v4688 = vpack.c.b16 %v3878, %v3788
    %v4689 = vpack.c.b16 %v3879, %v3789
    %v4690 = vpack.c.b16 %v3880, %v3790
    %v4691 = vpack.c.b16 %v3881, %v3791
    %v4692 = vpack.c.b16 %v3882, %v3792
    %v4693 = vpack.c.b16 %v3883, %v3793
    %v4694 = vpack.c.b16 %v3884, %v3794
    %v4695 = vpack.c.b16 %v3885, %v3795
    %v4696 = vpack.c.b16 %v3886, %v3796
    %v4697 = vpack.c.b16 %v3887, %v3797
    %v4698 = vpack.c.b16 %v3888, %v3798
    %v4699 = vpack.c.b16 %v3889, %v3799
    %v4700 = vpack.c.b16 %v3890, %v3800
    %v4701 = vpack.c.b16 %v3891, %v3801
    %v4702 = vpack.c.b16 %v3892, %v3802
    %v4703 = vpack.c.b16 %v3893, %v3803
    %v4704 = vpack.c.b16 %v3894, %v3804
    %v4705 = vpack.c.b16 %v3895, %v3805
    %v4706 = vpack.c.b16 %v3896, %v3806
    %v4707 = vpack.c.b16 %v3987, %v3897
    %v4708 = vpack.c.b16 %v3988, %v3898
    %v4709 = vpack.c.b16 %v3989, %v3899
    %v4710 = vpack.c.b16 %v3990, %v3900
    %v4711 = vpack.c.b16 %v3991, %v3901
    %v4712 = vpack.c.b16 %v3992, %v3902
    %v4713 = vpack.c.b16 %v3993, %v3903
    %v4714 = vpack.c.b16 %v3994, %v3904
    %v4715 = vpack.c.b16 %v3995, %v3905
    %v4716 = vpack.c.b16 %v3996, %v3906
    %v4717 = vpack.c.b16 %v3997, %v3907
    %v4718 = vpack.c.b16 %v3998, %v3908
    %v4719 = vpack.c.b16 %v3999, %v3909
    %v4720 = vpack.c.b16 %v4000, %v3910
    %v4721 = vpack.c.b16 %v4001, %v3911
    %v4722 = vpack.c.b16 %v4002, %v3912
    %v4723 = vpack.c.b16 %v4003, %v3913
    %v4724 = vpack.c.b16 %v4004, %v3914
    %v4725 = vpack.c.b16 %v4005, %v3915
    %v4726 = vpack.c.b16 %v4006, %v3916
    %v4727 = vpack.c.b16 %v4007, %v3917
    %v4728 = vpack.c.b16 %v4008, %v3918
    %v4729 = vpack.c.b16 %v4009, %v3919
    %v4730 = vpack.c.b16 %v4010, %v3920
    %v4731 = vpack.c.b16 %v4011, %v3921
    %v4732 = vpack.c.b16 %v4012, %v3922
    %v4733 = vpack.c.b16 %v4013, %v3923
    %v4734 = vpack.c.b16 %v4014, %v3924
    %v4735 = vpack.c.b16 %v4015, %v3925
    %v4736 = vpack.c.b16 %v4016, %v3926
    %v4737 = vpack.c.b16 %v4017, %v3927
    %v4738 = vpack.c.b16 %v4018, %v3928
    %v4739 = vpack.c.b16 %v4019, %v3929
    %v4740 = vpack.c.b16 %v4020, %v3930
    %v4741 = vpack.c.b16 %v4021, %v3931
    %v4742 = vpack.c.b16 %v4022, %v3932
    %v4743 = vpack.c.b16 %v4023, %v3933
    %v4744 = vpack.c.b16 %v4024, %v3934
    %v4745 = vpack.c.b16 %v4025, %v3935
    %v4746 = vpack.c.b16 %v4026, %v3936
    %v4747 = vpack.c.b16 %v4027, %v3937
    %v4748 = vpack.c.b16 %v4028, %v3938
    %v4749 = vpack.c.b16 %v4029, %v3939
    %v4750 = vpack.c.b16 %v4030, %v3940
    %v4751 = vpack.c.b16 %v4031, %v3941
    %v4752 = vpack.c.b16 %v4032, %v3942
    %v4753 = vpack.c.b16 %v4033, %v3943
    %v4754 = vpack.c.b16 %v4034, %v3944
    %v4755 = vpack.c.b16 %v4035, %v3945
    %v4756 = vpack.c.b16 %v4036, %v3946
    %v4757 = vpack.c.b16 %v4037, %v3947
    %v4758 = vpack.c.b16 %v4038, %v3948
    %v4759 = vpack.c.b16 %v4039, %v3949
    %v4760 = vpack.c.b16 %v4040, %v3950
    %v4761 = vpack.c.b16 %v4041, %v3951
    %v4762 = vpack.c.b16 %v4042, %v3952
    %v4763 = vpack.c.b16 %v4043, %v3953
    %v4764 = vpack.c.b16 %v4044, %v3954
    %v4765 = vpack.c.b16 %v4045, %v3955
    %v4766 = vpack.c.b16 %v4046, %v3956
    %v4767 = vpack.c.b16 %v4047, %v3957
    %v4768 = vpack.c.b16 %v4048, %v3958
    %v4769 = vpack.c.b16 %v4049, %v3959
    %v4770 = vpack.c.b16 %v4050, %v3960
    %v4771 = vpack.c.b16 %v4051, %v3961
    %v4772 = vpack.c.b16 %v4052, %v3962
    %v4773 = vpack.c.b16 %v4053, %v3963
    %v4774 = vpack.c.b16 %v4054, %v3964
    %v4775 = vpack.c.b16 %v4055, %v3965
    %v4776 = vpack.c.b16 %v4056, %v3966
    %v4777 = vpack.c.b16 %v4057, %v3967
    %v4778 = vpack.c.b16 %v4058, %v3968
    %v4779 = vpack.c.b16 %v4059, %v3969
    %v4780 = vpack.c.b16 %v4060, %v3970
    %v4781 = vpack.c.b16 %v4061, %v3971
    %v4782 = vpack.c.b16 %v4062, %v3972
    %v4783 = vpack.c.b16 %v4063, %v3973
    %v4784 = vpack.c.b16 %v4064, %v3974
    %v4785 = vpack.c.b16 %v4065, %v3975
    %v4786 = vpack.c.b16 %v4066, %v3976
    %v4787 = vpack.c.b16 %v4067, %v3977
    %v4788 = vpack.c.b16 %v4068, %v3978
    %v4789 = vpack.c.b16 %v4069, %v3979
    %v4790 = vpack.c.b16 %v4070, %v3980
    %v4791 = vpack.c.b16 %v4071, %v3981
    %v4792 = vpack.c.b16 %v4072, %v3982
    %v4793 = vpack.c.b16 %v4073, %v3983
    %v4794 = vpack.c.b16 %v4074, %v3984
    %v4795 = vpack.c.b16 %v4075, %v3985
    %v4796 = vpack.c.b16 %v4076, %v3986
    %5517 = vmatprep.subr.bf16.mxu0 %v4078
    %5518 = vmatpush1.bf16.xpose.msra.mxu0 %v4077
    %5519 = vmatprep.subr.bf16.mxu0 %v4168
    %5520 = vmatpush1.bf16.xpose.msra.mxu0 %v4167
    %5521 = vmatprep.subr.bf16.mxu0 %v4258
    %5522 = vmatpush1.bf16.xpose.msra.mxu0 %v4257
    %5523 = vmatprep.subr.bf16.mxu0 %v4348
    %5524 = vmatpush1.bf16.xpose.msra.mxu0 %v4347
    %5525 = vmatprep.subr.bf16.mxu0 %v4438
    %5526 = vmatpush1.bf16.xpose.msra.mxu0 %v4437
    %5527 = vmatprep.subr.bf16.mxu0 %v4528
    %5528 = vmatpush1.bf16.xpose.msra.mxu0 %v4527
    %5529 = vmatprep.subr.bf16.mxu0 %v4618
    %5530 = vmatpush1.bf16.xpose.msra.mxu0 %v4617
    %5531 = vmatprep.subr.bf16.mxu0 %v4708
    %5532 = vmatpush1.bf16.xpose.msra.mxu0 %v4707
    %5533 = vmatprep.subr.bf16.mxu0 0
    %5534 = vmatpush1.bf16.xpose.msra.mxu0 0
    %5535 = vmatprep.subr.bf16.mxu0 0
    %5536 = vmatpush1.bf16.xpose.msra.mxu0 0
    %5537 = vmatprep.subr.bf16.mxu0 0
    %5538 = vmatpush1.bf16.xpose.msra.mxu0 0
    %5539 = vmatprep.subr.bf16.mxu0 0
    %5540 = vmatpush1.bf16.xpose.msra.mxu0 0
    %5541 = vmatprep.subr.bf16.mxu0 0
    %5542 = vmatpush1.bf16.xpose.msra.mxu0 0
    %5543 = vmatprep.subr.bf16.mxu0 0
    %5544 = vmatpush1.bf16.xpose.msra.mxu0 0
    %5545 = vmatprep.subr.bf16.mxu0 0
    %5546 = vmatpush1.bf16.xpose.msra.mxu0 0
    %5547 = vmatprep.subr.bf16.mxu0 0
    %5548 = vmatpush1.bf16.xpose.msra.mxu0 0
    %5549 = vmatprep.mubr.bf16.mxu0 %v1101
    %5550 = vmatmul.mubr.bf16.gmra.mrb[0].mxu0 %v1100
    %v5551 = vpop.f32.mrb[0].mxu0
    %v5552 = vadd.f32 %v1915, %v5551
    %v5553 = vpop.f32.mrb[0].mxu0
    %v5554 = vpop.f32.mrb[0].mxu0
    %v5555 = vpop.f32.mrb[0].mxu0
    %5556 = vdwg.mxu0
    %5557 = vmatprep.subr.bf16.mxu0 %v4080
    %5558 = vmatpush1.bf16.xpose.msra.mxu0 %v4079
    %5559 = vmatprep.subr.bf16.mxu0 %v4170
    %5560 = vmatpush1.bf16.xpose.msra.mxu0 %v4169
    %5561 = vmatprep.subr.bf16.mxu0 %v4260
    %5562 = vmatpush1.bf16.xpose.msra.mxu0 %v4259
    %5563 = vmatprep.subr.bf16.mxu0 %v4350
    %5564 = vmatpush1.bf16.xpose.msra.mxu0 %v4349
    %5565 = vmatprep.subr.bf16.mxu0 %v4440
    %5566 = vmatpush1.bf16.xpose.msra.mxu0 %v4439
    %5567 = vmatprep.subr.bf16.mxu0 %v4530
    %5568 = vmatpush1.bf16.xpose.msra.mxu0 %v4529
    %5569 = vmatprep.subr.bf16.mxu0 %v4620
    %5570 = vmatpush1.bf16.xpose.msra.mxu0 %v4619
    %5571 = vmatprep.subr.bf16.mxu0 %v4710
    %5572 = vmatpush1.bf16.xpose.msra.mxu0 %v4709
    %5573 = vmatprep.subr.bf16.mxu0 0
    %5574 = vmatpush1.bf16.xpose.msra.mxu0 0
    %5575 = vmatprep.subr.bf16.mxu0 0
    %5576 = vmatpush1.bf16.xpose.msra.mxu0 0
    %5577 = vmatprep.subr.bf16.mxu0 0
    %5578 = vmatpush1.bf16.xpose.msra.mxu0 0
    %5579 = vmatprep.subr.bf16.mxu0 0
    %5580 = vmatpush1.bf16.xpose.msra.mxu0 0
    %5581 = vmatprep.subr.bf16.mxu0 0
    %5582 = vmatpush1.bf16.xpose.msra.mxu0 0
    %5583 = vmatprep.subr.bf16.mxu0 0
    %5584 = vmatpush1.bf16.xpose.msra.mxu0 0
    %5585 = vmatprep.subr.bf16.mxu0 0
    %5586 = vmatpush1.bf16.xpose.msra.mxu0 0
    %5587 = vmatprep.subr.bf16.mxu0 0
    %5588 = vmatpush1.bf16.xpose.msra.mxu0 0
    %5589 = vmatprep.mubr.bf16.mxu0 %v1103
    %5590 = vmatmul.mubr.bf16.gmra.mrb[0].mxu0 %v1102
    %v5591 = vpop.f32.mrb[0].mxu0
    %v5592 = vadd.f32 %v5552, %v5591
    %v5593 = vpop.f32.mrb[0].mxu0
    %v5594 = vpop.f32.mrb[0].mxu0
    %v5595 = vpop.f32.mrb[0].mxu0
    %5596 = vdwg.mxu0
    %5597 = vmatprep.subr.bf16.mxu0 %v4082
    %5598 = vmatpush1.bf16.xpose.msra.mxu0 %v4081
    %5599 = vmatprep.subr.bf16.mxu0 %v4172
    %5600 = vmatpush1.bf16.xpose.msra.mxu0 %v4171
    %5601 = vmatprep.subr.bf16.mxu0 %v4262
    %5602 = vmatpush1.bf16.xpose.msra.mxu0 %v4261
    %5603 = vmatprep.subr.bf16.mxu0 %v4352
    %5604 = vmatpush1.bf16.xpose.msra.mxu0 %v4351
    %5605 = vmatprep.subr.bf16.mxu0 %v4442
    %5606 = vmatpush1.bf16.xpose.msra.mxu0 %v4441
    %5607 = vmatprep.subr.bf16.mxu0 %v4532
    %5608 = vmatpush1.bf16.xpose.msra.mxu0 %v4531
    %5609 = vmatprep.subr.bf16.mxu0 %v4622
    %5610 = vmatpush1.bf16.xpose.msra.mxu0 %v4621
    %5611 = vmatprep.subr.bf16.mxu0 %v4712
    %5612 = vmatpush1.bf16.xpose.msra.mxu0 %v4711
    %5613 = vmatprep.subr.bf16.mxu0 0
    %5614 = vmatpush1.bf16.xpose.msra.mxu0 0
    %5615 = vmatprep.subr.bf16.mxu0 0
    %5616 = vmatpush1.bf16.xpose.msra.mxu0 0
    %5617 = vmatprep.subr.bf16.mxu0 0
    %5618 = vmatpush1.bf16.xpose.msra.mxu0 0
    %5619 = vmatprep.subr.bf16.mxu0 0
    %5620 = vmatpush1.bf16.xpose.msra.mxu0 0
    %5621 = vmatprep.subr.bf16.mxu0 0
    %5622 = vmatpush1.bf16.xpose.msra.mxu0 0
    %5623 = vmatprep.subr.bf16.mxu0 0
    %5624 = vmatpush1.bf16.xpose.msra.mxu0 0
    %5625 = vmatprep.subr.bf16.mxu0 0
    %5626 = vmatpush1.bf16.xpose.msra.mxu0 0
    %5627 = vmatprep.subr.bf16.mxu0 0
    %5628 = vmatpush1.bf16.xpose.msra.mxu0 0
    %5629 = vmatprep.mubr.bf16.mxu0 %v1105
    %5630 = vmatmul.mubr.bf16.gmra.mrb[0].mxu0 %v1104
    %v5631 = vpop.f32.mrb[0].mxu0
    %v5632 = vadd.f32 %v5592, %v5631
    %v5633 = vpop.f32.mrb[0].mxu0
    %v5634 = vpop.f32.mrb[0].mxu0
    %v5635 = vpop.f32.mrb[0].mxu0
    %5636 = vdwg.mxu0
    %5637 = vmatprep.subr.bf16.mxu0 %v4084
    %5638 = vmatpush1.bf16.xpose.msra.mxu0 %v4083
    %5639 = vmatprep.subr.bf16.mxu0 %v4174
    %5640 = vmatpush1.bf16.xpose.msra.mxu0 %v4173
    %5641 = vmatprep.subr.bf16.mxu0 %v4264
    %5642 = vmatpush1.bf16.xpose.msra.mxu0 %v4263
    %5643 = vmatprep.subr.bf16.mxu0 %v4354
    %5644 = vmatpush1.bf16.xpose.msra.mxu0 %v4353
    %5645 = vmatprep.subr.bf16.mxu0 %v4444
    %5646 = vmatpush1.bf16.xpose.msra.mxu0 %v4443
    %5647 = vmatprep.subr.bf16.mxu0 %v4534
    %5648 = vmatpush1.bf16.xpose.msra.mxu0 %v4533
    %5649 = vmatprep.subr.bf16.mxu0 %v4624
    %5650 = vmatpush1.bf16.xpose.msra.mxu0 %v4623
    %5651 = vmatprep.subr.bf16.mxu0 %v4714
    %5652 = vmatpush1.bf16.xpose.msra.mxu0 %v4713
    %5653 = vmatprep.subr.bf16.mxu0 0
    %5654 = vmatpush1.bf16.xpose.msra.mxu0 0
    %5655 = vmatprep.subr.bf16.mxu0 0
    %5656 = vmatpush1.bf16.xpose.msra.mxu0 0
    %5657 = vmatprep.subr.bf16.mxu0 0
    %5658 = vmatpush1.bf16.xpose.msra.mxu0 0
    %5659 = vmatprep.subr.bf16.mxu0 0
    %5660 = vmatpush1.bf16.xpose.msra.mxu0 0
    %5661 = vmatprep.subr.bf16.mxu0 0
    %5662 = vmatpush1.bf16.xpose.msra.mxu0 0
    %5663 = vmatprep.subr.bf16.mxu0 0
    %5664 = vmatpush1.bf16.xpose.msra.mxu0 0
    %5665 = vmatprep.subr.bf16.mxu0 0
    %5666 = vmatpush1.bf16.xpose.msra.mxu0 0
    %5667 = vmatprep.subr.bf16.mxu0 0
    %5668 = vmatpush1.bf16.xpose.msra.mxu0 0
    %5669 = vmatprep.mubr.bf16.mxu0 %v1107
    %5670 = vmatmul.mubr.bf16.gmra.mrb[0].mxu0 %v1106
    %v5671 = vpop.f32.mrb[0].mxu0
    %v5672 = vadd.f32 %v5632, %v5671
    %v5673 = vpop.f32.mrb[0].mxu0
    %v5674 = vpop.f32.mrb[0].mxu0
    %v5675 = vpop.f32.mrb[0].mxu0
    %5676 = vdwg.mxu0
    %5677 = vmatprep.subr.bf16.mxu0 %v4086
    %5678 = vmatpush1.bf16.xpose.msra.mxu0 %v4085
    %5679 = vmatprep.subr.bf16.mxu0 %v4176
    %5680 = vmatpush1.bf16.xpose.msra.mxu0 %v4175
    %5681 = vmatprep.subr.bf16.mxu0 %v4266
    %5682 = vmatpush1.bf16.xpose.msra.mxu0 %v4265
    %5683 = vmatprep.subr.bf16.mxu0 %v4356
    %5684 = vmatpush1.bf16.xpose.msra.mxu0 %v4355
    %5685 = vmatprep.subr.bf16.mxu0 %v4446
    %5686 = vmatpush1.bf16.xpose.msra.mxu0 %v4445
    %5687 = vmatprep.subr.bf16.mxu0 %v4536
    %5688 = vmatpush1.bf16.xpose.msra.mxu0 %v4535
    %5689 = vmatprep.subr.bf16.mxu0 %v4626
    %5690 = vmatpush1.bf16.xpose.msra.mxu0 %v4625
    %5691 = vmatprep.subr.bf16.mxu0 %v4716
    %5692 = vmatpush1.bf16.xpose.msra.mxu0 %v4715
    %5693 = vmatprep.subr.bf16.mxu0 0
    %5694 = vmatpush1.bf16.xpose.msra.mxu0 0
    %5695 = vmatprep.subr.bf16.mxu0 0
    %5696 = vmatpush1.bf16.xpose.msra.mxu0 0
    %5697 = vmatprep.subr.bf16.mxu0 0
    %5698 = vmatpush1.bf16.xpose.msra.mxu0 0
    %5699 = vmatprep.subr.bf16.mxu0 0
    %5700 = vmatpush1.bf16.xpose.msra.mxu0 0
    %5701 = vmatprep.subr.bf16.mxu0 0
    %5702 = vmatpush1.bf16.xpose.msra.mxu0 0
    %5703 = vmatprep.subr.bf16.mxu0 0
    %5704 = vmatpush1.bf16.xpose.msra.mxu0 0
    %5705 = vmatprep.subr.bf16.mxu0 0
    %5706 = vmatpush1.bf16.xpose.msra.mxu0 0
    %5707 = vmatprep.subr.bf16.mxu0 0
    %5708 = vmatpush1.bf16.xpose.msra.mxu0 0
    %5709 = vmatprep.mubr.bf16.mxu0 %v1109
    %5710 = vmatmul.mubr.bf16.gmra.mrb[0].mxu0 %v1108
    %v5711 = vpop.f32.mrb[0].mxu0
    %v5712 = vadd.f32 %v5672, %v5711
    %v5713 = vpop.f32.mrb[0].mxu0
    %v5714 = vpop.f32.mrb[0].mxu0
    %v5715 = vpop.f32.mrb[0].mxu0
    %5716 = vdwg.mxu0
    %5717 = vmatprep.subr.bf16.mxu0 %v4088
    %5718 = vmatpush1.bf16.xpose.msra.mxu0 %v4087
    %5719 = vmatprep.subr.bf16.mxu0 %v4178
    %5720 = vmatpush1.bf16.xpose.msra.mxu0 %v4177
    %5721 = vmatprep.subr.bf16.mxu0 %v4268
    %5722 = vmatpush1.bf16.xpose.msra.mxu0 %v4267
    %5723 = vmatprep.subr.bf16.mxu0 %v4358
    %5724 = vmatpush1.bf16.xpose.msra.mxu0 %v4357
    %5725 = vmatprep.subr.bf16.mxu0 %v4448
    %5726 = vmatpush1.bf16.xpose.msra.mxu0 %v4447
    %5727 = vmatprep.subr.bf16.mxu0 %v4538
    %5728 = vmatpush1.bf16.xpose.msra.mxu0 %v4537
    %5729 = vmatprep.subr.bf16.mxu0 %v4628
    %5730 = vmatpush1.bf16.xpose.msra.mxu0 %v4627
    %5731 = vmatprep.subr.bf16.mxu0 %v4718
    %5732 = vmatpush1.bf16.xpose.msra.mxu0 %v4717
    %5733 = vmatprep.subr.bf16.mxu0 0
    %5734 = vmatpush1.bf16.xpose.msra.mxu0 0
    %5735 = vmatprep.subr.bf16.mxu0 0
    %5736 = vmatpush1.bf16.xpose.msra.mxu0 0
    %5737 = vmatprep.subr.bf16.mxu0 0
    %5738 = vmatpush1.bf16.xpose.msra.mxu0 0
    %5739 = vmatprep.subr.bf16.mxu0 0
    %5740 = vmatpush1.bf16.xpose.msra.mxu0 0
    %5741 = vmatprep.subr.bf16.mxu0 0
    %5742 = vmatpush1.bf16.xpose.msra.mxu0 0
    %5743 = vmatprep.subr.bf16.mxu0 0
    %5744 = vmatpush1.bf16.xpose.msra.mxu0 0
    %5745 = vmatprep.subr.bf16.mxu0 0
    %5746 = vmatpush1.bf16.xpose.msra.mxu0 0
    %5747 = vmatprep.subr.bf16.mxu0 0
    %5748 = vmatpush1.bf16.xpose.msra.mxu0 0
    %5749 = vmatprep.mubr.bf16.mxu0 %v1111
    %5750 = vmatmul.mubr.bf16.gmra.mrb[0].mxu0 %v1110
    %v5751 = vpop.f32.mrb[0].mxu0
    %v5752 = vadd.f32 %v5712, %v5751
    %v5753 = vpop.f32.mrb[0].mxu0
    %v5754 = vpop.f32.mrb[0].mxu0
    %v5755 = vpop.f32.mrb[0].mxu0
    %5756 = vdwg.mxu0
    %5757 = vmatprep.subr.bf16.mxu0 %v4090
    %5758 = vmatpush1.bf16.xpose.msra.mxu0 %v4089
    %5759 = vmatprep.subr.bf16.mxu0 %v4180
    %5760 = vmatpush1.bf16.xpose.msra.mxu0 %v4179
    %5761 = vmatprep.subr.bf16.mxu0 %v4270
    %5762 = vmatpush1.bf16.xpose.msra.mxu0 %v4269
    %5763 = vmatprep.subr.bf16.mxu0 %v4360
    %5764 = vmatpush1.bf16.xpose.msra.mxu0 %v4359
    %5765 = vmatprep.subr.bf16.mxu0 %v4450
    %5766 = vmatpush1.bf16.xpose.msra.mxu0 %v4449
    %5767 = vmatprep.subr.bf16.mxu0 %v4540
    %5768 = vmatpush1.bf16.xpose.msra.mxu0 %v4539
    %5769 = vmatprep.subr.bf16.mxu0 %v4630
    %5770 = vmatpush1.bf16.xpose.msra.mxu0 %v4629
    %5771 = vmatprep.subr.bf16.mxu0 %v4720
    %5772 = vmatpush1.bf16.xpose.msra.mxu0 %v4719
    %5773 = vmatprep.subr.bf16.mxu0 0
    %5774 = vmatpush1.bf16.xpose.msra.mxu0 0
    %5775 = vmatprep.subr.bf16.mxu0 0
    %5776 = vmatpush1.bf16.xpose.msra.mxu0 0
    %5777 = vmatprep.subr.bf16.mxu0 0
    %5778 = vmatpush1.bf16.xpose.msra.mxu0 0
    %5779 = vmatprep.subr.bf16.mxu0 0
    %5780 = vmatpush1.bf16.xpose.msra.mxu0 0
    %5781 = vmatprep.subr.bf16.mxu0 0
    %5782 = vmatpush1.bf16.xpose.msra.mxu0 0
    %5783 = vmatprep.subr.bf16.mxu0 0
    %5784 = vmatpush1.bf16.xpose.msra.mxu0 0
    %5785 = vmatprep.subr.bf16.mxu0 0
    %5786 = vmatpush1.bf16.xpose.msra.mxu0 0
    %5787 = vmatprep.subr.bf16.mxu0 0
    %5788 = vmatpush1.bf16.xpose.msra.mxu0 0
    %5789 = vmatprep.mubr.bf16.mxu0 %v1113
    %5790 = vmatmul.mubr.bf16.gmra.mrb[0].mxu0 %v1112
    %v5791 = vpop.f32.mrb[0].mxu0
    %v5792 = vadd.f32 %v5752, %v5791
    %v5793 = vpop.f32.mrb[0].mxu0
    %v5794 = vpop.f32.mrb[0].mxu0
    %v5795 = vpop.f32.mrb[0].mxu0
    %5796 = vdwg.mxu0
    %5797 = vmatprep.subr.bf16.mxu0 %v4092
    %5798 = vmatpush1.bf16.xpose.msra.mxu0 %v4091
    %5799 = vmatprep.subr.bf16.mxu0 %v4182
    %5800 = vmatpush1.bf16.xpose.msra.mxu0 %v4181
    %5801 = vmatprep.subr.bf16.mxu0 %v4272
    %5802 = vmatpush1.bf16.xpose.msra.mxu0 %v4271
    %5803 = vmatprep.subr.bf16.mxu0 %v4362
    %5804 = vmatpush1.bf16.xpose.msra.mxu0 %v4361
    %5805 = vmatprep.subr.bf16.mxu0 %v4452
    %5806 = vmatpush1.bf16.xpose.msra.mxu0 %v4451
    %5807 = vmatprep.subr.bf16.mxu0 %v4542
    %5808 = vmatpush1.bf16.xpose.msra.mxu0 %v4541
    %5809 = vmatprep.subr.bf16.mxu0 %v4632
    %5810 = vmatpush1.bf16.xpose.msra.mxu0 %v4631
    %5811 = vmatprep.subr.bf16.mxu0 %v4722
    %5812 = vmatpush1.bf16.xpose.msra.mxu0 %v4721
    %5813 = vmatprep.subr.bf16.mxu0 0
    %5814 = vmatpush1.bf16.xpose.msra.mxu0 0
    %5815 = vmatprep.subr.bf16.mxu0 0
    %5816 = vmatpush1.bf16.xpose.msra.mxu0 0
    %5817 = vmatprep.subr.bf16.mxu0 0
    %5818 = vmatpush1.bf16.xpose.msra.mxu0 0
    %5819 = vmatprep.subr.bf16.mxu0 0
    %5820 = vmatpush1.bf16.xpose.msra.mxu0 0
    %5821 = vmatprep.subr.bf16.mxu0 0
    %5822 = vmatpush1.bf16.xpose.msra.mxu0 0
    %5823 = vmatprep.subr.bf16.mxu0 0
    %5824 = vmatpush1.bf16.xpose.msra.mxu0 0
    %5825 = vmatprep.subr.bf16.mxu0 0
    %5826 = vmatpush1.bf16.xpose.msra.mxu0 0
    %5827 = vmatprep.subr.bf16.mxu0 0
    %5828 = vmatpush1.bf16.xpose.msra.mxu0 0
    %5829 = vmatprep.mubr.bf16.mxu0 %v1115
    %5830 = vmatmul.mubr.bf16.gmra.mrb[0].mxu0 %v1114
    %v5831 = vpop.f32.mrb[0].mxu0
    %v5832 = vadd.f32 %v5792, %v5831
    %v5833 = vpop.f32.mrb[0].mxu0
    %v5834 = vpop.f32.mrb[0].mxu0
    %v5835 = vpop.f32.mrb[0].mxu0
    %5836 = vdwg.mxu0
    %5837 = vmatprep.subr.bf16.mxu0 %v4094
    %5838 = vmatpush1.bf16.xpose.msra.mxu0 %v4093
    %5839 = vmatprep.subr.bf16.mxu0 %v4184
    %5840 = vmatpush1.bf16.xpose.msra.mxu0 %v4183
    %5841 = vmatprep.subr.bf16.mxu0 %v4274
    %5842 = vmatpush1.bf16.xpose.msra.mxu0 %v4273
    %5843 = vmatprep.subr.bf16.mxu0 %v4364
    %5844 = vmatpush1.bf16.xpose.msra.mxu0 %v4363
    %5845 = vmatprep.subr.bf16.mxu0 %v4454
    %5846 = vmatpush1.bf16.xpose.msra.mxu0 %v4453
    %5847 = vmatprep.subr.bf16.mxu0 %v4544
    %5848 = vmatpush1.bf16.xpose.msra.mxu0 %v4543
    %5849 = vmatprep.subr.bf16.mxu0 %v4634
    %5850 = vmatpush1.bf16.xpose.msra.mxu0 %v4633
    %5851 = vmatprep.subr.bf16.mxu0 %v4724
    %5852 = vmatpush1.bf16.xpose.msra.mxu0 %v4723
    %5853 = vmatprep.subr.bf16.mxu0 0
    %5854 = vmatpush1.bf16.xpose.msra.mxu0 0
    %5855 = vmatprep.subr.bf16.mxu0 0
    %5856 = vmatpush1.bf16.xpose.msra.mxu0 0
    %5857 = vmatprep.subr.bf16.mxu0 0
    %5858 = vmatpush1.bf16.xpose.msra.mxu0 0
    %5859 = vmatprep.subr.bf16.mxu0 0
    %5860 = vmatpush1.bf16.xpose.msra.mxu0 0
    %5861 = vmatprep.subr.bf16.mxu0 0
    %5862 = vmatpush1.bf16.xpose.msra.mxu0 0
    %5863 = vmatprep.subr.bf16.mxu0 0
    %5864 = vmatpush1.bf16.xpose.msra.mxu0 0
    %5865 = vmatprep.subr.bf16.mxu0 0
    %5866 = vmatpush1.bf16.xpose.msra.mxu0 0
    %5867 = vmatprep.subr.bf16.mxu0 0
    %5868 = vmatpush1.bf16.xpose.msra.mxu0 0
    %5869 = vmatprep.mubr.bf16.mxu0 %v1117
    %5870 = vmatmul.mubr.bf16.gmra.mrb[0].mxu0 %v1116
    %v5871 = vpop.f32.mrb[0].mxu0
    %v5872 = vadd.f32 %v5832, %v5871
    %v5873 = vpop.f32.mrb[0].mxu0
    %v5874 = vpop.f32.mrb[0].mxu0
    %v5875 = vpop.f32.mrb[0].mxu0
    %5876 = vdwg.mxu0
    %5877 = vmatprep.subr.bf16.mxu0 %v4096
    %5878 = vmatpush1.bf16.xpose.msra.mxu0 %v4095
    %5879 = vmatprep.subr.bf16.mxu0 %v4186
    %5880 = vmatpush1.bf16.xpose.msra.mxu0 %v4185
    %5881 = vmatprep.subr.bf16.mxu0 %v4276
    %5882 = vmatpush1.bf16.xpose.msra.mxu0 %v4275
    %5883 = vmatprep.subr.bf16.mxu0 %v4366
    %5884 = vmatpush1.bf16.xpose.msra.mxu0 %v4365
    %5885 = vmatprep.subr.bf16.mxu0 %v4456
    %5886 = vmatpush1.bf16.xpose.msra.mxu0 %v4455
    %5887 = vmatprep.subr.bf16.mxu0 %v4546
    %5888 = vmatpush1.bf16.xpose.msra.mxu0 %v4545
    %5889 = vmatprep.subr.bf16.mxu0 %v4636
    %5890 = vmatpush1.bf16.xpose.msra.mxu0 %v4635
    %5891 = vmatprep.subr.bf16.mxu0 %v4726
    %5892 = vmatpush1.bf16.xpose.msra.mxu0 %v4725
    %5893 = vmatprep.subr.bf16.mxu0 0
    %5894 = vmatpush1.bf16.xpose.msra.mxu0 0
    %5895 = vmatprep.subr.bf16.mxu0 0
    %5896 = vmatpush1.bf16.xpose.msra.mxu0 0
    %5897 = vmatprep.subr.bf16.mxu0 0
    %5898 = vmatpush1.bf16.xpose.msra.mxu0 0
    %5899 = vmatprep.subr.bf16.mxu0 0
    %5900 = vmatpush1.bf16.xpose.msra.mxu0 0
    %5901 = vmatprep.subr.bf16.mxu0 0
    %5902 = vmatpush1.bf16.xpose.msra.mxu0 0
    %5903 = vmatprep.subr.bf16.mxu0 0
    %5904 = vmatpush1.bf16.xpose.msra.mxu0 0
    %5905 = vmatprep.subr.bf16.mxu0 0
    %5906 = vmatpush1.bf16.xpose.msra.mxu0 0
    %5907 = vmatprep.subr.bf16.mxu0 0
    %5908 = vmatpush1.bf16.xpose.msra.mxu0 0
    %5909 = vmatprep.mubr.bf16.mxu0 %v1119
    %5910 = vmatmul.mubr.bf16.gmra.mrb[0].mxu0 %v1118
    %v5911 = vpop.f32.mrb[0].mxu0
    %v5912 = vadd.f32 %v5872, %v5911
    %v5913 = vpop.f32.mrb[0].mxu0
    %v5914 = vpop.f32.mrb[0].mxu0
    %v5915 = vpop.f32.mrb[0].mxu0
    %5916 = vdwg.mxu0
    %5917 = vmatprep.subr.bf16.mxu0 %v4098
    %5918 = vmatpush1.bf16.xpose.msra.mxu0 %v4097
    %5919 = vmatprep.subr.bf16.mxu0 %v4188
    %5920 = vmatpush1.bf16.xpose.msra.mxu0 %v4187
    %5921 = vmatprep.subr.bf16.mxu0 %v4278
    %5922 = vmatpush1.bf16.xpose.msra.mxu0 %v4277
    %5923 = vmatprep.subr.bf16.mxu0 %v4368
    %5924 = vmatpush1.bf16.xpose.msra.mxu0 %v4367
    %5925 = vmatprep.subr.bf16.mxu0 %v4458
    %5926 = vmatpush1.bf16.xpose.msra.mxu0 %v4457
    %5927 = vmatprep.subr.bf16.mxu0 %v4548
    %5928 = vmatpush1.bf16.xpose.msra.mxu0 %v4547
    %5929 = vmatprep.subr.bf16.mxu0 %v4638
    %5930 = vmatpush1.bf16.xpose.msra.mxu0 %v4637
    %5931 = vmatprep.subr.bf16.mxu0 %v4728
    %5932 = vmatpush1.bf16.xpose.msra.mxu0 %v4727
    %5933 = vmatprep.subr.bf16.mxu0 0
    %5934 = vmatpush1.bf16.xpose.msra.mxu0 0
    %5935 = vmatprep.subr.bf16.mxu0 0
    %5936 = vmatpush1.bf16.xpose.msra.mxu0 0
    %5937 = vmatprep.subr.bf16.mxu0 0
    %5938 = vmatpush1.bf16.xpose.msra.mxu0 0
    %5939 = vmatprep.subr.bf16.mxu0 0
    %5940 = vmatpush1.bf16.xpose.msra.mxu0 0
    %5941 = vmatprep.subr.bf16.mxu0 0
    %5942 = vmatpush1.bf16.xpose.msra.mxu0 0
    %5943 = vmatprep.subr.bf16.mxu0 0
    %5944 = vmatpush1.bf16.xpose.msra.mxu0 0
    %5945 = vmatprep.subr.bf16.mxu0 0
    %5946 = vmatpush1.bf16.xpose.msra.mxu0 0
    %5947 = vmatprep.subr.bf16.mxu0 0
    %5948 = vmatpush1.bf16.xpose.msra.mxu0 0
    %5949 = vmatprep.mubr.bf16.mxu0 %v1121
    %5950 = vmatmul.mubr.bf16.gmra.mrb[0].mxu0 %v1120
    %v5951 = vpop.f32.mrb[0].mxu0
    %v5952 = vadd.f32 %v5912, %v5951
    %v5953 = vpop.f32.mrb[0].mxu0
    %v5954 = vpop.f32.mrb[0].mxu0
    %v5955 = vpop.f32.mrb[0].mxu0
    %5956 = vdwg.mxu0
    %5957 = vmatprep.subr.bf16.mxu0 %v4100
    %5958 = vmatpush1.bf16.xpose.msra.mxu0 %v4099
    %5959 = vmatprep.subr.bf16.mxu0 %v4190
    %5960 = vmatpush1.bf16.xpose.msra.mxu0 %v4189
    %5961 = vmatprep.subr.bf16.mxu0 %v4280
    %5962 = vmatpush1.bf16.xpose.msra.mxu0 %v4279
    %5963 = vmatprep.subr.bf16.mxu0 %v4370
    %5964 = vmatpush1.bf16.xpose.msra.mxu0 %v4369
    %5965 = vmatprep.subr.bf16.mxu0 %v4460
    %5966 = vmatpush1.bf16.xpose.msra.mxu0 %v4459
    %5967 = vmatprep.subr.bf16.mxu0 %v4550
    %5968 = vmatpush1.bf16.xpose.msra.mxu0 %v4549
    %5969 = vmatprep.subr.bf16.mxu0 %v4640
    %5970 = vmatpush1.bf16.xpose.msra.mxu0 %v4639
    %5971 = vmatprep.subr.bf16.mxu0 %v4730
    %5972 = vmatpush1.bf16.xpose.msra.mxu0 %v4729
    %5973 = vmatprep.subr.bf16.mxu0 0
    %5974 = vmatpush1.bf16.xpose.msra.mxu0 0
    %5975 = vmatprep.subr.bf16.mxu0 0
    %5976 = vmatpush1.bf16.xpose.msra.mxu0 0
    %5977 = vmatprep.subr.bf16.mxu0 0
    %5978 = vmatpush1.bf16.xpose.msra.mxu0 0
    %5979 = vmatprep.subr.bf16.mxu0 0
    %5980 = vmatpush1.bf16.xpose.msra.mxu0 0
    %5981 = vmatprep.subr.bf16.mxu0 0
    %5982 = vmatpush1.bf16.xpose.msra.mxu0 0
    %5983 = vmatprep.subr.bf16.mxu0 0
    %5984 = vmatpush1.bf16.xpose.msra.mxu0 0
    %5985 = vmatprep.subr.bf16.mxu0 0
    %5986 = vmatpush1.bf16.xpose.msra.mxu0 0
    %5987 = vmatprep.subr.bf16.mxu0 0
    %5988 = vmatpush1.bf16.xpose.msra.mxu0 0
    %5989 = vmatprep.mubr.bf16.mxu0 %v1123
    %5990 = vmatmul.mubr.bf16.gmra.mrb[0].mxu0 %v1122
    %v5991 = vpop.f32.mrb[0].mxu0
    %v5992 = vadd.f32 %v5952, %v5991
    %v5993 = vpop.f32.mrb[0].mxu0
    %v5994 = vpop.f32.mrb[0].mxu0
    %v5995 = vpop.f32.mrb[0].mxu0
    %5996 = vdwg.mxu0
    %5997 = vmatprep.subr.bf16.mxu0 %v4102
    %5998 = vmatpush1.bf16.xpose.msra.mxu0 %v4101
    %5999 = vmatprep.subr.bf16.mxu0 %v4192
    %6000 = vmatpush1.bf16.xpose.msra.mxu0 %v4191
    %6001 = vmatprep.subr.bf16.mxu0 %v4282
    %6002 = vmatpush1.bf16.xpose.msra.mxu0 %v4281
    %6003 = vmatprep.subr.bf16.mxu0 %v4372
    %6004 = vmatpush1.bf16.xpose.msra.mxu0 %v4371
    %6005 = vmatprep.subr.bf16.mxu0 %v4462
    %6006 = vmatpush1.bf16.xpose.msra.mxu0 %v4461
    %6007 = vmatprep.subr.bf16.mxu0 %v4552
    %6008 = vmatpush1.bf16.xpose.msra.mxu0 %v4551
    %6009 = vmatprep.subr.bf16.mxu0 %v4642
    %6010 = vmatpush1.bf16.xpose.msra.mxu0 %v4641
    %6011 = vmatprep.subr.bf16.mxu0 %v4732
    %6012 = vmatpush1.bf16.xpose.msra.mxu0 %v4731
    %6013 = vmatprep.subr.bf16.mxu0 0
    %6014 = vmatpush1.bf16.xpose.msra.mxu0 0
    %6015 = vmatprep.subr.bf16.mxu0 0
    %6016 = vmatpush1.bf16.xpose.msra.mxu0 0
    %6017 = vmatprep.subr.bf16.mxu0 0
    %6018 = vmatpush1.bf16.xpose.msra.mxu0 0
    %6019 = vmatprep.subr.bf16.mxu0 0
    %6020 = vmatpush1.bf16.xpose.msra.mxu0 0
    %6021 = vmatprep.subr.bf16.mxu0 0
    %6022 = vmatpush1.bf16.xpose.msra.mxu0 0
    %6023 = vmatprep.subr.bf16.mxu0 0
    %6024 = vmatpush1.bf16.xpose.msra.mxu0 0
    %6025 = vmatprep.subr.bf16.mxu0 0
    %6026 = vmatpush1.bf16.xpose.msra.mxu0 0
    %6027 = vmatprep.subr.bf16.mxu0 0
    %6028 = vmatpush1.bf16.xpose.msra.mxu0 0
    %6029 = vmatprep.mubr.bf16.mxu0 %v1125
    %6030 = vmatmul.mubr.bf16.gmra.mrb[0].mxu0 %v1124
    %v6031 = vpop.f32.mrb[0].mxu0
    %v6032 = vadd.f32 %v5992, %v6031
    %v6033 = vpop.f32.mrb[0].mxu0
    %v6034 = vpop.f32.mrb[0].mxu0
    %v6035 = vpop.f32.mrb[0].mxu0
    %6036 = vdwg.mxu0
    %6037 = vmatprep.subr.bf16.mxu0 %v4104
    %6038 = vmatpush1.bf16.xpose.msra.mxu0 %v4103
    %6039 = vmatprep.subr.bf16.mxu0 %v4194
    %6040 = vmatpush1.bf16.xpose.msra.mxu0 %v4193
    %6041 = vmatprep.subr.bf16.mxu0 %v4284
    %6042 = vmatpush1.bf16.xpose.msra.mxu0 %v4283
    %6043 = vmatprep.subr.bf16.mxu0 %v4374
    %6044 = vmatpush1.bf16.xpose.msra.mxu0 %v4373
    %6045 = vmatprep.subr.bf16.mxu0 %v4464
    %6046 = vmatpush1.bf16.xpose.msra.mxu0 %v4463
    %6047 = vmatprep.subr.bf16.mxu0 %v4554
    %6048 = vmatpush1.bf16.xpose.msra.mxu0 %v4553
    %6049 = vmatprep.subr.bf16.mxu0 %v4644
    %6050 = vmatpush1.bf16.xpose.msra.mxu0 %v4643
    %6051 = vmatprep.subr.bf16.mxu0 %v4734
    %6052 = vmatpush1.bf16.xpose.msra.mxu0 %v4733
    %6053 = vmatprep.subr.bf16.mxu0 0
    %6054 = vmatpush1.bf16.xpose.msra.mxu0 0
    %6055 = vmatprep.subr.bf16.mxu0 0
    %6056 = vmatpush1.bf16.xpose.msra.mxu0 0
    %6057 = vmatprep.subr.bf16.mxu0 0
    %6058 = vmatpush1.bf16.xpose.msra.mxu0 0
    %6059 = vmatprep.subr.bf16.mxu0 0
    %6060 = vmatpush1.bf16.xpose.msra.mxu0 0
    %6061 = vmatprep.subr.bf16.mxu0 0
    %6062 = vmatpush1.bf16.xpose.msra.mxu0 0
    %6063 = vmatprep.subr.bf16.mxu0 0
    %6064 = vmatpush1.bf16.xpose.msra.mxu0 0
    %6065 = vmatprep.subr.bf16.mxu0 0
    %6066 = vmatpush1.bf16.xpose.msra.mxu0 0
    %6067 = vmatprep.subr.bf16.mxu0 0
    %6068 = vmatpush1.bf16.xpose.msra.mxu0 0
    %6069 = vmatprep.mubr.bf16.mxu0 %v1127
    %6070 = vmatmul.mubr.bf16.gmra.mrb[0].mxu0 %v1126
    %v6071 = vpop.f32.mrb[0].mxu0
    %v6072 = vadd.f32 %v6032, %v6071
    %v6073 = vpop.f32.mrb[0].mxu0
    %v6074 = vpop.f32.mrb[0].mxu0
    %v6075 = vpop.f32.mrb[0].mxu0
    %6076 = vdwg.mxu0
    %6077 = vmatprep.subr.bf16.mxu0 %v4106
    %6078 = vmatpush1.bf16.xpose.msra.mxu0 %v4105
    %6079 = vmatprep.subr.bf16.mxu0 %v4196
    %6080 = vmatpush1.bf16.xpose.msra.mxu0 %v4195
    %6081 = vmatprep.subr.bf16.mxu0 %v4286
    %6082 = vmatpush1.bf16.xpose.msra.mxu0 %v4285
    %6083 = vmatprep.subr.bf16.mxu0 %v4376
    %6084 = vmatpush1.bf16.xpose.msra.mxu0 %v4375
    %6085 = vmatprep.subr.bf16.mxu0 %v4466
    %6086 = vmatpush1.bf16.xpose.msra.mxu0 %v4465
    %6087 = vmatprep.subr.bf16.mxu0 %v4556
    %6088 = vmatpush1.bf16.xpose.msra.mxu0 %v4555
    %6089 = vmatprep.subr.bf16.mxu0 %v4646
    %6090 = vmatpush1.bf16.xpose.msra.mxu0 %v4645
    %6091 = vmatprep.subr.bf16.mxu0 %v4736
    %6092 = vmatpush1.bf16.xpose.msra.mxu0 %v4735
    %6093 = vmatprep.subr.bf16.mxu0 0
    %6094 = vmatpush1.bf16.xpose.msra.mxu0 0
    %6095 = vmatprep.subr.bf16.mxu0 0
    %6096 = vmatpush1.bf16.xpose.msra.mxu0 0
    %6097 = vmatprep.subr.bf16.mxu0 0
    %6098 = vmatpush1.bf16.xpose.msra.mxu0 0
    %6099 = vmatprep.subr.bf16.mxu0 0
    %6100 = vmatpush1.bf16.xpose.msra.mxu0 0
    %6101 = vmatprep.subr.bf16.mxu0 0
    %6102 = vmatpush1.bf16.xpose.msra.mxu0 0
    %6103 = vmatprep.subr.bf16.mxu0 0
    %6104 = vmatpush1.bf16.xpose.msra.mxu0 0
    %6105 = vmatprep.subr.bf16.mxu0 0
    %6106 = vmatpush1.bf16.xpose.msra.mxu0 0
    %6107 = vmatprep.subr.bf16.mxu0 0
    %6108 = vmatpush1.bf16.xpose.msra.mxu0 0
    %6109 = vmatprep.mubr.bf16.mxu0 %v1129
    %6110 = vmatmul.mubr.bf16.gmra.mrb[0].mxu0 %v1128
    %v6111 = vpop.f32.mrb[0].mxu0
    %v6112 = vadd.f32 %v6072, %v6111
    %v6113 = vpop.f32.mrb[0].mxu0
    %v6114 = vpop.f32.mrb[0].mxu0
    %v6115 = vpop.f32.mrb[0].mxu0
    %6116 = vdwg.mxu0
    %6117 = vmatprep.subr.bf16.mxu0 %v4108
    %6118 = vmatpush1.bf16.xpose.msra.mxu0 %v4107
    %6119 = vmatprep.subr.bf16.mxu0 %v4198
    %6120 = vmatpush1.bf16.xpose.msra.mxu0 %v4197
    %6121 = vmatprep.subr.bf16.mxu0 %v4288
    %6122 = vmatpush1.bf16.xpose.msra.mxu0 %v4287
    %6123 = vmatprep.subr.bf16.mxu0 %v4378
    %6124 = vmatpush1.bf16.xpose.msra.mxu0 %v4377
    %6125 = vmatprep.subr.bf16.mxu0 %v4468
    %6126 = vmatpush1.bf16.xpose.msra.mxu0 %v4467
    %6127 = vmatprep.subr.bf16.mxu0 %v4558
    %6128 = vmatpush1.bf16.xpose.msra.mxu0 %v4557
    %6129 = vmatprep.subr.bf16.mxu0 %v4648
    %6130 = vmatpush1.bf16.xpose.msra.mxu0 %v4647
    %6131 = vmatprep.subr.bf16.mxu0 %v4738
    %6132 = vmatpush1.bf16.xpose.msra.mxu0 %v4737
    %6133 = vmatprep.subr.bf16.mxu0 0
    %6134 = vmatpush1.bf16.xpose.msra.mxu0 0
    %6135 = vmatprep.subr.bf16.mxu0 0
    %6136 = vmatpush1.bf16.xpose.msra.mxu0 0
    %6137 = vmatprep.subr.bf16.mxu0 0
    %6138 = vmatpush1.bf16.xpose.msra.mxu0 0
    %6139 = vmatprep.subr.bf16.mxu0 0
    %6140 = vmatpush1.bf16.xpose.msra.mxu0 0
    %6141 = vmatprep.subr.bf16.mxu0 0
    %6142 = vmatpush1.bf16.xpose.msra.mxu0 0
    %6143 = vmatprep.subr.bf16.mxu0 0
    %6144 = vmatpush1.bf16.xpose.msra.mxu0 0
    %6145 = vmatprep.subr.bf16.mxu0 0
    %6146 = vmatpush1.bf16.xpose.msra.mxu0 0
    %6147 = vmatprep.subr.bf16.mxu0 0
    %6148 = vmatpush1.bf16.xpose.msra.mxu0 0
    %6149 = vmatprep.mubr.bf16.mxu0 %v1131
    %6150 = vmatmul.mubr.bf16.gmra.mrb[0].mxu0 %v1130
    %v6151 = vpop.f32.mrb[0].mxu0
    %v6152 = vadd.f32 %v6112, %v6151
    %v6153 = vpop.f32.mrb[0].mxu0
    %v6154 = vpop.f32.mrb[0].mxu0
    %v6155 = vpop.f32.mrb[0].mxu0
    %6156 = vdwg.mxu0
    %6157 = vmatprep.subr.bf16.mxu0 %v4110
    %6158 = vmatpush1.bf16.xpose.msra.mxu0 %v4109
    %6159 = vmatprep.subr.bf16.mxu0 %v4200
    %6160 = vmatpush1.bf16.xpose.msra.mxu0 %v4199
    %6161 = vmatprep.subr.bf16.mxu0 %v4290
    %6162 = vmatpush1.bf16.xpose.msra.mxu0 %v4289
    %6163 = vmatprep.subr.bf16.mxu0 %v4380
    %6164 = vmatpush1.bf16.xpose.msra.mxu0 %v4379
    %6165 = vmatprep.subr.bf16.mxu0 %v4470
    %6166 = vmatpush1.bf16.xpose.msra.mxu0 %v4469
    %6167 = vmatprep.subr.bf16.mxu0 %v4560
    %6168 = vmatpush1.bf16.xpose.msra.mxu0 %v4559
    %6169 = vmatprep.subr.bf16.mxu0 %v4650
    %6170 = vmatpush1.bf16.xpose.msra.mxu0 %v4649
    %6171 = vmatprep.subr.bf16.mxu0 %v4740
    %6172 = vmatpush1.bf16.xpose.msra.mxu0 %v4739
    %6173 = vmatprep.subr.bf16.mxu0 0
    %6174 = vmatpush1.bf16.xpose.msra.mxu0 0
    %6175 = vmatprep.subr.bf16.mxu0 0
    %6176 = vmatpush1.bf16.xpose.msra.mxu0 0
    %6177 = vmatprep.subr.bf16.mxu0 0
    %6178 = vmatpush1.bf16.xpose.msra.mxu0 0
    %6179 = vmatprep.subr.bf16.mxu0 0
    %6180 = vmatpush1.bf16.xpose.msra.mxu0 0
    %6181 = vmatprep.subr.bf16.mxu0 0
    %6182 = vmatpush1.bf16.xpose.msra.mxu0 0
    %6183 = vmatprep.subr.bf16.mxu0 0
    %6184 = vmatpush1.bf16.xpose.msra.mxu0 0
    %6185 = vmatprep.subr.bf16.mxu0 0
    %6186 = vmatpush1.bf16.xpose.msra.mxu0 0
    %6187 = vmatprep.subr.bf16.mxu0 0
    %6188 = vmatpush1.bf16.xpose.msra.mxu0 0
    %6189 = vmatprep.mubr.bf16.mxu0 %v1133
    %6190 = vmatmul.mubr.bf16.gmra.mrb[0].mxu0 %v1132
    %v6191 = vpop.f32.mrb[0].mxu0
    %v6192 = vadd.f32 %v6152, %v6191
    %v6193 = vpop.f32.mrb[0].mxu0
    %v6194 = vpop.f32.mrb[0].mxu0
    %v6195 = vpop.f32.mrb[0].mxu0
    %6196 = vdwg.mxu0
    %6197 = vmatprep.subr.bf16.mxu0 %v4112
    %6198 = vmatpush1.bf16.xpose.msra.mxu0 %v4111
    %6199 = vmatprep.subr.bf16.mxu0 %v4202
    %6200 = vmatpush1.bf16.xpose.msra.mxu0 %v4201
    %6201 = vmatprep.subr.bf16.mxu0 %v4292
    %6202 = vmatpush1.bf16.xpose.msra.mxu0 %v4291
    %6203 = vmatprep.subr.bf16.mxu0 %v4382
    %6204 = vmatpush1.bf16.xpose.msra.mxu0 %v4381
    %6205 = vmatprep.subr.bf16.mxu0 %v4472
    %6206 = vmatpush1.bf16.xpose.msra.mxu0 %v4471
    %6207 = vmatprep.subr.bf16.mxu0 %v4562
    %6208 = vmatpush1.bf16.xpose.msra.mxu0 %v4561
    %6209 = vmatprep.subr.bf16.mxu0 %v4652
    %6210 = vmatpush1.bf16.xpose.msra.mxu0 %v4651
    %6211 = vmatprep.subr.bf16.mxu0 %v4742
    %6212 = vmatpush1.bf16.xpose.msra.mxu0 %v4741
    %6213 = vmatprep.subr.bf16.mxu0 0
    %6214 = vmatpush1.bf16.xpose.msra.mxu0 0
    %6215 = vmatprep.subr.bf16.mxu0 0
    %6216 = vmatpush1.bf16.xpose.msra.mxu0 0
    %6217 = vmatprep.subr.bf16.mxu0 0
    %6218 = vmatpush1.bf16.xpose.msra.mxu0 0
    %6219 = vmatprep.subr.bf16.mxu0 0
    %6220 = vmatpush1.bf16.xpose.msra.mxu0 0
    %6221 = vmatprep.subr.bf16.mxu0 0
    %6222 = vmatpush1.bf16.xpose.msra.mxu0 0
    %6223 = vmatprep.subr.bf16.mxu0 0
    %6224 = vmatpush1.bf16.xpose.msra.mxu0 0
    %6225 = vmatprep.subr.bf16.mxu0 0
    %6226 = vmatpush1.bf16.xpose.msra.mxu0 0
    %6227 = vmatprep.subr.bf16.mxu0 0
    %6228 = vmatpush1.bf16.xpose.msra.mxu0 0
    %6229 = vmatprep.mubr.bf16.mxu0 %v1135
    %6230 = vmatmul.mubr.bf16.gmra.mrb[0].mxu0 %v1134
    %v6231 = vpop.f32.mrb[0].mxu0
    %v6232 = vadd.f32 %v6192, %v6231
    %v6233 = vpop.f32.mrb[0].mxu0
    %v6234 = vpop.f32.mrb[0].mxu0
    %v6235 = vpop.f32.mrb[0].mxu0
    %6236 = vdwg.mxu0
    %6237 = vmatprep.subr.bf16.mxu0 %v4114
    %6238 = vmatpush1.bf16.xpose.msra.mxu0 %v4113
    %6239 = vmatprep.subr.bf16.mxu0 %v4204
    %6240 = vmatpush1.bf16.xpose.msra.mxu0 %v4203
    %6241 = vmatprep.subr.bf16.mxu0 %v4294
    %6242 = vmatpush1.bf16.xpose.msra.mxu0 %v4293
    %6243 = vmatprep.subr.bf16.mxu0 %v4384
    %6244 = vmatpush1.bf16.xpose.msra.mxu0 %v4383
    %6245 = vmatprep.subr.bf16.mxu0 %v4474
    %6246 = vmatpush1.bf16.xpose.msra.mxu0 %v4473
    %6247 = vmatprep.subr.bf16.mxu0 %v4564
    %6248 = vmatpush1.bf16.xpose.msra.mxu0 %v4563
    %6249 = vmatprep.subr.bf16.mxu0 %v4654
    %6250 = vmatpush1.bf16.xpose.msra.mxu0 %v4653
    %6251 = vmatprep.subr.bf16.mxu0 %v4744
    %6252 = vmatpush1.bf16.xpose.msra.mxu0 %v4743
    %6253 = vmatprep.subr.bf16.mxu0 0
    %6254 = vmatpush1.bf16.xpose.msra.mxu0 0
    %6255 = vmatprep.subr.bf16.mxu0 0
    %6256 = vmatpush1.bf16.xpose.msra.mxu0 0
    %6257 = vmatprep.subr.bf16.mxu0 0
    %6258 = vmatpush1.bf16.xpose.msra.mxu0 0
    %6259 = vmatprep.subr.bf16.mxu0 0
    %6260 = vmatpush1.bf16.xpose.msra.mxu0 0
    %6261 = vmatprep.subr.bf16.mxu0 0
    %6262 = vmatpush1.bf16.xpose.msra.mxu0 0
    %6263 = vmatprep.subr.bf16.mxu0 0
    %6264 = vmatpush1.bf16.xpose.msra.mxu0 0
    %6265 = vmatprep.subr.bf16.mxu0 0
    %6266 = vmatpush1.bf16.xpose.msra.mxu0 0
    %6267 = vmatprep.subr.bf16.mxu0 0
    %6268 = vmatpush1.bf16.xpose.msra.mxu0 0
    %6269 = vmatprep.mubr.bf16.mxu0 %v1137
    %6270 = vmatmul.mubr.bf16.gmra.mrb[0].mxu0 %v1136
    %v6271 = vpop.f32.mrb[0].mxu0
    %v6272 = vadd.f32 %v6232, %v6271
    %v6273 = vpop.f32.mrb[0].mxu0
    %v6274 = vpop.f32.mrb[0].mxu0
    %v6275 = vpop.f32.mrb[0].mxu0
    %6276 = vdwg.mxu0
    %6277 = vmatprep.subr.bf16.mxu0 %v4116
    %6278 = vmatpush1.bf16.xpose.msra.mxu0 %v4115
    %6279 = vmatprep.subr.bf16.mxu0 %v4206
    %6280 = vmatpush1.bf16.xpose.msra.mxu0 %v4205
    %6281 = vmatprep.subr.bf16.mxu0 %v4296
    %6282 = vmatpush1.bf16.xpose.msra.mxu0 %v4295
    %6283 = vmatprep.subr.bf16.mxu0 %v4386
    %6284 = vmatpush1.bf16.xpose.msra.mxu0 %v4385
    %6285 = vmatprep.subr.bf16.mxu0 %v4476
    %6286 = vmatpush1.bf16.xpose.msra.mxu0 %v4475
    %6287 = vmatprep.subr.bf16.mxu0 %v4566
    %6288 = vmatpush1.bf16.xpose.msra.mxu0 %v4565
    %6289 = vmatprep.subr.bf16.mxu0 %v4656
    %6290 = vmatpush1.bf16.xpose.msra.mxu0 %v4655
    %6291 = vmatprep.subr.bf16.mxu0 %v4746
    %6292 = vmatpush1.bf16.xpose.msra.mxu0 %v4745
    %6293 = vmatprep.subr.bf16.mxu0 0
    %6294 = vmatpush1.bf16.xpose.msra.mxu0 0
    %6295 = vmatprep.subr.bf16.mxu0 0
    %6296 = vmatpush1.bf16.xpose.msra.mxu0 0
    %6297 = vmatprep.subr.bf16.mxu0 0
    %6298 = vmatpush1.bf16.xpose.msra.mxu0 0
    %6299 = vmatprep.subr.bf16.mxu0 0
    %6300 = vmatpush1.bf16.xpose.msra.mxu0 0
    %6301 = vmatprep.subr.bf16.mxu0 0
    %6302 = vmatpush1.bf16.xpose.msra.mxu0 0
    %6303 = vmatprep.subr.bf16.mxu0 0
    %6304 = vmatpush1.bf16.xpose.msra.mxu0 0
    %6305 = vmatprep.subr.bf16.mxu0 0
    %6306 = vmatpush1.bf16.xpose.msra.mxu0 0
    %6307 = vmatprep.subr.bf16.mxu0 0
    %6308 = vmatpush1.bf16.xpose.msra.mxu0 0
    %6309 = vmatprep.mubr.bf16.mxu0 %v1139
    %6310 = vmatmul.mubr.bf16.gmra.mrb[0].mxu0 %v1138
    %v6311 = vpop.f32.mrb[0].mxu0
    %v6312 = vadd.f32 %v6272, %v6311
    %v6313 = vpop.f32.mrb[0].mxu0
    %v6314 = vpop.f32.mrb[0].mxu0
    %v6315 = vpop.f32.mrb[0].mxu0
    %6316 = vdwg.mxu0
    %6317 = vmatprep.subr.bf16.mxu0 %v4118
    %6318 = vmatpush1.bf16.xpose.msra.mxu0 %v4117
    %6319 = vmatprep.subr.bf16.mxu0 %v4208
    %6320 = vmatpush1.bf16.xpose.msra.mxu0 %v4207
    %6321 = vmatprep.subr.bf16.mxu0 %v4298
    %6322 = vmatpush1.bf16.xpose.msra.mxu0 %v4297
    %6323 = vmatprep.subr.bf16.mxu0 %v4388
    %6324 = vmatpush1.bf16.xpose.msra.mxu0 %v4387
    %6325 = vmatprep.subr.bf16.mxu0 %v4478
    %6326 = vmatpush1.bf16.xpose.msra.mxu0 %v4477
    %6327 = vmatprep.subr.bf16.mxu0 %v4568
    %6328 = vmatpush1.bf16.xpose.msra.mxu0 %v4567
    %6329 = vmatprep.subr.bf16.mxu0 %v4658
    %6330 = vmatpush1.bf16.xpose.msra.mxu0 %v4657
    %6331 = vmatprep.subr.bf16.mxu0 %v4748
    %6332 = vmatpush1.bf16.xpose.msra.mxu0 %v4747
    %6333 = vmatprep.subr.bf16.mxu0 0
    %6334 = vmatpush1.bf16.xpose.msra.mxu0 0
    %6335 = vmatprep.subr.bf16.mxu0 0
    %6336 = vmatpush1.bf16.xpose.msra.mxu0 0
    %6337 = vmatprep.subr.bf16.mxu0 0
    %6338 = vmatpush1.bf16.xpose.msra.mxu0 0
    %6339 = vmatprep.subr.bf16.mxu0 0
    %6340 = vmatpush1.bf16.xpose.msra.mxu0 0
    %6341 = vmatprep.subr.bf16.mxu0 0
    %6342 = vmatpush1.bf16.xpose.msra.mxu0 0
    %6343 = vmatprep.subr.bf16.mxu0 0
    %6344 = vmatpush1.bf16.xpose.msra.mxu0 0
    %6345 = vmatprep.subr.bf16.mxu0 0
    %6346 = vmatpush1.bf16.xpose.msra.mxu0 0
    %6347 = vmatprep.subr.bf16.mxu0 0
    %6348 = vmatpush1.bf16.xpose.msra.mxu0 0
    %6349 = vmatprep.mubr.bf16.mxu0 %v1141
    %6350 = vmatmul.mubr.bf16.gmra.mrb[0].mxu0 %v1140
    %v6351 = vpop.f32.mrb[0].mxu0
    %v6352 = vadd.f32 %v6312, %v6351
    %v6353 = vpop.f32.mrb[0].mxu0
    %v6354 = vpop.f32.mrb[0].mxu0
    %v6355 = vpop.f32.mrb[0].mxu0
    %6356 = vdwg.mxu0
    %6357 = vmatprep.subr.bf16.mxu0 %v4120
    %6358 = vmatpush1.bf16.xpose.msra.mxu0 %v4119
    %6359 = vmatprep.subr.bf16.mxu0 %v4210
    %6360 = vmatpush1.bf16.xpose.msra.mxu0 %v4209
    %6361 = vmatprep.subr.bf16.mxu0 %v4300
    %6362 = vmatpush1.bf16.xpose.msra.mxu0 %v4299
    %6363 = vmatprep.subr.bf16.mxu0 %v4390
    %6364 = vmatpush1.bf16.xpose.msra.mxu0 %v4389
    %6365 = vmatprep.subr.bf16.mxu0 %v4480
    %6366 = vmatpush1.bf16.xpose.msra.mxu0 %v4479
    %6367 = vmatprep.subr.bf16.mxu0 %v4570
    %6368 = vmatpush1.bf16.xpose.msra.mxu0 %v4569
    %6369 = vmatprep.subr.bf16.mxu0 %v4660
    %6370 = vmatpush1.bf16.xpose.msra.mxu0 %v4659
    %6371 = vmatprep.subr.bf16.mxu0 %v4750
    %6372 = vmatpush1.bf16.xpose.msra.mxu0 %v4749
    %6373 = vmatprep.subr.bf16.mxu0 0
    %6374 = vmatpush1.bf16.xpose.msra.mxu0 0
    %6375 = vmatprep.subr.bf16.mxu0 0
    %6376 = vmatpush1.bf16.xpose.msra.mxu0 0
    %6377 = vmatprep.subr.bf16.mxu0 0
    %6378 = vmatpush1.bf16.xpose.msra.mxu0 0
    %6379 = vmatprep.subr.bf16.mxu0 0
    %6380 = vmatpush1.bf16.xpose.msra.mxu0 0
    %6381 = vmatprep.subr.bf16.mxu0 0
    %6382 = vmatpush1.bf16.xpose.msra.mxu0 0
    %6383 = vmatprep.subr.bf16.mxu0 0
    %6384 = vmatpush1.bf16.xpose.msra.mxu0 0
    %6385 = vmatprep.subr.bf16.mxu0 0
    %6386 = vmatpush1.bf16.xpose.msra.mxu0 0
    %6387 = vmatprep.subr.bf16.mxu0 0
    %6388 = vmatpush1.bf16.xpose.msra.mxu0 0
    %6389 = vmatprep.mubr.bf16.mxu0 %v1143
    %6390 = vmatmul.mubr.bf16.gmra.mrb[0].mxu0 %v1142
    %v6391 = vpop.f32.mrb[0].mxu0
    %v6392 = vadd.f32 %v6352, %v6391
    %v6393 = vpop.f32.mrb[0].mxu0
    %v6394 = vpop.f32.mrb[0].mxu0
    %v6395 = vpop.f32.mrb[0].mxu0
    %6396 = vdwg.mxu0
    %6397 = vmatprep.subr.bf16.mxu0 %v4122
    %6398 = vmatpush1.bf16.xpose.msra.mxu0 %v4121
    %6399 = vmatprep.subr.bf16.mxu0 %v4212
    %6400 = vmatpush1.bf16.xpose.msra.mxu0 %v4211
    %6401 = vmatprep.subr.bf16.mxu0 %v4302
    %6402 = vmatpush1.bf16.xpose.msra.mxu0 %v4301
    %6403 = vmatprep.subr.bf16.mxu0 %v4392
    %6404 = vmatpush1.bf16.xpose.msra.mxu0 %v4391
    %6405 = vmatprep.subr.bf16.mxu0 %v4482
    %6406 = vmatpush1.bf16.xpose.msra.mxu0 %v4481
    %6407 = vmatprep.subr.bf16.mxu0 %v4572
    %6408 = vmatpush1.bf16.xpose.msra.mxu0 %v4571
    %6409 = vmatprep.subr.bf16.mxu0 %v4662
    %6410 = vmatpush1.bf16.xpose.msra.mxu0 %v4661
    %6411 = vmatprep.subr.bf16.mxu0 %v4752
    %6412 = vmatpush1.bf16.xpose.msra.mxu0 %v4751
    %6413 = vmatprep.subr.bf16.mxu0 0
    %6414 = vmatpush1.bf16.xpose.msra.mxu0 0
    %6415 = vmatprep.subr.bf16.mxu0 0
    %6416 = vmatpush1.bf16.xpose.msra.mxu0 0
    %6417 = vmatprep.subr.bf16.mxu0 0
    %6418 = vmatpush1.bf16.xpose.msra.mxu0 0
    %6419 = vmatprep.subr.bf16.mxu0 0
    %6420 = vmatpush1.bf16.xpose.msra.mxu0 0
    %6421 = vmatprep.subr.bf16.mxu0 0
    %6422 = vmatpush1.bf16.xpose.msra.mxu0 0
    %6423 = vmatprep.subr.bf16.mxu0 0
    %6424 = vmatpush1.bf16.xpose.msra.mxu0 0
    %6425 = vmatprep.subr.bf16.mxu0 0
    %6426 = vmatpush1.bf16.xpose.msra.mxu0 0
    %6427 = vmatprep.subr.bf16.mxu0 0
    %6428 = vmatpush1.bf16.xpose.msra.mxu0 0
    %6429 = vmatprep.mubr.bf16.mxu0 %v1145
    %6430 = vmatmul.mubr.bf16.gmra.mrb[0].mxu0 %v1144
    %v6431 = vpop.f32.mrb[0].mxu0
    %v6432 = vadd.f32 %v6392, %v6431
    %v6433 = vpop.f32.mrb[0].mxu0
    %v6434 = vpop.f32.mrb[0].mxu0
    %v6435 = vpop.f32.mrb[0].mxu0
    %6436 = vdwg.mxu0
    %6437 = vmatprep.subr.bf16.mxu0 %v4124
    %6438 = vmatpush1.bf16.xpose.msra.mxu0 %v4123
    %6439 = vmatprep.subr.bf16.mxu0 %v4214
    %6440 = vmatpush1.bf16.xpose.msra.mxu0 %v4213
    %6441 = vmatprep.subr.bf16.mxu0 %v4304
    %6442 = vmatpush1.bf16.xpose.msra.mxu0 %v4303
    %6443 = vmatprep.subr.bf16.mxu0 %v4394
    %6444 = vmatpush1.bf16.xpose.msra.mxu0 %v4393
    %6445 = vmatprep.subr.bf16.mxu0 %v4484
    %6446 = vmatpush1.bf16.xpose.msra.mxu0 %v4483
    %6447 = vmatprep.subr.bf16.mxu0 %v4574
    %6448 = vmatpush1.bf16.xpose.msra.mxu0 %v4573
    %6449 = vmatprep.subr.bf16.mxu0 %v4664
    %6450 = vmatpush1.bf16.xpose.msra.mxu0 %v4663
    %6451 = vmatprep.subr.bf16.mxu0 %v4754
    %6452 = vmatpush1.bf16.xpose.msra.mxu0 %v4753
    %6453 = vmatprep.subr.bf16.mxu0 0
    %6454 = vmatpush1.bf16.xpose.msra.mxu0 0
    %6455 = vmatprep.subr.bf16.mxu0 0
    %6456 = vmatpush1.bf16.xpose.msra.mxu0 0
    %6457 = vmatprep.subr.bf16.mxu0 0
    %6458 = vmatpush1.bf16.xpose.msra.mxu0 0
    %6459 = vmatprep.subr.bf16.mxu0 0
    %6460 = vmatpush1.bf16.xpose.msra.mxu0 0
    %6461 = vmatprep.subr.bf16.mxu0 0
    %6462 = vmatpush1.bf16.xpose.msra.mxu0 0
    %6463 = vmatprep.subr.bf16.mxu0 0
    %6464 = vmatpush1.bf16.xpose.msra.mxu0 0
    %6465 = vmatprep.subr.bf16.mxu0 0
    %6466 = vmatpush1.bf16.xpose.msra.mxu0 0
    %6467 = vmatprep.subr.bf16.mxu0 0
    %6468 = vmatpush1.bf16.xpose.msra.mxu0 0
    %6469 = vmatprep.mubr.bf16.mxu0 %v1147
    %6470 = vmatmul.mubr.bf16.gmra.mrb[0].mxu0 %v1146
    %v6471 = vpop.f32.mrb[0].mxu0
    %v6472 = vadd.f32 %v6432, %v6471
    %v6473 = vpop.f32.mrb[0].mxu0
    %v6474 = vpop.f32.mrb[0].mxu0
    %v6475 = vpop.f32.mrb[0].mxu0
    %6476 = vdwg.mxu0
    %6477 = vmatprep.subr.bf16.mxu0 %v4126
    %6478 = vmatpush1.bf16.xpose.msra.mxu0 %v4125
    %6479 = vmatprep.subr.bf16.mxu0 %v4216
    %6480 = vmatpush1.bf16.xpose.msra.mxu0 %v4215
    %6481 = vmatprep.subr.bf16.mxu0 %v4306
    %6482 = vmatpush1.bf16.xpose.msra.mxu0 %v4305
    %6483 = vmatprep.subr.bf16.mxu0 %v4396
    %6484 = vmatpush1.bf16.xpose.msra.mxu0 %v4395
    %6485 = vmatprep.subr.bf16.mxu0 %v4486
    %6486 = vmatpush1.bf16.xpose.msra.mxu0 %v4485
    %6487 = vmatprep.subr.bf16.mxu0 %v4576
    %6488 = vmatpush1.bf16.xpose.msra.mxu0 %v4575
    %6489 = vmatprep.subr.bf16.mxu0 %v4666
    %6490 = vmatpush1.bf16.xpose.msra.mxu0 %v4665
    %6491 = vmatprep.subr.bf16.mxu0 %v4756
    %6492 = vmatpush1.bf16.xpose.msra.mxu0 %v4755
    %6493 = vmatprep.subr.bf16.mxu0 0
    %6494 = vmatpush1.bf16.xpose.msra.mxu0 0
    %6495 = vmatprep.subr.bf16.mxu0 0
    %6496 = vmatpush1.bf16.xpose.msra.mxu0 0
    %6497 = vmatprep.subr.bf16.mxu0 0
    %6498 = vmatpush1.bf16.xpose.msra.mxu0 0
    %6499 = vmatprep.subr.bf16.mxu0 0
    %6500 = vmatpush1.bf16.xpose.msra.mxu0 0
    %6501 = vmatprep.subr.bf16.mxu0 0
    %6502 = vmatpush1.bf16.xpose.msra.mxu0 0
    %6503 = vmatprep.subr.bf16.mxu0 0
    %6504 = vmatpush1.bf16.xpose.msra.mxu0 0
    %6505 = vmatprep.subr.bf16.mxu0 0
    %6506 = vmatpush1.bf16.xpose.msra.mxu0 0
    %6507 = vmatprep.subr.bf16.mxu0 0
    %6508 = vmatpush1.bf16.xpose.msra.mxu0 0
    %6509 = vmatprep.mubr.bf16.mxu0 %v1149
    %6510 = vmatmul.mubr.bf16.gmra.mrb[0].mxu0 %v1148
    %v6511 = vpop.f32.mrb[0].mxu0
    %v6512 = vadd.f32 %v6472, %v6511
    %v6513 = vpop.f32.mrb[0].mxu0
    %v6514 = vpop.f32.mrb[0].mxu0
    %v6515 = vpop.f32.mrb[0].mxu0
    %6516 = vdwg.mxu0
    %6517 = vmatprep.subr.bf16.mxu0 %v4128
    %6518 = vmatpush1.bf16.xpose.msra.mxu0 %v4127
    %6519 = vmatprep.subr.bf16.mxu0 %v4218
    %6520 = vmatpush1.bf16.xpose.msra.mxu0 %v4217
    %6521 = vmatprep.subr.bf16.mxu0 %v4308
    %6522 = vmatpush1.bf16.xpose.msra.mxu0 %v4307
    %6523 = vmatprep.subr.bf16.mxu0 %v4398
    %6524 = vmatpush1.bf16.xpose.msra.mxu0 %v4397
    %6525 = vmatprep.subr.bf16.mxu0 %v4488
    %6526 = vmatpush1.bf16.xpose.msra.mxu0 %v4487
    %6527 = vmatprep.subr.bf16.mxu0 %v4578
    %6528 = vmatpush1.bf16.xpose.msra.mxu0 %v4577
    %6529 = vmatprep.subr.bf16.mxu0 %v4668
    %6530 = vmatpush1.bf16.xpose.msra.mxu0 %v4667
    %6531 = vmatprep.subr.bf16.mxu0 %v4758
    %6532 = vmatpush1.bf16.xpose.msra.mxu0 %v4757
    %6533 = vmatprep.subr.bf16.mxu0 0
    %6534 = vmatpush1.bf16.xpose.msra.mxu0 0
    %6535 = vmatprep.subr.bf16.mxu0 0
    %6536 = vmatpush1.bf16.xpose.msra.mxu0 0
    %6537 = vmatprep.subr.bf16.mxu0 0
    %6538 = vmatpush1.bf16.xpose.msra.mxu0 0
    %6539 = vmatprep.subr.bf16.mxu0 0
    %6540 = vmatpush1.bf16.xpose.msra.mxu0 0
    %6541 = vmatprep.subr.bf16.mxu0 0
    %6542 = vmatpush1.bf16.xpose.msra.mxu0 0
    %6543 = vmatprep.subr.bf16.mxu0 0
    %6544 = vmatpush1.bf16.xpose.msra.mxu0 0
    %6545 = vmatprep.subr.bf16.mxu0 0
    %6546 = vmatpush1.bf16.xpose.msra.mxu0 0
    %6547 = vmatprep.subr.bf16.mxu0 0
    %6548 = vmatpush1.bf16.xpose.msra.mxu0 0
    %6549 = vmatprep.mubr.bf16.mxu0 %v1151
    %6550 = vmatmul.mubr.bf16.gmra.mrb[0].mxu0 %v1150
    %v6551 = vpop.f32.mrb[0].mxu0
    %v6552 = vadd.f32 %v6512, %v6551
    %v6553 = vpop.f32.mrb[0].mxu0
    %v6554 = vpop.f32.mrb[0].mxu0
    %v6555 = vpop.f32.mrb[0].mxu0
    %6556 = vdwg.mxu0
    %6557 = vmatprep.subr.bf16.mxu0 %v4130
    %6558 = vmatpush1.bf16.xpose.msra.mxu0 %v4129
    %6559 = vmatprep.subr.bf16.mxu0 %v4220
    %6560 = vmatpush1.bf16.xpose.msra.mxu0 %v4219
    %6561 = vmatprep.subr.bf16.mxu0 %v4310
    %6562 = vmatpush1.bf16.xpose.msra.mxu0 %v4309
    %6563 = vmatprep.subr.bf16.mxu0 %v4400
    %6564 = vmatpush1.bf16.xpose.msra.mxu0 %v4399
    %6565 = vmatprep.subr.bf16.mxu0 %v4490
    %6566 = vmatpush1.bf16.xpose.msra.mxu0 %v4489
    %6567 = vmatprep.subr.bf16.mxu0 %v4580
    %6568 = vmatpush1.bf16.xpose.msra.mxu0 %v4579
    %6569 = vmatprep.subr.bf16.mxu0 %v4670
    %6570 = vmatpush1.bf16.xpose.msra.mxu0 %v4669
    %6571 = vmatprep.subr.bf16.mxu0 %v4760
    %6572 = vmatpush1.bf16.xpose.msra.mxu0 %v4759
    %6573 = vmatprep.subr.bf16.mxu0 0
    %6574 = vmatpush1.bf16.xpose.msra.mxu0 0
    %6575 = vmatprep.subr.bf16.mxu0 0
    %6576 = vmatpush1.bf16.xpose.msra.mxu0 0
    %6577 = vmatprep.subr.bf16.mxu0 0
    %6578 = vmatpush1.bf16.xpose.msra.mxu0 0
    %6579 = vmatprep.subr.bf16.mxu0 0
    %6580 = vmatpush1.bf16.xpose.msra.mxu0 0
    %6581 = vmatprep.subr.bf16.mxu0 0
    %6582 = vmatpush1.bf16.xpose.msra.mxu0 0
    %6583 = vmatprep.subr.bf16.mxu0 0
    %6584 = vmatpush1.bf16.xpose.msra.mxu0 0
    %6585 = vmatprep.subr.bf16.mxu0 0
    %6586 = vmatpush1.bf16.xpose.msra.mxu0 0
    %6587 = vmatprep.subr.bf16.mxu0 0
    %6588 = vmatpush1.bf16.xpose.msra.mxu0 0
    %6589 = vmatprep.mubr.bf16.mxu0 %v1153
    %6590 = vmatmul.mubr.bf16.gmra.mrb[0].mxu0 %v1152
    %v6591 = vpop.f32.mrb[0].mxu0
    %v6592 = vadd.f32 %v6552, %v6591
    %v6593 = vpop.f32.mrb[0].mxu0
    %v6594 = vpop.f32.mrb[0].mxu0
    %v6595 = vpop.f32.mrb[0].mxu0
    %6596 = vdwg.mxu0
    %6597 = vmatprep.subr.bf16.mxu0 %v4132
    %6598 = vmatpush1.bf16.xpose.msra.mxu0 %v4131
    %6599 = vmatprep.subr.bf16.mxu0 %v4222
    %6600 = vmatpush1.bf16.xpose.msra.mxu0 %v4221
    %6601 = vmatprep.subr.bf16.mxu0 %v4312
    %6602 = vmatpush1.bf16.xpose.msra.mxu0 %v4311
    %6603 = vmatprep.subr.bf16.mxu0 %v4402
    %6604 = vmatpush1.bf16.xpose.msra.mxu0 %v4401
    %6605 = vmatprep.subr.bf16.mxu0 %v4492
    %6606 = vmatpush1.bf16.xpose.msra.mxu0 %v4491
    %6607 = vmatprep.subr.bf16.mxu0 %v4582
    %6608 = vmatpush1.bf16.xpose.msra.mxu0 %v4581
    %6609 = vmatprep.subr.bf16.mxu0 %v4672
    %6610 = vmatpush1.bf16.xpose.msra.mxu0 %v4671
    %6611 = vmatprep.subr.bf16.mxu0 %v4762
    %6612 = vmatpush1.bf16.xpose.msra.mxu0 %v4761
    %6613 = vmatprep.subr.bf16.mxu0 0
    %6614 = vmatpush1.bf16.xpose.msra.mxu0 0
    %6615 = vmatprep.subr.bf16.mxu0 0
    %6616 = vmatpush1.bf16.xpose.msra.mxu0 0
    %6617 = vmatprep.subr.bf16.mxu0 0
    %6618 = vmatpush1.bf16.xpose.msra.mxu0 0
    %6619 = vmatprep.subr.bf16.mxu0 0
    %6620 = vmatpush1.bf16.xpose.msra.mxu0 0
    %6621 = vmatprep.subr.bf16.mxu0 0
    %6622 = vmatpush1.bf16.xpose.msra.mxu0 0
    %6623 = vmatprep.subr.bf16.mxu0 0
    %6624 = vmatpush1.bf16.xpose.msra.mxu0 0
    %6625 = vmatprep.subr.bf16.mxu0 0
    %6626 = vmatpush1.bf16.xpose.msra.mxu0 0
    %6627 = vmatprep.subr.bf16.mxu0 0
    %6628 = vmatpush1.bf16.xpose.msra.mxu0 0
    %6629 = vmatprep.mubr.bf16.mxu0 %v1155
    %6630 = vmatmul.mubr.bf16.gmra.mrb[0].mxu0 %v1154
    %v6631 = vpop.f32.mrb[0].mxu0
    %v6632 = vadd.f32 %v6592, %v6631
    %v6633 = vpop.f32.mrb[0].mxu0
    %v6634 = vpop.f32.mrb[0].mxu0
    %v6635 = vpop.f32.mrb[0].mxu0
    %6636 = vdwg.mxu0
    %6637 = vmatprep.subr.bf16.mxu0 %v4134
    %6638 = vmatpush1.bf16.xpose.msra.mxu0 %v4133
    %6639 = vmatprep.subr.bf16.mxu0 %v4224
    %6640 = vmatpush1.bf16.xpose.msra.mxu0 %v4223
    %6641 = vmatprep.subr.bf16.mxu0 %v4314
    %6642 = vmatpush1.bf16.xpose.msra.mxu0 %v4313
    %6643 = vmatprep.subr.bf16.mxu0 %v4404
    %6644 = vmatpush1.bf16.xpose.msra.mxu0 %v4403
    %6645 = vmatprep.subr.bf16.mxu0 %v4494
    %6646 = vmatpush1.bf16.xpose.msra.mxu0 %v4493
    %6647 = vmatprep.subr.bf16.mxu0 %v4584
    %6648 = vmatpush1.bf16.xpose.msra.mxu0 %v4583
    %6649 = vmatprep.subr.bf16.mxu0 %v4674
    %6650 = vmatpush1.bf16.xpose.msra.mxu0 %v4673
    %6651 = vmatprep.subr.bf16.mxu0 %v4764
    %6652 = vmatpush1.bf16.xpose.msra.mxu0 %v4763
    %6653 = vmatprep.subr.bf16.mxu0 0
    %6654 = vmatpush1.bf16.xpose.msra.mxu0 0
    %6655 = vmatprep.subr.bf16.mxu0 0
    %6656 = vmatpush1.bf16.xpose.msra.mxu0 0
    %6657 = vmatprep.subr.bf16.mxu0 0
    %6658 = vmatpush1.bf16.xpose.msra.mxu0 0
    %6659 = vmatprep.subr.bf16.mxu0 0
    %6660 = vmatpush1.bf16.xpose.msra.mxu0 0
    %6661 = vmatprep.subr.bf16.mxu0 0
    %6662 = vmatpush1.bf16.xpose.msra.mxu0 0
    %6663 = vmatprep.subr.bf16.mxu0 0
    %6664 = vmatpush1.bf16.xpose.msra.mxu0 0
    %6665 = vmatprep.subr.bf16.mxu0 0
    %6666 = vmatpush1.bf16.xpose.msra.mxu0 0
    %6667 = vmatprep.subr.bf16.mxu0 0
    %6668 = vmatpush1.bf16.xpose.msra.mxu0 0
    %6669 = vmatprep.mubr.bf16.mxu0 %v1157
    %6670 = vmatmul.mubr.bf16.gmra.mrb[0].mxu0 %v1156
    %v6671 = vpop.f32.mrb[0].mxu0
    %v6672 = vadd.f32 %v6632, %v6671
    %v6673 = vpop.f32.mrb[0].mxu0
    %v6674 = vpop.f32.mrb[0].mxu0
    %v6675 = vpop.f32.mrb[0].mxu0
    %6676 = vdwg.mxu0
    %6677 = vmatprep.subr.bf16.mxu0 %v4136
    %6678 = vmatpush1.bf16.xpose.msra.mxu0 %v4135
    %6679 = vmatprep.subr.bf16.mxu0 %v4226
    %6680 = vmatpush1.bf16.xpose.msra.mxu0 %v4225
    %6681 = vmatprep.subr.bf16.mxu0 %v4316
    %6682 = vmatpush1.bf16.xpose.msra.mxu0 %v4315
    %6683 = vmatprep.subr.bf16.mxu0 %v4406
    %6684 = vmatpush1.bf16.xpose.msra.mxu0 %v4405
    %6685 = vmatprep.subr.bf16.mxu0 %v4496
    %6686 = vmatpush1.bf16.xpose.msra.mxu0 %v4495
    %6687 = vmatprep.subr.bf16.mxu0 %v4586
    %6688 = vmatpush1.bf16.xpose.msra.mxu0 %v4585
    %6689 = vmatprep.subr.bf16.mxu0 %v4676
    %6690 = vmatpush1.bf16.xpose.msra.mxu0 %v4675
    %6691 = vmatprep.subr.bf16.mxu0 %v4766
    %6692 = vmatpush1.bf16.xpose.msra.mxu0 %v4765
    %6693 = vmatprep.subr.bf16.mxu0 0
    %6694 = vmatpush1.bf16.xpose.msra.mxu0 0
    %6695 = vmatprep.subr.bf16.mxu0 0
    %6696 = vmatpush1.bf16.xpose.msra.mxu0 0
    %6697 = vmatprep.subr.bf16.mxu0 0
    %6698 = vmatpush1.bf16.xpose.msra.mxu0 0
    %6699 = vmatprep.subr.bf16.mxu0 0
    %6700 = vmatpush1.bf16.xpose.msra.mxu0 0
    %6701 = vmatprep.subr.bf16.mxu0 0
    %6702 = vmatpush1.bf16.xpose.msra.mxu0 0
    %6703 = vmatprep.subr.bf16.mxu0 0
    %6704 = vmatpush1.bf16.xpose.msra.mxu0 0
    %6705 = vmatprep.subr.bf16.mxu0 0
    %6706 = vmatpush1.bf16.xpose.msra.mxu0 0
    %6707 = vmatprep.subr.bf16.mxu0 0
    %6708 = vmatpush1.bf16.xpose.msra.mxu0 0
    %6709 = vmatprep.mubr.bf16.mxu0 %v1159
    %6710 = vmatmul.mubr.bf16.gmra.mrb[0].mxu0 %v1158
    %v6711 = vpop.f32.mrb[0].mxu0
    %v6712 = vadd.f32 %v6672, %v6711
    %v6713 = vpop.f32.mrb[0].mxu0
    %v6714 = vpop.f32.mrb[0].mxu0
    %v6715 = vpop.f32.mrb[0].mxu0
    %6716 = vdwg.mxu0
    %6717 = vmatprep.subr.bf16.mxu0 %v4138
    %6718 = vmatpush1.bf16.xpose.msra.mxu0 %v4137
    %6719 = vmatprep.subr.bf16.mxu0 %v4228
    %6720 = vmatpush1.bf16.xpose.msra.mxu0 %v4227
    %6721 = vmatprep.subr.bf16.mxu0 %v4318
    %6722 = vmatpush1.bf16.xpose.msra.mxu0 %v4317
    %6723 = vmatprep.subr.bf16.mxu0 %v4408
    %6724 = vmatpush1.bf16.xpose.msra.mxu0 %v4407
    %6725 = vmatprep.subr.bf16.mxu0 %v4498
    %6726 = vmatpush1.bf16.xpose.msra.mxu0 %v4497
    %6727 = vmatprep.subr.bf16.mxu0 %v4588
    %6728 = vmatpush1.bf16.xpose.msra.mxu0 %v4587
    %6729 = vmatprep.subr.bf16.mxu0 %v4678
    %6730 = vmatpush1.bf16.xpose.msra.mxu0 %v4677
    %6731 = vmatprep.subr.bf16.mxu0 %v4768
    %6732 = vmatpush1.bf16.xpose.msra.mxu0 %v4767
    %6733 = vmatprep.subr.bf16.mxu0 0
    %6734 = vmatpush1.bf16.xpose.msra.mxu0 0
    %6735 = vmatprep.subr.bf16.mxu0 0
    %6736 = vmatpush1.bf16.xpose.msra.mxu0 0
    %6737 = vmatprep.subr.bf16.mxu0 0
    %6738 = vmatpush1.bf16.xpose.msra.mxu0 0
    %6739 = vmatprep.subr.bf16.mxu0 0
    %6740 = vmatpush1.bf16.xpose.msra.mxu0 0
    %6741 = vmatprep.subr.bf16.mxu0 0
    %6742 = vmatpush1.bf16.xpose.msra.mxu0 0
    %6743 = vmatprep.subr.bf16.mxu0 0
    %6744 = vmatpush1.bf16.xpose.msra.mxu0 0
    %6745 = vmatprep.subr.bf16.mxu0 0
    %6746 = vmatpush1.bf16.xpose.msra.mxu0 0
    %6747 = vmatprep.subr.bf16.mxu0 0
    %6748 = vmatpush1.bf16.xpose.msra.mxu0 0
    %6749 = vmatprep.mubr.bf16.mxu0 %v1161
    %6750 = vmatmul.mubr.bf16.gmra.mrb[0].mxu0 %v1160
    %v6751 = vpop.f32.mrb[0].mxu0
    %v6752 = vadd.f32 %v6712, %v6751
    %v6753 = vpop.f32.mrb[0].mxu0
    %v6754 = vpop.f32.mrb[0].mxu0
    %v6755 = vpop.f32.mrb[0].mxu0
    %6756 = vdwg.mxu0
    %6757 = vmatprep.subr.bf16.mxu0 %v4140
    %6758 = vmatpush1.bf16.xpose.msra.mxu0 %v4139
    %6759 = vmatprep.subr.bf16.mxu0 %v4230
    %6760 = vmatpush1.bf16.xpose.msra.mxu0 %v4229
    %6761 = vmatprep.subr.bf16.mxu0 %v4320
    %6762 = vmatpush1.bf16.xpose.msra.mxu0 %v4319
    %6763 = vmatprep.subr.bf16.mxu0 %v4410
    %6764 = vmatpush1.bf16.xpose.msra.mxu0 %v4409
    %6765 = vmatprep.subr.bf16.mxu0 %v4500
    %6766 = vmatpush1.bf16.xpose.msra.mxu0 %v4499
    %6767 = vmatprep.subr.bf16.mxu0 %v4590
    %6768 = vmatpush1.bf16.xpose.msra.mxu0 %v4589
    %6769 = vmatprep.subr.bf16.mxu0 %v4680
    %6770 = vmatpush1.bf16.xpose.msra.mxu0 %v4679
    %6771 = vmatprep.subr.bf16.mxu0 %v4770
    %6772 = vmatpush1.bf16.xpose.msra.mxu0 %v4769
    %6773 = vmatprep.subr.bf16.mxu0 0
    %6774 = vmatpush1.bf16.xpose.msra.mxu0 0
    %6775 = vmatprep.subr.bf16.mxu0 0
    %6776 = vmatpush1.bf16.xpose.msra.mxu0 0
    %6777 = vmatprep.subr.bf16.mxu0 0
    %6778 = vmatpush1.bf16.xpose.msra.mxu0 0
    %6779 = vmatprep.subr.bf16.mxu0 0
    %6780 = vmatpush1.bf16.xpose.msra.mxu0 0
    %6781 = vmatprep.subr.bf16.mxu0 0
    %6782 = vmatpush1.bf16.xpose.msra.mxu0 0
    %6783 = vmatprep.subr.bf16.mxu0 0
    %6784 = vmatpush1.bf16.xpose.msra.mxu0 0
    %6785 = vmatprep.subr.bf16.mxu0 0
    %6786 = vmatpush1.bf16.xpose.msra.mxu0 0
    %6787 = vmatprep.subr.bf16.mxu0 0
    %6788 = vmatpush1.bf16.xpose.msra.mxu0 0
    %6789 = vmatprep.mubr.bf16.mxu0 %v1163
    %6790 = vmatmul.mubr.bf16.gmra.mrb[0].mxu0 %v1162
    %v6791 = vpop.f32.mrb[0].mxu0
    %v6792 = vadd.f32 %v6752, %v6791
    %v6793 = vpop.f32.mrb[0].mxu0
    %v6794 = vpop.f32.mrb[0].mxu0
    %v6795 = vpop.f32.mrb[0].mxu0
    %6796 = vdwg.mxu0
    %6797 = vmatprep.subr.bf16.mxu0 %v4142
    %6798 = vmatpush1.bf16.xpose.msra.mxu0 %v4141
    %6799 = vmatprep.subr.bf16.mxu0 %v4232
    %6800 = vmatpush1.bf16.xpose.msra.mxu0 %v4231
    %6801 = vmatprep.subr.bf16.mxu0 %v4322
    %6802 = vmatpush1.bf16.xpose.msra.mxu0 %v4321
    %6803 = vmatprep.subr.bf16.mxu0 %v4412
    %6804 = vmatpush1.bf16.xpose.msra.mxu0 %v4411
    %6805 = vmatprep.subr.bf16.mxu0 %v4502
    %6806 = vmatpush1.bf16.xpose.msra.mxu0 %v4501
    %6807 = vmatprep.subr.bf16.mxu0 %v4592
    %6808 = vmatpush1.bf16.xpose.msra.mxu0 %v4591
    %6809 = vmatprep.subr.bf16.mxu0 %v4682
    %6810 = vmatpush1.bf16.xpose.msra.mxu0 %v4681
    %6811 = vmatprep.subr.bf16.mxu0 %v4772
    %6812 = vmatpush1.bf16.xpose.msra.mxu0 %v4771
    %6813 = vmatprep.subr.bf16.mxu0 0
    %6814 = vmatpush1.bf16.xpose.msra.mxu0 0
    %6815 = vmatprep.subr.bf16.mxu0 0
    %6816 = vmatpush1.bf16.xpose.msra.mxu0 0
    %6817 = vmatprep.subr.bf16.mxu0 0
    %6818 = vmatpush1.bf16.xpose.msra.mxu0 0
    %6819 = vmatprep.subr.bf16.mxu0 0
    %6820 = vmatpush1.bf16.xpose.msra.mxu0 0
    %6821 = vmatprep.subr.bf16.mxu0 0
    %6822 = vmatpush1.bf16.xpose.msra.mxu0 0
    %6823 = vmatprep.subr.bf16.mxu0 0
    %6824 = vmatpush1.bf16.xpose.msra.mxu0 0
    %6825 = vmatprep.subr.bf16.mxu0 0
    %6826 = vmatpush1.bf16.xpose.msra.mxu0 0
    %6827 = vmatprep.subr.bf16.mxu0 0
    %6828 = vmatpush1.bf16.xpose.msra.mxu0 0
    %6829 = vmatprep.mubr.bf16.mxu0 %v1165
    %6830 = vmatmul.mubr.bf16.gmra.mrb[0].mxu0 %v1164
    %v6831 = vpop.f32.mrb[0].mxu0
    %v6832 = vadd.f32 %v6792, %v6831
    %v6833 = vpop.f32.mrb[0].mxu0
    %v6834 = vpop.f32.mrb[0].mxu0
    %v6835 = vpop.f32.mrb[0].mxu0
    %6836 = vdwg.mxu0
    %6837 = vmatprep.subr.bf16.mxu0 %v4144
    %6838 = vmatpush1.bf16.xpose.msra.mxu0 %v4143
    %6839 = vmatprep.subr.bf16.mxu0 %v4234
    %6840 = vmatpush1.bf16.xpose.msra.mxu0 %v4233
    %6841 = vmatprep.subr.bf16.mxu0 %v4324
    %6842 = vmatpush1.bf16.xpose.msra.mxu0 %v4323
    %6843 = vmatprep.subr.bf16.mxu0 %v4414
    %6844 = vmatpush1.bf16.xpose.msra.mxu0 %v4413
    %6845 = vmatprep.subr.bf16.mxu0 %v4504
    %6846 = vmatpush1.bf16.xpose.msra.mxu0 %v4503
    %6847 = vmatprep.subr.bf16.mxu0 %v4594
    %6848 = vmatpush1.bf16.xpose.msra.mxu0 %v4593
    %6849 = vmatprep.subr.bf16.mxu0 %v4684
    %6850 = vmatpush1.bf16.xpose.msra.mxu0 %v4683
    %6851 = vmatprep.subr.bf16.mxu0 %v4774
    %6852 = vmatpush1.bf16.xpose.msra.mxu0 %v4773
    %6853 = vmatprep.subr.bf16.mxu0 0
    %6854 = vmatpush1.bf16.xpose.msra.mxu0 0
    %6855 = vmatprep.subr.bf16.mxu0 0
    %6856 = vmatpush1.bf16.xpose.msra.mxu0 0
    %6857 = vmatprep.subr.bf16.mxu0 0
    %6858 = vmatpush1.bf16.xpose.msra.mxu0 0
    %6859 = vmatprep.subr.bf16.mxu0 0
    %6860 = vmatpush1.bf16.xpose.msra.mxu0 0
    %6861 = vmatprep.subr.bf16.mxu0 0
    %6862 = vmatpush1.bf16.xpose.msra.mxu0 0
    %6863 = vmatprep.subr.bf16.mxu0 0
    %6864 = vmatpush1.bf16.xpose.msra.mxu0 0
    %6865 = vmatprep.subr.bf16.mxu0 0
    %6866 = vmatpush1.bf16.xpose.msra.mxu0 0
    %6867 = vmatprep.subr.bf16.mxu0 0
    %6868 = vmatpush1.bf16.xpose.msra.mxu0 0
    %6869 = vmatprep.mubr.bf16.mxu0 %v1167
    %6870 = vmatmul.mubr.bf16.gmra.mrb[0].mxu0 %v1166
    %v6871 = vpop.f32.mrb[0].mxu0
    %v6872 = vadd.f32 %v6832, %v6871
    %v6873 = vpop.f32.mrb[0].mxu0
    %v6874 = vpop.f32.mrb[0].mxu0
    %v6875 = vpop.f32.mrb[0].mxu0
    %6876 = vdwg.mxu0
    %6877 = vmatprep.subr.bf16.mxu0 %v4146
    %6878 = vmatpush1.bf16.xpose.msra.mxu0 %v4145
    %6879 = vmatprep.subr.bf16.mxu0 %v4236
    %6880 = vmatpush1.bf16.xpose.msra.mxu0 %v4235
    %6881 = vmatprep.subr.bf16.mxu0 %v4326
    %6882 = vmatpush1.bf16.xpose.msra.mxu0 %v4325
    %6883 = vmatprep.subr.bf16.mxu0 %v4416
    %6884 = vmatpush1.bf16.xpose.msra.mxu0 %v4415
    %6885 = vmatprep.subr.bf16.mxu0 %v4506
    %6886 = vmatpush1.bf16.xpose.msra.mxu0 %v4505
    %6887 = vmatprep.subr.bf16.mxu0 %v4596
    %6888 = vmatpush1.bf16.xpose.msra.mxu0 %v4595
    %6889 = vmatprep.subr.bf16.mxu0 %v4686
    %6890 = vmatpush1.bf16.xpose.msra.mxu0 %v4685
    %6891 = vmatprep.subr.bf16.mxu0 %v4776
    %6892 = vmatpush1.bf16.xpose.msra.mxu0 %v4775
    %6893 = vmatprep.subr.bf16.mxu0 0
    %6894 = vmatpush1.bf16.xpose.msra.mxu0 0
    %6895 = vmatprep.subr.bf16.mxu0 0
    %6896 = vmatpush1.bf16.xpose.msra.mxu0 0
    %6897 = vmatprep.subr.bf16.mxu0 0
    %6898 = vmatpush1.bf16.xpose.msra.mxu0 0
    %6899 = vmatprep.subr.bf16.mxu0 0
    %6900 = vmatpush1.bf16.xpose.msra.mxu0 0
    %6901 = vmatprep.subr.bf16.mxu0 0
    %6902 = vmatpush1.bf16.xpose.msra.mxu0 0
    %6903 = vmatprep.subr.bf16.mxu0 0
    %6904 = vmatpush1.bf16.xpose.msra.mxu0 0
    %6905 = vmatprep.subr.bf16.mxu0 0
    %6906 = vmatpush1.bf16.xpose.msra.mxu0 0
    %6907 = vmatprep.subr.bf16.mxu0 0
    %6908 = vmatpush1.bf16.xpose.msra.mxu0 0
    %6909 = vmatprep.mubr.bf16.mxu0 %v1169
    %6910 = vmatmul.mubr.bf16.gmra.mrb[0].mxu0 %v1168
    %v6911 = vpop.f32.mrb[0].mxu0
    %v6912 = vadd.f32 %v6872, %v6911
    %v6913 = vpop.f32.mrb[0].mxu0
    %v6914 = vpop.f32.mrb[0].mxu0
    %v6915 = vpop.f32.mrb[0].mxu0
    %6916 = vdwg.mxu0
    %6917 = vmatprep.subr.bf16.mxu0 %v4148
    %6918 = vmatpush1.bf16.xpose.msra.mxu0 %v4147
    %6919 = vmatprep.subr.bf16.mxu0 %v4238
    %6920 = vmatpush1.bf16.xpose.msra.mxu0 %v4237
    %6921 = vmatprep.subr.bf16.mxu0 %v4328
    %6922 = vmatpush1.bf16.xpose.msra.mxu0 %v4327
    %6923 = vmatprep.subr.bf16.mxu0 %v4418
    %6924 = vmatpush1.bf16.xpose.msra.mxu0 %v4417
    %6925 = vmatprep.subr.bf16.mxu0 %v4508
    %6926 = vmatpush1.bf16.xpose.msra.mxu0 %v4507
    %6927 = vmatprep.subr.bf16.mxu0 %v4598
    %6928 = vmatpush1.bf16.xpose.msra.mxu0 %v4597
    %6929 = vmatprep.subr.bf16.mxu0 %v4688
    %6930 = vmatpush1.bf16.xpose.msra.mxu0 %v4687
    %6931 = vmatprep.subr.bf16.mxu0 %v4778
    %6932 = vmatpush1.bf16.xpose.msra.mxu0 %v4777
    %6933 = vmatprep.subr.bf16.mxu0 0
    %6934 = vmatpush1.bf16.xpose.msra.mxu0 0
    %6935 = vmatprep.subr.bf16.mxu0 0
    %6936 = vmatpush1.bf16.xpose.msra.mxu0 0
    %6937 = vmatprep.subr.bf16.mxu0 0
    %6938 = vmatpush1.bf16.xpose.msra.mxu0 0
    %6939 = vmatprep.subr.bf16.mxu0 0
    %6940 = vmatpush1.bf16.xpose.msra.mxu0 0
    %6941 = vmatprep.subr.bf16.mxu0 0
    %6942 = vmatpush1.bf16.xpose.msra.mxu0 0
    %6943 = vmatprep.subr.bf16.mxu0 0
    %6944 = vmatpush1.bf16.xpose.msra.mxu0 0
    %6945 = vmatprep.subr.bf16.mxu0 0
    %6946 = vmatpush1.bf16.xpose.msra.mxu0 0
    %6947 = vmatprep.subr.bf16.mxu0 0
    %6948 = vmatpush1.bf16.xpose.msra.mxu0 0
    %6949 = vmatprep.mubr.bf16.mxu0 %v1171
    %6950 = vmatmul.mubr.bf16.gmra.mrb[0].mxu0 %v1170
    %v6951 = vpop.f32.mrb[0].mxu0
    %v6952 = vadd.f32 %v6912, %v6951
    %v6953 = vpop.f32.mrb[0].mxu0
    %v6954 = vpop.f32.mrb[0].mxu0
    %v6955 = vpop.f32.mrb[0].mxu0
    %6956 = vdwg.mxu0
    %6957 = vmatprep.subr.bf16.mxu0 %v4150
    %6958 = vmatpush1.bf16.xpose.msra.mxu0 %v4149
    %6959 = vmatprep.subr.bf16.mxu0 %v4240
    %6960 = vmatpush1.bf16.xpose.msra.mxu0 %v4239
    %6961 = vmatprep.subr.bf16.mxu0 %v4330
    %6962 = vmatpush1.bf16.xpose.msra.mxu0 %v4329
    %6963 = vmatprep.subr.bf16.mxu0 %v4420
    %6964 = vmatpush1.bf16.xpose.msra.mxu0 %v4419
    %6965 = vmatprep.subr.bf16.mxu0 %v4510
    %6966 = vmatpush1.bf16.xpose.msra.mxu0 %v4509
    %6967 = vmatprep.subr.bf16.mxu0 %v4600
    %6968 = vmatpush1.bf16.xpose.msra.mxu0 %v4599
    %6969 = vmatprep.subr.bf16.mxu0 %v4690
    %6970 = vmatpush1.bf16.xpose.msra.mxu0 %v4689
    %6971 = vmatprep.subr.bf16.mxu0 %v4780
    %6972 = vmatpush1.bf16.xpose.msra.mxu0 %v4779
    %6973 = vmatprep.subr.bf16.mxu0 0
    %6974 = vmatpush1.bf16.xpose.msra.mxu0 0
    %6975 = vmatprep.subr.bf16.mxu0 0
    %6976 = vmatpush1.bf16.xpose.msra.mxu0 0
    %6977 = vmatprep.subr.bf16.mxu0 0
    %6978 = vmatpush1.bf16.xpose.msra.mxu0 0
    %6979 = vmatprep.subr.bf16.mxu0 0
    %6980 = vmatpush1.bf16.xpose.msra.mxu0 0
    %6981 = vmatprep.subr.bf16.mxu0 0
    %6982 = vmatpush1.bf16.xpose.msra.mxu0 0
    %6983 = vmatprep.subr.bf16.mxu0 0
    %6984 = vmatpush1.bf16.xpose.msra.mxu0 0
    %6985 = vmatprep.subr.bf16.mxu0 0
    %6986 = vmatpush1.bf16.xpose.msra.mxu0 0
    %6987 = vmatprep.subr.bf16.mxu0 0
    %6988 = vmatpush1.bf16.xpose.msra.mxu0 0
    %6989 = vmatprep.mubr.bf16.mxu0 %v1173
    %6990 = vmatmul.mubr.bf16.gmra.mrb[0].mxu0 %v1172
    %v6991 = vpop.f32.mrb[0].mxu0
    %v6992 = vadd.f32 %v6952, %v6991
    %v6993 = vpop.f32.mrb[0].mxu0
    %v6994 = vpop.f32.mrb[0].mxu0
    %v6995 = vpop.f32.mrb[0].mxu0
    %6996 = vdwg.mxu0
    %6997 = vmatprep.subr.bf16.mxu0 %v4152
    %6998 = vmatpush1.bf16.xpose.msra.mxu0 %v4151
    %6999 = vmatprep.subr.bf16.mxu0 %v4242
    %7000 = vmatpush1.bf16.xpose.msra.mxu0 %v4241
    %7001 = vmatprep.subr.bf16.mxu0 %v4332
    %7002 = vmatpush1.bf16.xpose.msra.mxu0 %v4331
    %7003 = vmatprep.subr.bf16.mxu0 %v4422
    %7004 = vmatpush1.bf16.xpose.msra.mxu0 %v4421
    %7005 = vmatprep.subr.bf16.mxu0 %v4512
    %7006 = vmatpush1.bf16.xpose.msra.mxu0 %v4511
    %7007 = vmatprep.subr.bf16.mxu0 %v4602
    %7008 = vmatpush1.bf16.xpose.msra.mxu0 %v4601
    %7009 = vmatprep.subr.bf16.mxu0 %v4692
    %7010 = vmatpush1.bf16.xpose.msra.mxu0 %v4691
    %7011 = vmatprep.subr.bf16.mxu0 %v4782
    %7012 = vmatpush1.bf16.xpose.msra.mxu0 %v4781
    %7013 = vmatprep.subr.bf16.mxu0 0
    %7014 = vmatpush1.bf16.xpose.msra.mxu0 0
    %7015 = vmatprep.subr.bf16.mxu0 0
    %7016 = vmatpush1.bf16.xpose.msra.mxu0 0
    %7017 = vmatprep.subr.bf16.mxu0 0
    %7018 = vmatpush1.bf16.xpose.msra.mxu0 0
    %7019 = vmatprep.subr.bf16.mxu0 0
    %7020 = vmatpush1.bf16.xpose.msra.mxu0 0
    %7021 = vmatprep.subr.bf16.mxu0 0
    %7022 = vmatpush1.bf16.xpose.msra.mxu0 0
    %7023 = vmatprep.subr.bf16.mxu0 0
    %7024 = vmatpush1.bf16.xpose.msra.mxu0 0
    %7025 = vmatprep.subr.bf16.mxu0 0
    %7026 = vmatpush1.bf16.xpose.msra.mxu0 0
    %7027 = vmatprep.subr.bf16.mxu0 0
    %7028 = vmatpush1.bf16.xpose.msra.mxu0 0
    %7029 = vmatprep.mubr.bf16.mxu0 %v1175
    %7030 = vmatmul.mubr.bf16.gmra.mrb[0].mxu0 %v1174
    %v7031 = vpop.f32.mrb[0].mxu0
    %v7032 = vadd.f32 %v6992, %v7031
    %v7033 = vpop.f32.mrb[0].mxu0
    %v7034 = vpop.f32.mrb[0].mxu0
    %v7035 = vpop.f32.mrb[0].mxu0
    %7036 = vdwg.mxu0
    %7037 = vmatprep.subr.bf16.mxu0 %v4154
    %7038 = vmatpush1.bf16.xpose.msra.mxu0 %v4153
    %7039 = vmatprep.subr.bf16.mxu0 %v4244
    %7040 = vmatpush1.bf16.xpose.msra.mxu0 %v4243
    %7041 = vmatprep.subr.bf16.mxu0 %v4334
    %7042 = vmatpush1.bf16.xpose.msra.mxu0 %v4333
    %7043 = vmatprep.subr.bf16.mxu0 %v4424
    %7044 = vmatpush1.bf16.xpose.msra.mxu0 %v4423
    %7045 = vmatprep.subr.bf16.mxu0 %v4514
    %7046 = vmatpush1.bf16.xpose.msra.mxu0 %v4513
    %7047 = vmatprep.subr.bf16.mxu0 %v4604
    %7048 = vmatpush1.bf16.xpose.msra.mxu0 %v4603
    %7049 = vmatprep.subr.bf16.mxu0 %v4694
    %7050 = vmatpush1.bf16.xpose.msra.mxu0 %v4693
    %7051 = vmatprep.subr.bf16.mxu0 %v4784
    %7052 = vmatpush1.bf16.xpose.msra.mxu0 %v4783
    %7053 = vmatprep.subr.bf16.mxu0 0
    %7054 = vmatpush1.bf16.xpose.msra.mxu0 0
    %7055 = vmatprep.subr.bf16.mxu0 0
    %7056 = vmatpush1.bf16.xpose.msra.mxu0 0
    %7057 = vmatprep.subr.bf16.mxu0 0
    %7058 = vmatpush1.bf16.xpose.msra.mxu0 0
    %7059 = vmatprep.subr.bf16.mxu0 0
    %7060 = vmatpush1.bf16.xpose.msra.mxu0 0
    %7061 = vmatprep.subr.bf16.mxu0 0
    %7062 = vmatpush1.bf16.xpose.msra.mxu0 0
    %7063 = vmatprep.subr.bf16.mxu0 0
    %7064 = vmatpush1.bf16.xpose.msra.mxu0 0
    %7065 = vmatprep.subr.bf16.mxu0 0
    %7066 = vmatpush1.bf16.xpose.msra.mxu0 0
    %7067 = vmatprep.subr.bf16.mxu0 0
    %7068 = vmatpush1.bf16.xpose.msra.mxu0 0
    %7069 = vmatprep.mubr.bf16.mxu0 %v1177
    %7070 = vmatmul.mubr.bf16.gmra.mrb[0].mxu0 %v1176
    %v7071 = vpop.f32.mrb[0].mxu0
    %v7072 = vadd.f32 %v7032, %v7071
    %v7073 = vpop.f32.mrb[0].mxu0
    %v7074 = vpop.f32.mrb[0].mxu0
    %v7075 = vpop.f32.mrb[0].mxu0
    %7076 = vdwg.mxu0
    %7077 = vmatprep.subr.bf16.mxu0 %v4156
    %7078 = vmatpush1.bf16.xpose.msra.mxu0 %v4155
    %7079 = vmatprep.subr.bf16.mxu0 %v4246
    %7080 = vmatpush1.bf16.xpose.msra.mxu0 %v4245
    %7081 = vmatprep.subr.bf16.mxu0 %v4336
    %7082 = vmatpush1.bf16.xpose.msra.mxu0 %v4335
    %7083 = vmatprep.subr.bf16.mxu0 %v4426
    %7084 = vmatpush1.bf16.xpose.msra.mxu0 %v4425
    %7085 = vmatprep.subr.bf16.mxu0 %v4516
    %7086 = vmatpush1.bf16.xpose.msra.mxu0 %v4515
    %7087 = vmatprep.subr.bf16.mxu0 %v4606
    %7088 = vmatpush1.bf16.xpose.msra.mxu0 %v4605
    %7089 = vmatprep.subr.bf16.mxu0 %v4696
    %7090 = vmatpush1.bf16.xpose.msra.mxu0 %v4695
    %7091 = vmatprep.subr.bf16.mxu0 %v4786
    %7092 = vmatpush1.bf16.xpose.msra.mxu0 %v4785
    %7093 = vmatprep.subr.bf16.mxu0 0
    %7094 = vmatpush1.bf16.xpose.msra.mxu0 0
    %7095 = vmatprep.subr.bf16.mxu0 0
    %7096 = vmatpush1.bf16.xpose.msra.mxu0 0
    %7097 = vmatprep.subr.bf16.mxu0 0
    %7098 = vmatpush1.bf16.xpose.msra.mxu0 0
    %7099 = vmatprep.subr.bf16.mxu0 0
    %7100 = vmatpush1.bf16.xpose.msra.mxu0 0
    %7101 = vmatprep.subr.bf16.mxu0 0
    %7102 = vmatpush1.bf16.xpose.msra.mxu0 0
    %7103 = vmatprep.subr.bf16.mxu0 0
    %7104 = vmatpush1.bf16.xpose.msra.mxu0 0
    %7105 = vmatprep.subr.bf16.mxu0 0
    %7106 = vmatpush1.bf16.xpose.msra.mxu0 0
    %7107 = vmatprep.subr.bf16.mxu0 0
    %7108 = vmatpush1.bf16.xpose.msra.mxu0 0
    %7109 = vmatprep.mubr.bf16.mxu0 %v1179
    %7110 = vmatmul.mubr.bf16.gmra.mrb[0].mxu0 %v1178
    %v7111 = vpop.f32.mrb[0].mxu0
    %v7112 = vadd.f32 %v7072, %v7111
    %v7113 = vpop.f32.mrb[0].mxu0
    %v7114 = vpop.f32.mrb[0].mxu0
    %v7115 = vpop.f32.mrb[0].mxu0
    %7116 = vdwg.mxu0
    %7117 = vmatprep.subr.bf16.mxu0 %v4158
    %7118 = vmatpush1.bf16.xpose.msra.mxu0 %v4157
    %7119 = vmatprep.subr.bf16.mxu0 %v4248
    %7120 = vmatpush1.bf16.xpose.msra.mxu0 %v4247
    %7121 = vmatprep.subr.bf16.mxu0 %v4338
    %7122 = vmatpush1.bf16.xpose.msra.mxu0 %v4337
    %7123 = vmatprep.subr.bf16.mxu0 %v4428
    %7124 = vmatpush1.bf16.xpose.msra.mxu0 %v4427
    %7125 = vmatprep.subr.bf16.mxu0 %v4518
    %7126 = vmatpush1.bf16.xpose.msra.mxu0 %v4517
    %7127 = vmatprep.subr.bf16.mxu0 %v4608
    %7128 = vmatpush1.bf16.xpose.msra.mxu0 %v4607
    %7129 = vmatprep.subr.bf16.mxu0 %v4698
    %7130 = vmatpush1.bf16.xpose.msra.mxu0 %v4697
    %7131 = vmatprep.subr.bf16.mxu0 %v4788
    %7132 = vmatpush1.bf16.xpose.msra.mxu0 %v4787
    %7133 = vmatprep.subr.bf16.mxu0 0
    %7134 = vmatpush1.bf16.xpose.msra.mxu0 0
    %7135 = vmatprep.subr.bf16.mxu0 0
    %7136 = vmatpush1.bf16.xpose.msra.mxu0 0
    %7137 = vmatprep.subr.bf16.mxu0 0
    %7138 = vmatpush1.bf16.xpose.msra.mxu0 0
    %7139 = vmatprep.subr.bf16.mxu0 0
    %7140 = vmatpush1.bf16.xpose.msra.mxu0 0
    %7141 = vmatprep.subr.bf16.mxu0 0
    %7142 = vmatpush1.bf16.xpose.msra.mxu0 0
    %7143 = vmatprep.subr.bf16.mxu0 0
    %7144 = vmatpush1.bf16.xpose.msra.mxu0 0
    %7145 = vmatprep.subr.bf16.mxu0 0
    %7146 = vmatpush1.bf16.xpose.msra.mxu0 0
    %7147 = vmatprep.subr.bf16.mxu0 0
    %7148 = vmatpush1.bf16.xpose.msra.mxu0 0
    %7149 = vmatprep.mubr.bf16.mxu0 %v1181
    %7150 = vmatmul.mubr.bf16.gmra.mrb[0].mxu0 %v1180
    %v7151 = vpop.f32.mrb[0].mxu0
    %v7152 = vadd.f32 %v7112, %v7151
    %v7153 = vpop.f32.mrb[0].mxu0
    %v7154 = vpop.f32.mrb[0].mxu0
    %v7155 = vpop.f32.mrb[0].mxu0
    %7156 = vdwg.mxu0
    %7157 = vmatprep.subr.bf16.mxu0 %v4160
    %7158 = vmatpush1.bf16.xpose.msra.mxu0 %v4159
    %7159 = vmatprep.subr.bf16.mxu0 %v4250
    %7160 = vmatpush1.bf16.xpose.msra.mxu0 %v4249
    %7161 = vmatprep.subr.bf16.mxu0 %v4340
    %7162 = vmatpush1.bf16.xpose.msra.mxu0 %v4339
    %7163 = vmatprep.subr.bf16.mxu0 %v4430
    %7164 = vmatpush1.bf16.xpose.msra.mxu0 %v4429
    %7165 = vmatprep.subr.bf16.mxu0 %v4520
    %7166 = vmatpush1.bf16.xpose.msra.mxu0 %v4519
    %7167 = vmatprep.subr.bf16.mxu0 %v4610
    %7168 = vmatpush1.bf16.xpose.msra.mxu0 %v4609
    %7169 = vmatprep.subr.bf16.mxu0 %v4700
    %7170 = vmatpush1.bf16.xpose.msra.mxu0 %v4699
    %7171 = vmatprep.subr.bf16.mxu0 %v4790
    %7172 = vmatpush1.bf16.xpose.msra.mxu0 %v4789
    %7173 = vmatprep.subr.bf16.mxu0 0
    %7174 = vmatpush1.bf16.xpose.msra.mxu0 0
    %7175 = vmatprep.subr.bf16.mxu0 0
    %7176 = vmatpush1.bf16.xpose.msra.mxu0 0
    %7177 = vmatprep.subr.bf16.mxu0 0
    %7178 = vmatpush1.bf16.xpose.msra.mxu0 0
    %7179 = vmatprep.subr.bf16.mxu0 0
    %7180 = vmatpush1.bf16.xpose.msra.mxu0 0
    %7181 = vmatprep.subr.bf16.mxu0 0
    %7182 = vmatpush1.bf16.xpose.msra.mxu0 0
    %7183 = vmatprep.subr.bf16.mxu0 0
    %7184 = vmatpush1.bf16.xpose.msra.mxu0 0
    %7185 = vmatprep.subr.bf16.mxu0 0
    %7186 = vmatpush1.bf16.xpose.msra.mxu0 0
    %7187 = vmatprep.subr.bf16.mxu0 0
    %7188 = vmatpush1.bf16.xpose.msra.mxu0 0
    %7189 = vmatprep.mubr.bf16.mxu0 %v1183
    %7190 = vmatmul.mubr.bf16.gmra.mrb[0].mxu0 %v1182
    %v7191 = vpop.f32.mrb[0].mxu0
    %v7192 = vadd.f32 %v7152, %v7191
    %v7193 = vpop.f32.mrb[0].mxu0
    %v7194 = vpop.f32.mrb[0].mxu0
    %v7195 = vpop.f32.mrb[0].mxu0
    %7196 = vdwg.mxu0
    %7197 = vmatprep.subr.bf16.mxu0 %v4162
    %7198 = vmatpush1.bf16.xpose.msra.mxu0 %v4161
    %7199 = vmatprep.subr.bf16.mxu0 %v4252
    %7200 = vmatpush1.bf16.xpose.msra.mxu0 %v4251
    %7201 = vmatprep.subr.bf16.mxu0 %v4342
    %7202 = vmatpush1.bf16.xpose.msra.mxu0 %v4341
    %7203 = vmatprep.subr.bf16.mxu0 %v4432
    %7204 = vmatpush1.bf16.xpose.msra.mxu0 %v4431
    %7205 = vmatprep.subr.bf16.mxu0 %v4522
    %7206 = vmatpush1.bf16.xpose.msra.mxu0 %v4521
    %7207 = vmatprep.subr.bf16.mxu0 %v4612
    %7208 = vmatpush1.bf16.xpose.msra.mxu0 %v4611
    %7209 = vmatprep.subr.bf16.mxu0 %v4702
    %7210 = vmatpush1.bf16.xpose.msra.mxu0 %v4701
    %7211 = vmatprep.subr.bf16.mxu0 %v4792
    %7212 = vmatpush1.bf16.xpose.msra.mxu0 %v4791
    %7213 = vmatprep.subr.bf16.mxu0 0
    %7214 = vmatpush1.bf16.xpose.msra.mxu0 0
    %7215 = vmatprep.subr.bf16.mxu0 0
    %7216 = vmatpush1.bf16.xpose.msra.mxu0 0
    %7217 = vmatprep.subr.bf16.mxu0 0
    %7218 = vmatpush1.bf16.xpose.msra.mxu0 0
    %7219 = vmatprep.subr.bf16.mxu0 0
    %7220 = vmatpush1.bf16.xpose.msra.mxu0 0
    %7221 = vmatprep.subr.bf16.mxu0 0
    %7222 = vmatpush1.bf16.xpose.msra.mxu0 0
    %7223 = vmatprep.subr.bf16.mxu0 0
    %7224 = vmatpush1.bf16.xpose.msra.mxu0 0
    %7225 = vmatprep.subr.bf16.mxu0 0
    %7226 = vmatpush1.bf16.xpose.msra.mxu0 0
    %7227 = vmatprep.subr.bf16.mxu0 0
    %7228 = vmatpush1.bf16.xpose.msra.mxu0 0
    %7229 = vmatprep.mubr.bf16.mxu0 %v1185
    %7230 = vmatmul.mubr.bf16.gmra.mrb[0].mxu0 %v1184
    %v7231 = vpop.f32.mrb[0].mxu0
    %v7232 = vadd.f32 %v7192, %v7231
    %v7233 = vpop.f32.mrb[0].mxu0
    %v7234 = vpop.f32.mrb[0].mxu0
    %v7235 = vpop.f32.mrb[0].mxu0
    %7236 = vdwg.mxu0
    %7237 = vmatprep.subr.bf16.mxu0 %v4164
    %7238 = vmatpush1.bf16.xpose.msra.mxu0 %v4163
    %7239 = vmatprep.subr.bf16.mxu0 %v4254
    %7240 = vmatpush1.bf16.xpose.msra.mxu0 %v4253
    %7241 = vmatprep.subr.bf16.mxu0 %v4344
    %7242 = vmatpush1.bf16.xpose.msra.mxu0 %v4343
    %7243 = vmatprep.subr.bf16.mxu0 %v4434
    %7244 = vmatpush1.bf16.xpose.msra.mxu0 %v4433
    %7245 = vmatprep.subr.bf16.mxu0 %v4524
    %7246 = vmatpush1.bf16.xpose.msra.mxu0 %v4523
    %7247 = vmatprep.subr.bf16.mxu0 %v4614
    %7248 = vmatpush1.bf16.xpose.msra.mxu0 %v4613
    %7249 = vmatprep.subr.bf16.mxu0 %v4704
    %7250 = vmatpush1.bf16.xpose.msra.mxu0 %v4703
    %7251 = vmatprep.subr.bf16.mxu0 %v4794
    %7252 = vmatpush1.bf16.xpose.msra.mxu0 %v4793
    %7253 = vmatprep.subr.bf16.mxu0 0
    %7254 = vmatpush1.bf16.xpose.msra.mxu0 0
    %7255 = vmatprep.subr.bf16.mxu0 0
    %7256 = vmatpush1.bf16.xpose.msra.mxu0 0
    %7257 = vmatprep.subr.bf16.mxu0 0
    %7258 = vmatpush1.bf16.xpose.msra.mxu0 0
    %7259 = vmatprep.subr.bf16.mxu0 0
    %7260 = vmatpush1.bf16.xpose.msra.mxu0 0
    %7261 = vmatprep.subr.bf16.mxu0 0
    %7262 = vmatpush1.bf16.xpose.msra.mxu0 0
    %7263 = vmatprep.subr.bf16.mxu0 0
    %7264 = vmatpush1.bf16.xpose.msra.mxu0 0
    %7265 = vmatprep.subr.bf16.mxu0 0
    %7266 = vmatpush1.bf16.xpose.msra.mxu0 0
    %7267 = vmatprep.subr.bf16.mxu0 0
    %7268 = vmatpush1.bf16.xpose.msra.mxu0 0
    %7269 = vmatprep.mubr.bf16.mxu0 %v1187
    %7270 = vmatmul.mubr.bf16.gmra.mrb[0].mxu0 %v1186
    %v7271 = vpop.f32.mrb[0].mxu0
    %v7272 = vadd.f32 %v7232, %v7271
    %v7273 = vpop.f32.mrb[0].mxu0
    %v7274 = vpop.f32.mrb[0].mxu0
    %v7275 = vpop.f32.mrb[0].mxu0
    %7276 = vdwg.mxu0
    %7277 = vmatprep.subr.bf16.mxu0 %v4166
    %7278 = vmatpush1.bf16.xpose.msra.mxu0 %v4165
    %7279 = vmatprep.subr.bf16.mxu0 %v4256
    %7280 = vmatpush1.bf16.xpose.msra.mxu0 %v4255
    %7281 = vmatprep.subr.bf16.mxu0 %v4346
    %7282 = vmatpush1.bf16.xpose.msra.mxu0 %v4345
    %7283 = vmatprep.subr.bf16.mxu0 %v4436
    %7284 = vmatpush1.bf16.xpose.msra.mxu0 %v4435
    %7285 = vmatprep.subr.bf16.mxu0 %v4526
    %7286 = vmatpush1.bf16.xpose.msra.mxu0 %v4525
    %7287 = vmatprep.subr.bf16.mxu0 %v4616
    %7288 = vmatpush1.bf16.xpose.msra.mxu0 %v4615
    %7289 = vmatprep.subr.bf16.mxu0 %v4706
    %7290 = vmatpush1.bf16.xpose.msra.mxu0 %v4705
    %7291 = vmatprep.subr.bf16.mxu0 %v4796
    %7292 = vmatpush1.bf16.xpose.msra.mxu0 %v4795
    %7293 = vmatprep.subr.bf16.mxu0 0
    %7294 = vmatpush1.bf16.xpose.msra.mxu0 0
    %7295 = vmatprep.subr.bf16.mxu0 0
    %7296 = vmatpush1.bf16.xpose.msra.mxu0 0
    %7297 = vmatprep.subr.bf16.mxu0 0
    %7298 = vmatpush1.bf16.xpose.msra.mxu0 0
    %7299 = vmatprep.subr.bf16.mxu0 0
    %7300 = vmatpush1.bf16.xpose.msra.mxu0 0
    %7301 = vmatprep.subr.bf16.mxu0 0
    %7302 = vmatpush1.bf16.xpose.msra.mxu0 0
    %7303 = vmatprep.subr.bf16.mxu0 0
    %7304 = vmatpush1.bf16.xpose.msra.mxu0 0
    %7305 = vmatprep.subr.bf16.mxu0 0
    %7306 = vmatpush1.bf16.xpose.msra.mxu0 0
    %7307 = vmatprep.subr.bf16.mxu0 0
    %7308 = vmatpush1.bf16.xpose.msra.mxu0 0
    %7309 = vmatprep.mubr.bf16.mxu0 %v1189
    %7310 = vmatmul.mubr.bf16.gmra.mrb[0].mxu0 %v1188
    %v7311 = vpop.f32.mrb[0].mxu0
    %v7312 = vadd.f32 %v7272, %v7311
    %v7313 = vpop.f32.mrb[0].mxu0
    %v7314 = vpop.f32.mrb[0].mxu0
    %v7315 = vpop.f32.mrb[0].mxu0
    %7316 = vdwg.mxu0
    %7317 = vst [vmem:[#allocation2] sm:$0xff] %v7312
    // Predicated region
    $region14: #{edge_classifier_forward.1} parent=1 // pred_check
      _
    $region15: #{edge_classifier_forward.1} parent=1 // pred_check_branch
      %7319 = sbr.rel (0) target = $region17
    $region16: #{edge_classifier_forward.1} parent=1 // pred_region
      %s7321 = ssub.s32 128, 32
      %7322 = vsyncadd [#allocation3], %s7321
      %s7323 = sshll.u32 [#allocation2], 4
      %s7324 = int_to_ptr.vmem [resolvable:$true] %s7323
      %7329 = dma.vmem_to_hbm [thread:$0]  %s7324, 32, %s3, [#allocation3], 32, 32, 2
    $region17: #{edge_classifier_forward.1} parent=1 // pred_fallthru
      _
    // Predicated region
    $region18: #{edge_classifier_forward.1} parent=1 // pred_check
      _
    $region19: #{edge_classifier_forward.1} parent=1 // pred_check_branch
      %7331 = sbr.rel (0) target = $region21
    $region20: #{edge_classifier_forward.1} parent=1 // pred_region
      %7332 = dma.done [#allocation3], 128
    $region21: #{edge_classifier_forward.1} parent=1 // pred_fallthru
      _
    %7333 = vsyncpa [#allocation3], 1

// kernel: edge_classifier_forward.1
$region0: #{edge_classifier_forward.1}
  #allocation0 [shape = 'u32[]', space=smem, size = 0x4, offset = 0x4, fixed_abs, tag = 'smem constant byte address 0x4 - core index']
  #allocation1 [shape = 'u32[144,128]{1,0:T(1,128)}', space=vmem, size = 0x12000, scoped, tag = 'internal scratch']
  %s0 = inlined_call_operand.vmem [shape: f32[2,11520], index: 0, kind: input, shape index: {}]
  %s1 = inlined_call_operand.vmem [shape: bf16[128,11520], index: 1, kind: input, shape index: {}]
  %s2 = inlined_call_operand.vmem [shape: f32[1,128], index: 2, kind: input, shape index: {}]
  %s3 = inlined_call_operand.hbm [shape: f32[2,128], index: 3, kind: output, shape index: {}]
  %s4 = sld [smem:[#allocation0]]
  $region22: #{edge_classifier_forward.1} parent=0
    _
  %s6 = ssub.s32 1, %s4
  %s7 = scalar_select 0, %s6, %s4
  $region1: #{edge_classifier_forward.1} parent=0
    #allocation2 [shape = 'u8[4096]{0}', space=vmem, size = 0x1000, scoped, tag = 'output window, operand 0, single buffered']
    #allocation3 [shape = 's32[1]{0}', space=sflag, size = 0x4, scoped, tag = 'scoped memory for edge_classifier_forward.1']
    %8 = vsyncpa [#allocation3], 0
    // Predicated region
    $region2: #{edge_classifier_forward.1} parent=1 // pred_check
      _
    $region3: #{edge_classifier_forward.1} parent=1 // pred_check_branch
      %10 = sbr.rel (0) target = $region5
    $region4: #{edge_classifier_forward.1} parent=1 // pred_region
      _
    $region5: #{edge_classifier_forward.1} parent=1 // pred_fallthru
      _
    // Predicated region
    $region6: #{edge_classifier_forward.1} parent=1 // pred_check
      _
    $region7: #{edge_classifier_forward.1} parent=1 // pred_check_branch
      %12 = sbr.rel (0) target = $region9
    $region8: #{edge_classifier_forward.1} parent=1 // pred_region
      _
    $region9: #{edge_classifier_forward.1} parent=1 // pred_fallthru
      _
    // Predicated region
    $region10: #{edge_classifier_forward.1} parent=1 // pred_check
      _
    $region11: #{edge_classifier_forward.1} parent=1 // pred_check_branch
      %14 = sbr.rel (0) target = $region13
    $region12: #{edge_classifier_forward.1} parent=1 // pred_region
      _
    $region13: #{edge_classifier_forward.1} parent=1 // pred_fallthru
      _
    %v16 = vld [vmem:[%s0] sm:$0xff]
    %v17 = vld [vmem:[%s0 + $0x8] sm:$0xff]
    %v18 = vld [vmem:[%s0 + $0x10] sm:$0xff]
    %v19 = vld [vmem:[%s0 + $0x18] sm:$0xff]
    %v20 = vld [vmem:[%s0 + $0x20] sm:$0xff]
    %v21 = vld [vmem:[%s0 + $0x28] sm:$0xff]
    %v22 = vld [vmem:[%s0 + $0x30] sm:$0xff]
    %v23 = vld [vmem:[%s0 + $0x38] sm:$0xff]
    %v24 = vld [vmem:[%s0 + $0x40] sm:$0xff]
    %v25 = vld [vmem:[%s0 + $0x48] sm:$0xff]
    %v26 = vld [vmem:[%s0 + $0x50] sm:$0xff]
    %v27 = vld [vmem:[%s0 + $0x58] sm:$0xff]
    %v28 = vld [vmem:[%s0 + $0x60] sm:$0xff]
    %v29 = vld [vmem:[%s0 + $0x68] sm:$0xff]
    %v30 = vld [vmem:[%s0 + $0x70] sm:$0xff]
    %v31 = vld [vmem:[%s0 + $0x78] sm:$0xff]
    %v32 = vld [vmem:[%s0 + $0x80] sm:$0xff]
    %v33 = vld [vmem:[%s0 + $0x88] sm:$0xff]
    %v34 = vld [vmem:[%s0 + $0x90] sm:$0xff]
    %v35 = vld [vmem:[%s0 + $0x98] sm:$0xff]
    %v36 = vld [vmem:[%s0 + $0xa0] sm:$0xff]
    %v37 = vld [vmem:[%s0 + $0xa8] sm:$0xff]
    %v38 = vld [vmem:[%s0 + $0xb0] sm:$0xf]
    %v39 = vld [vmem:[%s0 + $0xb4] sm:$0xff]
    %v40 = vld [vmem:[%s0 + $0xbc] sm:$0xff]
    %v41 = vld [vmem:[%s0 + $0xc4] sm:$0xff]
    %v42 = vld [vmem:[%s0 + $0xcc] sm:$0xff]
    %v43 = vld [vmem:[%s0 + $0xd4] sm:$0xff]
    %v44 = vld [vmem:[%s0 + $0xdc] sm:$0xff]
    %v45 = vld [vmem:[%s0 + $0xe4] sm:$0xff]
    %v46 = vld [vmem:[%s0 + $0xec] sm:$0xff]
    %v47 = vld [vmem:[%s0 + $0xf4] sm:$0xff]
    %v48 = vld [vmem:[%s0 + $0xfc] sm:$0xff]
    %v49 = vld [vmem:[%s0 + $0x104] sm:$0xff]
    %v50 = vld [vmem:[%s0 + $0x10c] sm:$0xff]
    %v51 = vld [vmem:[%s0 + $0x114] sm:$0xff]
    %v52 = vld [vmem:[%s0 + $0x11c] sm:$0xff]
    %v53 = vld [vmem:[%s0 + $0x124] sm:$0xff]
    %v54 = vld [vmem:[%s0 + $0x12c] sm:$0xff]
    %v55 = vld [vmem:[%s0 + $0x134] sm:$0xff]
    %v56 = vld [vmem:[%s0 + $0x13c] sm:$0xff]
    %v57 = vld [vmem:[%s0 + $0x144] sm:$0xff]
    %v58 = vld [vmem:[%s0 + $0x14c] sm:$0xff]
    %v59 = vld [vmem:[%s0 + $0x154] sm:$0xff]
    %v60 = vld [vmem:[%s0 + $0x15c] sm:$0xff]
    %v61 = vld [vmem:[%s0 + $0x164] sm:$0xf]
    %v62 = vld [vmem:[%s0 + $0x168] sm:$0xff]
    %v63 = vld [vmem:[%s0 + $0x170] sm:$0xff]
    %v64 = vld [vmem:[%s0 + $0x178] sm:$0xff]
    %v65 = vld [vmem:[%s0 + $0x180] sm:$0xff]
    %v66 = vld [vmem:[%s0 + $0x188] sm:$0xff]
    %v67 = vld [vmem:[%s0 + $0x190] sm:$0xff]
    %v68 = vld [vmem:[%s0 + $0x198] sm:$0xff]
    %v69 = vld [vmem:[%s0 + $0x1a0] sm:$0xff]
    %v70 = vld [vmem:[%s0 + $0x1a8] sm:$0xff]
    %v71 = vld [vmem:[%s0 + $0x1b0] sm:$0xff]
    %v72 = vld [vmem:[%s0 + $0x1b8] sm:$0xff]
    %v73 = vld [vmem:[%s0 + $0x1c0] sm:$0xff]
    %v74 = vld [vmem:[%s0 + $0x1c8] sm:$0xff]
    %v75 = vld [vmem:[%s0 + $0x1d0] sm:$0xff]
    %v76 = vld [vmem:[%s0 + $0x1d8] sm:$0xff]
    %v77 = vld [vmem:[%s0 + $0x1e0] sm:$0xff]
    %v78 = vld [vmem:[%s0 + $0x1e8] sm:$0xff]
    %v79 = vld [vmem:[%s0 + $0x1f0] sm:$0xff]
    %v80 = vld [vmem:[%s0 + $0x1f8] sm:$0xff]
    %v81 = vld [vmem:[%s0 + $0x200] sm:$0xff]
    %v82 = vld [vmem:[%s0 + $0x208] sm:$0xff]
    %v83 = vld [vmem:[%s0 + $0x210] sm:$0xff]
    %v84 = vld [vmem:[%s0 + $0x218] sm:$0xf]
    %v85 = vld [vmem:[%s0 + $0x21c] sm:$0xff]
    %v86 = vld [vmem:[%s0 + $0x224] sm:$0xff]
    %v87 = vld [vmem:[%s0 + $0x22c] sm:$0xff]
    %v88 = vld [vmem:[%s0 + $0x234] sm:$0xff]
    %v89 = vld [vmem:[%s0 + $0x23c] sm:$0xff]
    %v90 = vld [vmem:[%s0 + $0x244] sm:$0xff]
    %v91 = vld [vmem:[%s0 + $0x24c] sm:$0xff]
    %v92 = vld [vmem:[%s0 + $0x254] sm:$0xff]
    %v93 = vld [vmem:[%s0 + $0x25c] sm:$0xff]
    %v94 = vld [vmem:[%s0 + $0x264] sm:$0xff]
    %v95 = vld [vmem:[%s0 + $0x26c] sm:$0xff]
    %v96 = vld [vmem:[%s0 + $0x274] sm:$0xff]
    %v97 = vld [vmem:[%s0 + $0x27c] sm:$0xff]
    %v98 = vld [vmem:[%s0 + $0x284] sm:$0xff]
    %v99 = vld [vmem:[%s0 + $0x28c] sm:$0xff]
    %v100 = vld [vmem:[%s0 + $0x294] sm:$0xff]
    %v101 = vld [vmem:[%s0 + $0x29c] sm:$0xff]
    %v102 = vld [vmem:[%s0 + $0x2a4] sm:$0xff]
    %v103 = vld [vmem:[%s0 + $0x2ac] sm:$0xff]
    %v104 = vld [vmem:[%s0 + $0x2b4] sm:$0xff]
    %v105 = vld [vmem:[%s0 + $0x2bc] sm:$0xff]
    %v106 = vld [vmem:[%s0 + $0x2c4] sm:$0xff]
    %v107 = vld [vmem:[%s0 + $0x2cc] sm:$0xf]
    %v200 = vcombine.low %v16, %v39
    %v201 = vcombine.high %v16, %v39
    %v202 = vcombine.low %v62, %v85
    %v203 = vcombine.high %v62, %v85
    %v205 = vunpack.c.l.s4 1983009808
    %v206 = vunpack.c.0.s8 %v205
    %v207 = vlaneseq
    %v208 = vshrl.u32 %v207, 7
    %v209 = vsub.s32 %v206, %v208
    %v210 = vrot.slane %v200, %v209
    %v212 = vunpack.c.l.s4 1983009808
    %v213 = vunpack.c.0.s8 %v212
    %v214 = vlaneseq
    %v215 = vshrl.u32 %v214, 7
    %v216 = vsub.s32 %v213, %v215
    %v217 = vrot.slane %v201, %v216
    %v219 = vunpack.c.l.s4 1983009808
    %v220 = vunpack.c.0.s8 %v219
    %v221 = vlaneseq
    %v222 = vshrl.u32 %v221, 7
    %v223 = vsub.s32 %v220, %v222
    %v224 = vrot.slane %v202, %v223
    %v226 = vunpack.c.l.s4 1983009808
    %v227 = vunpack.c.0.s8 %v226
    %v228 = vlaneseq
    %v229 = vshrl.u32 %v228, 7
    %v230 = vsub.s32 %v227, %v229
    %v231 = vrot.slane %v203, %v230
    %v232 = vcombine.low %v210, %v224
    %v233 = vcombine.high %v210, %v224
    %v234 = vcombine.low %v217, %v231
    %v235 = vcombine.high %v217, %v231
    %v236 = vcombine.low %v17, %v40
    %v237 = vcombine.high %v17, %v40
    %v238 = vcombine.low %v63, %v86
    %v239 = vcombine.high %v63, %v86
    %v241 = vunpack.c.l.s4 1983009808
    %v242 = vunpack.c.0.s8 %v241
    %v243 = vlaneseq
    %v244 = vshrl.u32 %v243, 7
    %v245 = vsub.s32 %v242, %v244
    %v246 = vrot.slane %v236, %v245
    %v248 = vunpack.c.l.s4 1983009808
    %v249 = vunpack.c.0.s8 %v248
    %v250 = vlaneseq
    %v251 = vshrl.u32 %v250, 7
    %v252 = vsub.s32 %v249, %v251
    %v253 = vrot.slane %v237, %v252
    %v255 = vunpack.c.l.s4 1983009808
    %v256 = vunpack.c.0.s8 %v255
    %v257 = vlaneseq
    %v258 = vshrl.u32 %v257, 7
    %v259 = vsub.s32 %v256, %v258
    %v260 = vrot.slane %v238, %v259
    %v262 = vunpack.c.l.s4 1983009808
    %v263 = vunpack.c.0.s8 %v262
    %v264 = vlaneseq
    %v265 = vshrl.u32 %v264, 7
    %v266 = vsub.s32 %v263, %v265
    %v267 = vrot.slane %v239, %v266
    %v268 = vcombine.low %v246, %v260
    %v269 = vcombine.high %v246, %v260
    %v270 = vcombine.low %v253, %v267
    %v271 = vcombine.high %v253, %v267
    %v272 = vcombine.low %v18, %v41
    %v273 = vcombine.high %v18, %v41
    %v274 = vcombine.low %v64, %v87
    %v275 = vcombine.high %v64, %v87
    %v277 = vunpack.c.l.s4 1983009808
    %v278 = vunpack.c.0.s8 %v277
    %v279 = vlaneseq
    %v280 = vshrl.u32 %v279, 7
    %v281 = vsub.s32 %v278, %v280
    %v282 = vrot.slane %v272, %v281
    %v284 = vunpack.c.l.s4 1983009808
    %v285 = vunpack.c.0.s8 %v284
    %v286 = vlaneseq
    %v287 = vshrl.u32 %v286, 7
    %v288 = vsub.s32 %v285, %v287
    %v289 = vrot.slane %v273, %v288
    %v291 = vunpack.c.l.s4 1983009808
    %v292 = vunpack.c.0.s8 %v291
    %v293 = vlaneseq
    %v294 = vshrl.u32 %v293, 7
    %v295 = vsub.s32 %v292, %v294
    %v296 = vrot.slane %v274, %v295
    %v298 = vunpack.c.l.s4 1983009808
    %v299 = vunpack.c.0.s8 %v298
    %v300 = vlaneseq
    %v301 = vshrl.u32 %v300, 7
    %v302 = vsub.s32 %v299, %v301
    %v303 = vrot.slane %v275, %v302
    %v304 = vcombine.low %v282, %v296
    %v305 = vcombine.high %v282, %v296
    %v306 = vcombine.low %v289, %v303
    %v307 = vcombine.high %v289, %v303
    %v308 = vcombine.low %v19, %v42
    %v309 = vcombine.high %v19, %v42
    %v310 = vcombine.low %v65, %v88
    %v311 = vcombine.high %v65, %v88
    %v313 = vunpack.c.l.s4 1983009808
    %v314 = vunpack.c.0.s8 %v313
    %v315 = vlaneseq
    %v316 = vshrl.u32 %v315, 7
    %v317 = vsub.s32 %v314, %v316
    %v318 = vrot.slane %v308, %v317
    %v320 = vunpack.c.l.s4 1983009808
    %v321 = vunpack.c.0.s8 %v320
    %v322 = vlaneseq
    %v323 = vshrl.u32 %v322, 7
    %v324 = vsub.s32 %v321, %v323
    %v325 = vrot.slane %v309, %v324
    %v327 = vunpack.c.l.s4 1983009808
    %v328 = vunpack.c.0.s8 %v327
    %v329 = vlaneseq
    %v330 = vshrl.u32 %v329, 7
    %v331 = vsub.s32 %v328, %v330
    %v332 = vrot.slane %v310, %v331
    %v334 = vunpack.c.l.s4 1983009808
    %v335 = vunpack.c.0.s8 %v334
    %v336 = vlaneseq
    %v337 = vshrl.u32 %v336, 7
    %v338 = vsub.s32 %v335, %v337
    %v339 = vrot.slane %v311, %v338
    %v340 = vcombine.low %v318, %v332
    %v341 = vcombine.high %v318, %v332
    %v342 = vcombine.low %v325, %v339
    %v343 = vcombine.high %v325, %v339
    %v344 = vcombine.low %v20, %v43
    %v345 = vcombine.high %v20, %v43
    %v346 = vcombine.low %v66, %v89
    %v347 = vcombine.high %v66, %v89
    %v349 = vunpack.c.l.s4 1983009808
    %v350 = vunpack.c.0.s8 %v349
    %v351 = vlaneseq
    %v352 = vshrl.u32 %v351, 7
    %v353 = vsub.s32 %v350, %v352
    %v354 = vrot.slane %v344, %v353
    %v356 = vunpack.c.l.s4 1983009808
    %v357 = vunpack.c.0.s8 %v356
    %v358 = vlaneseq
    %v359 = vshrl.u32 %v358, 7
    %v360 = vsub.s32 %v357, %v359
    %v361 = vrot.slane %v345, %v360
    %v363 = vunpack.c.l.s4 1983009808
    %v364 = vunpack.c.0.s8 %v363
    %v365 = vlaneseq
    %v366 = vshrl.u32 %v365, 7
    %v367 = vsub.s32 %v364, %v366
    %v368 = vrot.slane %v346, %v367
    %v370 = vunpack.c.l.s4 1983009808
    %v371 = vunpack.c.0.s8 %v370
    %v372 = vlaneseq
    %v373 = vshrl.u32 %v372, 7
    %v374 = vsub.s32 %v371, %v373
    %v375 = vrot.slane %v347, %v374
    %v376 = vcombine.low %v354, %v368
    %v377 = vcombine.high %v354, %v368
    %v378 = vcombine.low %v361, %v375
    %v379 = vcombine.high %v361, %v375
    %v380 = vcombine.low %v21, %v44
    %v381 = vcombine.high %v21, %v44
    %v382 = vcombine.low %v67, %v90
    %v383 = vcombine.high %v67, %v90
    %v385 = vunpack.c.l.s4 1983009808
    %v386 = vunpack.c.0.s8 %v385
    %v387 = vlaneseq
    %v388 = vshrl.u32 %v387, 7
    %v389 = vsub.s32 %v386, %v388
    %v390 = vrot.slane %v380, %v389
    %v392 = vunpack.c.l.s4 1983009808
    %v393 = vunpack.c.0.s8 %v392
    %v394 = vlaneseq
    %v395 = vshrl.u32 %v394, 7
    %v396 = vsub.s32 %v393, %v395
    %v397 = vrot.slane %v381, %v396
    %v399 = vunpack.c.l.s4 1983009808
    %v400 = vunpack.c.0.s8 %v399
    %v401 = vlaneseq
    %v402 = vshrl.u32 %v401, 7
    %v403 = vsub.s32 %v400, %v402
    %v404 = vrot.slane %v382, %v403
    %v406 = vunpack.c.l.s4 1983009808
    %v407 = vunpack.c.0.s8 %v406
    %v408 = vlaneseq
    %v409 = vshrl.u32 %v408, 7
    %v410 = vsub.s32 %v407, %v409
    %v411 = vrot.slane %v383, %v410
    %v412 = vcombine.low %v390, %v404
    %v413 = vcombine.high %v390, %v404
    %v414 = vcombine.low %v397, %v411
    %v415 = vcombine.high %v397, %v411
    %v416 = vcombine.low %v22, %v45
    %v417 = vcombine.high %v22, %v45
    %v418 = vcombine.low %v68, %v91
    %v419 = vcombine.high %v68, %v91
    %v421 = vunpack.c.l.s4 1983009808
    %v422 = vunpack.c.0.s8 %v421
    %v423 = vlaneseq
    %v424 = vshrl.u32 %v423, 7
    %v425 = vsub.s32 %v422, %v424
    %v426 = vrot.slane %v416, %v425
    %v428 = vunpack.c.l.s4 1983009808
    %v429 = vunpack.c.0.s8 %v428
    %v430 = vlaneseq
    %v431 = vshrl.u32 %v430, 7
    %v432 = vsub.s32 %v429, %v431
    %v433 = vrot.slane %v417, %v432
    %v435 = vunpack.c.l.s4 1983009808
    %v436 = vunpack.c.0.s8 %v435
    %v437 = vlaneseq
    %v438 = vshrl.u32 %v437, 7
    %v439 = vsub.s32 %v436, %v438
    %v440 = vrot.slane %v418, %v439
    %v442 = vunpack.c.l.s4 1983009808
    %v443 = vunpack.c.0.s8 %v442
    %v444 = vlaneseq
    %v445 = vshrl.u32 %v444, 7
    %v446 = vsub.s32 %v443, %v445
    %v447 = vrot.slane %v419, %v446
    %v448 = vcombine.low %v426, %v440
    %v449 = vcombine.high %v426, %v440
    %v450 = vcombine.low %v433, %v447
    %v451 = vcombine.high %v433, %v447
    %v452 = vcombine.low %v23, %v46
    %v453 = vcombine.high %v23, %v46
    %v454 = vcombine.low %v69, %v92
    %v455 = vcombine.high %v69, %v92
    %v457 = vunpack.c.l.s4 1983009808
    %v458 = vunpack.c.0.s8 %v457
    %v459 = vlaneseq
    %v460 = vshrl.u32 %v459, 7
    %v461 = vsub.s32 %v458, %v460
    %v462 = vrot.slane %v452, %v461
    %v464 = vunpack.c.l.s4 1983009808
    %v465 = vunpack.c.0.s8 %v464
    %v466 = vlaneseq
    %v467 = vshrl.u32 %v466, 7
    %v468 = vsub.s32 %v465, %v467
    %v469 = vrot.slane %v453, %v468
    %v471 = vunpack.c.l.s4 1983009808
    %v472 = vunpack.c.0.s8 %v471
    %v473 = vlaneseq
    %v474 = vshrl.u32 %v473, 7
    %v475 = vsub.s32 %v472, %v474
    %v476 = vrot.slane %v454, %v475
    %v478 = vunpack.c.l.s4 1983009808
    %v479 = vunpack.c.0.s8 %v478
    %v480 = vlaneseq
    %v481 = vshrl.u32 %v480, 7
    %v482 = vsub.s32 %v479, %v481
    %v483 = vrot.slane %v455, %v482
    %v484 = vcombine.low %v462, %v476
    %v485 = vcombine.high %v462, %v476
    %v486 = vcombine.low %v469, %v483
    %v487 = vcombine.high %v469, %v483
    %v488 = vcombine.low %v24, %v47
    %v489 = vcombine.high %v24, %v47
    %v490 = vcombine.low %v70, %v93
    %v491 = vcombine.high %v70, %v93
    %v493 = vunpack.c.l.s4 1983009808
    %v494 = vunpack.c.0.s8 %v493
    %v495 = vlaneseq
    %v496 = vshrl.u32 %v495, 7
    %v497 = vsub.s32 %v494, %v496
    %v498 = vrot.slane %v488, %v497
    %v500 = vunpack.c.l.s4 1983009808
    %v501 = vunpack.c.0.s8 %v500
    %v502 = vlaneseq
    %v503 = vshrl.u32 %v502, 7
    %v504 = vsub.s32 %v501, %v503
    %v505 = vrot.slane %v489, %v504
    %v507 = vunpack.c.l.s4 1983009808
    %v508 = vunpack.c.0.s8 %v507
    %v509 = vlaneseq
    %v510 = vshrl.u32 %v509, 7
    %v511 = vsub.s32 %v508, %v510
    %v512 = vrot.slane %v490, %v511
    %v514 = vunpack.c.l.s4 1983009808
    %v515 = vunpack.c.0.s8 %v514
    %v516 = vlaneseq
    %v517 = vshrl.u32 %v516, 7
    %v518 = vsub.s32 %v515, %v517
    %v519 = vrot.slane %v491, %v518
    %v520 = vcombine.low %v498, %v512
    %v521 = vcombine.high %v498, %v512
    %v522 = vcombine.low %v505, %v519
    %v523 = vcombine.high %v505, %v519
    %v524 = vcombine.low %v25, %v48
    %v525 = vcombine.high %v25, %v48
    %v526 = vcombine.low %v71, %v94
    %v527 = vcombine.high %v71, %v94
    %v529 = vunpack.c.l.s4 1983009808
    %v530 = vunpack.c.0.s8 %v529
    %v531 = vlaneseq
    %v532 = vshrl.u32 %v531, 7
    %v533 = vsub.s32 %v530, %v532
    %v534 = vrot.slane %v524, %v533
    %v536 = vunpack.c.l.s4 1983009808
    %v537 = vunpack.c.0.s8 %v536
    %v538 = vlaneseq
    %v539 = vshrl.u32 %v538, 7
    %v540 = vsub.s32 %v537, %v539
    %v541 = vrot.slane %v525, %v540
    %v543 = vunpack.c.l.s4 1983009808
    %v544 = vunpack.c.0.s8 %v543
    %v545 = vlaneseq
    %v546 = vshrl.u32 %v545, 7
    %v547 = vsub.s32 %v544, %v546
    %v548 = vrot.slane %v526, %v547
    %v550 = vunpack.c.l.s4 1983009808
    %v551 = vunpack.c.0.s8 %v550
    %v552 = vlaneseq
    %v553 = vshrl.u32 %v552, 7
    %v554 = vsub.s32 %v551, %v553
    %v555 = vrot.slane %v527, %v554
    %v556 = vcombine.low %v534, %v548
    %v557 = vcombine.high %v534, %v548
    %v558 = vcombine.low %v541, %v555
    %v559 = vcombine.high %v541, %v555
    %v560 = vcombine.low %v26, %v49
    %v561 = vcombine.high %v26, %v49
    %v562 = vcombine.low %v72, %v95
    %v563 = vcombine.high %v72, %v95
    %v565 = vunpack.c.l.s4 1983009808
    %v566 = vunpack.c.0.s8 %v565
    %v567 = vlaneseq
    %v568 = vshrl.u32 %v567, 7
    %v569 = vsub.s32 %v566, %v568
    %v570 = vrot.slane %v560, %v569
    %v572 = vunpack.c.l.s4 1983009808
    %v573 = vunpack.c.0.s8 %v572
    %v574 = vlaneseq
    %v575 = vshrl.u32 %v574, 7
    %v576 = vsub.s32 %v573, %v575
    %v577 = vrot.slane %v561, %v576
    %v579 = vunpack.c.l.s4 1983009808
    %v580 = vunpack.c.0.s8 %v579
    %v581 = vlaneseq
    %v582 = vshrl.u32 %v581, 7
    %v583 = vsub.s32 %v580, %v582
    %v584 = vrot.slane %v562, %v583
    %v586 = vunpack.c.l.s4 1983009808
    %v587 = vunpack.c.0.s8 %v586
    %v588 = vlaneseq
    %v589 = vshrl.u32 %v588, 7
    %v590 = vsub.s32 %v587, %v589
    %v591 = vrot.slane %v563, %v590
    %v592 = vcombine.low %v570, %v584
    %v593 = vcombine.high %v570, %v584
    %v594 = vcombine.low %v577, %v591
    %v595 = vcombine.high %v577, %v591
    %v596 = vcombine.low %v27, %v50
    %v597 = vcombine.high %v27, %v50
    %v598 = vcombine.low %v73, %v96
    %v599 = vcombine.high %v73, %v96
    %v601 = vunpack.c.l.s4 1983009808
    %v602 = vunpack.c.0.s8 %v601
    %v603 = vlaneseq
    %v604 = vshrl.u32 %v603, 7
    %v605 = vsub.s32 %v602, %v604
    %v606 = vrot.slane %v596, %v605
    %v608 = vunpack.c.l.s4 1983009808
    %v609 = vunpack.c.0.s8 %v608
    %v610 = vlaneseq
    %v611 = vshrl.u32 %v610, 7
    %v612 = vsub.s32 %v609, %v611
    %v613 = vrot.slane %v597, %v612
    %v615 = vunpack.c.l.s4 1983009808
    %v616 = vunpack.c.0.s8 %v615
    %v617 = vlaneseq
    %v618 = vshrl.u32 %v617, 7
    %v619 = vsub.s32 %v616, %v618
    %v620 = vrot.slane %v598, %v619
    %v622 = vunpack.c.l.s4 1983009808
    %v623 = vunpack.c.0.s8 %v622
    %v624 = vlaneseq
    %v625 = vshrl.u32 %v624, 7
    %v626 = vsub.s32 %v623, %v625
    %v627 = vrot.slane %v599, %v626
    %v628 = vcombine.low %v606, %v620
    %v629 = vcombine.high %v606, %v620
    %v630 = vcombine.low %v613, %v627
    %v631 = vcombine.high %v613, %v627
    %v632 = vcombine.low %v28, %v51
    %v633 = vcombine.high %v28, %v51
    %v634 = vcombine.low %v74, %v97
    %v635 = vcombine.high %v74, %v97
    %v637 = vunpack.c.l.s4 1983009808
    %v638 = vunpack.c.0.s8 %v637
    %v639 = vlaneseq
    %v640 = vshrl.u32 %v639, 7
    %v641 = vsub.s32 %v638, %v640
    %v642 = vrot.slane %v632, %v641
    %v644 = vunpack.c.l.s4 1983009808
    %v645 = vunpack.c.0.s8 %v644
    %v646 = vlaneseq
    %v647 = vshrl.u32 %v646, 7
    %v648 = vsub.s32 %v645, %v647
    %v649 = vrot.slane %v633, %v648
    %v651 = vunpack.c.l.s4 1983009808
    %v652 = vunpack.c.0.s8 %v651
    %v653 = vlaneseq
    %v654 = vshrl.u32 %v653, 7
    %v655 = vsub.s32 %v652, %v654
    %v656 = vrot.slane %v634, %v655
    %v658 = vunpack.c.l.s4 1983009808
    %v659 = vunpack.c.0.s8 %v658
    %v660 = vlaneseq
    %v661 = vshrl.u32 %v660, 7
    %v662 = vsub.s32 %v659, %v661
    %v663 = vrot.slane %v635, %v662
    %v664 = vcombine.low %v642, %v656
    %v665 = vcombine.high %v642, %v656
    %v666 = vcombine.low %v649, %v663
    %v667 = vcombine.high %v649, %v663
    %v668 = vcombine.low %v29, %v52
    %v669 = vcombine.high %v29, %v52
    %v670 = vcombine.low %v75, %v98
    %v671 = vcombine.high %v75, %v98
    %v673 = vunpack.c.l.s4 1983009808
    %v674 = vunpack.c.0.s8 %v673
    %v675 = vlaneseq
    %v676 = vshrl.u32 %v675, 7
    %v677 = vsub.s32 %v674, %v676
    %v678 = vrot.slane %v668, %v677
    %v680 = vunpack.c.l.s4 1983009808
    %v681 = vunpack.c.0.s8 %v680
    %v682 = vlaneseq
    %v683 = vshrl.u32 %v682, 7
    %v684 = vsub.s32 %v681, %v683
    %v685 = vrot.slane %v669, %v684
    %v687 = vunpack.c.l.s4 1983009808
    %v688 = vunpack.c.0.s8 %v687
    %v689 = vlaneseq
    %v690 = vshrl.u32 %v689, 7
    %v691 = vsub.s32 %v688, %v690
    %v692 = vrot.slane %v670, %v691
    %v694 = vunpack.c.l.s4 1983009808
    %v695 = vunpack.c.0.s8 %v694
    %v696 = vlaneseq
    %v697 = vshrl.u32 %v696, 7
    %v698 = vsub.s32 %v695, %v697
    %v699 = vrot.slane %v671, %v698
    %v700 = vcombine.low %v678, %v692
    %v701 = vcombine.high %v678, %v692
    %v702 = vcombine.low %v685, %v699
    %v703 = vcombine.high %v685, %v699
    %v704 = vcombine.low %v30, %v53
    %v705 = vcombine.high %v30, %v53
    %v706 = vcombine.low %v76, %v99
    %v707 = vcombine.high %v76, %v99
    %v709 = vunpack.c.l.s4 1983009808
    %v710 = vunpack.c.0.s8 %v709
    %v711 = vlaneseq
    %v712 = vshrl.u32 %v711, 7
    %v713 = vsub.s32 %v710, %v712
    %v714 = vrot.slane %v704, %v713
    %v716 = vunpack.c.l.s4 1983009808
    %v717 = vunpack.c.0.s8 %v716
    %v718 = vlaneseq
    %v719 = vshrl.u32 %v718, 7
    %v720 = vsub.s32 %v717, %v719
    %v721 = vrot.slane %v705, %v720
    %v723 = vunpack.c.l.s4 1983009808
    %v724 = vunpack.c.0.s8 %v723
    %v725 = vlaneseq
    %v726 = vshrl.u32 %v725, 7
    %v727 = vsub.s32 %v724, %v726
    %v728 = vrot.slane %v706, %v727
    %v730 = vunpack.c.l.s4 1983009808
    %v731 = vunpack.c.0.s8 %v730
    %v732 = vlaneseq
    %v733 = vshrl.u32 %v732, 7
    %v734 = vsub.s32 %v731, %v733
    %v735 = vrot.slane %v707, %v734
    %v736 = vcombine.low %v714, %v728
    %v737 = vcombine.high %v714, %v728
    %v738 = vcombine.low %v721, %v735
    %v739 = vcombine.high %v721, %v735
    %v740 = vcombine.low %v31, %v54
    %v741 = vcombine.high %v31, %v54
    %v742 = vcombine.low %v77, %v100
    %v743 = vcombine.high %v77, %v100
    %v745 = vunpack.c.l.s4 1983009808
    %v746 = vunpack.c.0.s8 %v745
    %v747 = vlaneseq
    %v748 = vshrl.u32 %v747, 7
    %v749 = vsub.s32 %v746, %v748
    %v750 = vrot.slane %v740, %v749
    %v752 = vunpack.c.l.s4 1983009808
    %v753 = vunpack.c.0.s8 %v752
    %v754 = vlaneseq
    %v755 = vshrl.u32 %v754, 7
    %v756 = vsub.s32 %v753, %v755
    %v757 = vrot.slane %v741, %v756
    %v759 = vunpack.c.l.s4 1983009808
    %v760 = vunpack.c.0.s8 %v759
    %v761 = vlaneseq
    %v762 = vshrl.u32 %v761, 7
    %v763 = vsub.s32 %v760, %v762
    %v764 = vrot.slane %v742, %v763
    %v766 = vunpack.c.l.s4 1983009808
    %v767 = vunpack.c.0.s8 %v766
    %v768 = vlaneseq
    %v769 = vshrl.u32 %v768, 7
    %v770 = vsub.s32 %v767, %v769
    %v771 = vrot.slane %v743, %v770
    %v772 = vcombine.low %v750, %v764
    %v773 = vcombine.high %v750, %v764
    %v774 = vcombine.low %v757, %v771
    %v775 = vcombine.high %v757, %v771
    %v776 = vcombine.low %v32, %v55
    %v777 = vcombine.high %v32, %v55
    %v778 = vcombine.low %v78, %v101
    %v779 = vcombine.high %v78, %v101
    %v781 = vunpack.c.l.s4 1983009808
    %v782 = vunpack.c.0.s8 %v781
    %v783 = vlaneseq
    %v784 = vshrl.u32 %v783, 7
    %v785 = vsub.s32 %v782, %v784
    %v786 = vrot.slane %v776, %v785
    %v788 = vunpack.c.l.s4 1983009808
    %v789 = vunpack.c.0.s8 %v788
    %v790 = vlaneseq
    %v791 = vshrl.u32 %v790, 7
    %v792 = vsub.s32 %v789, %v791
    %v793 = vrot.slane %v777, %v792
    %v795 = vunpack.c.l.s4 1983009808
    %v796 = vunpack.c.0.s8 %v795
    %v797 = vlaneseq
    %v798 = vshrl.u32 %v797, 7
    %v799 = vsub.s32 %v796, %v798
    %v800 = vrot.slane %v778, %v799
    %v802 = vunpack.c.l.s4 1983009808
    %v803 = vunpack.c.0.s8 %v802
    %v804 = vlaneseq
    %v805 = vshrl.u32 %v804, 7
    %v806 = vsub.s32 %v803, %v805
    %v807 = vrot.slane %v779, %v806
    %v808 = vcombine.low %v786, %v800
    %v809 = vcombine.high %v786, %v800
    %v810 = vcombine.low %v793, %v807
    %v811 = vcombine.high %v793, %v807
    %v812 = vcombine.low %v33, %v56
    %v813 = vcombine.high %v33, %v56
    %v814 = vcombine.low %v79, %v102
    %v815 = vcombine.high %v79, %v102
    %v817 = vunpack.c.l.s4 1983009808
    %v818 = vunpack.c.0.s8 %v817
    %v819 = vlaneseq
    %v820 = vshrl.u32 %v819, 7
    %v821 = vsub.s32 %v818, %v820
    %v822 = vrot.slane %v812, %v821
    %v824 = vunpack.c.l.s4 1983009808
    %v825 = vunpack.c.0.s8 %v824
    %v826 = vlaneseq
    %v827 = vshrl.u32 %v826, 7
    %v828 = vsub.s32 %v825, %v827
    %v829 = vrot.slane %v813, %v828
    %v831 = vunpack.c.l.s4 1983009808
    %v832 = vunpack.c.0.s8 %v831
    %v833 = vlaneseq
    %v834 = vshrl.u32 %v833, 7
    %v835 = vsub.s32 %v832, %v834
    %v836 = vrot.slane %v814, %v835
    %v838 = vunpack.c.l.s4 1983009808
    %v839 = vunpack.c.0.s8 %v838
    %v840 = vlaneseq
    %v841 = vshrl.u32 %v840, 7
    %v842 = vsub.s32 %v839, %v841
    %v843 = vrot.slane %v815, %v842
    %v844 = vcombine.low %v822, %v836
    %v845 = vcombine.high %v822, %v836
    %v846 = vcombine.low %v829, %v843
    %v847 = vcombine.high %v829, %v843
    %v848 = vcombine.low %v34, %v57
    %v849 = vcombine.high %v34, %v57
    %v850 = vcombine.low %v80, %v103
    %v851 = vcombine.high %v80, %v103
    %v853 = vunpack.c.l.s4 1983009808
    %v854 = vunpack.c.0.s8 %v853
    %v855 = vlaneseq
    %v856 = vshrl.u32 %v855, 7
    %v857 = vsub.s32 %v854, %v856
    %v858 = vrot.slane %v848, %v857
    %v860 = vunpack.c.l.s4 1983009808
    %v861 = vunpack.c.0.s8 %v860
    %v862 = vlaneseq
    %v863 = vshrl.u32 %v862, 7
    %v864 = vsub.s32 %v861, %v863
    %v865 = vrot.slane %v849, %v864
    %v867 = vunpack.c.l.s4 1983009808
    %v868 = vunpack.c.0.s8 %v867
    %v869 = vlaneseq
    %v870 = vshrl.u32 %v869, 7
    %v871 = vsub.s32 %v868, %v870
    %v872 = vrot.slane %v850, %v871
    %v874 = vunpack.c.l.s4 1983009808
    %v875 = vunpack.c.0.s8 %v874
    %v876 = vlaneseq
    %v877 = vshrl.u32 %v876, 7
    %v878 = vsub.s32 %v875, %v877
    %v879 = vrot.slane %v851, %v878
    %v880 = vcombine.low %v858, %v872
    %v881 = vcombine.high %v858, %v872
    %v882 = vcombine.low %v865, %v879
    %v883 = vcombine.high %v865, %v879
    %v884 = vcombine.low %v35, %v58
    %v885 = vcombine.high %v35, %v58
    %v886 = vcombine.low %v81, %v104
    %v887 = vcombine.high %v81, %v104
    %v889 = vunpack.c.l.s4 1983009808
    %v890 = vunpack.c.0.s8 %v889
    %v891 = vlaneseq
    %v892 = vshrl.u32 %v891, 7
    %v893 = vsub.s32 %v890, %v892
    %v894 = vrot.slane %v884, %v893
    %v896 = vunpack.c.l.s4 1983009808
    %v897 = vunpack.c.0.s8 %v896
    %v898 = vlaneseq
    %v899 = vshrl.u32 %v898, 7
    %v900 = vsub.s32 %v897, %v899
    %v901 = vrot.slane %v885, %v900
    %v903 = vunpack.c.l.s4 1983009808
    %v904 = vunpack.c.0.s8 %v903
    %v905 = vlaneseq
    %v906 = vshrl.u32 %v905, 7
    %v907 = vsub.s32 %v904, %v906
    %v908 = vrot.slane %v886, %v907
    %v910 = vunpack.c.l.s4 1983009808
    %v911 = vunpack.c.0.s8 %v910
    %v912 = vlaneseq
    %v913 = vshrl.u32 %v912, 7
    %v914 = vsub.s32 %v911, %v913
    %v915 = vrot.slane %v887, %v914
    %v916 = vcombine.low %v894, %v908
    %v917 = vcombine.high %v894, %v908
    %v918 = vcombine.low %v901, %v915
    %v919 = vcombine.high %v901, %v915
    %v920 = vcombine.low %v36, %v59
    %v921 = vcombine.high %v36, %v59
    %v922 = vcombine.low %v82, %v105
    %v923 = vcombine.high %v82, %v105
    %v925 = vunpack.c.l.s4 1983009808
    %v926 = vunpack.c.0.s8 %v925
    %v927 = vlaneseq
    %v928 = vshrl.u32 %v927, 7
    %v929 = vsub.s32 %v926, %v928
    %v930 = vrot.slane %v920, %v929
    %v932 = vunpack.c.l.s4 1983009808
    %v933 = vunpack.c.0.s8 %v932
    %v934 = vlaneseq
    %v935 = vshrl.u32 %v934, 7
    %v936 = vsub.s32 %v933, %v935
    %v937 = vrot.slane %v921, %v936
    %v939 = vunpack.c.l.s4 1983009808
    %v940 = vunpack.c.0.s8 %v939
    %v941 = vlaneseq
    %v942 = vshrl.u32 %v941, 7
    %v943 = vsub.s32 %v940, %v942
    %v944 = vrot.slane %v922, %v943
    %v946 = vunpack.c.l.s4 1983009808
    %v947 = vunpack.c.0.s8 %v946
    %v948 = vlaneseq
    %v949 = vshrl.u32 %v948, 7
    %v950 = vsub.s32 %v947, %v949
    %v951 = vrot.slane %v923, %v950
    %v952 = vcombine.low %v930, %v944
    %v953 = vcombine.high %v930, %v944
    %v954 = vcombine.low %v937, %v951
    %v955 = vcombine.high %v937, %v951
    %v956 = vcombine.low %v37, %v60
    %v957 = vcombine.high %v37, %v60
    %v958 = vcombine.low %v83, %v106
    %v959 = vcombine.high %v83, %v106
    %v961 = vunpack.c.l.s4 1983009808
    %v962 = vunpack.c.0.s8 %v961
    %v963 = vlaneseq
    %v964 = vshrl.u32 %v963, 7
    %v965 = vsub.s32 %v962, %v964
    %v966 = vrot.slane %v956, %v965
    %v968 = vunpack.c.l.s4 1983009808
    %v969 = vunpack.c.0.s8 %v968
    %v970 = vlaneseq
    %v971 = vshrl.u32 %v970, 7
    %v972 = vsub.s32 %v969, %v971
    %v973 = vrot.slane %v957, %v972
    %v975 = vunpack.c.l.s4 1983009808
    %v976 = vunpack.c.0.s8 %v975
    %v977 = vlaneseq
    %v978 = vshrl.u32 %v977, 7
    %v979 = vsub.s32 %v976, %v978
    %v980 = vrot.slane %v958, %v979
    %v982 = vunpack.c.l.s4 1983009808
    %v983 = vunpack.c.0.s8 %v982
    %v984 = vlaneseq
    %v985 = vshrl.u32 %v984, 7
    %v986 = vsub.s32 %v983, %v985
    %v987 = vrot.slane %v959, %v986
    %v988 = vcombine.low %v966, %v980
    %v989 = vcombine.high %v966, %v980
    %v990 = vcombine.low %v973, %v987
    %v991 = vcombine.high %v973, %v987
    %v992 = vcombine.low %v38, %v61
    %v993 = vcombine.low %v84, %v107
    %v995 = vunpack.c.l.s4 1983009808
    %v996 = vunpack.c.0.s8 %v995
    %v997 = vlaneseq
    %v998 = vshrl.u32 %v997, 7
    %v999 = vsub.s32 %v996, %v998
    %v1000 = vrot.slane %v992, %v999
    %v1002 = vunpack.c.l.s4 1983009808
    %v1003 = vunpack.c.0.s8 %v1002
    %v1004 = vlaneseq
    %v1005 = vshrl.u32 %v1004, 7
    %v1006 = vsub.s32 %v1003, %v1005
    %v1007 = vrot.slane %v993, %v1006
    %v1008 = vcombine.low %v1000, %v1007
    %v1009 = vcombine.high %v1000, %v1007
    %v1100 = vpack.c.bf16 %v232, %v232
    %v1101 = vpack.c.bf16 %v233, %v233
    %v1102 = vpack.c.bf16 %v234, %v234
    %v1103 = vpack.c.bf16 %v235, %v235
    %v1104 = vpack.c.bf16 %v268, %v268
    %v1105 = vpack.c.bf16 %v269, %v269
    %v1106 = vpack.c.bf16 %v270, %v270
    %v1107 = vpack.c.bf16 %v271, %v271
    %v1108 = vpack.c.bf16 %v304, %v304
    %v1109 = vpack.c.bf16 %v305, %v305
    %v1110 = vpack.c.bf16 %v306, %v306
    %v1111 = vpack.c.bf16 %v307, %v307
    %v1112 = vpack.c.bf16 %v340, %v340
    %v1113 = vpack.c.bf16 %v341, %v341
    %v1114 = vpack.c.bf16 %v342, %v342
    %v1115 = vpack.c.bf16 %v343, %v343
    %v1116 = vpack.c.bf16 %v376, %v376
    %v1117 = vpack.c.bf16 %v377, %v377
    %v1118 = vpack.c.bf16 %v378, %v378
    %v1119 = vpack.c.bf16 %v379, %v379
    %v1120 = vpack.c.bf16 %v412, %v412
    %v1121 = vpack.c.bf16 %v413, %v413
    %v1122 = vpack.c.bf16 %v414, %v414
    %v1123 = vpack.c.bf16 %v415, %v415
    %v1124 = vpack.c.bf16 %v448, %v448
    %v1125 = vpack.c.bf16 %v449, %v449
    %v1126 = vpack.c.bf16 %v450, %v450
    %v1127 = vpack.c.bf16 %v451, %v451
    %v1128 = vpack.c.bf16 %v484, %v484
    %v1129 = vpack.c.bf16 %v485, %v485
    %v1130 = vpack.c.bf16 %v486, %v486
    %v1131 = vpack.c.bf16 %v487, %v487
    %v1132 = vpack.c.bf16 %v520, %v520
    %v1133 = vpack.c.bf16 %v521, %v521
    %v1134 = vpack.c.bf16 %v522, %v522
    %v1135 = vpack.c.bf16 %v523, %v523
    %v1136 = vpack.c.bf16 %v556, %v556
    %v1137 = vpack.c.bf16 %v557, %v557
    %v1138 = vpack.c.bf16 %v558, %v558
    %v1139 = vpack.c.bf16 %v559, %v559
    %v1140 = vpack.c.bf16 %v592, %v592
    %v1141 = vpack.c.bf16 %v593, %v593
    %v1142 = vpack.c.bf16 %v594, %v594
    %v1143 = vpack.c.bf16 %v595, %v595
    %v1144 = vpack.c.bf16 %v628, %v628
    %v1145 = vpack.c.bf16 %v629, %v629
    %v1146 = vpack.c.bf16 %v630, %v630
    %v1147 = vpack.c.bf16 %v631, %v631
    %v1148 = vpack.c.bf16 %v664, %v664
    %v1149 = vpack.c.bf16 %v665, %v665
    %v1150 = vpack.c.bf16 %v666, %v666
    %v1151 = vpack.c.bf16 %v667, %v667
    %v1152 = vpack.c.bf16 %v700, %v700
    %v1153 = vpack.c.bf16 %v701, %v701
    %v1154 = vpack.c.bf16 %v702, %v702
    %v1155 = vpack.c.bf16 %v703, %v703
    %v1156 = vpack.c.bf16 %v736, %v736
    %v1157 = vpack.c.bf16 %v737, %v737
    %v1158 = vpack.c.bf16 %v738, %v738
    %v1159 = vpack.c.bf16 %v739, %v739
    %v1160 = vpack.c.bf16 %v772, %v772
    %v1161 = vpack.c.bf16 %v773, %v773
    %v1162 = vpack.c.bf16 %v774, %v774
    %v1163 = vpack.c.bf16 %v775, %v775
    %v1164 = vpack.c.bf16 %v808, %v808
    %v1165 = vpack.c.bf16 %v809, %v809
    %v1166 = vpack.c.bf16 %v810, %v810
    %v1167 = vpack.c.bf16 %v811, %v811
    %v1168 = vpack.c.bf16 %v844, %v844
    %v1169 = vpack.c.bf16 %v845, %v845
    %v1170 = vpack.c.bf16 %v846, %v846
    %v1171 = vpack.c.bf16 %v847, %v847
    %v1172 = vpack.c.bf16 %v880, %v880
    %v1173 = vpack.c.bf16 %v881, %v881
    %v1174 = vpack.c.bf16 %v882, %v882
    %v1175 = vpack.c.bf16 %v883, %v883
    %v1176 = vpack.c.bf16 %v916, %v916
    %v1177 = vpack.c.bf16 %v917, %v917
    %v1178 = vpack.c.bf16 %v918, %v918
    %v1179 = vpack.c.bf16 %v919, %v919
    %v1180 = vpack.c.bf16 %v952, %v952
    %v1181 = vpack.c.bf16 %v953, %v953
    %v1182 = vpack.c.bf16 %v954, %v954
    %v1183 = vpack.c.bf16 %v955, %v955
    %v1184 = vpack.c.bf16 %v988, %v988
    %v1185 = vpack.c.bf16 %v989, %v989
    %v1186 = vpack.c.bf16 %v990, %v990
    %v1187 = vpack.c.bf16 %v991, %v991
    %v1188 = vpack.c.bf16 %v1008, %v1008
    %v1189 = vpack.c.bf16 %v1009, %v1009
    %v1190 = vld [vmem:[%s1] sm:$0xff]
    %v1191 = vld [vmem:[%s1 + $0x8] sm:$0xff]
    %v1192 = vld [vmem:[%s1 + $0x10] sm:$0xff]
    %v1193 = vld [vmem:[%s1 + $0x18] sm:$0xff]
    %v1194 = vld [vmem:[%s1 + $0x20] sm:$0xff]
    %v1195 = vld [vmem:[%s1 + $0x28] sm:$0xff]
    %v1196 = vld [vmem:[%s1 + $0x30] sm:$0xff]
    %v1197 = vld [vmem:[%s1 + $0x38] sm:$0xff]
    %v1198 = vld [vmem:[%s1 + $0x40] sm:$0xff]
    %v1199 = vld [vmem:[%s1 + $0x48] sm:$0xff]
    %v1200 = vld [vmem:[%s1 + $0x50] sm:$0xff]
    %v1201 = vld [vmem:[%s1 + $0x58] sm:$0xff]
    %v1202 = vld [vmem:[%s1 + $0x60] sm:$0xff]
    %v1203 = vld [vmem:[%s1 + $0x68] sm:$0xff]
    %v1204 = vld [vmem:[%s1 + $0x70] sm:$0xff]
    %v1205 = vld [vmem:[%s1 + $0x78] sm:$0xff]
    %v1206 = vld [vmem:[%s1 + $0x80] sm:$0xff]
    %v1207 = vld [vmem:[%s1 + $0x88] sm:$0xff]
    %v1208 = vld [vmem:[%s1 + $0x90] sm:$0xff]
    %v1209 = vld [vmem:[%s1 + $0x98] sm:$0xff]
    %v1210 = vld [vmem:[%s1 + $0xa0] sm:$0xff]
    %v1211 = vld [vmem:[%s1 + $0xa8] sm:$0xff]
    %v1212 = vld [vmem:[%s1 + $0xb0] sm:$0xff]
    %v1213 = vld [vmem:[%s1 + $0xb8] sm:$0xff]
    %v1214 = vld [vmem:[%s1 + $0xc0] sm:$0xff]
    %v1215 = vld [vmem:[%s1 + $0xc8] sm:$0xff]
    %v1216 = vld [vmem:[%s1 + $0xd0] sm:$0xff]
    %v1217 = vld [vmem:[%s1 + $0xd8] sm:$0xff]
    %v1218 = vld [vmem:[%s1 + $0xe0] sm:$0xff]
    %v1219 = vld [vmem:[%s1 + $0xe8] sm:$0xff]
    %v1220 = vld [vmem:[%s1 + $0xf0] sm:$0xff]
    %v1221 = vld [vmem:[%s1 + $0xf8] sm:$0xff]
    %v1222 = vld [vmem:[%s1 + $0x100] sm:$0xff]
    %v1223 = vld [vmem:[%s1 + $0x108] sm:$0xff]
    %v1224 = vld [vmem:[%s1 + $0x110] sm:$0xff]
    %v1225 = vld [vmem:[%s1 + $0x118] sm:$0xff]
    %v1226 = vld [vmem:[%s1 + $0x120] sm:$0xff]
    %v1227 = vld [vmem:[%s1 + $0x128] sm:$0xff]
    %v1228 = vld [vmem:[%s1 + $0x130] sm:$0xff]
    %v1229 = vld [vmem:[%s1 + $0x138] sm:$0xff]
    %v1230 = vld [vmem:[%s1 + $0x140] sm:$0xff]
    %v1231 = vld [vmem:[%s1 + $0x148] sm:$0xff]
    %v1232 = vld [vmem:[%s1 + $0x150] sm:$0xff]
    %v1233 = vld [vmem:[%s1 + $0x158] sm:$0xff]
    %v1234 = vld [vmem:[%s1 + $0x160] sm:$0xff]
    %v1235 = vld [vmem:[%s1 + $0x168] sm:$0xff]
    %v1236 = vld [vmem:[%s1 + $0x170] sm:$0xff]
    %v1237 = vld [vmem:[%s1 + $0x178] sm:$0xff]
    %v1238 = vld [vmem:[%s1 + $0x180] sm:$0xff]
    %v1239 = vld [vmem:[%s1 + $0x188] sm:$0xff]
    %v1240 = vld [vmem:[%s1 + $0x190] sm:$0xff]
    %v1241 = vld [vmem:[%s1 + $0x198] sm:$0xff]
    %v1242 = vld [vmem:[%s1 + $0x1a0] sm:$0xff]
    %v1243 = vld [vmem:[%s1 + $0x1a8] sm:$0xff]
    %v1244 = vld [vmem:[%s1 + $0x1b0] sm:$0xff]
    %v1245 = vld [vmem:[%s1 + $0x1b8] sm:$0xff]
    %v1246 = vld [vmem:[%s1 + $0x1c0] sm:$0xff]
    %v1247 = vld [vmem:[%s1 + $0x1c8] sm:$0xff]
    %v1248 = vld [vmem:[%s1 + $0x1d0] sm:$0xff]
    %v1249 = vld [vmem:[%s1 + $0x1d8] sm:$0xff]
    %v1250 = vld [vmem:[%s1 + $0x1e0] sm:$0xff]
    %v1251 = vld [vmem:[%s1 + $0x1e8] sm:$0xff]
    %v1252 = vld [vmem:[%s1 + $0x1f0] sm:$0xff]
    %v1253 = vld [vmem:[%s1 + $0x1f8] sm:$0xff]
    %v1254 = vld [vmem:[%s1 + $0x200] sm:$0xff]
    %v1255 = vld [vmem:[%s1 + $0x208] sm:$0xff]
    %v1256 = vld [vmem:[%s1 + $0x210] sm:$0xff]
    %v1257 = vld [vmem:[%s1 + $0x218] sm:$0xff]
    %v1258 = vld [vmem:[%s1 + $0x220] sm:$0xff]
    %v1259 = vld [vmem:[%s1 + $0x228] sm:$0xff]
    %v1260 = vld [vmem:[%s1 + $0x230] sm:$0xff]
    %v1261 = vld [vmem:[%s1 + $0x238] sm:$0xff]
    %v1262 = vld [vmem:[%s1 + $0x240] sm:$0xff]
    %v1263 = vld [vmem:[%s1 + $0x248] sm:$0xff]
    %v1264 = vld [vmem:[%s1 + $0x250] sm:$0xff]
    %v1265 = vld [vmem:[%s1 + $0x258] sm:$0xff]
    %v1266 = vld [vmem:[%s1 + $0x260] sm:$0xff]
    %v1267 = vld [vmem:[%s1 + $0x268] sm:$0xff]
    %v1268 = vld [vmem:[%s1 + $0x270] sm:$0xff]
    %v1269 = vld [vmem:[%s1 + $0x278] sm:$0xff]
    %v1270 = vld [vmem:[%s1 + $0x280] sm:$0xff]
    %v1271 = vld [vmem:[%s1 + $0x288] sm:$0xff]
    %v1272 = vld [vmem:[%s1 + $0x290] sm:$0xff]
    %v1273 = vld [vmem:[%s1 + $0x298] sm:$0xff]
    %v1274 = vld [vmem:[%s1 + $0x2a0] sm:$0xff]
    %v1275 = vld [vmem:[%s1 + $0x2a8] sm:$0xff]
    %v1276 = vld [vmem:[%s1 + $0x2b0] sm:$0xff]
    %v1277 = vld [vmem:[%s1 + $0x2b8] sm:$0xff]
    %v1278 = vld [vmem:[%s1 + $0x2c0] sm:$0xff]
    %v1279 = vld [vmem:[%s1 + $0x2c8] sm:$0xff]
    %v1280 = vld [vmem:[%s1 + $0x2d0] sm:$0xff]
    %v1281 = vld [vmem:[%s1 + $0x2d8] sm:$0xff]
    %v1282 = vld [vmem:[%s1 + $0x2e0] sm:$0xff]
    %v1283 = vld [vmem:[%s1 + $0x2e8] sm:$0xff]
    %v1284 = vld [vmem:[%s1 + $0x2f0] sm:$0xff]
    %v1285 = vld [vmem:[%s1 + $0x2f8] sm:$0xff]
    %v1286 = vld [vmem:[%s1 + $0x300] sm:$0xff]
    %v1287 = vld [vmem:[%s1 + $0x308] sm:$0xff]
    %v1288 = vld [vmem:[%s1 + $0x310] sm:$0xff]
    %v1289 = vld [vmem:[%s1 + $0x318] sm:$0xff]
    %v1290 = vld [vmem:[%s1 + $0x320] sm:$0xff]
    %v1291 = vld [vmem:[%s1 + $0x328] sm:$0xff]
    %v1292 = vld [vmem:[%s1 + $0x330] sm:$0xff]
    %v1293 = vld [vmem:[%s1 + $0x338] sm:$0xff]
    %v1294 = vld [vmem:[%s1 + $0x340] sm:$0xff]
    %v1295 = vld [vmem:[%s1 + $0x348] sm:$0xff]
    %v1296 = vld [vmem:[%s1 + $0x350] sm:$0xff]
    %v1297 = vld [vmem:[%s1 + $0x358] sm:$0xff]
    %v1298 = vld [vmem:[%s1 + $0x360] sm:$0xff]
    %v1299 = vld [vmem:[%s1 + $0x368] sm:$0xff]
    %v1300 = vld [vmem:[%s1 + $0x370] sm:$0xff]
    %v1301 = vld [vmem:[%s1 + $0x378] sm:$0xff]
    %v1302 = vld [vmem:[%s1 + $0x380] sm:$0xff]
    %v1303 = vld [vmem:[%s1 + $0x388] sm:$0xff]
    %v1304 = vld [vmem:[%s1 + $0x390] sm:$0xff]
    %v1305 = vld [vmem:[%s1 + $0x398] sm:$0xff]
    %v1306 = vld [vmem:[%s1 + $0x3a0] sm:$0xff]
    %v1307 = vld [vmem:[%s1 + $0x3a8] sm:$0xff]
    %v1308 = vld [vmem:[%s1 + $0x3b0] sm:$0xff]
    %v1309 = vld [vmem:[%s1 + $0x3b8] sm:$0xff]
    %v1310 = vld [vmem:[%s1 + $0x3c0] sm:$0xff]
    %v1311 = vld [vmem:[%s1 + $0x3c8] sm:$0xff]
    %v1312 = vld [vmem:[%s1 + $0x3d0] sm:$0xff]
    %v1313 = vld [vmem:[%s1 + $0x3d8] sm:$0xff]
    %v1314 = vld [vmem:[%s1 + $0x3e0] sm:$0xff]
    %v1315 = vld [vmem:[%s1 + $0x3e8] sm:$0xff]
    %v1316 = vld [vmem:[%s1 + $0x3f0] sm:$0xff]
    %v1317 = vld [vmem:[%s1 + $0x3f8] sm:$0xff]
    %v1318 = vld [vmem:[%s1 + $0x400] sm:$0xff]
    %v1319 = vld [vmem:[%s1 + $0x408] sm:$0xff]
    %v1320 = vld [vmem:[%s1 + $0x410] sm:$0xff]
    %v1321 = vld [vmem:[%s1 + $0x418] sm:$0xff]
    %v1322 = vld [vmem:[%s1 + $0x420] sm:$0xff]
    %v1323 = vld [vmem:[%s1 + $0x428] sm:$0xff]
    %v1324 = vld [vmem:[%s1 + $0x430] sm:$0xff]
    %v1325 = vld [vmem:[%s1 + $0x438] sm:$0xff]
    %v1326 = vld [vmem:[%s1 + $0x440] sm:$0xff]
    %v1327 = vld [vmem:[%s1 + $0x448] sm:$0xff]
    %v1328 = vld [vmem:[%s1 + $0x450] sm:$0xff]
    %v1329 = vld [vmem:[%s1 + $0x458] sm:$0xff]
    %v1330 = vld [vmem:[%s1 + $0x460] sm:$0xff]
    %v1331 = vld [vmem:[%s1 + $0x468] sm:$0xff]
    %v1332 = vld [vmem:[%s1 + $0x470] sm:$0xff]
    %v1333 = vld [vmem:[%s1 + $0x478] sm:$0xff]
    %v1334 = vld [vmem:[%s1 + $0x480] sm:$0xff]
    %v1335 = vld [vmem:[%s1 + $0x488] sm:$0xff]
    %v1336 = vld [vmem:[%s1 + $0x490] sm:$0xff]
    %v1337 = vld [vmem:[%s1 + $0x498] sm:$0xff]
    %v1338 = vld [vmem:[%s1 + $0x4a0] sm:$0xff]
    %v1339 = vld [vmem:[%s1 + $0x4a8] sm:$0xff]
    %v1340 = vld [vmem:[%s1 + $0x4b0] sm:$0xff]
    %v1341 = vld [vmem:[%s1 + $0x4b8] sm:$0xff]
    %v1342 = vld [vmem:[%s1 + $0x4c0] sm:$0xff]
    %v1343 = vld [vmem:[%s1 + $0x4c8] sm:$0xff]
    %v1344 = vld [vmem:[%s1 + $0x4d0] sm:$0xff]
    %v1345 = vld [vmem:[%s1 + $0x4d8] sm:$0xff]
    %v1346 = vld [vmem:[%s1 + $0x4e0] sm:$0xff]
    %v1347 = vld [vmem:[%s1 + $0x4e8] sm:$0xff]
    %v1348 = vld [vmem:[%s1 + $0x4f0] sm:$0xff]
    %v1349 = vld [vmem:[%s1 + $0x4f8] sm:$0xff]
    %v1350 = vld [vmem:[%s1 + $0x500] sm:$0xff]
    %v1351 = vld [vmem:[%s1 + $0x508] sm:$0xff]
    %v1352 = vld [vmem:[%s1 + $0x510] sm:$0xff]
    %v1353 = vld [vmem:[%s1 + $0x518] sm:$0xff]
    %v1354 = vld [vmem:[%s1 + $0x520] sm:$0xff]
    %v1355 = vld [vmem:[%s1 + $0x528] sm:$0xff]
    %v1356 = vld [vmem:[%s1 + $0x530] sm:$0xff]
    %v1357 = vld [vmem:[%s1 + $0x538] sm:$0xff]
    %v1358 = vld [vmem:[%s1 + $0x540] sm:$0xff]
    %v1359 = vld [vmem:[%s1 + $0x548] sm:$0xff]
    %v1360 = vld [vmem:[%s1 + $0x550] sm:$0xff]
    %v1361 = vld [vmem:[%s1 + $0x558] sm:$0xff]
    %v1362 = vld [vmem:[%s1 + $0x560] sm:$0xff]
    %v1363 = vld [vmem:[%s1 + $0x568] sm:$0xff]
    %v1364 = vld [vmem:[%s1 + $0x570] sm:$0xff]
    %v1365 = vld [vmem:[%s1 + $0x578] sm:$0xff]
    %v1366 = vld [vmem:[%s1 + $0x580] sm:$0xff]
    %v1367 = vld [vmem:[%s1 + $0x588] sm:$0xff]
    %v1368 = vld [vmem:[%s1 + $0x590] sm:$0xff]
    %v1369 = vld [vmem:[%s1 + $0x598] sm:$0xff]
    %v1370 = vld [vmem:[%s1 + $0x5a0] sm:$0xff]
    %v1371 = vld [vmem:[%s1 + $0x5a8] sm:$0xff]
    %v1372 = vld [vmem:[%s1 + $0x5b0] sm:$0xff]
    %v1373 = vld [vmem:[%s1 + $0x5b8] sm:$0xff]
    %v1374 = vld [vmem:[%s1 + $0x5c0] sm:$0xff]
    %v1375 = vld [vmem:[%s1 + $0x5c8] sm:$0xff]
    %v1376 = vld [vmem:[%s1 + $0x5d0] sm:$0xff]
    %v1377 = vld [vmem:[%s1 + $0x5d8] sm:$0xff]
    %v1378 = vld [vmem:[%s1 + $0x5e0] sm:$0xff]
    %v1379 = vld [vmem:[%s1 + $0x5e8] sm:$0xff]
    %v1380 = vld [vmem:[%s1 + $0x5f0] sm:$0xff]
    %v1381 = vld [vmem:[%s1 + $0x5f8] sm:$0xff]
    %v1382 = vld [vmem:[%s1 + $0x600] sm:$0xff]
    %v1383 = vld [vmem:[%s1 + $0x608] sm:$0xff]
    %v1384 = vld [vmem:[%s1 + $0x610] sm:$0xff]
    %v1385 = vld [vmem:[%s1 + $0x618] sm:$0xff]
    %v1386 = vld [vmem:[%s1 + $0x620] sm:$0xff]
    %v1387 = vld [vmem:[%s1 + $0x628] sm:$0xff]
    %v1388 = vld [vmem:[%s1 + $0x630] sm:$0xff]
    %v1389 = vld [vmem:[%s1 + $0x638] sm:$0xff]
    %v1390 = vld [vmem:[%s1 + $0x640] sm:$0xff]
    %v1391 = vld [vmem:[%s1 + $0x648] sm:$0xff]
    %v1392 = vld [vmem:[%s1 + $0x650] sm:$0xff]
    %v1393 = vld [vmem:[%s1 + $0x658] sm:$0xff]
    %v1394 = vld [vmem:[%s1 + $0x660] sm:$0xff]
    %v1395 = vld [vmem:[%s1 + $0x668] sm:$0xff]
    %v1396 = vld [vmem:[%s1 + $0x670] sm:$0xff]
    %v1397 = vld [vmem:[%s1 + $0x678] sm:$0xff]
    %v1398 = vld [vmem:[%s1 + $0x680] sm:$0xff]
    %v1399 = vld [vmem:[%s1 + $0x688] sm:$0xff]
    %v1400 = vld [vmem:[%s1 + $0x690] sm:$0xff]
    %v1401 = vld [vmem:[%s1 + $0x698] sm:$0xff]
    %v1402 = vld [vmem:[%s1 + $0x6a0] sm:$0xff]
    %v1403 = vld [vmem:[%s1 + $0x6a8] sm:$0xff]
    %v1404 = vld [vmem:[%s1 + $0x6b0] sm:$0xff]
    %v1405 = vld [vmem:[%s1 + $0x6b8] sm:$0xff]
    %v1406 = vld [vmem:[%s1 + $0x6c0] sm:$0xff]
    %v1407 = vld [vmem:[%s1 + $0x6c8] sm:$0xff]
    %v1408 = vld [vmem:[%s1 + $0x6d0] sm:$0xff]
    %v1409 = vld [vmem:[%s1 + $0x6d8] sm:$0xff]
    %v1410 = vld [vmem:[%s1 + $0x6e0] sm:$0xff]
    %v1411 = vld [vmem:[%s1 + $0x6e8] sm:$0xff]
    %v1412 = vld [vmem:[%s1 + $0x6f0] sm:$0xff]
    %v1413 = vld [vmem:[%s1 + $0x6f8] sm:$0xff]
    %v1414 = vld [vmem:[%s1 + $0x700] sm:$0xff]
    %v1415 = vld [vmem:[%s1 + $0x708] sm:$0xff]
    %v1416 = vld [vmem:[%s1 + $0x710] sm:$0xff]
    %v1417 = vld [vmem:[%s1 + $0x718] sm:$0xff]
    %v1418 = vld [vmem:[%s1 + $0x720] sm:$0xff]
    %v1419 = vld [vmem:[%s1 + $0x728] sm:$0xff]
    %v1420 = vld [vmem:[%s1 + $0x730] sm:$0xff]
    %v1421 = vld [vmem:[%s1 + $0x738] sm:$0xff]
    %v1422 = vld [vmem:[%s1 + $0x740] sm:$0xff]
    %v1423 = vld [vmem:[%s1 + $0x748] sm:$0xff]
    %v1424 = vld [vmem:[%s1 + $0x750] sm:$0xff]
    %v1425 = vld [vmem:[%s1 + $0x758] sm:$0xff]
    %v1426 = vld [vmem:[%s1 + $0x760] sm:$0xff]
    %v1427 = vld [vmem:[%s1 + $0x768] sm:$0xff]
    %v1428 = vld [vmem:[%s1 + $0x770] sm:$0xff]
    %v1429 = vld [vmem:[%s1 + $0x778] sm:$0xff]
    %v1430 = vld [vmem:[%s1 + $0x780] sm:$0xff]
    %v1431 = vld [vmem:[%s1 + $0x788] sm:$0xff]
    %v1432 = vld [vmem:[%s1 + $0x790] sm:$0xff]
    %v1433 = vld [vmem:[%s1 + $0x798] sm:$0xff]
    %v1434 = vld [vmem:[%s1 + $0x7a0] sm:$0xff]
    %v1435 = vld [vmem:[%s1 + $0x7a8] sm:$0xff]
    %v1436 = vld [vmem:[%s1 + $0x7b0] sm:$0xff]
    %v1437 = vld [vmem:[%s1 + $0x7b8] sm:$0xff]
    %v1438 = vld [vmem:[%s1 + $0x7c0] sm:$0xff]
    %v1439 = vld [vmem:[%s1 + $0x7c8] sm:$0xff]
    %v1440 = vld [vmem:[%s1 + $0x7d0] sm:$0xff]
    %v1441 = vld [vmem:[%s1 + $0x7d8] sm:$0xff]
    %v1442 = vld [vmem:[%s1 + $0x7e0] sm:$0xff]
    %v1443 = vld [vmem:[%s1 + $0x7e8] sm:$0xff]
    %v1444 = vld [vmem:[%s1 + $0x7f0] sm:$0xff]
    %v1445 = vld [vmem:[%s1 + $0x7f8] sm:$0xff]
    %v1446 = vld [vmem:[%s1 + $0x800] sm:$0xff]
    %v1447 = vld [vmem:[%s1 + $0x808] sm:$0xff]
    %v1448 = vld [vmem:[%s1 + $0x810] sm:$0xff]
    %v1449 = vld [vmem:[%s1 + $0x818] sm:$0xff]
    %v1450 = vld [vmem:[%s1 + $0x820] sm:$0xff]
    %v1451 = vld [vmem:[%s1 + $0x828] sm:$0xff]
    %v1452 = vld [vmem:[%s1 + $0x830] sm:$0xff]
    %v1453 = vld [vmem:[%s1 + $0x838] sm:$0xff]
    %v1454 = vld [vmem:[%s1 + $0x840] sm:$0xff]
    %v1455 = vld [vmem:[%s1 + $0x848] sm:$0xff]
    %v1456 = vld [vmem:[%s1 + $0x850] sm:$0xff]
    %v1457 = vld [vmem:[%s1 + $0x858] sm:$0xff]
    %v1458 = vld [vmem:[%s1 + $0x860] sm:$0xff]
    %v1459 = vld [vmem:[%s1 + $0x868] sm:$0xff]
    %v1460 = vld [vmem:[%s1 + $0x870] sm:$0xff]
    %v1461 = vld [vmem:[%s1 + $0x878] sm:$0xff]
    %v1462 = vld [vmem:[%s1 + $0x880] sm:$0xff]
    %v1463 = vld [vmem:[%s1 + $0x888] sm:$0xff]
    %v1464 = vld [vmem:[%s1 + $0x890] sm:$0xff]
    %v1465 = vld [vmem:[%s1 + $0x898] sm:$0xff]
    %v1466 = vld [vmem:[%s1 + $0x8a0] sm:$0xff]
    %v1467 = vld [vmem:[%s1 + $0x8a8] sm:$0xff]
    %v1468 = vld [vmem:[%s1 + $0x8b0] sm:$0xff]
    %v1469 = vld [vmem:[%s1 + $0x8b8] sm:$0xff]
    %v1470 = vld [vmem:[%s1 + $0x8c0] sm:$0xff]
    %v1471 = vld [vmem:[%s1 + $0x8c8] sm:$0xff]
    %v1472 = vld [vmem:[%s1 + $0x8d0] sm:$0xff]
    %v1473 = vld [vmem:[%s1 + $0x8d8] sm:$0xff]
    %v1474 = vld [vmem:[%s1 + $0x8e0] sm:$0xff]
    %v1475 = vld [vmem:[%s1 + $0x8e8] sm:$0xff]
    %v1476 = vld [vmem:[%s1 + $0x8f0] sm:$0xff]
    %v1477 = vld [vmem:[%s1 + $0x8f8] sm:$0xff]
    %v1478 = vld [vmem:[%s1 + $0x900] sm:$0xff]
    %v1479 = vld [vmem:[%s1 + $0x908] sm:$0xff]
    %v1480 = vld [vmem:[%s1 + $0x910] sm:$0xff]
    %v1481 = vld [vmem:[%s1 + $0x918] sm:$0xff]
    %v1482 = vld [vmem:[%s1 + $0x920] sm:$0xff]
    %v1483 = vld [vmem:[%s1 + $0x928] sm:$0xff]
    %v1484 = vld [vmem:[%s1 + $0x930] sm:$0xff]
    %v1485 = vld [vmem:[%s1 + $0x938] sm:$0xff]
    %v1486 = vld [vmem:[%s1 + $0x940] sm:$0xff]
    %v1487 = vld [vmem:[%s1 + $0x948] sm:$0xff]
    %v1488 = vld [vmem:[%s1 + $0x950] sm:$0xff]
    %v1489 = vld [vmem:[%s1 + $0x958] sm:$0xff]
    %v1490 = vld [vmem:[%s1 + $0x960] sm:$0xff]
    %v1491 = vld [vmem:[%s1 + $0x968] sm:$0xff]
    %v1492 = vld [vmem:[%s1 + $0x970] sm:$0xff]
    %v1493 = vld [vmem:[%s1 + $0x978] sm:$0xff]
    %v1494 = vld [vmem:[%s1 + $0x980] sm:$0xff]
    %v1495 = vld [vmem:[%s1 + $0x988] sm:$0xff]
    %v1496 = vld [vmem:[%s1 + $0x990] sm:$0xff]
    %v1497 = vld [vmem:[%s1 + $0x998] sm:$0xff]
    %v1498 = vld [vmem:[%s1 + $0x9a0] sm:$0xff]
    %v1499 = vld [vmem:[%s1 + $0x9a8] sm:$0xff]
    %v1500 = vld [vmem:[%s1 + $0x9b0] sm:$0xff]
    %v1501 = vld [vmem:[%s1 + $0x9b8] sm:$0xff]
    %v1502 = vld [vmem:[%s1 + $0x9c0] sm:$0xff]
    %v1503 = vld [vmem:[%s1 + $0x9c8] sm:$0xff]
    %v1504 = vld [vmem:[%s1 + $0x9d0] sm:$0xff]
    %v1505 = vld [vmem:[%s1 + $0x9d8] sm:$0xff]
    %v1506 = vld [vmem:[%s1 + $0x9e0] sm:$0xff]
    %v1507 = vld [vmem:[%s1 + $0x9e8] sm:$0xff]
    %v1508 = vld [vmem:[%s1 + $0x9f0] sm:$0xff]
    %v1509 = vld [vmem:[%s1 + $0x9f8] sm:$0xff]
    %v1510 = vld [vmem:[%s1 + $0xa00] sm:$0xff]
    %v1511 = vld [vmem:[%s1 + $0xa08] sm:$0xff]
    %v1512 = vld [vmem:[%s1 + $0xa10] sm:$0xff]
    %v1513 = vld [vmem:[%s1 + $0xa18] sm:$0xff]
    %v1514 = vld [vmem:[%s1 + $0xa20] sm:$0xff]
    %v1515 = vld [vmem:[%s1 + $0xa28] sm:$0xff]
    %v1516 = vld [vmem:[%s1 + $0xa30] sm:$0xff]
    %v1517 = vld [vmem:[%s1 + $0xa38] sm:$0xff]
    %v1518 = vld [vmem:[%s1 + $0xa40] sm:$0xff]
    %v1519 = vld [vmem:[%s1 + $0xa48] sm:$0xff]
    %v1520 = vld [vmem:[%s1 + $0xa50] sm:$0xff]
    %v1521 = vld [vmem:[%s1 + $0xa58] sm:$0xff]
    %v1522 = vld [vmem:[%s1 + $0xa60] sm:$0xff]
    %v1523 = vld [vmem:[%s1 + $0xa68] sm:$0xff]
    %v1524 = vld [vmem:[%s1 + $0xa70] sm:$0xff]
    %v1525 = vld [vmem:[%s1 + $0xa78] sm:$0xff]
    %v1526 = vld [vmem:[%s1 + $0xa80] sm:$0xff]
    %v1527 = vld [vmem:[%s1 + $0xa88] sm:$0xff]
    %v1528 = vld [vmem:[%s1 + $0xa90] sm:$0xff]
    %v1529 = vld [vmem:[%s1 + $0xa98] sm:$0xff]
    %v1530 = vld [vmem:[%s1 + $0xaa0] sm:$0xff]
    %v1531 = vld [vmem:[%s1 + $0xaa8] sm:$0xff]
    %v1532 = vld [vmem:[%s1 + $0xab0] sm:$0xff]
    %v1533 = vld [vmem:[%s1 + $0xab8] sm:$0xff]
    %v1534 = vld [vmem:[%s1 + $0xac0] sm:$0xff]
    %v1535 = vld [vmem:[%s1 + $0xac8] sm:$0xff]
    %v1536 = vld [vmem:[%s1 + $0xad0] sm:$0xff]
    %v1537 = vld [vmem:[%s1 + $0xad8] sm:$0xff]
    %v1538 = vld [vmem:[%s1 + $0xae0] sm:$0xff]
    %v1539 = vld [vmem:[%s1 + $0xae8] sm:$0xff]
    %v1540 = vld [vmem:[%s1 + $0xaf0] sm:$0xff]
    %v1541 = vld [vmem:[%s1 + $0xaf8] sm:$0xff]
    %v1542 = vld [vmem:[%s1 + $0xb00] sm:$0xff]
    %v1543 = vld [vmem:[%s1 + $0xb08] sm:$0xff]
    %v1544 = vld [vmem:[%s1 + $0xb10] sm:$0xff]
    %v1545 = vld [vmem:[%s1 + $0xb18] sm:$0xff]
    %v1546 = vld [vmem:[%s1 + $0xb20] sm:$0xff]
    %v1547 = vld [vmem:[%s1 + $0xb28] sm:$0xff]
    %v1548 = vld [vmem:[%s1 + $0xb30] sm:$0xff]
    %v1549 = vld [vmem:[%s1 + $0xb38] sm:$0xff]
    %v1550 = vld [vmem:[%s1 + $0xb40] sm:$0xff]
    %v1551 = vld [vmem:[%s1 + $0xb48] sm:$0xff]
    %v1552 = vld [vmem:[%s1 + $0xb50] sm:$0xff]
    %v1553 = vld [vmem:[%s1 + $0xb58] sm:$0xff]
    %v1554 = vld [vmem:[%s1 + $0xb60] sm:$0xff]
    %v1555 = vld [vmem:[%s1 + $0xb68] sm:$0xff]
    %v1556 = vld [vmem:[%s1 + $0xb70] sm:$0xff]
    %v1557 = vld [vmem:[%s1 + $0xb78] sm:$0xff]
    %v1558 = vld [vmem:[%s1 + $0xb80] sm:$0xff]
    %v1559 = vld [vmem:[%s1 + $0xb88] sm:$0xff]
    %v1560 = vld [vmem:[%s1 + $0xb90] sm:$0xff]
    %v1561 = vld [vmem:[%s1 + $0xb98] sm:$0xff]
    %v1562 = vld [vmem:[%s1 + $0xba0] sm:$0xff]
    %v1563 = vld [vmem:[%s1 + $0xba8] sm:$0xff]
    %v1564 = vld [vmem:[%s1 + $0xbb0] sm:$0xff]
    %v1565 = vld [vmem:[%s1 + $0xbb8] sm:$0xff]
    %v1566 = vld [vmem:[%s1 + $0xbc0] sm:$0xff]
    %v1567 = vld [vmem:[%s1 + $0xbc8] sm:$0xff]
    %v1568 = vld [vmem:[%s1 + $0xbd0] sm:$0xff]
    %v1569 = vld [vmem:[%s1 + $0xbd8] sm:$0xff]
    %v1570 = vld [vmem:[%s1 + $0xbe0] sm:$0xff]
    %v1571 = vld [vmem:[%s1 + $0xbe8] sm:$0xff]
    %v1572 = vld [vmem:[%s1 + $0xbf0] sm:$0xff]
    %v1573 = vld [vmem:[%s1 + $0xbf8] sm:$0xff]
    %v1574 = vld [vmem:[%s1 + $0xc00] sm:$0xff]
    %v1575 = vld [vmem:[%s1 + $0xc08] sm:$0xff]
    %v1576 = vld [vmem:[%s1 + $0xc10] sm:$0xff]
    %v1577 = vld [vmem:[%s1 + $0xc18] sm:$0xff]
    %v1578 = vld [vmem:[%s1 + $0xc20] sm:$0xff]
    %v1579 = vld [vmem:[%s1 + $0xc28] sm:$0xff]
    %v1580 = vld [vmem:[%s1 + $0xc30] sm:$0xff]
    %v1581 = vld [vmem:[%s1 + $0xc38] sm:$0xff]
    %v1582 = vld [vmem:[%s1 + $0xc40] sm:$0xff]
    %v1583 = vld [vmem:[%s1 + $0xc48] sm:$0xff]
    %v1584 = vld [vmem:[%s1 + $0xc50] sm:$0xff]
    %v1585 = vld [vmem:[%s1 + $0xc58] sm:$0xff]
    %v1586 = vld [vmem:[%s1 + $0xc60] sm:$0xff]
    %v1587 = vld [vmem:[%s1 + $0xc68] sm:$0xff]
    %v1588 = vld [vmem:[%s1 + $0xc70] sm:$0xff]
    %v1589 = vld [vmem:[%s1 + $0xc78] sm:$0xff]
    %v1590 = vld [vmem:[%s1 + $0xc80] sm:$0xff]
    %v1591 = vld [vmem:[%s1 + $0xc88] sm:$0xff]
    %v1592 = vld [vmem:[%s1 + $0xc90] sm:$0xff]
    %v1593 = vld [vmem:[%s1 + $0xc98] sm:$0xff]
    %v1594 = vld [vmem:[%s1 + $0xca0] sm:$0xff]
    %v1595 = vld [vmem:[%s1 + $0xca8] sm:$0xff]
    %v1596 = vld [vmem:[%s1 + $0xcb0] sm:$0xff]
    %v1597 = vld [vmem:[%s1 + $0xcb8] sm:$0xff]
    %v1598 = vld [vmem:[%s1 + $0xcc0] sm:$0xff]
    %v1599 = vld [vmem:[%s1 + $0xcc8] sm:$0xff]
    %v1600 = vld [vmem:[%s1 + $0xcd0] sm:$0xff]
    %v1601 = vld [vmem:[%s1 + $0xcd8] sm:$0xff]
    %v1602 = vld [vmem:[%s1 + $0xce0] sm:$0xff]
    %v1603 = vld [vmem:[%s1 + $0xce8] sm:$0xff]
    %v1604 = vld [vmem:[%s1 + $0xcf0] sm:$0xff]
    %v1605 = vld [vmem:[%s1 + $0xcf8] sm:$0xff]
    %v1606 = vld [vmem:[%s1 + $0xd00] sm:$0xff]
    %v1607 = vld [vmem:[%s1 + $0xd08] sm:$0xff]
    %v1608 = vld [vmem:[%s1 + $0xd10] sm:$0xff]
    %v1609 = vld [vmem:[%s1 + $0xd18] sm:$0xff]
    %v1610 = vld [vmem:[%s1 + $0xd20] sm:$0xff]
    %v1611 = vld [vmem:[%s1 + $0xd28] sm:$0xff]
    %v1612 = vld [vmem:[%s1 + $0xd30] sm:$0xff]
    %v1613 = vld [vmem:[%s1 + $0xd38] sm:$0xff]
    %v1614 = vld [vmem:[%s1 + $0xd40] sm:$0xff]
    %v1615 = vld [vmem:[%s1 + $0xd48] sm:$0xff]
    %v1616 = vld [vmem:[%s1 + $0xd50] sm:$0xff]
    %v1617 = vld [vmem:[%s1 + $0xd58] sm:$0xff]
    %v1618 = vld [vmem:[%s1 + $0xd60] sm:$0xff]
    %v1619 = vld [vmem:[%s1 + $0xd68] sm:$0xff]
    %v1620 = vld [vmem:[%s1 + $0xd70] sm:$0xff]
    %v1621 = vld [vmem:[%s1 + $0xd78] sm:$0xff]
    %v1622 = vld [vmem:[%s1 + $0xd80] sm:$0xff]
    %v1623 = vld [vmem:[%s1 + $0xd88] sm:$0xff]
    %v1624 = vld [vmem:[%s1 + $0xd90] sm:$0xff]
    %v1625 = vld [vmem:[%s1 + $0xd98] sm:$0xff]
    %v1626 = vld [vmem:[%s1 + $0xda0] sm:$0xff]
    %v1627 = vld [vmem:[%s1 + $0xda8] sm:$0xff]
    %v1628 = vld [vmem:[%s1 + $0xdb0] sm:$0xff]
    %v1629 = vld [vmem:[%s1 + $0xdb8] sm:$0xff]
    %v1630 = vld [vmem:[%s1 + $0xdc0] sm:$0xff]
    %v1631 = vld [vmem:[%s1 + $0xdc8] sm:$0xff]
    %v1632 = vld [vmem:[%s1 + $0xdd0] sm:$0xff]
    %v1633 = vld [vmem:[%s1 + $0xdd8] sm:$0xff]
    %v1634 = vld [vmem:[%s1 + $0xde0] sm:$0xff]
    %v1635 = vld [vmem:[%s1 + $0xde8] sm:$0xff]
    %v1636 = vld [vmem:[%s1 + $0xdf0] sm:$0xff]
    %v1637 = vld [vmem:[%s1 + $0xdf8] sm:$0xff]
    %v1638 = vld [vmem:[%s1 + $0xe00] sm:$0xff]
    %v1639 = vld [vmem:[%s1 + $0xe08] sm:$0xff]
    %v1640 = vld [vmem:[%s1 + $0xe10] sm:$0xff]
    %v1641 = vld [vmem:[%s1 + $0xe18] sm:$0xff]
    %v1642 = vld [vmem:[%s1 + $0xe20] sm:$0xff]
    %v1643 = vld [vmem:[%s1 + $0xe28] sm:$0xff]
    %v1644 = vld [vmem:[%s1 + $0xe30] sm:$0xff]
    %v1645 = vld [vmem:[%s1 + $0xe38] sm:$0xff]
    %v1646 = vld [vmem:[%s1 + $0xe40] sm:$0xff]
    %v1647 = vld [vmem:[%s1 + $0xe48] sm:$0xff]
    %v1648 = vld [vmem:[%s1 + $0xe50] sm:$0xff]
    %v1649 = vld [vmem:[%s1 + $0xe58] sm:$0xff]
    %v1650 = vld [vmem:[%s1 + $0xe60] sm:$0xff]
    %v1651 = vld [vmem:[%s1 + $0xe68] sm:$0xff]
    %v1652 = vld [vmem:[%s1 + $0xe70] sm:$0xff]
    %v1653 = vld [vmem:[%s1 + $0xe78] sm:$0xff]
    %v1654 = vld [vmem:[%s1 + $0xe80] sm:$0xff]
    %v1655 = vld [vmem:[%s1 + $0xe88] sm:$0xff]
    %v1656 = vld [vmem:[%s1 + $0xe90] sm:$0xff]
    %v1657 = vld [vmem:[%s1 + $0xe98] sm:$0xff]
    %v1658 = vld [vmem:[%s1 + $0xea0] sm:$0xff]
    %v1659 = vld [vmem:[%s1 + $0xea8] sm:$0xff]
    %v1660 = vld [vmem:[%s1 + $0xeb0] sm:$0xff]
    %v1661 = vld [vmem:[%s1 + $0xeb8] sm:$0xff]
    %v1662 = vld [vmem:[%s1 + $0xec0] sm:$0xff]
    %v1663 = vld [vmem:[%s1 + $0xec8] sm:$0xff]
    %v1664 = vld [vmem:[%s1 + $0xed0] sm:$0xff]
    %v1665 = vld [vmem:[%s1 + $0xed8] sm:$0xff]
    %v1666 = vld [vmem:[%s1 + $0xee0] sm:$0xff]
    %v1667 = vld [vmem:[%s1 + $0xee8] sm:$0xff]
    %v1668 = vld [vmem:[%s1 + $0xef0] sm:$0xff]
    %v1669 = vld [vmem:[%s1 + $0xef8] sm:$0xff]
    %v1670 = vld [vmem:[%s1 + $0xf00] sm:$0xff]
    %v1671 = vld [vmem:[%s1 + $0xf08] sm:$0xff]
    %v1672 = vld [vmem:[%s1 + $0xf10] sm:$0xff]
    %v1673 = vld [vmem:[%s1 + $0xf18] sm:$0xff]
    %v1674 = vld [vmem:[%s1 + $0xf20] sm:$0xff]
    %v1675 = vld [vmem:[%s1 + $0xf28] sm:$0xff]
    %v1676 = vld [vmem:[%s1 + $0xf30] sm:$0xff]
    %v1677 = vld [vmem:[%s1 + $0xf38] sm:$0xff]
    %v1678 = vld [vmem:[%s1 + $0xf40] sm:$0xff]
    %v1679 = vld [vmem:[%s1 + $0xf48] sm:$0xff]
    %v1680 = vld [vmem:[%s1 + $0xf50] sm:$0xff]
    %v1681 = vld [vmem:[%s1 + $0xf58] sm:$0xff]
    %v1682 = vld [vmem:[%s1 + $0xf60] sm:$0xff]
    %v1683 = vld [vmem:[%s1 + $0xf68] sm:$0xff]
    %v1684 = vld [vmem:[%s1 + $0xf70] sm:$0xff]
    %v1685 = vld [vmem:[%s1 + $0xf78] sm:$0xff]
    %v1686 = vld [vmem:[%s1 + $0xf80] sm:$0xff]
    %v1687 = vld [vmem:[%s1 + $0xf88] sm:$0xff]
    %v1688 = vld [vmem:[%s1 + $0xf90] sm:$0xff]
    %v1689 = vld [vmem:[%s1 + $0xf98] sm:$0xff]
    %v1690 = vld [vmem:[%s1 + $0xfa0] sm:$0xff]
    %v1691 = vld [vmem:[%s1 + $0xfa8] sm:$0xff]
    %v1692 = vld [vmem:[%s1 + $0xfb0] sm:$0xff]
    %v1693 = vld [vmem:[%s1 + $0xfb8] sm:$0xff]
    %v1694 = vld [vmem:[%s1 + $0xfc0] sm:$0xff]
    %v1695 = vld [vmem:[%s1 + $0xfc8] sm:$0xff]
    %v1696 = vld [vmem:[%s1 + $0xfd0] sm:$0xff]
    %v1697 = vld [vmem:[%s1 + $0xfd8] sm:$0xff]
    %v1698 = vld [vmem:[%s1 + $0xfe0] sm:$0xff]
    %v1699 = vld [vmem:[%s1 + $0xfe8] sm:$0xff]
    %v1700 = vld [vmem:[%s1 + $0xff0] sm:$0xff]
    %v1701 = vld [vmem:[%s1 + $0xff8] sm:$0xff]
    %v1702 = vld [vmem:[%s1 + $0x1000] sm:$0xff]
    %v1703 = vld [vmem:[%s1 + $0x1008] sm:$0xff]
    %v1704 = vld [vmem:[%s1 + $0x1010] sm:$0xff]
    %v1705 = vld [vmem:[%s1 + $0x1018] sm:$0xff]
    %v1706 = vld [vmem:[%s1 + $0x1020] sm:$0xff]
    %v1707 = vld [vmem:[%s1 + $0x1028] sm:$0xff]
    %v1708 = vld [vmem:[%s1 + $0x1030] sm:$0xff]
    %v1709 = vld [vmem:[%s1 + $0x1038] sm:$0xff]
    %v1710 = vld [vmem:[%s1 + $0x1040] sm:$0xff]
    %v1711 = vld [vmem:[%s1 + $0x1048] sm:$0xff]
    %v1712 = vld [vmem:[%s1 + $0x1050] sm:$0xff]
    %v1713 = vld [vmem:[%s1 + $0x1058] sm:$0xff]
    %v1714 = vld [vmem:[%s1 + $0x1060] sm:$0xff]
    %v1715 = vld [vmem:[%s1 + $0x1068] sm:$0xff]
    %v1716 = vld [vmem:[%s1 + $0x1070] sm:$0xff]
    %v1717 = vld [vmem:[%s1 + $0x1078] sm:$0xff]
    %v1718 = vld [vmem:[%s1 + $0x1080] sm:$0xff]
    %v1719 = vld [vmem:[%s1 + $0x1088] sm:$0xff]
    %v1720 = vld [vmem:[%s1 + $0x1090] sm:$0xff]
    %v1721 = vld [vmem:[%s1 + $0x1098] sm:$0xff]
    %v1722 = vld [vmem:[%s1 + $0x10a0] sm:$0xff]
    %v1723 = vld [vmem:[%s1 + $0x10a8] sm:$0xff]
    %v1724 = vld [vmem:[%s1 + $0x10b0] sm:$0xff]
    %v1725 = vld [vmem:[%s1 + $0x10b8] sm:$0xff]
    %v1726 = vld [vmem:[%s1 + $0x10c0] sm:$0xff]
    %v1727 = vld [vmem:[%s1 + $0x10c8] sm:$0xff]
    %v1728 = vld [vmem:[%s1 + $0x10d0] sm:$0xff]
    %v1729 = vld [vmem:[%s1 + $0x10d8] sm:$0xff]
    %v1730 = vld [vmem:[%s1 + $0x10e0] sm:$0xff]
    %v1731 = vld [vmem:[%s1 + $0x10e8] sm:$0xff]
    %v1732 = vld [vmem:[%s1 + $0x10f0] sm:$0xff]
    %v1733 = vld [vmem:[%s1 + $0x10f8] sm:$0xff]
    %v1734 = vld [vmem:[%s1 + $0x1100] sm:$0xff]
    %v1735 = vld [vmem:[%s1 + $0x1108] sm:$0xff]
    %v1736 = vld [vmem:[%s1 + $0x1110] sm:$0xff]
    %v1737 = vld [vmem:[%s1 + $0x1118] sm:$0xff]
    %v1738 = vld [vmem:[%s1 + $0x1120] sm:$0xff]
    %v1739 = vld [vmem:[%s1 + $0x1128] sm:$0xff]
    %v1740 = vld [vmem:[%s1 + $0x1130] sm:$0xff]
    %v1741 = vld [vmem:[%s1 + $0x1138] sm:$0xff]
    %v1742 = vld [vmem:[%s1 + $0x1140] sm:$0xff]
    %v1743 = vld [vmem:[%s1 + $0x1148] sm:$0xff]
    %v1744 = vld [vmem:[%s1 + $0x1150] sm:$0xff]
    %v1745 = vld [vmem:[%s1 + $0x1158] sm:$0xff]
    %v1746 = vld [vmem:[%s1 + $0x1160] sm:$0xff]
    %v1747 = vld [vmem:[%s1 + $0x1168] sm:$0xff]
    %v1748 = vld [vmem:[%s1 + $0x1170] sm:$0xff]
    %v1749 = vld [vmem:[%s1 + $0x1178] sm:$0xff]
    %v1750 = vld [vmem:[%s1 + $0x1180] sm:$0xff]
    %v1751 = vld [vmem:[%s1 + $0x1188] sm:$0xff]
    %v1752 = vld [vmem:[%s1 + $0x1190] sm:$0xff]
    %v1753 = vld [vmem:[%s1 + $0x1198] sm:$0xff]
    %v1754 = vld [vmem:[%s1 + $0x11a0] sm:$0xff]
    %v1755 = vld [vmem:[%s1 + $0x11a8] sm:$0xff]
    %v1756 = vld [vmem:[%s1 + $0x11b0] sm:$0xff]
    %v1757 = vld [vmem:[%s1 + $0x11b8] sm:$0xff]
    %v1758 = vld [vmem:[%s1 + $0x11c0] sm:$0xff]
    %v1759 = vld [vmem:[%s1 + $0x11c8] sm:$0xff]
    %v1760 = vld [vmem:[%s1 + $0x11d0] sm:$0xff]
    %v1761 = vld [vmem:[%s1 + $0x11d8] sm:$0xff]
    %v1762 = vld [vmem:[%s1 + $0x11e0] sm:$0xff]
    %v1763 = vld [vmem:[%s1 + $0x11e8] sm:$0xff]
    %v1764 = vld [vmem:[%s1 + $0x11f0] sm:$0xff]
    %v1765 = vld [vmem:[%s1 + $0x11f8] sm:$0xff]
    %v1766 = vld [vmem:[%s1 + $0x1200] sm:$0xff]
    %v1767 = vld [vmem:[%s1 + $0x1208] sm:$0xff]
    %v1768 = vld [vmem:[%s1 + $0x1210] sm:$0xff]
    %v1769 = vld [vmem:[%s1 + $0x1218] sm:$0xff]
    %v1770 = vld [vmem:[%s1 + $0x1220] sm:$0xff]
    %v1771 = vld [vmem:[%s1 + $0x1228] sm:$0xff]
    %v1772 = vld [vmem:[%s1 + $0x1230] sm:$0xff]
    %v1773 = vld [vmem:[%s1 + $0x1238] sm:$0xff]
    %v1774 = vld [vmem:[%s1 + $0x1240] sm:$0xff]
    %v1775 = vld [vmem:[%s1 + $0x1248] sm:$0xff]
    %v1776 = vld [vmem:[%s1 + $0x1250] sm:$0xff]
    %v1777 = vld [vmem:[%s1 + $0x1258] sm:$0xff]
    %v1778 = vld [vmem:[%s1 + $0x1260] sm:$0xff]
    %v1779 = vld [vmem:[%s1 + $0x1268] sm:$0xff]
    %v1780 = vld [vmem:[%s1 + $0x1270] sm:$0xff]
    %v1781 = vld [vmem:[%s1 + $0x1278] sm:$0xff]
    %v1782 = vld [vmem:[%s1 + $0x1280] sm:$0xff]
    %v1783 = vld [vmem:[%s1 + $0x1288] sm:$0xff]
    %v1784 = vld [vmem:[%s1 + $0x1290] sm:$0xff]
    %v1785 = vld [vmem:[%s1 + $0x1298] sm:$0xff]
    %v1786 = vld [vmem:[%s1 + $0x12a0] sm:$0xff]
    %v1787 = vld [vmem:[%s1 + $0x12a8] sm:$0xff]
    %v1788 = vld [vmem:[%s1 + $0x12b0] sm:$0xff]
    %v1789 = vld [vmem:[%s1 + $0x12b8] sm:$0xff]
    %v1790 = vld [vmem:[%s1 + $0x12c0] sm:$0xff]
    %v1791 = vld [vmem:[%s1 + $0x12c8] sm:$0xff]
    %v1792 = vld [vmem:[%s1 + $0x12d0] sm:$0xff]
    %v1793 = vld [vmem:[%s1 + $0x12d8] sm:$0xff]
    %v1794 = vld [vmem:[%s1 + $0x12e0] sm:$0xff]
    %v1795 = vld [vmem:[%s1 + $0x12e8] sm:$0xff]
    %v1796 = vld [vmem:[%s1 + $0x12f0] sm:$0xff]
    %v1797 = vld [vmem:[%s1 + $0x12f8] sm:$0xff]
    %v1798 = vld [vmem:[%s1 + $0x1300] sm:$0xff]
    %v1799 = vld [vmem:[%s1 + $0x1308] sm:$0xff]
    %v1800 = vld [vmem:[%s1 + $0x1310] sm:$0xff]
    %v1801 = vld [vmem:[%s1 + $0x1318] sm:$0xff]
    %v1802 = vld [vmem:[%s1 + $0x1320] sm:$0xff]
    %v1803 = vld [vmem:[%s1 + $0x1328] sm:$0xff]
    %v1804 = vld [vmem:[%s1 + $0x1330] sm:$0xff]
    %v1805 = vld [vmem:[%s1 + $0x1338] sm:$0xff]
    %v1806 = vld [vmem:[%s1 + $0x1340] sm:$0xff]
    %v1807 = vld [vmem:[%s1 + $0x1348] sm:$0xff]
    %v1808 = vld [vmem:[%s1 + $0x1350] sm:$0xff]
    %v1809 = vld [vmem:[%s1 + $0x1358] sm:$0xff]
    %v1810 = vld [vmem:[%s1 + $0x1360] sm:$0xff]
    %v1811 = vld [vmem:[%s1 + $0x1368] sm:$0xff]
    %v1812 = vld [vmem:[%s1 + $0x1370] sm:$0xff]
    %v1813 = vld [vmem:[%s1 + $0x1378] sm:$0xff]
    %v1814 = vld [vmem:[%s1 + $0x1380] sm:$0xff]
    %v1815 = vld [vmem:[%s1 + $0x1388] sm:$0xff]
    %v1816 = vld [vmem:[%s1 + $0x1390] sm:$0xff]
    %v1817 = vld [vmem:[%s1 + $0x1398] sm:$0xff]
    %v1818 = vld [vmem:[%s1 + $0x13a0] sm:$0xff]
    %v1819 = vld [vmem:[%s1 + $0x13a8] sm:$0xff]
    %v1820 = vld [vmem:[%s1 + $0x13b0] sm:$0xff]
    %v1821 = vld [vmem:[%s1 + $0x13b8] sm:$0xff]
    %v1822 = vld [vmem:[%s1 + $0x13c0] sm:$0xff]
    %v1823 = vld [vmem:[%s1 + $0x13c8] sm:$0xff]
    %v1824 = vld [vmem:[%s1 + $0x13d0] sm:$0xff]
    %v1825 = vld [vmem:[%s1 + $0x13d8] sm:$0xff]
    %v1826 = vld [vmem:[%s1 + $0x13e0] sm:$0xff]
    %v1827 = vld [vmem:[%s1 + $0x13e8] sm:$0xff]
    %v1828 = vld [vmem:[%s1 + $0x13f0] sm:$0xff]
    %v1829 = vld [vmem:[%s1 + $0x13f8] sm:$0xff]
    %v1830 = vld [vmem:[%s1 + $0x1400] sm:$0xff]
    %v1831 = vld [vmem:[%s1 + $0x1408] sm:$0xff]
    %v1832 = vld [vmem:[%s1 + $0x1410] sm:$0xff]
    %v1833 = vld [vmem:[%s1 + $0x1418] sm:$0xff]
    %v1834 = vld [vmem:[%s1 + $0x1420] sm:$0xff]
    %v1835 = vld [vmem:[%s1 + $0x1428] sm:$0xff]
    %v1836 = vld [vmem:[%s1 + $0x1430] sm:$0xff]
    %v1837 = vld [vmem:[%s1 + $0x1438] sm:$0xff]
    %v1838 = vld [vmem:[%s1 + $0x1440] sm:$0xff]
    %v1839 = vld [vmem:[%s1 + $0x1448] sm:$0xff]
    %v1840 = vld [vmem:[%s1 + $0x1450] sm:$0xff]
    %v1841 = vld [vmem:[%s1 + $0x1458] sm:$0xff]
    %v1842 = vld [vmem:[%s1 + $0x1460] sm:$0xff]
    %v1843 = vld [vmem:[%s1 + $0x1468] sm:$0xff]
    %v1844 = vld [vmem:[%s1 + $0x1470] sm:$0xff]
    %v1845 = vld [vmem:[%s1 + $0x1478] sm:$0xff]
    %v1846 = vld [vmem:[%s1 + $0x1480] sm:$0xff]
    %v1847 = vld [vmem:[%s1 + $0x1488] sm:$0xff]
    %v1848 = vld [vmem:[%s1 + $0x1490] sm:$0xff]
    %v1849 = vld [vmem:[%s1 + $0x1498] sm:$0xff]
    %v1850 = vld [vmem:[%s1 + $0x14a0] sm:$0xff]
    %v1851 = vld [vmem:[%s1 + $0x14a8] sm:$0xff]
    %v1852 = vld [vmem:[%s1 + $0x14b0] sm:$0xff]
    %v1853 = vld [vmem:[%s1 + $0x14b8] sm:$0xff]
    %v1854 = vld [vmem:[%s1 + $0x14c0] sm:$0xff]
    %v1855 = vld [vmem:[%s1 + $0x14c8] sm:$0xff]
    %v1856 = vld [vmem:[%s1 + $0x14d0] sm:$0xff]
    %v1857 = vld [vmem:[%s1 + $0x14d8] sm:$0xff]
    %v1858 = vld [vmem:[%s1 + $0x14e0] sm:$0xff]
    %v1859 = vld [vmem:[%s1 + $0x14e8] sm:$0xff]
    %v1860 = vld [vmem:[%s1 + $0x14f0] sm:$0xff]
    %v1861 = vld [vmem:[%s1 + $0x14f8] sm:$0xff]
    %v1862 = vld [vmem:[%s1 + $0x1500] sm:$0xff]
    %v1863 = vld [vmem:[%s1 + $0x1508] sm:$0xff]
    %v1864 = vld [vmem:[%s1 + $0x1510] sm:$0xff]
    %v1865 = vld [vmem:[%s1 + $0x1518] sm:$0xff]
    %v1866 = vld [vmem:[%s1 + $0x1520] sm:$0xff]
    %v1867 = vld [vmem:[%s1 + $0x1528] sm:$0xff]
    %v1868 = vld [vmem:[%s1 + $0x1530] sm:$0xff]
    %v1869 = vld [vmem:[%s1 + $0x1538] sm:$0xff]
    %v1870 = vld [vmem:[%s1 + $0x1540] sm:$0xff]
    %v1871 = vld [vmem:[%s1 + $0x1548] sm:$0xff]
    %v1872 = vld [vmem:[%s1 + $0x1550] sm:$0xff]
    %v1873 = vld [vmem:[%s1 + $0x1558] sm:$0xff]
    %v1874 = vld [vmem:[%s1 + $0x1560] sm:$0xff]
    %v1875 = vld [vmem:[%s1 + $0x1568] sm:$0xff]
    %v1876 = vld [vmem:[%s1 + $0x1570] sm:$0xff]
    %v1877 = vld [vmem:[%s1 + $0x1578] sm:$0xff]
    %v1878 = vld [vmem:[%s1 + $0x1580] sm:$0xff]
    %v1879 = vld [vmem:[%s1 + $0x1588] sm:$0xff]
    %v1880 = vld [vmem:[%s1 + $0x1590] sm:$0xff]
    %v1881 = vld [vmem:[%s1 + $0x1598] sm:$0xff]
    %v1882 = vld [vmem:[%s1 + $0x15a0] sm:$0xff]
    %v1883 = vld [vmem:[%s1 + $0x15a8] sm:$0xff]
    %v1884 = vld [vmem:[%s1 + $0x15b0] sm:$0xff]
    %v1885 = vld [vmem:[%s1 + $0x15b8] sm:$0xff]
    %v1886 = vld [vmem:[%s1 + $0x15c0] sm:$0xff]
    %v1887 = vld [vmem:[%s1 + $0x15c8] sm:$0xff]
    %v1888 = vld [vmem:[%s1 + $0x15d0] sm:$0xff]
    %v1889 = vld [vmem:[%s1 + $0x15d8] sm:$0xff]
    %v1890 = vld [vmem:[%s1 + $0x15e0] sm:$0xff]
    %v1891 = vld [vmem:[%s1 + $0x15e8] sm:$0xff]
    %v1892 = vld [vmem:[%s1 + $0x15f0] sm:$0xff]
    %v1893 = vld [vmem:[%s1 + $0x15f8] sm:$0xff]
    %v1894 = vld [vmem:[%s1 + $0x1600] sm:$0xff]
    %v1895 = vld [vmem:[%s1 + $0x1608] sm:$0xff]
    %v1896 = vld [vmem:[%s1 + $0x1610] sm:$0xff]
    %v1897 = vld [vmem:[%s1 + $0x1618] sm:$0xff]
    %v1898 = vld [vmem:[%s1 + $0x1620] sm:$0xff]
    %v1899 = vld [vmem:[%s1 + $0x1628] sm:$0xff]
    %v1900 = vld [vmem:[%s1 + $0x1630] sm:$0xff]
    %v1901 = vld [vmem:[%s1 + $0x1638] sm:$0xff]
    %v1902 = vld [vmem:[%s1 + $0x1640] sm:$0xff]
    %v1903 = vld [vmem:[%s1 + $0x1648] sm:$0xff]
    %v1904 = vld [vmem:[%s1 + $0x1650] sm:$0xff]
    %v1905 = vld [vmem:[%s1 + $0x1658] sm:$0xff]
    %v1906 = vld [vmem:[%s1 + $0x1660] sm:$0xff]
    %v1907 = vld [vmem:[%s1 + $0x1668] sm:$0xff]
    %v1908 = vld [vmem:[%s1 + $0x1670] sm:$0xff]
    %v1909 = vld [vmem:[%s1 + $0x1678] sm:$0xff]
    %v1910 = vld [vmem:[%s2] sm:$0x1]
    %v1912 = vlaneseq
    %v1913 = vshrl.u32 %v1912, 7
    %v1914 = vsub.s32 0, %v1913
    %v1915 = vrot.slane %v1910, %v1914
    %v2637 = vunpack.c.l.b16 %v1190
    %v2638 = vunpack.c.h.b16 %v1190
    %v2639 = vunpack.c.l.b16 %v1191
    %v2640 = vunpack.c.h.b16 %v1191
    %v2641 = vunpack.c.l.b16 %v1192
    %v2642 = vunpack.c.h.b16 %v1192
    %v2643 = vunpack.c.l.b16 %v1193
    %v2644 = vunpack.c.h.b16 %v1193
    %v2645 = vunpack.c.l.b16 %v1194
    %v2646 = vunpack.c.h.b16 %v1194
    %v2647 = vunpack.c.l.b16 %v1195
    %v2648 = vunpack.c.h.b16 %v1195
    %v2649 = vunpack.c.l.b16 %v1196
    %v2650 = vunpack.c.h.b16 %v1196
    %v2651 = vunpack.c.l.b16 %v1197
    %v2652 = vunpack.c.h.b16 %v1197
    %v2653 = vunpack.c.l.b16 %v1198
    %v2654 = vunpack.c.h.b16 %v1198
    %v2655 = vunpack.c.l.b16 %v1199
    %v2656 = vunpack.c.h.b16 %v1199
    %v2657 = vunpack.c.l.b16 %v1200
    %v2658 = vunpack.c.h.b16 %v1200
    %v2659 = vunpack.c.l.b16 %v1201
    %v2660 = vunpack.c.h.b16 %v1201
    %v2661 = vunpack.c.l.b16 %v1202
    %v2662 = vunpack.c.h.b16 %v1202
    %v2663 = vunpack.c.l.b16 %v1203
    %v2664 = vunpack.c.h.b16 %v1203
    %v2665 = vunpack.c.l.b16 %v1204
    %v2666 = vunpack.c.h.b16 %v1204
    %v2667 = vunpack.c.l.b16 %v1205
    %v2668 = vunpack.c.h.b16 %v1205
    %v2669 = vunpack.c.l.b16 %v1206
    %v2670 = vunpack.c.h.b16 %v1206
    %v2671 = vunpack.c.l.b16 %v1207
    %v2672 = vunpack.c.h.b16 %v1207
    %v2673 = vunpack.c.l.b16 %v1208
    %v2674 = vunpack.c.h.b16 %v1208
    %v2675 = vunpack.c.l.b16 %v1209
    %v2676 = vunpack.c.h.b16 %v1209
    %v2677 = vunpack.c.l.b16 %v1210
    %v2678 = vunpack.c.h.b16 %v1210
    %v2679 = vunpack.c.l.b16 %v1211
    %v2680 = vunpack.c.h.b16 %v1211
    %v2681 = vunpack.c.l.b16 %v1212
    %v2682 = vunpack.c.h.b16 %v1212
    %v2683 = vunpack.c.l.b16 %v1213
    %v2684 = vunpack.c.h.b16 %v1213
    %v2685 = vunpack.c.l.b16 %v1214
    %v2686 = vunpack.c.h.b16 %v1214
    %v2687 = vunpack.c.l.b16 %v1215
    %v2688 = vunpack.c.h.b16 %v1215
    %v2689 = vunpack.c.l.b16 %v1216
    %v2690 = vunpack.c.h.b16 %v1216
    %v2691 = vunpack.c.l.b16 %v1217
    %v2692 = vunpack.c.h.b16 %v1217
    %v2693 = vunpack.c.l.b16 %v1218
    %v2694 = vunpack.c.h.b16 %v1218
    %v2695 = vunpack.c.l.b16 %v1219
    %v2696 = vunpack.c.h.b16 %v1219
    %v2697 = vunpack.c.l.b16 %v1220
    %v2698 = vunpack.c.h.b16 %v1220
    %v2699 = vunpack.c.l.b16 %v1221
    %v2700 = vunpack.c.h.b16 %v1221
    %v2701 = vunpack.c.l.b16 %v1222
    %v2702 = vunpack.c.h.b16 %v1222
    %v2703 = vunpack.c.l.b16 %v1223
    %v2704 = vunpack.c.h.b16 %v1223
    %v2705 = vunpack.c.l.b16 %v1224
    %v2706 = vunpack.c.h.b16 %v1224
    %v2707 = vunpack.c.l.b16 %v1225
    %v2708 = vunpack.c.h.b16 %v1225
    %v2709 = vunpack.c.l.b16 %v1226
    %v2710 = vunpack.c.h.b16 %v1226
    %v2711 = vunpack.c.l.b16 %v1227
    %v2712 = vunpack.c.h.b16 %v1227
    %v2713 = vunpack.c.l.b16 %v1228
    %v2714 = vunpack.c.h.b16 %v1228
    %v2715 = vunpack.c.l.b16 %v1229
    %v2716 = vunpack.c.h.b16 %v1229
    %v2717 = vunpack.c.l.b16 %v1230
    %v2718 = vunpack.c.h.b16 %v1230
    %v2719 = vunpack.c.l.b16 %v1231
    %v2720 = vunpack.c.h.b16 %v1231
    %v2721 = vunpack.c.l.b16 %v1232
    %v2722 = vunpack.c.h.b16 %v1232
    %v2723 = vunpack.c.l.b16 %v1233
    %v2724 = vunpack.c.h.b16 %v1233
    %v2725 = vunpack.c.l.b16 %v1234
    %v2726 = vunpack.c.h.b16 %v1234
    %v2727 = vunpack.c.l.b16 %v1235
    %v2728 = vunpack.c.h.b16 %v1235
    %v2729 = vunpack.c.l.b16 %v1236
    %v2730 = vunpack.c.h.b16 %v1236
    %v2731 = vunpack.c.l.b16 %v1237
    %v2732 = vunpack.c.h.b16 %v1237
    %v2733 = vunpack.c.l.b16 %v1238
    %v2734 = vunpack.c.h.b16 %v1238
    %v2735 = vunpack.c.l.b16 %v1239
    %v2736 = vunpack.c.h.b16 %v1239
    %v2737 = vunpack.c.l.b16 %v1240
    %v2738 = vunpack.c.h.b16 %v1240
    %v2739 = vunpack.c.l.b16 %v1241
    %v2740 = vunpack.c.h.b16 %v1241
    %v2741 = vunpack.c.l.b16 %v1242
    %v2742 = vunpack.c.h.b16 %v1242
    %v2743 = vunpack.c.l.b16 %v1243
    %v2744 = vunpack.c.h.b16 %v1243
    %v2745 = vunpack.c.l.b16 %v1244
    %v2746 = vunpack.c.h.b16 %v1244
    %v2747 = vunpack.c.l.b16 %v1245
    %v2748 = vunpack.c.h.b16 %v1245
    %v2749 = vunpack.c.l.b16 %v1246
    %v2750 = vunpack.c.h.b16 %v1246
    %v2751 = vunpack.c.l.b16 %v1247
    %v2752 = vunpack.c.h.b16 %v1247
    %v2753 = vunpack.c.l.b16 %v1248
    %v2754 = vunpack.c.h.b16 %v1248
    %v2755 = vunpack.c.l.b16 %v1249
    %v2756 = vunpack.c.h.b16 %v1249
    %v2757 = vunpack.c.l.b16 %v1250
    %v2758 = vunpack.c.h.b16 %v1250
    %v2759 = vunpack.c.l.b16 %v1251
    %v2760 = vunpack.c.h.b16 %v1251
    %v2761 = vunpack.c.l.b16 %v1252
    %v2762 = vunpack.c.h.b16 %v1252
    %v2763 = vunpack.c.l.b16 %v1253
    %v2764 = vunpack.c.h.b16 %v1253
    %v2765 = vunpack.c.l.b16 %v1254
    %v2766 = vunpack.c.h.b16 %v1254
    %v2767 = vunpack.c.l.b16 %v1255
    %v2768 = vunpack.c.h.b16 %v1255
    %v2769 = vunpack.c.l.b16 %v1256
    %v2770 = vunpack.c.h.b16 %v1256
    %v2771 = vunpack.c.l.b16 %v1257
    %v2772 = vunpack.c.h.b16 %v1257
    %v2773 = vunpack.c.l.b16 %v1258
    %v2774 = vunpack.c.h.b16 %v1258
    %v2775 = vunpack.c.l.b16 %v1259
    %v2776 = vunpack.c.h.b16 %v1259
    %v2777 = vunpack.c.l.b16 %v1260
    %v2778 = vunpack.c.h.b16 %v1260
    %v2779 = vunpack.c.l.b16 %v1261
    %v2780 = vunpack.c.h.b16 %v1261
    %v2781 = vunpack.c.l.b16 %v1262
    %v2782 = vunpack.c.h.b16 %v1262
    %v2783 = vunpack.c.l.b16 %v1263
    %v2784 = vunpack.c.h.b16 %v1263
    %v2785 = vunpack.c.l.b16 %v1264
    %v2786 = vunpack.c.h.b16 %v1264
    %v2787 = vunpack.c.l.b16 %v1265
    %v2788 = vunpack.c.h.b16 %v1265
    %v2789 = vunpack.c.l.b16 %v1266
    %v2790 = vunpack.c.h.b16 %v1266
    %v2791 = vunpack.c.l.b16 %v1267
    %v2792 = vunpack.c.h.b16 %v1267
    %v2793 = vunpack.c.l.b16 %v1268
    %v2794 = vunpack.c.h.b16 %v1268
    %v2795 = vunpack.c.l.b16 %v1269
    %v2796 = vunpack.c.h.b16 %v1269
    %v2797 = vunpack.c.l.b16 %v1270
    %v2798 = vunpack.c.h.b16 %v1270
    %v2799 = vunpack.c.l.b16 %v1271
    %v2800 = vunpack.c.h.b16 %v1271
    %v2801 = vunpack.c.l.b16 %v1272
    %v2802 = vunpack.c.h.b16 %v1272
    %v2803 = vunpack.c.l.b16 %v1273
    %v2804 = vunpack.c.h.b16 %v1273
    %v2805 = vunpack.c.l.b16 %v1274
    %v2806 = vunpack.c.h.b16 %v1274
    %v2807 = vunpack.c.l.b16 %v1275
    %v2808 = vunpack.c.h.b16 %v1275
    %v2809 = vunpack.c.l.b16 %v1276
    %v2810 = vunpack.c.h.b16 %v1276
    %v2811 = vunpack.c.l.b16 %v1277
    %v2812 = vunpack.c.h.b16 %v1277
    %v2813 = vunpack.c.l.b16 %v1278
    %v2814 = vunpack.c.h.b16 %v1278
    %v2815 = vunpack.c.l.b16 %v1279
    %v2816 = vunpack.c.h.b16 %v1279
    %v2817 = vunpack.c.l.b16 %v1280
    %v2818 = vunpack.c.h.b16 %v1280
    %v2819 = vunpack.c.l.b16 %v1281
    %v2820 = vunpack.c.h.b16 %v1281
    %v2821 = vunpack.c.l.b16 %v1282
    %v2822 = vunpack.c.h.b16 %v1282
    %v2823 = vunpack.c.l.b16 %v1283
    %v2824 = vunpack.c.h.b16 %v1283
    %v2825 = vunpack.c.l.b16 %v1284
    %v2826 = vunpack.c.h.b16 %v1284
    %v2827 = vunpack.c.l.b16 %v1285
    %v2828 = vunpack.c.h.b16 %v1285
    %v2829 = vunpack.c.l.b16 %v1286
    %v2830 = vunpack.c.h.b16 %v1286
    %v2831 = vunpack.c.l.b16 %v1287
    %v2832 = vunpack.c.h.b16 %v1287
    %v2833 = vunpack.c.l.b16 %v1288
    %v2834 = vunpack.c.h.b16 %v1288
    %v2835 = vunpack.c.l.b16 %v1289
    %v2836 = vunpack.c.h.b16 %v1289
    %v2837 = vunpack.c.l.b16 %v1290
    %v2838 = vunpack.c.h.b16 %v1290
    %v2839 = vunpack.c.l.b16 %v1291
    %v2840 = vunpack.c.h.b16 %v1291
    %v2841 = vunpack.c.l.b16 %v1292
    %v2842 = vunpack.c.h.b16 %v1292
    %v2843 = vunpack.c.l.b16 %v1293
    %v2844 = vunpack.c.h.b16 %v1293
    %v2845 = vunpack.c.l.b16 %v1294
    %v2846 = vunpack.c.h.b16 %v1294
    %v2847 = vunpack.c.l.b16 %v1295
    %v2848 = vunpack.c.h.b16 %v1295
    %v2849 = vunpack.c.l.b16 %v1296
    %v2850 = vunpack.c.h.b16 %v1296
    %v2851 = vunpack.c.l.b16 %v1297
    %v2852 = vunpack.c.h.b16 %v1297
    %v2853 = vunpack.c.l.b16 %v1298
    %v2854 = vunpack.c.h.b16 %v1298
    %v2855 = vunpack.c.l.b16 %v1299
    %v2856 = vunpack.c.h.b16 %v1299
    %v2857 = vunpack.c.l.b16 %v1300
    %v2858 = vunpack.c.h.b16 %v1300
    %v2859 = vunpack.c.l.b16 %v1301
    %v2860 = vunpack.c.h.b16 %v1301
    %v2861 = vunpack.c.l.b16 %v1302
    %v2862 = vunpack.c.h.b16 %v1302
    %v2863 = vunpack.c.l.b16 %v1303
    %v2864 = vunpack.c.h.b16 %v1303
    %v2865 = vunpack.c.l.b16 %v1304
    %v2866 = vunpack.c.h.b16 %v1304
    %v2867 = vunpack.c.l.b16 %v1305
    %v2868 = vunpack.c.h.b16 %v1305
    %v2869 = vunpack.c.l.b16 %v1306
    %v2870 = vunpack.c.h.b16 %v1306
    %v2871 = vunpack.c.l.b16 %v1307
    %v2872 = vunpack.c.h.b16 %v1307
    %v2873 = vunpack.c.l.b16 %v1308
    %v2874 = vunpack.c.h.b16 %v1308
    %v2875 = vunpack.c.l.b16 %v1309
    %v2876 = vunpack.c.h.b16 %v1309
    %v2877 = vunpack.c.l.b16 %v1310
    %v2878 = vunpack.c.h.b16 %v1310
    %v2879 = vunpack.c.l.b16 %v1311
    %v2880 = vunpack.c.h.b16 %v1311
    %v2881 = vunpack.c.l.b16 %v1312
    %v2882 = vunpack.c.h.b16 %v1312
    %v2883 = vunpack.c.l.b16 %v1313
    %v2884 = vunpack.c.h.b16 %v1313
    %v2885 = vunpack.c.l.b16 %v1314
    %v2886 = vunpack.c.h.b16 %v1314
    %v2887 = vunpack.c.l.b16 %v1315
    %v2888 = vunpack.c.h.b16 %v1315
    %v2889 = vunpack.c.l.b16 %v1316
    %v2890 = vunpack.c.h.b16 %v1316
    %v2891 = vunpack.c.l.b16 %v1317
    %v2892 = vunpack.c.h.b16 %v1317
    %v2893 = vunpack.c.l.b16 %v1318
    %v2894 = vunpack.c.h.b16 %v1318
    %v2895 = vunpack.c.l.b16 %v1319
    %v2896 = vunpack.c.h.b16 %v1319
    %v2897 = vunpack.c.l.b16 %v1320
    %v2898 = vunpack.c.h.b16 %v1320
    %v2899 = vunpack.c.l.b16 %v1321
    %v2900 = vunpack.c.h.b16 %v1321
    %v2901 = vunpack.c.l.b16 %v1322
    %v2902 = vunpack.c.h.b16 %v1322
    %v2903 = vunpack.c.l.b16 %v1323
    %v2904 = vunpack.c.h.b16 %v1323
    %v2905 = vunpack.c.l.b16 %v1324
    %v2906 = vunpack.c.h.b16 %v1324
    %v2907 = vunpack.c.l.b16 %v1325
    %v2908 = vunpack.c.h.b16 %v1325
    %v2909 = vunpack.c.l.b16 %v1326
    %v2910 = vunpack.c.h.b16 %v1326
    %v2911 = vunpack.c.l.b16 %v1327
    %v2912 = vunpack.c.h.b16 %v1327
    %v2913 = vunpack.c.l.b16 %v1328
    %v2914 = vunpack.c.h.b16 %v1328
    %v2915 = vunpack.c.l.b16 %v1329
    %v2916 = vunpack.c.h.b16 %v1329
    %v2917 = vunpack.c.l.b16 %v1330
    %v2918 = vunpack.c.h.b16 %v1330
    %v2919 = vunpack.c.l.b16 %v1331
    %v2920 = vunpack.c.h.b16 %v1331
    %v2921 = vunpack.c.l.b16 %v1332
    %v2922 = vunpack.c.h.b16 %v1332
    %v2923 = vunpack.c.l.b16 %v1333
    %v2924 = vunpack.c.h.b16 %v1333
    %v2925 = vunpack.c.l.b16 %v1334
    %v2926 = vunpack.c.h.b16 %v1334
    %v2927 = vunpack.c.l.b16 %v1335
    %v2928 = vunpack.c.h.b16 %v1335
    %v2929 = vunpack.c.l.b16 %v1336
    %v2930 = vunpack.c.h.b16 %v1336
    %v2931 = vunpack.c.l.b16 %v1337
    %v2932 = vunpack.c.h.b16 %v1337
    %v2933 = vunpack.c.l.b16 %v1338
    %v2934 = vunpack.c.h.b16 %v1338
    %v2935 = vunpack.c.l.b16 %v1339
    %v2936 = vunpack.c.h.b16 %v1339
    %v2937 = vunpack.c.l.b16 %v1340
    %v2938 = vunpack.c.h.b16 %v1340
    %v2939 = vunpack.c.l.b16 %v1341
    %v2940 = vunpack.c.h.b16 %v1341
    %v2941 = vunpack.c.l.b16 %v1342
    %v2942 = vunpack.c.h.b16 %v1342
    %v2943 = vunpack.c.l.b16 %v1343
    %v2944 = vunpack.c.h.b16 %v1343
    %v2945 = vunpack.c.l.b16 %v1344
    %v2946 = vunpack.c.h.b16 %v1344
    %v2947 = vunpack.c.l.b16 %v1345
    %v2948 = vunpack.c.h.b16 %v1345
    %v2949 = vunpack.c.l.b16 %v1346
    %v2950 = vunpack.c.h.b16 %v1346
    %v2951 = vunpack.c.l.b16 %v1347
    %v2952 = vunpack.c.h.b16 %v1347
    %v2953 = vunpack.c.l.b16 %v1348
    %v2954 = vunpack.c.h.b16 %v1348
    %v2955 = vunpack.c.l.b16 %v1349
    %v2956 = vunpack.c.h.b16 %v1349
    %v2957 = vunpack.c.l.b16 %v1350
    %v2958 = vunpack.c.h.b16 %v1350
    %v2959 = vunpack.c.l.b16 %v1351
    %v2960 = vunpack.c.h.b16 %v1351
    %v2961 = vunpack.c.l.b16 %v1352
    %v2962 = vunpack.c.h.b16 %v1352
    %v2963 = vunpack.c.l.b16 %v1353
    %v2964 = vunpack.c.h.b16 %v1353
    %v2965 = vunpack.c.l.b16 %v1354
    %v2966 = vunpack.c.h.b16 %v1354
    %v2967 = vunpack.c.l.b16 %v1355
    %v2968 = vunpack.c.h.b16 %v1355
    %v2969 = vunpack.c.l.b16 %v1356
    %v2970 = vunpack.c.h.b16 %v1356
    %v2971 = vunpack.c.l.b16 %v1357
    %v2972 = vunpack.c.h.b16 %v1357
    %v2973 = vunpack.c.l.b16 %v1358
    %v2974 = vunpack.c.h.b16 %v1358
    %v2975 = vunpack.c.l.b16 %v1359
    %v2976 = vunpack.c.h.b16 %v1359
    %v2977 = vunpack.c.l.b16 %v1360
    %v2978 = vunpack.c.h.b16 %v1360
    %v2979 = vunpack.c.l.b16 %v1361
    %v2980 = vunpack.c.h.b16 %v1361
    %v2981 = vunpack.c.l.b16 %v1362
    %v2982 = vunpack.c.h.b16 %v1362
    %v2983 = vunpack.c.l.b16 %v1363
    %v2984 = vunpack.c.h.b16 %v1363
    %v2985 = vunpack.c.l.b16 %v1364
    %v2986 = vunpack.c.h.b16 %v1364
    %v2987 = vunpack.c.l.b16 %v1365
    %v2988 = vunpack.c.h.b16 %v1365
    %v2989 = vunpack.c.l.b16 %v1366
    %v2990 = vunpack.c.h.b16 %v1366
    %v2991 = vunpack.c.l.b16 %v1367
    %v2992 = vunpack.c.h.b16 %v1367
    %v2993 = vunpack.c.l.b16 %v1368
    %v2994 = vunpack.c.h.b16 %v1368
    %v2995 = vunpack.c.l.b16 %v1369
    %v2996 = vunpack.c.h.b16 %v1369
    %v2997 = vunpack.c.l.b16 %v1370
    %v2998 = vunpack.c.h.b16 %v1370
    %v2999 = vunpack.c.l.b16 %v1371
    %v3000 = vunpack.c.h.b16 %v1371
    %v3001 = vunpack.c.l.b16 %v1372
    %v3002 = vunpack.c.h.b16 %v1372
    %v3003 = vunpack.c.l.b16 %v1373
    %v3004 = vunpack.c.h.b16 %v1373
    %v3005 = vunpack.c.l.b16 %v1374
    %v3006 = vunpack.c.h.b16 %v1374
    %v3007 = vunpack.c.l.b16 %v1375
    %v3008 = vunpack.c.h.b16 %v1375
    %v3009 = vunpack.c.l.b16 %v1376
    %v3010 = vunpack.c.h.b16 %v1376
    %v3011 = vunpack.c.l.b16 %v1377
    %v3012 = vunpack.c.h.b16 %v1377
    %v3013 = vunpack.c.l.b16 %v1378
    %v3014 = vunpack.c.h.b16 %v1378
    %v3015 = vunpack.c.l.b16 %v1379
    %v3016 = vunpack.c.h.b16 %v1379
    %v3017 = vunpack.c.l.b16 %v1380
    %v3018 = vunpack.c.h.b16 %v1380
    %v3019 = vunpack.c.l.b16 %v1381
    %v3020 = vunpack.c.h.b16 %v1381
    %v3021 = vunpack.c.l.b16 %v1382
    %v3022 = vunpack.c.h.b16 %v1382
    %v3023 = vunpack.c.l.b16 %v1383
    %v3024 = vunpack.c.h.b16 %v1383
    %v3025 = vunpack.c.l.b16 %v1384
    %v3026 = vunpack.c.h.b16 %v1384
    %v3027 = vunpack.c.l.b16 %v1385
    %v3028 = vunpack.c.h.b16 %v1385
    %v3029 = vunpack.c.l.b16 %v1386
    %v3030 = vunpack.c.h.b16 %v1386
    %v3031 = vunpack.c.l.b16 %v1387
    %v3032 = vunpack.c.h.b16 %v1387
    %v3033 = vunpack.c.l.b16 %v1388
    %v3034 = vunpack.c.h.b16 %v1388
    %v3035 = vunpack.c.l.b16 %v1389
    %v3036 = vunpack.c.h.b16 %v1389
    %v3037 = vunpack.c.l.b16 %v1390
    %v3038 = vunpack.c.h.b16 %v1390
    %v3039 = vunpack.c.l.b16 %v1391
    %v3040 = vunpack.c.h.b16 %v1391
    %v3041 = vunpack.c.l.b16 %v1392
    %v3042 = vunpack.c.h.b16 %v1392
    %v3043 = vunpack.c.l.b16 %v1393
    %v3044 = vunpack.c.h.b16 %v1393
    %v3045 = vunpack.c.l.b16 %v1394
    %v3046 = vunpack.c.h.b16 %v1394
    %v3047 = vunpack.c.l.b16 %v1395
    %v3048 = vunpack.c.h.b16 %v1395
    %v3049 = vunpack.c.l.b16 %v1396
    %v3050 = vunpack.c.h.b16 %v1396
    %v3051 = vunpack.c.l.b16 %v1397
    %v3052 = vunpack.c.h.b16 %v1397
    %v3053 = vunpack.c.l.b16 %v1398
    %v3054 = vunpack.c.h.b16 %v1398
    %v3055 = vunpack.c.l.b16 %v1399
    %v3056 = vunpack.c.h.b16 %v1399
    %v3057 = vunpack.c.l.b16 %v1400
    %v3058 = vunpack.c.h.b16 %v1400
    %v3059 = vunpack.c.l.b16 %v1401
    %v3060 = vunpack.c.h.b16 %v1401
    %v3061 = vunpack.c.l.b16 %v1402
    %v3062 = vunpack.c.h.b16 %v1402
    %v3063 = vunpack.c.l.b16 %v1403
    %v3064 = vunpack.c.h.b16 %v1403
    %v3065 = vunpack.c.l.b16 %v1404
    %v3066 = vunpack.c.h.b16 %v1404
    %v3067 = vunpack.c.l.b16 %v1405
    %v3068 = vunpack.c.h.b16 %v1405
    %v3069 = vunpack.c.l.b16 %v1406
    %v3070 = vunpack.c.h.b16 %v1406
    %v3071 = vunpack.c.l.b16 %v1407
    %v3072 = vunpack.c.h.b16 %v1407
    %v3073 = vunpack.c.l.b16 %v1408
    %v3074 = vunpack.c.h.b16 %v1408
    %v3075 = vunpack.c.l.b16 %v1409
    %v3076 = vunpack.c.h.b16 %v1409
    %v3077 = vunpack.c.l.b16 %v1410
    %v3078 = vunpack.c.h.b16 %v1410
    %v3079 = vunpack.c.l.b16 %v1411
    %v3080 = vunpack.c.h.b16 %v1411
    %v3081 = vunpack.c.l.b16 %v1412
    %v3082 = vunpack.c.h.b16 %v1412
    %v3083 = vunpack.c.l.b16 %v1413
    %v3084 = vunpack.c.h.b16 %v1413
    %v3085 = vunpack.c.l.b16 %v1414
    %v3086 = vunpack.c.h.b16 %v1414
    %v3087 = vunpack.c.l.b16 %v1415
    %v3088 = vunpack.c.h.b16 %v1415
    %v3089 = vunpack.c.l.b16 %v1416
    %v3090 = vunpack.c.h.b16 %v1416
    %v3091 = vunpack.c.l.b16 %v1417
    %v3092 = vunpack.c.h.b16 %v1417
    %v3093 = vunpack.c.l.b16 %v1418
    %v3094 = vunpack.c.h.b16 %v1418
    %v3095 = vunpack.c.l.b16 %v1419
    %v3096 = vunpack.c.h.b16 %v1419
    %v3097 = vunpack.c.l.b16 %v1420
    %v3098 = vunpack.c.h.b16 %v1420
    %v3099 = vunpack.c.l.b16 %v1421
    %v3100 = vunpack.c.h.b16 %v1421
    %v3101 = vunpack.c.l.b16 %v1422
    %v3102 = vunpack.c.h.b16 %v1422
    %v3103 = vunpack.c.l.b16 %v1423
    %v3104 = vunpack.c.h.b16 %v1423
    %v3105 = vunpack.c.l.b16 %v1424
    %v3106 = vunpack.c.h.b16 %v1424
    %v3107 = vunpack.c.l.b16 %v1425
    %v3108 = vunpack.c.h.b16 %v1425
    %v3109 = vunpack.c.l.b16 %v1426
    %v3110 = vunpack.c.h.b16 %v1426
    %v3111 = vunpack.c.l.b16 %v1427
    %v3112 = vunpack.c.h.b16 %v1427
    %v3113 = vunpack.c.l.b16 %v1428
    %v3114 = vunpack.c.h.b16 %v1428
    %v3115 = vunpack.c.l.b16 %v1429
    %v3116 = vunpack.c.h.b16 %v1429
    %v3117 = vunpack.c.l.b16 %v1430
    %v3118 = vunpack.c.h.b16 %v1430
    %v3119 = vunpack.c.l.b16 %v1431
    %v3120 = vunpack.c.h.b16 %v1431
    %v3121 = vunpack.c.l.b16 %v1432
    %v3122 = vunpack.c.h.b16 %v1432
    %v3123 = vunpack.c.l.b16 %v1433
    %v3124 = vunpack.c.h.b16 %v1433
    %v3125 = vunpack.c.l.b16 %v1434
    %v3126 = vunpack.c.h.b16 %v1434
    %v3127 = vunpack.c.l.b16 %v1435
    %v3128 = vunpack.c.h.b16 %v1435
    %v3129 = vunpack.c.l.b16 %v1436
    %v3130 = vunpack.c.h.b16 %v1436
    %v3131 = vunpack.c.l.b16 %v1437
    %v3132 = vunpack.c.h.b16 %v1437
    %v3133 = vunpack.c.l.b16 %v1438
    %v3134 = vunpack.c.h.b16 %v1438
    %v3135 = vunpack.c.l.b16 %v1439
    %v3136 = vunpack.c.h.b16 %v1439
    %v3137 = vunpack.c.l.b16 %v1440
    %v3138 = vunpack.c.h.b16 %v1440
    %v3139 = vunpack.c.l.b16 %v1441
    %v3140 = vunpack.c.h.b16 %v1441
    %v3141 = vunpack.c.l.b16 %v1442
    %v3142 = vunpack.c.h.b16 %v1442
    %v3143 = vunpack.c.l.b16 %v1443
    %v3144 = vunpack.c.h.b16 %v1443
    %v3145 = vunpack.c.l.b16 %v1444
    %v3146 = vunpack.c.h.b16 %v1444
    %v3147 = vunpack.c.l.b16 %v1445
    %v3148 = vunpack.c.h.b16 %v1445
    %v3149 = vunpack.c.l.b16 %v1446
    %v3150 = vunpack.c.h.b16 %v1446
    %v3151 = vunpack.c.l.b16 %v1447
    %v3152 = vunpack.c.h.b16 %v1447
    %v3153 = vunpack.c.l.b16 %v1448
    %v3154 = vunpack.c.h.b16 %v1448
    %v3155 = vunpack.c.l.b16 %v1449
    %v3156 = vunpack.c.h.b16 %v1449
    %v3157 = vunpack.c.l.b16 %v1450
    %v3158 = vunpack.c.h.b16 %v1450
    %v3159 = vunpack.c.l.b16 %v1451
    %v3160 = vunpack.c.h.b16 %v1451
    %v3161 = vunpack.c.l.b16 %v1452
    %v3162 = vunpack.c.h.b16 %v1452
    %v3163 = vunpack.c.l.b16 %v1453
    %v3164 = vunpack.c.h.b16 %v1453
    %v3165 = vunpack.c.l.b16 %v1454
    %v3166 = vunpack.c.h.b16 %v1454
    %v3167 = vunpack.c.l.b16 %v1455
    %v3168 = vunpack.c.h.b16 %v1455
    %v3169 = vunpack.c.l.b16 %v1456
    %v3170 = vunpack.c.h.b16 %v1456
    %v3171 = vunpack.c.l.b16 %v1457
    %v3172 = vunpack.c.h.b16 %v1457
    %v3173 = vunpack.c.l.b16 %v1458
    %v3174 = vunpack.c.h.b16 %v1458
    %v3175 = vunpack.c.l.b16 %v1459
    %v3176 = vunpack.c.h.b16 %v1459
    %v3177 = vunpack.c.l.b16 %v1460
    %v3178 = vunpack.c.h.b16 %v1460
    %v3179 = vunpack.c.l.b16 %v1461
    %v3180 = vunpack.c.h.b16 %v1461
    %v3181 = vunpack.c.l.b16 %v1462
    %v3182 = vunpack.c.h.b16 %v1462
    %v3183 = vunpack.c.l.b16 %v1463
    %v3184 = vunpack.c.h.b16 %v1463
    %v3185 = vunpack.c.l.b16 %v1464
    %v3186 = vunpack.c.h.b16 %v1464
    %v3187 = vunpack.c.l.b16 %v1465
    %v3188 = vunpack.c.h.b16 %v1465
    %v3189 = vunpack.c.l.b16 %v1466
    %v3190 = vunpack.c.h.b16 %v1466
    %v3191 = vunpack.c.l.b16 %v1467
    %v3192 = vunpack.c.h.b16 %v1467
    %v3193 = vunpack.c.l.b16 %v1468
    %v3194 = vunpack.c.h.b16 %v1468
    %v3195 = vunpack.c.l.b16 %v1469
    %v3196 = vunpack.c.h.b16 %v1469
    %v3197 = vunpack.c.l.b16 %v1470
    %v3198 = vunpack.c.h.b16 %v1470
    %v3199 = vunpack.c.l.b16 %v1471
    %v3200 = vunpack.c.h.b16 %v1471
    %v3201 = vunpack.c.l.b16 %v1472
    %v3202 = vunpack.c.h.b16 %v1472
    %v3203 = vunpack.c.l.b16 %v1473
    %v3204 = vunpack.c.h.b16 %v1473
    %v3205 = vunpack.c.l.b16 %v1474
    %v3206 = vunpack.c.h.b16 %v1474
    %v3207 = vunpack.c.l.b16 %v1475
    %v3208 = vunpack.c.h.b16 %v1475
    %v3209 = vunpack.c.l.b16 %v1476
    %v3210 = vunpack.c.h.b16 %v1476
    %v3211 = vunpack.c.l.b16 %v1477
    %v3212 = vunpack.c.h.b16 %v1477
    %v3213 = vunpack.c.l.b16 %v1478
    %v3214 = vunpack.c.h.b16 %v1478
    %v3215 = vunpack.c.l.b16 %v1479
    %v3216 = vunpack.c.h.b16 %v1479
    %v3217 = vunpack.c.l.b16 %v1480
    %v3218 = vunpack.c.h.b16 %v1480
    %v3219 = vunpack.c.l.b16 %v1481
    %v3220 = vunpack.c.h.b16 %v1481
    %v3221 = vunpack.c.l.b16 %v1482
    %v3222 = vunpack.c.h.b16 %v1482
    %v3223 = vunpack.c.l.b16 %v1483
    %v3224 = vunpack.c.h.b16 %v1483
    %v3225 = vunpack.c.l.b16 %v1484
    %v3226 = vunpack.c.h.b16 %v1484
    %v3227 = vunpack.c.l.b16 %v1485
    %v3228 = vunpack.c.h.b16 %v1485
    %v3229 = vunpack.c.l.b16 %v1486
    %v3230 = vunpack.c.h.b16 %v1486
    %v3231 = vunpack.c.l.b16 %v1487
    %v3232 = vunpack.c.h.b16 %v1487
    %v3233 = vunpack.c.l.b16 %v1488
    %v3234 = vunpack.c.h.b16 %v1488
    %v3235 = vunpack.c.l.b16 %v1489
    %v3236 = vunpack.c.h.b16 %v1489
    %v3237 = vunpack.c.l.b16 %v1490
    %v3238 = vunpack.c.h.b16 %v1490
    %v3239 = vunpack.c.l.b16 %v1491
    %v3240 = vunpack.c.h.b16 %v1491
    %v3241 = vunpack.c.l.b16 %v1492
    %v3242 = vunpack.c.h.b16 %v1492
    %v3243 = vunpack.c.l.b16 %v1493
    %v3244 = vunpack.c.h.b16 %v1493
    %v3245 = vunpack.c.l.b16 %v1494
    %v3246 = vunpack.c.h.b16 %v1494
    %v3247 = vunpack.c.l.b16 %v1495
    %v3248 = vunpack.c.h.b16 %v1495
    %v3249 = vunpack.c.l.b16 %v1496
    %v3250 = vunpack.c.h.b16 %v1496
    %v3251 = vunpack.c.l.b16 %v1497
    %v3252 = vunpack.c.h.b16 %v1497
    %v3253 = vunpack.c.l.b16 %v1498
    %v3254 = vunpack.c.h.b16 %v1498
    %v3255 = vunpack.c.l.b16 %v1499
    %v3256 = vunpack.c.h.b16 %v1499
    %v3257 = vunpack.c.l.b16 %v1500
    %v3258 = vunpack.c.h.b16 %v1500
    %v3259 = vunpack.c.l.b16 %v1501
    %v3260 = vunpack.c.h.b16 %v1501
    %v3261 = vunpack.c.l.b16 %v1502
    %v3262 = vunpack.c.h.b16 %v1502
    %v3263 = vunpack.c.l.b16 %v1503
    %v3264 = vunpack.c.h.b16 %v1503
    %v3265 = vunpack.c.l.b16 %v1504
    %v3266 = vunpack.c.h.b16 %v1504
    %v3267 = vunpack.c.l.b16 %v1505
    %v3268 = vunpack.c.h.b16 %v1505
    %v3269 = vunpack.c.l.b16 %v1506
    %v3270 = vunpack.c.h.b16 %v1506
    %v3271 = vunpack.c.l.b16 %v1507
    %v3272 = vunpack.c.h.b16 %v1507
    %v3273 = vunpack.c.l.b16 %v1508
    %v3274 = vunpack.c.h.b16 %v1508
    %v3275 = vunpack.c.l.b16 %v1509
    %v3276 = vunpack.c.h.b16 %v1509
    %v3277 = vunpack.c.l.b16 %v1510
    %v3278 = vunpack.c.h.b16 %v1510
    %v3279 = vunpack.c.l.b16 %v1511
    %v3280 = vunpack.c.h.b16 %v1511
    %v3281 = vunpack.c.l.b16 %v1512
    %v3282 = vunpack.c.h.b16 %v1512
    %v3283 = vunpack.c.l.b16 %v1513
    %v3284 = vunpack.c.h.b16 %v1513
    %v3285 = vunpack.c.l.b16 %v1514
    %v3286 = vunpack.c.h.b16 %v1514
    %v3287 = vunpack.c.l.b16 %v1515
    %v3288 = vunpack.c.h.b16 %v1515
    %v3289 = vunpack.c.l.b16 %v1516
    %v3290 = vunpack.c.h.b16 %v1516
    %v3291 = vunpack.c.l.b16 %v1517
    %v3292 = vunpack.c.h.b16 %v1517
    %v3293 = vunpack.c.l.b16 %v1518
    %v3294 = vunpack.c.h.b16 %v1518
    %v3295 = vunpack.c.l.b16 %v1519
    %v3296 = vunpack.c.h.b16 %v1519
    %v3297 = vunpack.c.l.b16 %v1520
    %v3298 = vunpack.c.h.b16 %v1520
    %v3299 = vunpack.c.l.b16 %v1521
    %v3300 = vunpack.c.h.b16 %v1521
    %v3301 = vunpack.c.l.b16 %v1522
    %v3302 = vunpack.c.h.b16 %v1522
    %v3303 = vunpack.c.l.b16 %v1523
    %v3304 = vunpack.c.h.b16 %v1523
    %v3305 = vunpack.c.l.b16 %v1524
    %v3306 = vunpack.c.h.b16 %v1524
    %v3307 = vunpack.c.l.b16 %v1525
    %v3308 = vunpack.c.h.b16 %v1525
    %v3309 = vunpack.c.l.b16 %v1526
    %v3310 = vunpack.c.h.b16 %v1526
    %v3311 = vunpack.c.l.b16 %v1527
    %v3312 = vunpack.c.h.b16 %v1527
    %v3313 = vunpack.c.l.b16 %v1528
    %v3314 = vunpack.c.h.b16 %v1528
    %v3315 = vunpack.c.l.b16 %v1529
    %v3316 = vunpack.c.h.b16 %v1529
    %v3317 = vunpack.c.l.b16 %v1530
    %v3318 = vunpack.c.h.b16 %v1530
    %v3319 = vunpack.c.l.b16 %v1531
    %v3320 = vunpack.c.h.b16 %v1531
    %v3321 = vunpack.c.l.b16 %v1532
    %v3322 = vunpack.c.h.b16 %v1532
    %v3323 = vunpack.c.l.b16 %v1533
    %v3324 = vunpack.c.h.b16 %v1533
    %v3325 = vunpack.c.l.b16 %v1534
    %v3326 = vunpack.c.h.b16 %v1534
    %v3327 = vunpack.c.l.b16 %v1535
    %v3328 = vunpack.c.h.b16 %v1535
    %v3329 = vunpack.c.l.b16 %v1536
    %v3330 = vunpack.c.h.b16 %v1536
    %v3331 = vunpack.c.l.b16 %v1537
    %v3332 = vunpack.c.h.b16 %v1537
    %v3333 = vunpack.c.l.b16 %v1538
    %v3334 = vunpack.c.h.b16 %v1538
    %v3335 = vunpack.c.l.b16 %v1539
    %v3336 = vunpack.c.h.b16 %v1539
    %v3337 = vunpack.c.l.b16 %v1540
    %v3338 = vunpack.c.h.b16 %v1540
    %v3339 = vunpack.c.l.b16 %v1541
    %v3340 = vunpack.c.h.b16 %v1541
    %v3341 = vunpack.c.l.b16 %v1542
    %v3342 = vunpack.c.h.b16 %v1542
    %v3343 = vunpack.c.l.b16 %v1543
    %v3344 = vunpack.c.h.b16 %v1543
    %v3345 = vunpack.c.l.b16 %v1544
    %v3346 = vunpack.c.h.b16 %v1544
    %v3347 = vunpack.c.l.b16 %v1545
    %v3348 = vunpack.c.h.b16 %v1545
    %v3349 = vunpack.c.l.b16 %v1546
    %v3350 = vunpack.c.h.b16 %v1546
    %v3351 = vunpack.c.l.b16 %v1547
    %v3352 = vunpack.c.h.b16 %v1547
    %v3353 = vunpack.c.l.b16 %v1548
    %v3354 = vunpack.c.h.b16 %v1548
    %v3355 = vunpack.c.l.b16 %v1549
    %v3356 = vunpack.c.h.b16 %v1549
    %v3357 = vunpack.c.l.b16 %v1550
    %v3358 = vunpack.c.h.b16 %v1550
    %v3359 = vunpack.c.l.b16 %v1551
    %v3360 = vunpack.c.h.b16 %v1551
    %v3361 = vunpack.c.l.b16 %v1552
    %v3362 = vunpack.c.h.b16 %v1552
    %v3363 = vunpack.c.l.b16 %v1553
    %v3364 = vunpack.c.h.b16 %v1553
    %v3365 = vunpack.c.l.b16 %v1554
    %v3366 = vunpack.c.h.b16 %v1554
    %v3367 = vunpack.c.l.b16 %v1555
    %v3368 = vunpack.c.h.b16 %v1555
    %v3369 = vunpack.c.l.b16 %v1556
    %v3370 = vunpack.c.h.b16 %v1556
    %v3371 = vunpack.c.l.b16 %v1557
    %v3372 = vunpack.c.h.b16 %v1557
    %v3373 = vunpack.c.l.b16 %v1558
    %v3374 = vunpack.c.h.b16 %v1558
    %v3375 = vunpack.c.l.b16 %v1559
    %v3376 = vunpack.c.h.b16 %v1559
    %v3377 = vunpack.c.l.b16 %v1560
    %v3378 = vunpack.c.h.b16 %v1560
    %v3379 = vunpack.c.l.b16 %v1561
    %v3380 = vunpack.c.h.b16 %v1561
    %v3381 = vunpack.c.l.b16 %v1562
    %v3382 = vunpack.c.h.b16 %v1562
    %v3383 = vunpack.c.l.b16 %v1563
    %v3384 = vunpack.c.h.b16 %v1563
    %v3385 = vunpack.c.l.b16 %v1564
    %v3386 = vunpack.c.h.b16 %v1564
    %v3387 = vunpack.c.l.b16 %v1565
    %v3388 = vunpack.c.h.b16 %v1565
    %v3389 = vunpack.c.l.b16 %v1566
    %v3390 = vunpack.c.h.b16 %v1566
    %v3391 = vunpack.c.l.b16 %v1567
    %v3392 = vunpack.c.h.b16 %v1567
    %v3393 = vunpack.c.l.b16 %v1568
    %v3394 = vunpack.c.h.b16 %v1568
    %v3395 = vunpack.c.l.b16 %v1569
    %v3396 = vunpack.c.h.b16 %v1569
    %v3397 = vunpack.c.l.b16 %v1570
    %v3398 = vunpack.c.h.b16 %v1570
    %v3399 = vunpack.c.l.b16 %v1571
    %v3400 = vunpack.c.h.b16 %v1571
    %v3401 = vunpack.c.l.b16 %v1572
    %v3402 = vunpack.c.h.b16 %v1572
    %v3403 = vunpack.c.l.b16 %v1573
    %v3404 = vunpack.c.h.b16 %v1573
    %v3405 = vunpack.c.l.b16 %v1574
    %v3406 = vunpack.c.h.b16 %v1574
    %v3407 = vunpack.c.l.b16 %v1575
    %v3408 = vunpack.c.h.b16 %v1575
    %v3409 = vunpack.c.l.b16 %v1576
    %v3410 = vunpack.c.h.b16 %v1576
    %v3411 = vunpack.c.l.b16 %v1577
    %v3412 = vunpack.c.h.b16 %v1577
    %v3413 = vunpack.c.l.b16 %v1578
    %v3414 = vunpack.c.h.b16 %v1578
    %v3415 = vunpack.c.l.b16 %v1579
    %v3416 = vunpack.c.h.b16 %v1579
    %v3417 = vunpack.c.l.b16 %v1580
    %v3418 = vunpack.c.h.b16 %v1580
    %v3419 = vunpack.c.l.b16 %v1581
    %v3420 = vunpack.c.h.b16 %v1581
    %v3421 = vunpack.c.l.b16 %v1582
    %v3422 = vunpack.c.h.b16 %v1582
    %v3423 = vunpack.c.l.b16 %v1583
    %v3424 = vunpack.c.h.b16 %v1583
    %v3425 = vunpack.c.l.b16 %v1584
    %v3426 = vunpack.c.h.b16 %v1584
    %v3427 = vunpack.c.l.b16 %v1585
    %v3428 = vunpack.c.h.b16 %v1585
    %v3429 = vunpack.c.l.b16 %v1586
    %v3430 = vunpack.c.h.b16 %v1586
    %v3431 = vunpack.c.l.b16 %v1587
    %v3432 = vunpack.c.h.b16 %v1587
    %v3433 = vunpack.c.l.b16 %v1588
    %v3434 = vunpack.c.h.b16 %v1588
    %v3435 = vunpack.c.l.b16 %v1589
    %v3436 = vunpack.c.h.b16 %v1589
    %v3437 = vunpack.c.l.b16 %v1590
    %v3438 = vunpack.c.h.b16 %v1590
    %v3439 = vunpack.c.l.b16 %v1591
    %v3440 = vunpack.c.h.b16 %v1591
    %v3441 = vunpack.c.l.b16 %v1592
    %v3442 = vunpack.c.h.b16 %v1592
    %v3443 = vunpack.c.l.b16 %v1593
    %v3444 = vunpack.c.h.b16 %v1593
    %v3445 = vunpack.c.l.b16 %v1594
    %v3446 = vunpack.c.h.b16 %v1594
    %v3447 = vunpack.c.l.b16 %v1595
    %v3448 = vunpack.c.h.b16 %v1595
    %v3449 = vunpack.c.l.b16 %v1596
    %v3450 = vunpack.c.h.b16 %v1596
    %v3451 = vunpack.c.l.b16 %v1597
    %v3452 = vunpack.c.h.b16 %v1597
    %v3453 = vunpack.c.l.b16 %v1598
    %v3454 = vunpack.c.h.b16 %v1598
    %v3455 = vunpack.c.l.b16 %v1599
    %v3456 = vunpack.c.h.b16 %v1599
    %v3457 = vunpack.c.l.b16 %v1600
    %v3458 = vunpack.c.h.b16 %v1600
    %v3459 = vunpack.c.l.b16 %v1601
    %v3460 = vunpack.c.h.b16 %v1601
    %v3461 = vunpack.c.l.b16 %v1602
    %v3462 = vunpack.c.h.b16 %v1602
    %v3463 = vunpack.c.l.b16 %v1603
    %v3464 = vunpack.c.h.b16 %v1603
    %v3465 = vunpack.c.l.b16 %v1604
    %v3466 = vunpack.c.h.b16 %v1604
    %v3467 = vunpack.c.l.b16 %v1605
    %v3468 = vunpack.c.h.b16 %v1605
    %v3469 = vunpack.c.l.b16 %v1606
    %v3470 = vunpack.c.h.b16 %v1606
    %v3471 = vunpack.c.l.b16 %v1607
    %v3472 = vunpack.c.h.b16 %v1607
    %v3473 = vunpack.c.l.b16 %v1608
    %v3474 = vunpack.c.h.b16 %v1608
    %v3475 = vunpack.c.l.b16 %v1609
    %v3476 = vunpack.c.h.b16 %v1609
    %v3477 = vunpack.c.l.b16 %v1610
    %v3478 = vunpack.c.h.b16 %v1610
    %v3479 = vunpack.c.l.b16 %v1611
    %v3480 = vunpack.c.h.b16 %v1611
    %v3481 = vunpack.c.l.b16 %v1612
    %v3482 = vunpack.c.h.b16 %v1612
    %v3483 = vunpack.c.l.b16 %v1613
    %v3484 = vunpack.c.h.b16 %v1613
    %v3485 = vunpack.c.l.b16 %v1614
    %v3486 = vunpack.c.h.b16 %v1614
    %v3487 = vunpack.c.l.b16 %v1615
    %v3488 = vunpack.c.h.b16 %v1615
    %v3489 = vunpack.c.l.b16 %v1616
    %v3490 = vunpack.c.h.b16 %v1616
    %v3491 = vunpack.c.l.b16 %v1617
    %v3492 = vunpack.c.h.b16 %v1617
    %v3493 = vunpack.c.l.b16 %v1618
    %v3494 = vunpack.c.h.b16 %v1618
    %v3495 = vunpack.c.l.b16 %v1619
    %v3496 = vunpack.c.h.b16 %v1619
    %v3497 = vunpack.c.l.b16 %v1620
    %v3498 = vunpack.c.h.b16 %v1620
    %v3499 = vunpack.c.l.b16 %v1621
    %v3500 = vunpack.c.h.b16 %v1621
    %v3501 = vunpack.c.l.b16 %v1622
    %v3502 = vunpack.c.h.b16 %v1622
    %v3503 = vunpack.c.l.b16 %v1623
    %v3504 = vunpack.c.h.b16 %v1623
    %v3505 = vunpack.c.l.b16 %v1624
    %v3506 = vunpack.c.h.b16 %v1624
    %v3507 = vunpack.c.l.b16 %v1625
    %v3508 = vunpack.c.h.b16 %v1625
    %v3509 = vunpack.c.l.b16 %v1626
    %v3510 = vunpack.c.h.b16 %v1626
    %v3511 = vunpack.c.l.b16 %v1627
    %v3512 = vunpack.c.h.b16 %v1627
    %v3513 = vunpack.c.l.b16 %v1628
    %v3514 = vunpack.c.h.b16 %v1628
    %v3515 = vunpack.c.l.b16 %v1629
    %v3516 = vunpack.c.h.b16 %v1629
    %v3517 = vunpack.c.l.b16 %v1630
    %v3518 = vunpack.c.h.b16 %v1630
    %v3519 = vunpack.c.l.b16 %v1631
    %v3520 = vunpack.c.h.b16 %v1631
    %v3521 = vunpack.c.l.b16 %v1632
    %v3522 = vunpack.c.h.b16 %v1632
    %v3523 = vunpack.c.l.b16 %v1633
    %v3524 = vunpack.c.h.b16 %v1633
    %v3525 = vunpack.c.l.b16 %v1634
    %v3526 = vunpack.c.h.b16 %v1634
    %v3527 = vunpack.c.l.b16 %v1635
    %v3528 = vunpack.c.h.b16 %v1635
    %v3529 = vunpack.c.l.b16 %v1636
    %v3530 = vunpack.c.h.b16 %v1636
    %v3531 = vunpack.c.l.b16 %v1637
    %v3532 = vunpack.c.h.b16 %v1637
    %v3533 = vunpack.c.l.b16 %v1638
    %v3534 = vunpack.c.h.b16 %v1638
    %v3535 = vunpack.c.l.b16 %v1639
    %v3536 = vunpack.c.h.b16 %v1639
    %v3537 = vunpack.c.l.b16 %v1640
    %v3538 = vunpack.c.h.b16 %v1640
    %v3539 = vunpack.c.l.b16 %v1641
    %v3540 = vunpack.c.h.b16 %v1641
    %v3541 = vunpack.c.l.b16 %v1642
    %v3542 = vunpack.c.h.b16 %v1642
    %v3543 = vunpack.c.l.b16 %v1643
    %v3544 = vunpack.c.h.b16 %v1643
    %v3545 = vunpack.c.l.b16 %v1644
    %v3546 = vunpack.c.h.b16 %v1644
    %v3547 = vunpack.c.l.b16 %v1645
    %v3548 = vunpack.c.h.b16 %v1645
    %v3549 = vunpack.c.l.b16 %v1646
    %v3550 = vunpack.c.h.b16 %v1646
    %v3551 = vunpack.c.l.b16 %v1647
    %v3552 = vunpack.c.h.b16 %v1647
    %v3553 = vunpack.c.l.b16 %v1648
    %v3554 = vunpack.c.h.b16 %v1648
    %v3555 = vunpack.c.l.b16 %v1649
    %v3556 = vunpack.c.h.b16 %v1649
    %v3557 = vunpack.c.l.b16 %v1650
    %v3558 = vunpack.c.h.b16 %v1650
    %v3559 = vunpack.c.l.b16 %v1651
    %v3560 = vunpack.c.h.b16 %v1651
    %v3561 = vunpack.c.l.b16 %v1652
    %v3562 = vunpack.c.h.b16 %v1652
    %v3563 = vunpack.c.l.b16 %v1653
    %v3564 = vunpack.c.h.b16 %v1653
    %v3565 = vunpack.c.l.b16 %v1654
    %v3566 = vunpack.c.h.b16 %v1654
    %v3567 = vunpack.c.l.b16 %v1655
    %v3568 = vunpack.c.h.b16 %v1655
    %v3569 = vunpack.c.l.b16 %v1656
    %v3570 = vunpack.c.h.b16 %v1656
    %v3571 = vunpack.c.l.b16 %v1657
    %v3572 = vunpack.c.h.b16 %v1657
    %v3573 = vunpack.c.l.b16 %v1658
    %v3574 = vunpack.c.h.b16 %v1658
    %v3575 = vunpack.c.l.b16 %v1659
    %v3576 = vunpack.c.h.b16 %v1659
    %v3577 = vunpack.c.l.b16 %v1660
    %v3578 = vunpack.c.h.b16 %v1660
    %v3579 = vunpack.c.l.b16 %v1661
    %v3580 = vunpack.c.h.b16 %v1661
    %v3581 = vunpack.c.l.b16 %v1662
    %v3582 = vunpack.c.h.b16 %v1662
    %v3583 = vunpack.c.l.b16 %v1663
    %v3584 = vunpack.c.h.b16 %v1663
    %v3585 = vunpack.c.l.b16 %v1664
    %v3586 = vunpack.c.h.b16 %v1664
    %v3587 = vunpack.c.l.b16 %v1665
    %v3588 = vunpack.c.h.b16 %v1665
    %v3589 = vunpack.c.l.b16 %v1666
    %v3590 = vunpack.c.h.b16 %v1666
    %v3591 = vunpack.c.l.b16 %v1667
    %v3592 = vunpack.c.h.b16 %v1667
    %v3593 = vunpack.c.l.b16 %v1668
    %v3594 = vunpack.c.h.b16 %v1668
    %v3595 = vunpack.c.l.b16 %v1669
    %v3596 = vunpack.c.h.b16 %v1669
    %v3597 = vunpack.c.l.b16 %v1670
    %v3598 = vunpack.c.h.b16 %v1670
    %v3599 = vunpack.c.l.b16 %v1671
    %v3600 = vunpack.c.h.b16 %v1671
    %v3601 = vunpack.c.l.b16 %v1672
    %v3602 = vunpack.c.h.b16 %v1672
    %v3603 = vunpack.c.l.b16 %v1673
    %v3604 = vunpack.c.h.b16 %v1673
    %v3605 = vunpack.c.l.b16 %v1674
    %v3606 = vunpack.c.h.b16 %v1674
    %v3607 = vunpack.c.l.b16 %v1675
    %v3608 = vunpack.c.h.b16 %v1675
    %v3609 = vunpack.c.l.b16 %v1676
    %v3610 = vunpack.c.h.b16 %v1676
    %v3611 = vunpack.c.l.b16 %v1677
    %v3612 = vunpack.c.h.b16 %v1677
    %v3613 = vunpack.c.l.b16 %v1678
    %v3614 = vunpack.c.h.b16 %v1678
    %v3615 = vunpack.c.l.b16 %v1679
    %v3616 = vunpack.c.h.b16 %v1679
    %v3617 = vunpack.c.l.b16 %v1680
    %v3618 = vunpack.c.h.b16 %v1680
    %v3619 = vunpack.c.l.b16 %v1681
    %v3620 = vunpack.c.h.b16 %v1681
    %v3621 = vunpack.c.l.b16 %v1682
    %v3622 = vunpack.c.h.b16 %v1682
    %v3623 = vunpack.c.l.b16 %v1683
    %v3624 = vunpack.c.h.b16 %v1683
    %v3625 = vunpack.c.l.b16 %v1684
    %v3626 = vunpack.c.h.b16 %v1684
    %v3627 = vunpack.c.l.b16 %v1685
    %v3628 = vunpack.c.h.b16 %v1685
    %v3629 = vunpack.c.l.b16 %v1686
    %v3630 = vunpack.c.h.b16 %v1686
    %v3631 = vunpack.c.l.b16 %v1687
    %v3632 = vunpack.c.h.b16 %v1687
    %v3633 = vunpack.c.l.b16 %v1688
    %v3634 = vunpack.c.h.b16 %v1688
    %v3635 = vunpack.c.l.b16 %v1689
    %v3636 = vunpack.c.h.b16 %v1689
    %v3637 = vunpack.c.l.b16 %v1690
    %v3638 = vunpack.c.h.b16 %v1690
    %v3639 = vunpack.c.l.b16 %v1691
    %v3640 = vunpack.c.h.b16 %v1691
    %v3641 = vunpack.c.l.b16 %v1692
    %v3642 = vunpack.c.h.b16 %v1692
    %v3643 = vunpack.c.l.b16 %v1693
    %v3644 = vunpack.c.h.b16 %v1693
    %v3645 = vunpack.c.l.b16 %v1694
    %v3646 = vunpack.c.h.b16 %v1694
    %v3647 = vunpack.c.l.b16 %v1695
    %v3648 = vunpack.c.h.b16 %v1695
    %v3649 = vunpack.c.l.b16 %v1696
    %v3650 = vunpack.c.h.b16 %v1696
    %v3651 = vunpack.c.l.b16 %v1697
    %v3652 = vunpack.c.h.b16 %v1697
    %v3653 = vunpack.c.l.b16 %v1698
    %v3654 = vunpack.c.h.b16 %v1698
    %v3655 = vunpack.c.l.b16 %v1699
    %v3656 = vunpack.c.h.b16 %v1699
    %v3657 = vunpack.c.l.b16 %v1700
    %v3658 = vunpack.c.h.b16 %v1700
    %v3659 = vunpack.c.l.b16 %v1701
    %v3660 = vunpack.c.h.b16 %v1701
    %v3661 = vunpack.c.l.b16 %v1702
    %v3662 = vunpack.c.h.b16 %v1702
    %v3663 = vunpack.c.l.b16 %v1703
    %v3664 = vunpack.c.h.b16 %v1703
    %v3665 = vunpack.c.l.b16 %v1704
    %v3666 = vunpack.c.h.b16 %v1704
    %v3667 = vunpack.c.l.b16 %v1705
    %v3668 = vunpack.c.h.b16 %v1705
    %v3669 = vunpack.c.l.b16 %v1706
    %v3670 = vunpack.c.h.b16 %v1706
    %v3671 = vunpack.c.l.b16 %v1707
    %v3672 = vunpack.c.h.b16 %v1707
    %v3673 = vunpack.c.l.b16 %v1708
    %v3674 = vunpack.c.h.b16 %v1708
    %v3675 = vunpack.c.l.b16 %v1709
    %v3676 = vunpack.c.h.b16 %v1709
    %v3677 = vunpack.c.l.b16 %v1710
    %v3678 = vunpack.c.h.b16 %v1710
    %v3679 = vunpack.c.l.b16 %v1711
    %v3680 = vunpack.c.h.b16 %v1711
    %v3681 = vunpack.c.l.b16 %v1712
    %v3682 = vunpack.c.h.b16 %v1712
    %v3683 = vunpack.c.l.b16 %v1713
    %v3684 = vunpack.c.h.b16 %v1713
    %v3685 = vunpack.c.l.b16 %v1714
    %v3686 = vunpack.c.h.b16 %v1714
    %v3687 = vunpack.c.l.b16 %v1715
    %v3688 = vunpack.c.h.b16 %v1715
    %v3689 = vunpack.c.l.b16 %v1716
    %v3690 = vunpack.c.h.b16 %v1716
    %v3691 = vunpack.c.l.b16 %v1717
    %v3692 = vunpack.c.h.b16 %v1717
    %v3693 = vunpack.c.l.b16 %v1718
    %v3694 = vunpack.c.h.b16 %v1718
    %v3695 = vunpack.c.l.b16 %v1719
    %v3696 = vunpack.c.h.b16 %v1719
    %v3697 = vunpack.c.l.b16 %v1720
    %v3698 = vunpack.c.h.b16 %v1720
    %v3699 = vunpack.c.l.b16 %v1721
    %v3700 = vunpack.c.h.b16 %v1721
    %v3701 = vunpack.c.l.b16 %v1722
    %v3702 = vunpack.c.h.b16 %v1722
    %v3703 = vunpack.c.l.b16 %v1723
    %v3704 = vunpack.c.h.b16 %v1723
    %v3705 = vunpack.c.l.b16 %v1724
    %v3706 = vunpack.c.h.b16 %v1724
    %v3707 = vunpack.c.l.b16 %v1725
    %v3708 = vunpack.c.h.b16 %v1725
    %v3709 = vunpack.c.l.b16 %v1726
    %v3710 = vunpack.c.h.b16 %v1726
    %v3711 = vunpack.c.l.b16 %v1727
    %v3712 = vunpack.c.h.b16 %v1727
    %v3713 = vunpack.c.l.b16 %v1728
    %v3714 = vunpack.c.h.b16 %v1728
    %v3715 = vunpack.c.l.b16 %v1729
    %v3716 = vunpack.c.h.b16 %v1729
    %v3717 = vunpack.c.l.b16 %v1730
    %v3718 = vunpack.c.h.b16 %v1730
    %v3719 = vunpack.c.l.b16 %v1731
    %v3720 = vunpack.c.h.b16 %v1731
    %v3721 = vunpack.c.l.b16 %v1732
    %v3722 = vunpack.c.h.b16 %v1732
    %v3723 = vunpack.c.l.b16 %v1733
    %v3724 = vunpack.c.h.b16 %v1733
    %v3725 = vunpack.c.l.b16 %v1734
    %v3726 = vunpack.c.h.b16 %v1734
    %v3727 = vunpack.c.l.b16 %v1735
    %v3728 = vunpack.c.h.b16 %v1735
    %v3729 = vunpack.c.l.b16 %v1736
    %v3730 = vunpack.c.h.b16 %v1736
    %v3731 = vunpack.c.l.b16 %v1737
    %v3732 = vunpack.c.h.b16 %v1737
    %v3733 = vunpack.c.l.b16 %v1738
    %v3734 = vunpack.c.h.b16 %v1738
    %v3735 = vunpack.c.l.b16 %v1739
    %v3736 = vunpack.c.h.b16 %v1739
    %v3737 = vunpack.c.l.b16 %v1740
    %v3738 = vunpack.c.h.b16 %v1740
    %v3739 = vunpack.c.l.b16 %v1741
    %v3740 = vunpack.c.h.b16 %v1741
    %v3741 = vunpack.c.l.b16 %v1742
    %v3742 = vunpack.c.h.b16 %v1742
    %v3743 = vunpack.c.l.b16 %v1743
    %v3744 = vunpack.c.h.b16 %v1743
    %v3745 = vunpack.c.l.b16 %v1744
    %v3746 = vunpack.c.h.b16 %v1744
    %v3747 = vunpack.c.l.b16 %v1745
    %v3748 = vunpack.c.h.b16 %v1745
    %v3749 = vunpack.c.l.b16 %v1746
    %v3750 = vunpack.c.h.b16 %v1746
    %v3751 = vunpack.c.l.b16 %v1747
    %v3752 = vunpack.c.h.b16 %v1747
    %v3753 = vunpack.c.l.b16 %v1748
    %v3754 = vunpack.c.h.b16 %v1748
    %v3755 = vunpack.c.l.b16 %v1749
    %v3756 = vunpack.c.h.b16 %v1749
    %v3757 = vunpack.c.l.b16 %v1750
    %v3758 = vunpack.c.h.b16 %v1750
    %v3759 = vunpack.c.l.b16 %v1751
    %v3760 = vunpack.c.h.b16 %v1751
    %v3761 = vunpack.c.l.b16 %v1752
    %v3762 = vunpack.c.h.b16 %v1752
    %v3763 = vunpack.c.l.b16 %v1753
    %v3764 = vunpack.c.h.b16 %v1753
    %v3765 = vunpack.c.l.b16 %v1754
    %v3766 = vunpack.c.h.b16 %v1754
    %v3767 = vunpack.c.l.b16 %v1755
    %v3768 = vunpack.c.h.b16 %v1755
    %v3769 = vunpack.c.l.b16 %v1756
    %v3770 = vunpack.c.h.b16 %v1756
    %v3771 = vunpack.c.l.b16 %v1757
    %v3772 = vunpack.c.h.b16 %v1757
    %v3773 = vunpack.c.l.b16 %v1758
    %v3774 = vunpack.c.h.b16 %v1758
    %v3775 = vunpack.c.l.b16 %v1759
    %v3776 = vunpack.c.h.b16 %v1759
    %v3777 = vunpack.c.l.b16 %v1760
    %v3778 = vunpack.c.h.b16 %v1760
    %v3779 = vunpack.c.l.b16 %v1761
    %v3780 = vunpack.c.h.b16 %v1761
    %v3781 = vunpack.c.l.b16 %v1762
    %v3782 = vunpack.c.h.b16 %v1762
    %v3783 = vunpack.c.l.b16 %v1763
    %v3784 = vunpack.c.h.b16 %v1763
    %v3785 = vunpack.c.l.b16 %v1764
    %v3786 = vunpack.c.h.b16 %v1764
    %v3787 = vunpack.c.l.b16 %v1765
    %v3788 = vunpack.c.h.b16 %v1765
    %v3789 = vunpack.c.l.b16 %v1766
    %v3790 = vunpack.c.h.b16 %v1766
    %v3791 = vunpack.c.l.b16 %v1767
    %v3792 = vunpack.c.h.b16 %v1767
    %v3793 = vunpack.c.l.b16 %v1768
    %v3794 = vunpack.c.h.b16 %v1768
    %v3795 = vunpack.c.l.b16 %v1769
    %v3796 = vunpack.c.h.b16 %v1769
    %v3797 = vunpack.c.l.b16 %v1770
    %v3798 = vunpack.c.h.b16 %v1770
    %v3799 = vunpack.c.l.b16 %v1771
    %v3800 = vunpack.c.h.b16 %v1771
    %v3801 = vunpack.c.l.b16 %v1772
    %v3802 = vunpack.c.h.b16 %v1772
    %v3803 = vunpack.c.l.b16 %v1773
    %v3804 = vunpack.c.h.b16 %v1773
    %v3805 = vunpack.c.l.b16 %v1774
    %v3806 = vunpack.c.h.b16 %v1774
    %v3807 = vunpack.c.l.b16 %v1775
    %v3808 = vunpack.c.h.b16 %v1775
    %v3809 = vunpack.c.l.b16 %v1776
    %v3810 = vunpack.c.h.b16 %v1776
    %v3811 = vunpack.c.l.b16 %v1777
    %v3812 = vunpack.c.h.b16 %v1777
    %v3813 = vunpack.c.l.b16 %v1778
    %v3814 = vunpack.c.h.b16 %v1778
    %v3815 = vunpack.c.l.b16 %v1779
    %v3816 = vunpack.c.h.b16 %v1779
    %v3817 = vunpack.c.l.b16 %v1780
    %v3818 = vunpack.c.h.b16 %v1780
    %v3819 = vunpack.c.l.b16 %v1781
    %v3820 = vunpack.c.h.b16 %v1781
    %v3821 = vunpack.c.l.b16 %v1782
    %v3822 = vunpack.c.h.b16 %v1782
    %v3823 = vunpack.c.l.b16 %v1783
    %v3824 = vunpack.c.h.b16 %v1783
    %v3825 = vunpack.c.l.b16 %v1784
    %v3826 = vunpack.c.h.b16 %v1784
    %v3827 = vunpack.c.l.b16 %v1785
    %v3828 = vunpack.c.h.b16 %v1785
    %v3829 = vunpack.c.l.b16 %v1786
    %v3830 = vunpack.c.h.b16 %v1786
    %v3831 = vunpack.c.l.b16 %v1787
    %v3832 = vunpack.c.h.b16 %v1787
    %v3833 = vunpack.c.l.b16 %v1788
    %v3834 = vunpack.c.h.b16 %v1788
    %v3835 = vunpack.c.l.b16 %v1789
    %v3836 = vunpack.c.h.b16 %v1789
    %v3837 = vunpack.c.l.b16 %v1790
    %v3838 = vunpack.c.h.b16 %v1790
    %v3839 = vunpack.c.l.b16 %v1791
    %v3840 = vunpack.c.h.b16 %v1791
    %v3841 = vunpack.c.l.b16 %v1792
    %v3842 = vunpack.c.h.b16 %v1792
    %v3843 = vunpack.c.l.b16 %v1793
    %v3844 = vunpack.c.h.b16 %v1793
    %v3845 = vunpack.c.l.b16 %v1794
    %v3846 = vunpack.c.h.b16 %v1794
    %v3847 = vunpack.c.l.b16 %v1795
    %v3848 = vunpack.c.h.b16 %v1795
    %v3849 = vunpack.c.l.b16 %v1796
    %v3850 = vunpack.c.h.b16 %v1796
    %v3851 = vunpack.c.l.b16 %v1797
    %v3852 = vunpack.c.h.b16 %v1797
    %v3853 = vunpack.c.l.b16 %v1798
    %v3854 = vunpack.c.h.b16 %v1798
    %v3855 = vunpack.c.l.b16 %v1799
    %v3856 = vunpack.c.h.b16 %v1799
    %v3857 = vunpack.c.l.b16 %v1800
    %v3858 = vunpack.c.h.b16 %v1800
    %v3859 = vunpack.c.l.b16 %v1801
    %v3860 = vunpack.c.h.b16 %v1801
    %v3861 = vunpack.c.l.b16 %v1802
    %v3862 = vunpack.c.h.b16 %v1802
    %v3863 = vunpack.c.l.b16 %v1803
    %v3864 = vunpack.c.h.b16 %v1803
    %v3865 = vunpack.c.l.b16 %v1804
    %v3866 = vunpack.c.h.b16 %v1804
    %v3867 = vunpack.c.l.b16 %v1805
    %v3868 = vunpack.c.h.b16 %v1805
    %v3869 = vunpack.c.l.b16 %v1806
    %v3870 = vunpack.c.h.b16 %v1806
    %v3871 = vunpack.c.l.b16 %v1807
    %v3872 = vunpack.c.h.b16 %v1807
    %v3873 = vunpack.c.l.b16 %v1808
    %v3874 = vunpack.c.h.b16 %v1808
    %v3875 = vunpack.c.l.b16 %v1809
    %v3876 = vunpack.c.h.b16 %v1809
    %v3877 = vunpack.c.l.b16 %v1810
    %v3878 = vunpack.c.h.b16 %v1810
    %v3879 = vunpack.c.l.b16 %v1811
    %v3880 = vunpack.c.h.b16 %v1811
    %v3881 = vunpack.c.l.b16 %v1812
    %v3882 = vunpack.c.h.b16 %v1812
    %v3883 = vunpack.c.l.b16 %v1813
    %v3884 = vunpack.c.h.b16 %v1813
    %v3885 = vunpack.c.l.b16 %v1814
    %v3886 = vunpack.c.h.b16 %v1814
    %v3887 = vunpack.c.l.b16 %v1815
    %v3888 = vunpack.c.h.b16 %v1815
    %v3889 = vunpack.c.l.b16 %v1816
    %v3890 = vunpack.c.h.b16 %v1816
    %v3891 = vunpack.c.l.b16 %v1817
    %v3892 = vunpack.c.h.b16 %v1817
    %v3893 = vunpack.c.l.b16 %v1818
    %v3894 = vunpack.c.h.b16 %v1818
    %v3895 = vunpack.c.l.b16 %v1819
    %v3896 = vunpack.c.h.b16 %v1819
    %v3897 = vunpack.c.l.b16 %v1820
    %v3898 = vunpack.c.h.b16 %v1820
    %v3899 = vunpack.c.l.b16 %v1821
    %v3900 = vunpack.c.h.b16 %v1821
    %v3901 = vunpack.c.l.b16 %v1822
    %v3902 = vunpack.c.h.b16 %v1822
    %v3903 = vunpack.c.l.b16 %v1823
    %v3904 = vunpack.c.h.b16 %v1823
    %v3905 = vunpack.c.l.b16 %v1824
    %v3906 = vunpack.c.h.b16 %v1824
    %v3907 = vunpack.c.l.b16 %v1825
    %v3908 = vunpack.c.h.b16 %v1825
    %v3909 = vunpack.c.l.b16 %v1826
    %v3910 = vunpack.c.h.b16 %v1826
    %v3911 = vunpack.c.l.b16 %v1827
    %v3912 = vunpack.c.h.b16 %v1827
    %v3913 = vunpack.c.l.b16 %v1828
    %v3914 = vunpack.c.h.b16 %v1828
    %v3915 = vunpack.c.l.b16 %v1829
    %v3916 = vunpack.c.h.b16 %v1829
    %v3917 = vunpack.c.l.b16 %v1830
    %v3918 = vunpack.c.h.b16 %v1830
    %v3919 = vunpack.c.l.b16 %v1831
    %v3920 = vunpack.c.h.b16 %v1831
    %v3921 = vunpack.c.l.b16 %v1832
    %v3922 = vunpack.c.h.b16 %v1832
    %v3923 = vunpack.c.l.b16 %v1833
    %v3924 = vunpack.c.h.b16 %v1833
    %v3925 = vunpack.c.l.b16 %v1834
    %v3926 = vunpack.c.h.b16 %v1834
    %v3927 = vunpack.c.l.b16 %v1835
    %v3928 = vunpack.c.h.b16 %v1835
    %v3929 = vunpack.c.l.b16 %v1836
    %v3930 = vunpack.c.h.b16 %v1836
    %v3931 = vunpack.c.l.b16 %v1837
    %v3932 = vunpack.c.h.b16 %v1837
    %v3933 = vunpack.c.l.b16 %v1838
    %v3934 = vunpack.c.h.b16 %v1838
    %v3935 = vunpack.c.l.b16 %v1839
    %v3936 = vunpack.c.h.b16 %v1839
    %v3937 = vunpack.c.l.b16 %v1840
    %v3938 = vunpack.c.h.b16 %v1840
    %v3939 = vunpack.c.l.b16 %v1841
    %v3940 = vunpack.c.h.b16 %v1841
    %v3941 = vunpack.c.l.b16 %v1842
    %v3942 = vunpack.c.h.b16 %v1842
    %v3943 = vunpack.c.l.b16 %v1843
    %v3944 = vunpack.c.h.b16 %v1843
    %v3945 = vunpack.c.l.b16 %v1844
    %v3946 = vunpack.c.h.b16 %v1844
    %v3947 = vunpack.c.l.b16 %v1845
    %v3948 = vunpack.c.h.b16 %v1845
    %v3949 = vunpack.c.l.b16 %v1846
    %v3950 = vunpack.c.h.b16 %v1846
    %v3951 = vunpack.c.l.b16 %v1847
    %v3952 = vunpack.c.h.b16 %v1847
    %v3953 = vunpack.c.l.b16 %v1848
    %v3954 = vunpack.c.h.b16 %v1848
    %v3955 = vunpack.c.l.b16 %v1849
    %v3956 = vunpack.c.h.b16 %v1849
    %v3957 = vunpack.c.l.b16 %v1850
    %v3958 = vunpack.c.h.b16 %v1850
    %v3959 = vunpack.c.l.b16 %v1851
    %v3960 = vunpack.c.h.b16 %v1851
    %v3961 = vunpack.c.l.b16 %v1852
    %v3962 = vunpack.c.h.b16 %v1852
    %v3963 = vunpack.c.l.b16 %v1853
    %v3964 = vunpack.c.h.b16 %v1853
    %v3965 = vunpack.c.l.b16 %v1854
    %v3966 = vunpack.c.h.b16 %v1854
    %v3967 = vunpack.c.l.b16 %v1855
    %v3968 = vunpack.c.h.b16 %v1855
    %v3969 = vunpack.c.l.b16 %v1856
    %v3970 = vunpack.c.h.b16 %v1856
    %v3971 = vunpack.c.l.b16 %v1857
    %v3972 = vunpack.c.h.b16 %v1857
    %v3973 = vunpack.c.l.b16 %v1858
    %v3974 = vunpack.c.h.b16 %v1858
    %v3975 = vunpack.c.l.b16 %v1859
    %v3976 = vunpack.c.h.b16 %v1859
    %v3977 = vunpack.c.l.b16 %v1860
    %v3978 = vunpack.c.h.b16 %v1860
    %v3979 = vunpack.c.l.b16 %v1861
    %v3980 = vunpack.c.h.b16 %v1861
    %v3981 = vunpack.c.l.b16 %v1862
    %v3982 = vunpack.c.h.b16 %v1862
    %v3983 = vunpack.c.l.b16 %v1863
    %v3984 = vunpack.c.h.b16 %v1863
    %v3985 = vunpack.c.l.b16 %v1864
    %v3986 = vunpack.c.h.b16 %v1864
    %v3987 = vunpack.c.l.b16 %v1865
    %v3988 = vunpack.c.h.b16 %v1865
    %v3989 = vunpack.c.l.b16 %v1866
    %v3990 = vunpack.c.h.b16 %v1866
    %v3991 = vunpack.c.l.b16 %v1867
    %v3992 = vunpack.c.h.b16 %v1867
    %v3993 = vunpack.c.l.b16 %v1868
    %v3994 = vunpack.c.h.b16 %v1868
    %v3995 = vunpack.c.l.b16 %v1869
    %v3996 = vunpack.c.h.b16 %v1869
    %v3997 = vunpack.c.l.b16 %v1870
    %v3998 = vunpack.c.h.b16 %v1870
    %v3999 = vunpack.c.l.b16 %v1871
    %v4000 = vunpack.c.h.b16 %v1871
    %v4001 = vunpack.c.l.b16 %v1872
    %v4002 = vunpack.c.h.b16 %v1872
    %v4003 = vunpack.c.l.b16 %v1873
    %v4004 = vunpack.c.h.b16 %v1873
    %v4005 = vunpack.c.l.b16 %v1874
    %v4006 = vunpack.c.h.b16 %v1874
    %v4007 = vunpack.c.l.b16 %v1875
    %v4008 = vunpack.c.h.b16 %v1875
    %v4009 = vunpack.c.l.b16 %v1876
    %v4010 = vunpack.c.h.b16 %v1876
    %v4011 = vunpack.c.l.b16 %v1877
    %v4012 = vunpack.c.h.b16 %v1877
    %v4013 = vunpack.c.l.b16 %v1878
    %v4014 = vunpack.c.h.b16 %v1878
    %v4015 = vunpack.c.l.b16 %v1879
    %v4016 = vunpack.c.h.b16 %v1879
    %v4017 = vunpack.c.l.b16 %v1880
    %v4018 = vunpack.c.h.b16 %v1880
    %v4019 = vunpack.c.l.b16 %v1881
    %v4020 = vunpack.c.h.b16 %v1881
    %v4021 = vunpack.c.l.b16 %v1882
    %v4022 = vunpack.c.h.b16 %v1882
    %v4023 = vunpack.c.l.b16 %v1883
    %v4024 = vunpack.c.h.b16 %v1883
    %v4025 = vunpack.c.l.b16 %v1884
    %v4026 = vunpack.c.h.b16 %v1884
    %v4027 = vunpack.c.l.b16 %v1885
    %v4028 = vunpack.c.h.b16 %v1885
    %v4029 = vunpack.c.l.b16 %v1886
    %v4030 = vunpack.c.h.b16 %v1886
    %v4031 = vunpack.c.l.b16 %v1887
    %v4032 = vunpack.c.h.b16 %v1887
    %v4033 = vunpack.c.l.b16 %v1888
    %v4034 = vunpack.c.h.b16 %v1888
    %v4035 = vunpack.c.l.b16 %v1889
    %v4036 = vunpack.c.h.b16 %v1889
    %v4037 = vunpack.c.l.b16 %v1890
    %v4038 = vunpack.c.h.b16 %v1890
    %v4039 = vunpack.c.l.b16 %v1891
    %v4040 = vunpack.c.h.b16 %v1891
    %v4041 = vunpack.c.l.b16 %v1892
    %v4042 = vunpack.c.h.b16 %v1892
    %v4043 = vunpack.c.l.b16 %v1893
    %v4044 = vunpack.c.h.b16 %v1893
    %v4045 = vunpack.c.l.b16 %v1894
    %v4046 = vunpack.c.h.b16 %v1894
    %v4047 = vunpack.c.l.b16 %v1895
    %v4048 = vunpack.c.h.b16 %v1895
    %v4049 = vunpack.c.l.b16 %v1896
    %v4050 = vunpack.c.h.b16 %v1896
    %v4051 = vunpack.c.l.b16 %v1897
    %v4052 = vunpack.c.h.b16 %v1897
    %v4053 = vunpack.c.l.b16 %v1898
    %v4054 = vunpack.c.h.b16 %v1898
    %v4055 = vunpack.c.l.b16 %v1899
    %v4056 = vunpack.c.h.b16 %v1899
    %v4057 = vunpack.c.l.b16 %v1900
    %v4058 = vunpack.c.h.b16 %v1900
    %v4059 = vunpack.c.l.b16 %v1901
    %v4060 = vunpack.c.h.b16 %v1901
    %v4061 = vunpack.c.l.b16 %v1902
    %v4062 = vunpack.c.h.b16 %v1902
    %v4063 = vunpack.c.l.b16 %v1903
    %v4064 = vunpack.c.h.b16 %v1903
    %v4065 = vunpack.c.l.b16 %v1904
    %v4066 = vunpack.c.h.b16 %v1904
    %v4067 = vunpack.c.l.b16 %v1905
    %v4068 = vunpack.c.h.b16 %v1905
    %v4069 = vunpack.c.l.b16 %v1906
    %v4070 = vunpack.c.h.b16 %v1906
    %v4071 = vunpack.c.l.b16 %v1907
    %v4072 = vunpack.c.h.b16 %v1907
    %v4073 = vunpack.c.l.b16 %v1908
    %v4074 = vunpack.c.h.b16 %v1908
    %v4075 = vunpack.c.l.b16 %v1909
    %v4076 = vunpack.c.h.b16 %v1909
    %v4077 = vpack.c.b16 %v2727, %v2637
    %v4078 = vpack.c.b16 %v2728, %v2638
    %v4079 = vpack.c.b16 %v2729, %v2639
    %v4080 = vpack.c.b16 %v2730, %v2640
    %v4081 = vpack.c.b16 %v2731, %v2641
    %v4082 = vpack.c.b16 %v2732, %v2642
    %v4083 = vpack.c.b16 %v2733, %v2643
    %v4084 = vpack.c.b16 %v2734, %v2644
    %v4085 = vpack.c.b16 %v2735, %v2645
    %v4086 = vpack.c.b16 %v2736, %v2646
    %v4087 = vpack.c.b16 %v2737, %v2647
    %v4088 = vpack.c.b16 %v2738, %v2648
    %v4089 = vpack.c.b16 %v2739, %v2649
    %v4090 = vpack.c.b16 %v2740, %v2650
    %v4091 = vpack.c.b16 %v2741, %v2651
    %v4092 = vpack.c.b16 %v2742, %v2652
    %v4093 = vpack.c.b16 %v2743, %v2653
    %v4094 = vpack.c.b16 %v2744, %v2654
    %v4095 = vpack.c.b16 %v2745, %v2655
    %v4096 = vpack.c.b16 %v2746, %v2656
    %v4097 = vpack.c.b16 %v2747, %v2657
    %v4098 = vpack.c.b16 %v2748, %v2658
    %v4099 = vpack.c.b16 %v2749, %v2659
    %v4100 = vpack.c.b16 %v2750, %v2660
    %v4101 = vpack.c.b16 %v2751, %v2661
    %v4102 = vpack.c.b16 %v2752, %v2662
    %v4103 = vpack.c.b16 %v2753, %v2663
    %v4104 = vpack.c.b16 %v2754, %v2664
    %v4105 = vpack.c.b16 %v2755, %v2665
    %v4106 = vpack.c.b16 %v2756, %v2666
    %v4107 = vpack.c.b16 %v2757, %v2667
    %v4108 = vpack.c.b16 %v2758, %v2668
    %v4109 = vpack.c.b16 %v2759, %v2669
    %v4110 = vpack.c.b16 %v2760, %v2670
    %v4111 = vpack.c.b16 %v2761, %v2671
    %v4112 = vpack.c.b16 %v2762, %v2672
    %v4113 = vpack.c.b16 %v2763, %v2673
    %v4114 = vpack.c.b16 %v2764, %v2674
    %v4115 = vpack.c.b16 %v2765, %v2675
    %v4116 = vpack.c.b16 %v2766, %v2676
    %v4117 = vpack.c.b16 %v2767, %v2677
    %v4118 = vpack.c.b16 %v2768, %v2678
    %v4119 = vpack.c.b16 %v2769, %v2679
    %v4120 = vpack.c.b16 %v2770, %v2680
    %v4121 = vpack.c.b16 %v2771, %v2681
    %v4122 = vpack.c.b16 %v2772, %v2682
    %v4123 = vpack.c.b16 %v2773, %v2683
    %v4124 = vpack.c.b16 %v2774, %v2684
    %v4125 = vpack.c.b16 %v2775, %v2685
    %v4126 = vpack.c.b16 %v2776, %v2686
    %v4127 = vpack.c.b16 %v2777, %v2687
    %v4128 = vpack.c.b16 %v2778, %v2688
    %v4129 = vpack.c.b16 %v2779, %v2689
    %v4130 = vpack.c.b16 %v2780, %v2690
    %v4131 = vpack.c.b16 %v2781, %v2691
    %v4132 = vpack.c.b16 %v2782, %v2692
    %v4133 = vpack.c.b16 %v2783, %v2693
    %v4134 = vpack.c.b16 %v2784, %v2694
    %v4135 = vpack.c.b16 %v2785, %v2695
    %v4136 = vpack.c.b16 %v2786, %v2696
    %v4137 = vpack.c.b16 %v2787, %v2697
    %v4138 = vpack.c.b16 %v2788, %v2698
    %v4139 = vpack.c.b16 %v2789, %v2699
    %v4140 = vpack.c.b16 %v2790, %v2700
    %v4141 = vpack.c.b16 %v2791, %v2701
    %v4142 = vpack.c.b16 %v2792, %v2702
    %v4143 = vpack.c.b16 %v2793, %v2703
    %v4144 = vpack.c.b16 %v2794, %v2704
    %v4145 = vpack.c.b16 %v2795, %v2705
    %v4146 = vpack.c.b16 %v2796, %v2706
    %v4147 = vpack.c.b16 %v2797, %v2707
    %v4148 = vpack.c.b16 %v2798, %v2708
    %v4149 = vpack.c.b16 %v2799, %v2709
    %v4150 = vpack.c.b16 %v2800, %v2710
    %v4151 = vpack.c.b16 %v2801, %v2711
    %v4152 = vpack.c.b16 %v2802, %v2712
    %v4153 = vpack.c.b16 %v2803, %v2713
    %v4154 = vpack.c.b16 %v2804, %v2714
    %v4155 = vpack.c.b16 %v2805, %v2715
    %v4156 = vpack.c.b16 %v2806, %v2716
    %v4157 = vpack.c.b16 %v2807, %v2717
    %v4158 = vpack.c.b16 %v2808, %v2718
    %v4159 = vpack.c.b16 %v2809, %v2719
    %v4160 = vpack.c.b16 %v2810, %v2720
    %v4161 = vpack.c.b16 %v2811, %v2721
    %v4162 = vpack.c.b16 %v2812, %v2722
    %v4163 = vpack.c.b16 %v2813, %v2723
    %v4164 = vpack.c.b16 %v2814, %v2724
    %v4165 = vpack.c.b16 %v2815, %v2725
    %v4166 = vpack.c.b16 %v2816, %v2726
    %v4167 = vpack.c.b16 %v2907, %v2817
    %v4168 = vpack.c.b16 %v2908, %v2818
    %v4169 = vpack.c.b16 %v2909, %v2819
    %v4170 = vpack.c.b16 %v2910, %v2820
    %v4171 = vpack.c.b16 %v2911, %v2821
    %v4172 = vpack.c.b16 %v2912, %v2822
    %v4173 = vpack.c.b16 %v2913, %v2823
    %v4174 = vpack.c.b16 %v2914, %v2824
    %v4175 = vpack.c.b16 %v2915, %v2825
    %v4176 = vpack.c.b16 %v2916, %v2826
    %v4177 = vpack.c.b16 %v2917, %v2827
    %v4178 = vpack.c.b16 %v2918, %v2828
    %v4179 = vpack.c.b16 %v2919, %v2829
    %v4180 = vpack.c.b16 %v2920, %v2830
    %v4181 = vpack.c.b16 %v2921, %v2831
    %v4182 = vpack.c.b16 %v2922, %v2832
    %v4183 = vpack.c.b16 %v2923, %v2833
    %v4184 = vpack.c.b16 %v2924, %v2834
    %v4185 = vpack.c.b16 %v2925, %v2835
    %v4186 = vpack.c.b16 %v2926, %v2836
    %v4187 = vpack.c.b16 %v2927, %v2837
    %v4188 = vpack.c.b16 %v2928, %v2838
    %v4189 = vpack.c.b16 %v2929, %v2839
    %v4190 = vpack.c.b16 %v2930, %v2840
    %v4191 = vpack.c.b16 %v2931, %v2841
    %v4192 = vpack.c.b16 %v2932, %v2842
    %v4193 = vpack.c.b16 %v2933, %v2843
    %v4194 = vpack.c.b16 %v2934, %v2844
    %v4195 = vpack.c.b16 %v2935, %v2845
    %v4196 = vpack.c.b16 %v2936, %v2846
    %v4197 = vpack.c.b16 %v2937, %v2847
    %v4198 = vpack.c.b16 %v2938, %v2848
    %v4199 = vpack.c.b16 %v2939, %v2849
    %v4200 = vpack.c.b16 %v2940, %v2850
    %v4201 = vpack.c.b16 %v2941, %v2851
    %v4202 = vpack.c.b16 %v2942, %v2852
    %v4203 = vpack.c.b16 %v2943, %v2853
    %v4204 = vpack.c.b16 %v2944, %v2854
    %v4205 = vpack.c.b16 %v2945, %v2855
    %v4206 = vpack.c.b16 %v2946, %v2856
    %v4207 = vpack.c.b16 %v2947, %v2857
    %v4208 = vpack.c.b16 %v2948, %v2858
    %v4209 = vpack.c.b16 %v2949, %v2859
    %v4210 = vpack.c.b16 %v2950, %v2860
    %v4211 = vpack.c.b16 %v2951, %v2861
    %v4212 = vpack.c.b16 %v2952, %v2862
    %v4213 = vpack.c.b16 %v2953, %v2863
    %v4214 = vpack.c.b16 %v2954, %v2864
    %v4215 = vpack.c.b16 %v2955, %v2865
    %v4216 = vpack.c.b16 %v2956, %v2866
    %v4217 = vpack.c.b16 %v2957, %v2867
    %v4218 = vpack.c.b16 %v2958, %v2868
    %v4219 = vpack.c.b16 %v2959, %v2869
    %v4220 = vpack.c.b16 %v2960, %v2870
    %v4221 = vpack.c.b16 %v2961, %v2871
    %v4222 = vpack.c.b16 %v2962, %v2872
    %v4223 = vpack.c.b16 %v2963, %v2873
    %v4224 = vpack.c.b16 %v2964, %v2874
    %v4225 = vpack.c.b16 %v2965, %v2875
    %v4226 = vpack.c.b16 %v2966, %v2876
    %v4227 = vpack.c.b16 %v2967, %v2877
    %v4228 = vpack.c.b16 %v2968, %v2878
    %v4229 = vpack.c.b16 %v2969, %v2879
    %v4230 = vpack.c.b16 %v2970, %v2880
    %v4231 = vpack.c.b16 %v2971, %v2881
    %v4232 = vpack.c.b16 %v2972, %v2882
    %v4233 = vpack.c.b16 %v2973, %v2883
    %v4234 = vpack.c.b16 %v2974, %v2884
    %v4235 = vpack.c.b16 %v2975, %v2885
    %v4236 = vpack.c.b16 %v2976, %v2886
    %v4237 = vpack.c.b16 %v2977, %v2887
    %v4238 = vpack.c.b16 %v2978, %v2888
    %v4239 = vpack.c.b16 %v2979, %v2889
    %v4240 = vpack.c.b16 %v2980, %v2890
    %v4241 = vpack.c.b16 %v2981, %v2891
    %v4242 = vpack.c.b16 %v2982, %v2892
    %v4243 = vpack.c.b16 %v2983, %v2893
    %v4244 = vpack.c.b16 %v2984, %v2894
    %v4245 = vpack.c.b16 %v2985, %v2895
    %v4246 = vpack.c.b16 %v2986, %v2896
    %v4247 = vpack.c.b16 %v2987, %v2897
    %v4248 = vpack.c.b16 %v2988, %v2898
    %v4249 = vpack.c.b16 %v2989, %v2899
    %v4250 = vpack.c.b16 %v2990, %v2900
    %v4251 = vpack.c.b16 %v2991, %v2901
    %v4252 = vpack.c.b16 %v2992, %v2902
    %v4253 = vpack.c.b16 %v2993, %v2903
    %v4254 = vpack.c.b16 %v2994, %v2904
    %v4255 = vpack.c.b16 %v2995, %v2905
    %v4256 = vpack.c.b16 %v2996, %v2906
    %v4257 = vpack.c.b16 %v3087, %v2997
    %v4258 = vpack.c.b16 %v3088, %v2998
    %v4259 = vpack.c.b16 %v3089, %v2999
    %v4260 = vpack.c.b16 %v3090, %v3000
    %v4261 = vpack.c.b16 %v3091, %v3001
    %v4262 = vpack.c.b16 %v3092, %v3002
    %v4263 = vpack.c.b16 %v3093, %v3003
    %v4264 = vpack.c.b16 %v3094, %v3004
    %v4265 = vpack.c.b16 %v3095, %v3005
    %v4266 = vpack.c.b16 %v3096, %v3006
    %v4267 = vpack.c.b16 %v3097, %v3007
    %v4268 = vpack.c.b16 %v3098, %v3008
    %v4269 = vpack.c.b16 %v3099, %v3009
    %v4270 = vpack.c.b16 %v3100, %v3010
    %v4271 = vpack.c.b16 %v3101, %v3011
    %v4272 = vpack.c.b16 %v3102, %v3012
    %v4273 = vpack.c.b16 %v3103, %v3013
    %v4274 = vpack.c.b16 %v3104, %v3014
    %v4275 = vpack.c.b16 %v3105, %v3015
    %v4276 = vpack.c.b16 %v3106, %v3016
    %v4277 = vpack.c.b16 %v3107, %v3017
    %v4278 = vpack.c.b16 %v3108, %v3018
    %v4279 = vpack.c.b16 %v3109, %v3019
    %v4280 = vpack.c.b16 %v3110, %v3020
    %v4281 = vpack.c.b16 %v3111, %v3021
    %v4282 = vpack.c.b16 %v3112, %v3022
    %v4283 = vpack.c.b16 %v3113, %v3023
    %v4284 = vpack.c.b16 %v3114, %v3024
    %v4285 = vpack.c.b16 %v3115, %v3025
    %v4286 = vpack.c.b16 %v3116, %v3026
    %v4287 = vpack.c.b16 %v3117, %v3027
    %v4288 = vpack.c.b16 %v3118, %v3028
    %v4289 = vpack.c.b16 %v3119, %v3029
    %v4290 = vpack.c.b16 %v3120, %v3030
    %v4291 = vpack.c.b16 %v3121, %v3031
    %v4292 = vpack.c.b16 %v3122, %v3032
    %v4293 = vpack.c.b16 %v3123, %v3033
    %v4294 = vpack.c.b16 %v3124, %v3034
    %v4295 = vpack.c.b16 %v3125, %v3035
    %v4296 = vpack.c.b16 %v3126, %v3036
    %v4297 = vpack.c.b16 %v3127, %v3037
    %v4298 = vpack.c.b16 %v3128, %v3038
    %v4299 = vpack.c.b16 %v3129, %v3039
    %v4300 = vpack.c.b16 %v3130, %v3040
    %v4301 = vpack.c.b16 %v3131, %v3041
    %v4302 = vpack.c.b16 %v3132, %v3042
    %v4303 = vpack.c.b16 %v3133, %v3043
    %v4304 = vpack.c.b16 %v3134, %v3044
    %v4305 = vpack.c.b16 %v3135, %v3045
    %v4306 = vpack.c.b16 %v3136, %v3046
    %v4307 = vpack.c.b16 %v3137, %v3047
    %v4308 = vpack.c.b16 %v3138, %v3048
    %v4309 = vpack.c.b16 %v3139, %v3049
    %v4310 = vpack.c.b16 %v3140, %v3050
    %v4311 = vpack.c.b16 %v3141, %v3051
    %v4312 = vpack.c.b16 %v3142, %v3052
    %v4313 = vpack.c.b16 %v3143, %v3053
    %v4314 = vpack.c.b16 %v3144, %v3054
    %v4315 = vpack.c.b16 %v3145, %v3055
    %v4316 = vpack.c.b16 %v3146, %v3056
    %v4317 = vpack.c.b16 %v3147, %v3057
    %v4318 = vpack.c.b16 %v3148, %v3058
    %v4319 = vpack.c.b16 %v3149, %v3059
    %v4320 = vpack.c.b16 %v3150, %v3060
    %v4321 = vpack.c.b16 %v3151, %v3061
    %v4322 = vpack.c.b16 %v3152, %v3062
    %v4323 = vpack.c.b16 %v3153, %v3063
    %v4324 = vpack.c.b16 %v3154, %v3064
    %v4325 = vpack.c.b16 %v3155, %v3065
    %v4326 = vpack.c.b16 %v3156, %v3066
    %v4327 = vpack.c.b16 %v3157, %v3067
    %v4328 = vpack.c.b16 %v3158, %v3068
    %v4329 = vpack.c.b16 %v3159, %v3069
    %v4330 = vpack.c.b16 %v3160, %v3070
    %v4331 = vpack.c.b16 %v3161, %v3071
    %v4332 = vpack.c.b16 %v3162, %v3072
    %v4333 = vpack.c.b16 %v3163, %v3073
    %v4334 = vpack.c.b16 %v3164, %v3074
    %v4335 = vpack.c.b16 %v3165, %v3075
    %v4336 = vpack.c.b16 %v3166, %v3076
    %v4337 = vpack.c.b16 %v3167, %v3077
    %v4338 = vpack.c.b16 %v3168, %v3078
    %v4339 = vpack.c.b16 %v3169, %v3079
    %v4340 = vpack.c.b16 %v3170, %v3080
    %v4341 = vpack.c.b16 %v3171, %v3081
    %v4342 = vpack.c.b16 %v3172, %v3082
    %v4343 = vpack.c.b16 %v3173, %v3083
    %v4344 = vpack.c.b16 %v3174, %v3084
    %v4345 = vpack.c.b16 %v3175, %v3085
    %v4346 = vpack.c.b16 %v3176, %v3086
    %v4347 = vpack.c.b16 %v3267, %v3177
    %v4348 = vpack.c.b16 %v3268, %v3178
    %v4349 = vpack.c.b16 %v3269, %v3179
    %v4350 = vpack.c.b16 %v3270, %v3180
    %v4351 = vpack.c.b16 %v3271, %v3181
    %v4352 = vpack.c.b16 %v3272, %v3182
    %v4353 = vpack.c.b16 %v3273, %v3183
    %v4354 = vpack.c.b16 %v3274, %v3184
    %v4355 = vpack.c.b16 %v3275, %v3185
    %v4356 = vpack.c.b16 %v3276, %v3186
    %v4357 = vpack.c.b16 %v3277, %v3187
    %v4358 = vpack.c.b16 %v3278, %v3188
    %v4359 = vpack.c.b16 %v3279, %v3189
    %v4360 = vpack.c.b16 %v3280, %v3190
    %v4361 = vpack.c.b16 %v3281, %v3191
    %v4362 = vpack.c.b16 %v3282, %v3192
    %v4363 = vpack.c.b16 %v3283, %v3193
    %v4364 = vpack.c.b16 %v3284, %v3194
    %v4365 = vpack.c.b16 %v3285, %v3195
    %v4366 = vpack.c.b16 %v3286, %v3196
    %v4367 = vpack.c.b16 %v3287, %v3197
    %v4368 = vpack.c.b16 %v3288, %v3198
    %v4369 = vpack.c.b16 %v3289, %v3199
    %v4370 = vpack.c.b16 %v3290, %v3200
    %v4371 = vpack.c.b16 %v3291, %v3201
    %v4372 = vpack.c.b16 %v3292, %v3202
    %v4373 = vpack.c.b16 %v3293, %v3203
    %v4374 = vpack.c.b16 %v3294, %v3204
    %v4375 = vpack.c.b16 %v3295, %v3205
    %v4376 = vpack.c.b16 %v3296, %v3206
    %v4377 = vpack.c.b16 %v3297, %v3207
    %v4378 = vpack.c.b16 %v3298, %v3208
    %v4379 = vpack.c.b16 %v3299, %v3209
    %v4380 = vpack.c.b16 %v3300, %v3210
    %v4381 = vpack.c.b16 %v3301, %v3211
    %v4382 = vpack.c.b16 %v3302, %v3212
    %v4383 = vpack.c.b16 %v3303, %v3213
    %v4384 = vpack.c.b16 %v3304, %v3214
    %v4385 = vpack.c.b16 %v3305, %v3215
    %v4386 = vpack.c.b16 %v3306, %v3216
    %v4387 = vpack.c.b16 %v3307, %v3217
    %v4388 = vpack.c.b16 %v3308, %v3218
    %v4389 = vpack.c.b16 %v3309, %v3219
    %v4390 = vpack.c.b16 %v3310, %v3220
    %v4391 = vpack.c.b16 %v3311, %v3221
    %v4392 = vpack.c.b16 %v3312, %v3222
    %v4393 = vpack.c.b16 %v3313, %v3223
    %v4394 = vpack.c.b16 %v3314, %v3224
    %v4395 = vpack.c.b16 %v3315, %v3225
    %v4396 = vpack.c.b16 %v3316, %v3226
    %v4397 = vpack.c.b16 %v3317, %v3227
    %v4398 = vpack.c.b16 %v3318, %v3228
    %v4399 = vpack.c.b16 %v3319, %v3229
    %v4400 = vpack.c.b16 %v3320, %v3230
    %v4401 = vpack.c.b16 %v3321, %v3231
    %v4402 = vpack.c.b16 %v3322, %v3232
    %v4403 = vpack.c.b16 %v3323, %v3233
    %v4404 = vpack.c.b16 %v3324, %v3234
    %v4405 = vpack.c.b16 %v3325, %v3235
    %v4406 = vpack.c.b16 %v3326, %v3236
    %v4407 = vpack.c.b16 %v3327, %v3237
    %v4408 = vpack.c.b16 %v3328, %v3238
    %v4409 = vpack.c.b16 %v3329, %v3239
    %v4410 = vpack.c.b16 %v3330, %v3240
    %v4411 = vpack.c.b16 %v3331, %v3241
    %v4412 = vpack.c.b16 %v3332, %v3242
    %v4413 = vpack.c.b16 %v3333, %v3243
    %v4414 = vpack.c.b16 %v3334, %v3244
    %v4415 = vpack.c.b16 %v3335, %v3245
    %v4416 = vpack.c.b16 %v3336, %v3246
    %v4417 = vpack.c.b16 %v3337, %v3247
    %v4418 = vpack.c.b16 %v3338, %v3248
    %v4419 = vpack.c.b16 %v3339, %v3249
    %v4420 = vpack.c.b16 %v3340, %v3250
    %v4421 = vpack.c.b16 %v3341, %v3251
    %v4422 = vpack.c.b16 %v3342, %v3252
    %v4423 = vpack.c.b16 %v3343, %v3253
    %v4424 = vpack.c.b16 %v3344, %v3254
    %v4425 = vpack.c.b16 %v3345, %v3255
    %v4426 = vpack.c.b16 %v3346, %v3256
    %v4427 = vpack.c.b16 %v3347, %v3257
    %v4428 = vpack.c.b16 %v3348, %v3258
    %v4429 = vpack.c.b16 %v3349, %v3259
    %v4430 = vpack.c.b16 %v3350, %v3260
    %v4431 = vpack.c.b16 %v3351, %v3261
    %v4432 = vpack.c.b16 %v3352, %v3262
    %v4433 = vpack.c.b16 %v3353, %v3263
    %v4434 = vpack.c.b16 %v3354, %v3264
    %v4435 = vpack.c.b16 %v3355, %v3265
    %v4436 = vpack.c.b16 %v3356, %v3266
    %v4437 = vpack.c.b16 %v3447, %v3357
    %v4438 = vpack.c.b16 %v3448, %v3358
    %v4439 = vpack.c.b16 %v3449, %v3359
    %v4440 = vpack.c.b16 %v3450, %v3360
    %v4441 = vpack.c.b16 %v3451, %v3361
    %v4442 = vpack.c.b16 %v3452, %v3362
    %v4443 = vpack.c.b16 %v3453, %v3363
    %v4444 = vpack.c.b16 %v3454, %v3364
    %v4445 = vpack.c.b16 %v3455, %v3365
    %v4446 = vpack.c.b16 %v3456, %v3366
    %v4447 = vpack.c.b16 %v3457, %v3367
    %v4448 = vpack.c.b16 %v3458, %v3368
    %v4449 = vpack.c.b16 %v3459, %v3369
    %v4450 = vpack.c.b16 %v3460, %v3370
    %v4451 = vpack.c.b16 %v3461, %v3371
    %v4452 = vpack.c.b16 %v3462, %v3372
    %v4453 = vpack.c.b16 %v3463, %v3373
    %v4454 = vpack.c.b16 %v3464, %v3374
    %v4455 = vpack.c.b16 %v3465, %v3375
    %v4456 = vpack.c.b16 %v3466, %v3376
    %v4457 = vpack.c.b16 %v3467, %v3377
    %v4458 = vpack.c.b16 %v3468, %v3378
    %v4459 = vpack.c.b16 %v3469, %v3379
    %v4460 = vpack.c.b16 %v3470, %v3380
    %v4461 = vpack.c.b16 %v3471, %v3381
    %v4462 = vpack.c.b16 %v3472, %v3382
    %v4463 = vpack.c.b16 %v3473, %v3383
    %v4464 = vpack.c.b16 %v3474, %v3384
    %v4465 = vpack.c.b16 %v3475, %v3385
    %v4466 = vpack.c.b16 %v3476, %v3386
    %v4467 = vpack.c.b16 %v3477, %v3387
    %v4468 = vpack.c.b16 %v3478, %v3388
    %v4469 = vpack.c.b16 %v3479, %v3389
    %v4470 = vpack.c.b16 %v3480, %v3390
    %v4471 = vpack.c.b16 %v3481, %v3391
    %v4472 = vpack.c.b16 %v3482, %v3392
    %v4473 = vpack.c.b16 %v3483, %v3393
    %v4474 = vpack.c.b16 %v3484, %v3394
    %v4475 = vpack.c.b16 %v3485, %v3395
    %v4476 = vpack.c.b16 %v3486, %v3396
    %v4477 = vpack.c.b16 %v3487, %v3397
    %v4478 = vpack.c.b16 %v3488, %v3398
    %v4479 = vpack.c.b16 %v3489, %v3399
    %v4480 = vpack.c.b16 %v3490, %v3400
    %v4481 = vpack.c.b16 %v3491, %v3401
    %v4482 = vpack.c.b16 %v3492, %v3402
    %v4483 = vpack.c.b16 %v3493, %v3403
    %v4484 = vpack.c.b16 %v3494, %v3404
    %v4485 = vpack.c.b16 %v3495, %v3405
    %v4486 = vpack.c.b16 %v3496, %v3406
    %v4487 = vpack.c.b16 %v3497, %v3407
    %v4488 = vpack.c.b16 %v3498, %v3408
    %v4489 = vpack.c.b16 %v3499, %v3409
    %v4490 = vpack.c.b16 %v3500, %v3410
    %v4491 = vpack.c.b16 %v3501, %v3411
    %v4492 = vpack.c.b16 %v3502, %v3412
    %v4493 = vpack.c.b16 %v3503, %v3413
    %v4494 = vpack.c.b16 %v3504, %v3414
    %v4495 = vpack.c.b16 %v3505, %v3415
    %v4496 = vpack.c.b16 %v3506, %v3416
    %v4497 = vpack.c.b16 %v3507, %v3417
    %v4498 = vpack.c.b16 %v3508, %v3418
    %v4499 = vpack.c.b16 %v3509, %v3419
    %v4500 = vpack.c.b16 %v3510, %v3420
    %v4501 = vpack.c.b16 %v3511, %v3421
    %v4502 = vpack.c.b16 %v3512, %v3422
    %v4503 = vpack.c.b16 %v3513, %v3423
    %v4504 = vpack.c.b16 %v3514, %v3424
    %v4505 = vpack.c.b16 %v3515, %v3425
    %v4506 = vpack.c.b16 %v3516, %v3426
    %v4507 = vpack.c.b16 %v3517, %v3427
    %v4508 = vpack.c.b16 %v3518, %v3428
    %v4509 = vpack.c.b16 %v3519, %v3429
    %v4510 = vpack.c.b16 %v3520, %v3430
    %v4511 = vpack.c.b16 %v3521, %v3431
    %v4512 = vpack.c.b16 %v3522, %v3432
    %v4513 = vpack.c.b16 %v3523, %v3433
    %v4514 = vpack.c.b16 %v3524, %v3434
    %v4515 = vpack.c.b16 %v3525, %v3435
    %v4516 = vpack.c.b16 %v3526, %v3436
    %v4517 = vpack.c.b16 %v3527, %v3437
    %v4518 = vpack.c.b16 %v3528, %v3438
    %v4519 = vpack.c.b16 %v3529, %v3439
    %v4520 = vpack.c.b16 %v3530, %v3440
    %v4521 = vpack.c.b16 %v3531, %v3441
    %v4522 = vpack.c.b16 %v3532, %v3442
    %v4523 = vpack.c.b16 %v3533, %v3443
    %v4524 = vpack.c.b16 %v3534, %v3444
    %v4525 = vpack.c.b16 %v3535, %v3445
    %v4526 = vpack.c.b16 %v3536, %v3446
    %v4527 = vpack.c.b16 %v3627, %v3537
    %v4528 = vpack.c.b16 %v3628, %v3538
    %v4529 = vpack.c.b16 %v3629, %v3539
    %v4530 = vpack.c.b16 %v3630, %v3540
    %v4531 = vpack.c.b16 %v3631, %v3541
    %v4532 = vpack.c.b16 %v3632, %v3542
    %v4533 = vpack.c.b16 %v3633, %v3543
    %v4534 = vpack.c.b16 %v3634, %v3544
    %v4535 = vpack.c.b16 %v3635, %v3545
    %v4536 = vpack.c.b16 %v3636, %v3546
    %v4537 = vpack.c.b16 %v3637, %v3547
    %v4538 = vpack.c.b16 %v3638, %v3548
    %v4539 = vpack.c.b16 %v3639, %v3549
    %v4540 = vpack.c.b16 %v3640, %v3550
    %v4541 = vpack.c.b16 %v3641, %v3551
    %v4542 = vpack.c.b16 %v3642, %v3552
    %v4543 = vpack.c.b16 %v3643, %v3553
    %v4544 = vpack.c.b16 %v3644, %v3554
    %v4545 = vpack.c.b16 %v3645, %v3555
    %v4546 = vpack.c.b16 %v3646, %v3556
    %v4547 = vpack.c.b16 %v3647, %v3557
    %v4548 = vpack.c.b16 %v3648, %v3558
    %v4549 = vpack.c.b16 %v3649, %v3559
    %v4550 = vpack.c.b16 %v3650, %v3560
    %v4551 = vpack.c.b16 %v3651, %v3561
    %v4552 = vpack.c.b16 %v3652, %v3562
    %v4553 = vpack.c.b16 %v3653, %v3563
    %v4554 = vpack.c.b16 %v3654, %v3564
    %v4555 = vpack.c.b16 %v3655, %v3565
    %v4556 = vpack.c.b16 %v3656, %v3566
    %v4557 = vpack.c.b16 %v3657, %v3567
    %v4558 = vpack.c.b16 %v3658, %v3568
    %v4559 = vpack.c.b16 %v3659, %v3569
    %v4560 = vpack.c.b16 %v3660, %v3570
    %v4561 = vpack.c.b16 %v3661, %v3571
    %v4562 = vpack.c.b16 %v3662, %v3572
    %v4563 = vpack.c.b16 %v3663, %v3573
    %v4564 = vpack.c.b16 %v3664, %v3574
    %v4565 = vpack.c.b16 %v3665, %v3575
    %v4566 = vpack.c.b16 %v3666, %v3576
    %v4567 = vpack.c.b16 %v3667, %v3577
    %v4568 = vpack.c.b16 %v3668, %v3578
    %v4569 = vpack.c.b16 %v3669, %v3579
    %v4570 = vpack.c.b16 %v3670, %v3580
    %v4571 = vpack.c.b16 %v3671, %v3581
    %v4572 = vpack.c.b16 %v3672, %v3582
    %v4573 = vpack.c.b16 %v3673, %v3583
    %v4574 = vpack.c.b16 %v3674, %v3584
    %v4575 = vpack.c.b16 %v3675, %v3585
    %v4576 = vpack.c.b16 %v3676, %v3586
    %v4577 = vpack.c.b16 %v3677, %v3587
    %v4578 = vpack.c.b16 %v3678, %v3588
    %v4579 = vpack.c.b16 %v3679, %v3589
    %v4580 = vpack.c.b16 %v3680, %v3590
    %v4581 = vpack.c.b16 %v3681, %v3591
    %v4582 = vpack.c.b16 %v3682, %v3592
    %v4583 = vpack.c.b16 %v3683, %v3593
    %v4584 = vpack.c.b16 %v3684, %v3594
    %v4585 = vpack.c.b16 %v3685, %v3595
    %v4586 = vpack.c.b16 %v3686, %v3596
    %v4587 = vpack.c.b16 %v3687, %v3597
    %v4588 = vpack.c.b16 %v3688, %v3598
    %v4589 = vpack.c.b16 %v3689, %v3599
    %v4590 = vpack.c.b16 %v3690, %v3600
    %v4591 = vpack.c.b16 %v3691, %v3601
    %v4592 = vpack.c.b16 %v3692, %v3602
    %v4593 = vpack.c.b16 %v3693, %v3603
    %v4594 = vpack.c.b16 %v3694, %v3604
    %v4595 = vpack.c.b16 %v3695, %v3605
    %v4596 = vpack.c.b16 %v3696, %v3606
    %v4597 = vpack.c.b16 %v3697, %v3607
    %v4598 = vpack.c.b16 %v3698, %v3608
    %v4599 = vpack.c.b16 %v3699, %v3609
    %v4600 = vpack.c.b16 %v3700, %v3610
    %v4601 = vpack.c.b16 %v3701, %v3611
    %v4602 = vpack.c.b16 %v3702, %v3612
    %v4603 = vpack.c.b16 %v3703, %v3613
    %v4604 = vpack.c.b16 %v3704, %v3614
    %v4605 = vpack.c.b16 %v3705, %v3615
    %v4606 = vpack.c.b16 %v3706, %v3616
    %v4607 = vpack.c.b16 %v3707, %v3617
    %v4608 = vpack.c.b16 %v3708, %v3618
    %v4609 = vpack.c.b16 %v3709, %v3619
    %v4610 = vpack.c.b16 %v3710, %v3620
    %v4611 = vpack.c.b16 %v3711, %v3621
    %v4612 = vpack.c.b16 %v3712, %v3622
    %v4613 = vpack.c.b16 %v3713, %v3623
    %v4614 = vpack.c.b16 %v3714, %v3624
    %v4615 = vpack.c.b16 %v3715, %v3625
    %v4616 = vpack.c.b16 %v3716, %v3626
    %v4617 = vpack.c.b16 %v3807, %v3717
    %v4618 = vpack.c.b16 %v3808, %v3718
    %v4619 = vpack.c.b16 %v3809, %v3719
    %v4620 = vpack.c.b16 %v3810, %v3720
    %v4621 = vpack.c.b16 %v3811, %v3721
    %v4622 = vpack.c.b16 %v3812, %v3722
    %v4623 = vpack.c.b16 %v3813, %v3723
    %v4624 = vpack.c.b16 %v3814, %v3724
    %v4625 = vpack.c.b16 %v3815, %v3725
    %v4626 = vpack.c.b16 %v3816, %v3726
    %v4627 = vpack.c.b16 %v3817, %v3727
    %v4628 = vpack.c.b16 %v3818, %v3728
    %v4629 = vpack.c.b16 %v3819, %v3729
    %v4630 = vpack.c.b16 %v3820, %v3730
    %v4631 = vpack.c.b16 %v3821, %v3731
    %v4632 = vpack.c.b16 %v3822, %v3732
    %v4633 = vpack.c.b16 %v3823, %v3733
    %v4634 = vpack.c.b16 %v3824, %v3734
    %v4635 = vpack.c.b16 %v3825, %v3735
    %v4636 = vpack.c.b16 %v3826, %v3736
    %v4637 = vpack.c.b16 %v3827, %v3737
    %v4638 = vpack.c.b16 %v3828, %v3738
    %v4639 = vpack.c.b16 %v3829, %v3739
    %v4640 = vpack.c.b16 %v3830, %v3740
    %v4641 = vpack.c.b16 %v3831, %v3741
    %v4642 = vpack.c.b16 %v3832, %v3742
    %v4643 = vpack.c.b16 %v3833, %v3743
    %v4644 = vpack.c.b16 %v3834, %v3744
    %v4645 = vpack.c.b16 %v3835, %v3745
    %v4646 = vpack.c.b16 %v3836, %v3746
    %v4647 = vpack.c.b16 %v3837, %v3747
    %v4648 = vpack.c.b16 %v3838, %v3748
    %v4649 = vpack.c.b16 %v3839, %v3749
    %v4650 = vpack.c.b16 %v3840, %v3750
    %v4651 = vpack.c.b16 %v3841, %v3751
    %v4652 = vpack.c.b16 %v3842, %v3752
    %v4653 = vpack.c.b16 %v3843, %v3753
    %v4654 = vpack.c.b16 %v3844, %v3754
    %v4655 = vpack.c.b16 %v3845, %v3755
    %v4656 = vpack.c.b16 %v3846, %v3756
    %v4657 = vpack.c.b16 %v3847, %v3757
    %v4658 = vpack.c.b16 %v3848, %v3758
    %v4659 = vpack.c.b16 %v3849, %v3759
    %v4660 = vpack.c.b16 %v3850, %v3760
    %v4661 = vpack.c.b16 %v3851, %v3761
    %v4662 = vpack.c.b16 %v3852, %v3762
    %v4663 = vpack.c.b16 %v3853, %v3763
    %v4664 = vpack.c.b16 %v3854, %v3764
    %v4665 = vpack.c.b16 %v3855, %v3765
    %v4666 = vpack.c.b16 %v3856, %v3766
    %v4667 = vpack.c.b16 %v3857, %v3767
    %v4668 = vpack.c.b16 %v3858, %v3768
    %v4669 = vpack.c.b16 %v3859, %v3769
    %v4670 = vpack.c.b16 %v3860, %v3770
    %v4671 = vpack.c.b16 %v3861, %v3771
    %v4672 = vpack.c.b16 %v3862, %v3772
    %v4673 = vpack.c.b16 %v3863, %v3773
    %v4674 = vpack.c.b16 %v3864, %v3774
    %v4675 = vpack.c.b16 %v3865, %v3775
    %v4676 = vpack.c.b16 %v3866, %v3776
    %v4677 = vpack.c.b16 %v3867, %v3777
    %v4678 = vpack.c.b16 %v3868, %v3778
    %v4679 = vpack.c.b16 %v3869, %v3779
    %v4680 = vpack.c.b16 %v3870, %v3780
    %v4681 = vpack.c.b16 %v3871, %v3781
    %v4682 = vpack.c.b16 %v3872, %v3782
    %v4683 = vpack.c.b16 %v3873, %v3783
    %v4684 = vpack.c.b16 %v3874, %v3784
    %v4685 = vpack.c.b16 %v3875, %v3785
    %v4686 = vpack.c.b16 %v3876, %v3786
    %v4687 = vpack.c.b16 %v3877, %v3787
    %v4688 = vpack.c.b16 %v3878, %v3788
    %v4689 = vpack.c.b16 %v3879, %v3789
    %v4690 = vpack.c.b16 %v3880, %v3790
    %v4691 = vpack.c.b16 %v3881, %v3791
    %v4692 = vpack.c.b16 %v3882, %v3792
    %v4693 = vpack.c.b16 %v3883, %v3793
    %v4694 = vpack.c.b16 %v3884, %v3794
    %v4695 = vpack.c.b16 %v3885, %v3795
    %v4696 = vpack.c.b16 %v3886, %v3796
    %v4697 = vpack.c.b16 %v3887, %v3797
    %v4698 = vpack.c.b16 %v3888, %v3798
    %v4699 = vpack.c.b16 %v3889, %v3799
    %v4700 = vpack.c.b16 %v3890, %v3800
    %v4701 = vpack.c.b16 %v3891, %v3801
    %v4702 = vpack.c.b16 %v3892, %v3802
    %v4703 = vpack.c.b16 %v3893, %v3803
    %v4704 = vpack.c.b16 %v3894, %v3804
    %v4705 = vpack.c.b16 %v3895, %v3805
    %v4706 = vpack.c.b16 %v3896, %v3806
    %v4707 = vpack.c.b16 %v3987, %v3897
    %v4708 = vpack.c.b16 %v3988, %v3898
    %v4709 = vpack.c.b16 %v3989, %v3899
    %v4710 = vpack.c.b16 %v3990, %v3900
    %v4711 = vpack.c.b16 %v3991, %v3901
    %v4712 = vpack.c.b16 %v3992, %v3902
    %v4713 = vpack.c.b16 %v3993, %v3903
    %v4714 = vpack.c.b16 %v3994, %v3904
    %v4715 = vpack.c.b16 %v3995, %v3905
    %v4716 = vpack.c.b16 %v3996, %v3906
    %v4717 = vpack.c.b16 %v3997, %v3907
    %v4718 = vpack.c.b16 %v3998, %v3908
    %v4719 = vpack.c.b16 %v3999, %v3909
    %v4720 = vpack.c.b16 %v4000, %v3910
    %v4721 = vpack.c.b16 %v4001, %v3911
    %v4722 = vpack.c.b16 %v4002, %v3912
    %v4723 = vpack.c.b16 %v4003, %v3913
    %v4724 = vpack.c.b16 %v4004, %v3914
    %v4725 = vpack.c.b16 %v4005, %v3915
    %v4726 = vpack.c.b16 %v4006, %v3916
    %v4727 = vpack.c.b16 %v4007, %v3917
    %v4728 = vpack.c.b16 %v4008, %v3918
    %v4729 = vpack.c.b16 %v4009, %v3919
    %v4730 = vpack.c.b16 %v4010, %v3920
    %v4731 = vpack.c.b16 %v4011, %v3921
    %v4732 = vpack.c.b16 %v4012, %v3922
    %v4733 = vpack.c.b16 %v4013, %v3923
    %v4734 = vpack.c.b16 %v4014, %v3924
    %v4735 = vpack.c.b16 %v4015, %v3925
    %v4736 = vpack.c.b16 %v4016, %v3926
    %v4737 = vpack.c.b16 %v4017, %v3927
    %v4738 = vpack.c.b16 %v4018, %v3928
    %v4739 = vpack.c.b16 %v4019, %v3929
    %v4740 = vpack.c.b16 %v4020, %v3930
    %v4741 = vpack.c.b16 %v4021, %v3931
    %v4742 = vpack.c.b16 %v4022, %v3932
    %v4743 = vpack.c.b16 %v4023, %v3933
    %v4744 = vpack.c.b16 %v4024, %v3934
    %v4745 = vpack.c.b16 %v4025, %v3935
    %v4746 = vpack.c.b16 %v4026, %v3936
    %v4747 = vpack.c.b16 %v4027, %v3937
    %v4748 = vpack.c.b16 %v4028, %v3938
    %v4749 = vpack.c.b16 %v4029, %v3939
    %v4750 = vpack.c.b16 %v4030, %v3940
    %v4751 = vpack.c.b16 %v4031, %v3941
    %v4752 = vpack.c.b16 %v4032, %v3942
    %v4753 = vpack.c.b16 %v4033, %v3943
    %v4754 = vpack.c.b16 %v4034, %v3944
    %v4755 = vpack.c.b16 %v4035, %v3945
    %v4756 = vpack.c.b16 %v4036, %v3946
    %v4757 = vpack.c.b16 %v4037, %v3947
    %v4758 = vpack.c.b16 %v4038, %v3948
    %v4759 = vpack.c.b16 %v4039, %v3949
    %v4760 = vpack.c.b16 %v4040, %v3950
    %v4761 = vpack.c.b16 %v4041, %v3951
    %v4762 = vpack.c.b16 %v4042, %v3952
    %v4763 = vpack.c.b16 %v4043, %v3953
    %v4764 = vpack.c.b16 %v4044, %v3954
    %v4765 = vpack.c.b16 %v4045, %v3955
    %v4766 = vpack.c.b16 %v4046, %v3956
    %v4767 = vpack.c.b16 %v4047, %v3957
    %v4768 = vpack.c.b16 %v4048, %v3958
    %v4769 = vpack.c.b16 %v4049, %v3959
    %v4770 = vpack.c.b16 %v4050, %v3960
    %v4771 = vpack.c.b16 %v4051, %v3961
    %v4772 = vpack.c.b16 %v4052, %v3962
    %v4773 = vpack.c.b16 %v4053, %v3963
    %v4774 = vpack.c.b16 %v4054, %v3964
    %v4775 = vpack.c.b16 %v4055, %v3965
    %v4776 = vpack.c.b16 %v4056, %v3966
    %v4777 = vpack.c.b16 %v4057, %v3967
    %v4778 = vpack.c.b16 %v4058, %v3968
    %v4779 = vpack.c.b16 %v4059, %v3969
    %v4780 = vpack.c.b16 %v4060, %v3970
    %v4781 = vpack.c.b16 %v4061, %v3971
    %v4782 = vpack.c.b16 %v4062, %v3972
    %v4783 = vpack.c.b16 %v4063, %v3973
    %v4784 = vpack.c.b16 %v4064, %v3974
    %v4785 = vpack.c.b16 %v4065, %v3975
    %v4786 = vpack.c.b16 %v4066, %v3976
    %v4787 = vpack.c.b16 %v4067, %v3977
    %v4788 = vpack.c.b16 %v4068, %v3978
    %v4789 = vpack.c.b16 %v4069, %v3979
    %v4790 = vpack.c.b16 %v4070, %v3980
    %v4791 = vpack.c.b16 %v4071, %v3981
    %v4792 = vpack.c.b16 %v4072, %v3982
    %v4793 = vpack.c.b16 %v4073, %v3983
    %v4794 = vpack.c.b16 %v4074, %v3984
    %v4795 = vpack.c.b16 %v4075, %v3985
    %v4796 = vpack.c.b16 %v4076, %v3986
    %5517 = vmatprep.subr.bf16.mxu0 %v4078
    %5518 = vmatpush1.bf16.xpose.msra.mxu0 %v4077
    %5519 = vmatprep.subr.bf16.mxu0 %v4168
    %5520 = vmatpush1.bf16.xpose.msra.mxu0 %v4167
    %5521 = vmatprep.subr.bf16.mxu0 %v4258
    %5522 = vmatpush1.bf16.xpose.msra.mxu0 %v4257
    %5523 = vmatprep.subr.bf16.mxu0 %v4348
    %5524 = vmatpush1.bf16.xpose.msra.mxu0 %v4347
    %5525 = vmatprep.subr.bf16.mxu0 %v4438
    %5526 = vmatpush1.bf16.xpose.msra.mxu0 %v4437
    %5527 = vmatprep.subr.bf16.mxu0 %v4528
    %5528 = vmatpush1.bf16.xpose.msra.mxu0 %v4527
    %5529 = vmatprep.subr.bf16.mxu0 %v4618
    %5530 = vmatpush1.bf16.xpose.msra.mxu0 %v4617
    %5531 = vmatprep.subr.bf16.mxu0 %v4708
    %5532 = vmatpush1.bf16.xpose.msra.mxu0 %v4707
    %5533 = vmatprep.subr.bf16.mxu0 0
    %5534 = vmatpush1.bf16.xpose.msra.mxu0 0
    %5535 = vmatprep.subr.bf16.mxu0 0
    %5536 = vmatpush1.bf16.xpose.msra.mxu0 0
    %5537 = vmatprep.subr.bf16.mxu0 0
    %5538 = vmatpush1.bf16.xpose.msra.mxu0 0
    %5539 = vmatprep.subr.bf16.mxu0 0
    %5540 = vmatpush1.bf16.xpose.msra.mxu0 0
    %5541 = vmatprep.subr.bf16.mxu0 0
    %5542 = vmatpush1.bf16.xpose.msra.mxu0 0
    %5543 = vmatprep.subr.bf16.mxu0 0
    %5544 = vmatpush1.bf16.xpose.msra.mxu0 0
    %5545 = vmatprep.subr.bf16.mxu0 0
    %5546 = vmatpush1.bf16.xpose.msra.mxu0 0
    %5547 = vmatprep.subr.bf16.mxu0 0
    %5548 = vmatpush1.bf16.xpose.msra.mxu0 0
    %5549 = vmatprep.mubr.bf16.mxu0 %v1101
    %5550 = vmatmul.mubr.bf16.gmra.mrb[0].mxu0 %v1100
    %v5551 = vpop.f32.mrb[0].mxu0
    %v5552 = vadd.f32 %v1915, %v5551
    %v5553 = vpop.f32.mrb[0].mxu0
    %v5554 = vpop.f32.mrb[0].mxu0
    %v5555 = vpop.f32.mrb[0].mxu0
    %5556 = vdwg.mxu0
    %5557 = vmatprep.subr.bf16.mxu0 %v4080
    %5558 = vmatpush1.bf16.xpose.msra.mxu0 %v4079
    %5559 = vmatprep.subr.bf16.mxu0 %v4170
    %5560 = vmatpush1.bf16.xpose.msra.mxu0 %v4169
    %5561 = vmatprep.subr.bf16.mxu0 %v4260
    %5562 = vmatpush1.bf16.xpose.msra.mxu0 %v4259
    %5563 = vmatprep.subr.bf16.mxu0 %v4350
    %5564 = vmatpush1.bf16.xpose.msra.mxu0 %v4349
    %5565 = vmatprep.subr.bf16.mxu0 %v4440
    %5566 = vmatpush1.bf16.xpose.msra.mxu0 %v4439
    %5567 = vmatprep.subr.bf16.mxu0 %v4530
    %5568 = vmatpush1.bf16.xpose.msra.mxu0 %v4529
    %5569 = vmatprep.subr.bf16.mxu0 %v4620
    %5570 = vmatpush1.bf16.xpose.msra.mxu0 %v4619
    %5571 = vmatprep.subr.bf16.mxu0 %v4710
    %5572 = vmatpush1.bf16.xpose.msra.mxu0 %v4709
    %5573 = vmatprep.subr.bf16.mxu0 0
    %5574 = vmatpush1.bf16.xpose.msra.mxu0 0
    %5575 = vmatprep.subr.bf16.mxu0 0
    %5576 = vmatpush1.bf16.xpose.msra.mxu0 0
    %5577 = vmatprep.subr.bf16.mxu0 0
    %5578 = vmatpush1.bf16.xpose.msra.mxu0 0
    %5579 = vmatprep.subr.bf16.mxu0 0
    %5580 = vmatpush1.bf16.xpose.msra.mxu0 0
    %5581 = vmatprep.subr.bf16.mxu0 0
    %5582 = vmatpush1.bf16.xpose.msra.mxu0 0
    %5583 = vmatprep.subr.bf16.mxu0 0
    %5584 = vmatpush1.bf16.xpose.msra.mxu0 0
    %5585 = vmatprep.subr.bf16.mxu0 0
    %5586 = vmatpush1.bf16.xpose.msra.mxu0 0
    %5587 = vmatprep.subr.bf16.mxu0 0
    %5588 = vmatpush1.bf16.xpose.msra.mxu0 0
    %5589 = vmatprep.mubr.bf16.mxu0 %v1103
    %5590 = vmatmul.mubr.bf16.gmra.mrb[0].mxu0 %v1102
    %v5591 = vpop.f32.mrb[0].mxu0
    %v5592 = vadd.f32 %v5552, %v5591
    %v5593 = vpop.f32.mrb[0].mxu0
    %v5594 = vpop.f32.mrb[0].mxu0
    %v5595 = vpop.f32.mrb[0].mxu0
    %5596 = vdwg.mxu0
    %5597 = vmatprep.subr.bf16.mxu0 %v4082
    %5598 = vmatpush1.bf16.xpose.msra.mxu0 %v4081
    %5599 = vmatprep.subr.bf16.mxu0 %v4172
    %5600 = vmatpush1.bf16.xpose.msra.mxu0 %v4171
    %5601 = vmatprep.subr.bf16.mxu0 %v4262
    %5602 = vmatpush1.bf16.xpose.msra.mxu0 %v4261
    %5603 = vmatprep.subr.bf16.mxu0 %v4352
    %5604 = vmatpush1.bf16.xpose.msra.mxu0 %v4351
    %5605 = vmatprep.subr.bf16.mxu0 %v4442
    %5606 = vmatpush1.bf16.xpose.msra.mxu0 %v4441
    %5607 = vmatprep.subr.bf16.mxu0 %v4532
    %5608 = vmatpush1.bf16.xpose.msra.mxu0 %v4531
    %5609 = vmatprep.subr.bf16.mxu0 %v4622
    %5610 = vmatpush1.bf16.xpose.msra.mxu0 %v4621
    %5611 = vmatprep.subr.bf16.mxu0 %v4712
    %5612 = vmatpush1.bf16.xpose.msra.mxu0 %v4711
    %5613 = vmatprep.subr.bf16.mxu0 0
    %5614 = vmatpush1.bf16.xpose.msra.mxu0 0
    %5615 = vmatprep.subr.bf16.mxu0 0
    %5616 = vmatpush1.bf16.xpose.msra.mxu0 0
    %5617 = vmatprep.subr.bf16.mxu0 0
    %5618 = vmatpush1.bf16.xpose.msra.mxu0 0
    %5619 = vmatprep.subr.bf16.mxu0 0
    %5620 = vmatpush1.bf16.xpose.msra.mxu0 0
    %5621 = vmatprep.subr.bf16.mxu0 0
    %5622 = vmatpush1.bf16.xpose.msra.mxu0 0
    %5623 = vmatprep.subr.bf16.mxu0 0
    %5624 = vmatpush1.bf16.xpose.msra.mxu0 0
    %5625 = vmatprep.subr.bf16.mxu0 0
    %5626 = vmatpush1.bf16.xpose.msra.mxu0 0
    %5627 = vmatprep.subr.bf16.mxu0 0
    %5628 = vmatpush1.bf16.xpose.msra.mxu0 0
    %5629 = vmatprep.mubr.bf16.mxu0 %v1105
    %5630 = vmatmul.mubr.bf16.gmra.mrb[0].mxu0 %v1104
    %v5631 = vpop.f32.mrb[0].mxu0
    %v5632 = vadd.f32 %v5592, %v5631
    %v5633 = vpop.f32.mrb[0].mxu0
    %v5634 = vpop.f32.mrb[0].mxu0
    %v5635 = vpop.f32.mrb[0].mxu0
    %5636 = vdwg.mxu0
    %5637 = vmatprep.subr.bf16.mxu0 %v4084
    %5638 = vmatpush1.bf16.xpose.msra.mxu0 %v4083
    %5639 = vmatprep.subr.bf16.mxu0 %v4174
    %5640 = vmatpush1.bf16.xpose.msra.mxu0 %v4173
    %5641 = vmatprep.subr.bf16.mxu0 %v4264
    %5642 = vmatpush1.bf16.xpose.msra.mxu0 %v4263
    %5643 = vmatprep.subr.bf16.mxu0 %v4354
    %5644 = vmatpush1.bf16.xpose.msra.mxu0 %v4353
    %5645 = vmatprep.subr.bf16.mxu0 %v4444
    %5646 = vmatpush1.bf16.xpose.msra.mxu0 %v4443
    %5647 = vmatprep.subr.bf16.mxu0 %v4534
    %5648 = vmatpush1.bf16.xpose.msra.mxu0 %v4533
    %5649 = vmatprep.subr.bf16.mxu0 %v4624
    %5650 = vmatpush1.bf16.xpose.msra.mxu0 %v4623
    %5651 = vmatprep.subr.bf16.mxu0 %v4714
    %5652 = vmatpush1.bf16.xpose.msra.mxu0 %v4713
    %5653 = vmatprep.subr.bf16.mxu0 0
    %5654 = vmatpush1.bf16.xpose.msra.mxu0 0
    %5655 = vmatprep.subr.bf16.mxu0 0
    %5656 = vmatpush1.bf16.xpose.msra.mxu0 0
    %5657 = vmatprep.subr.bf16.mxu0 0
    %5658 = vmatpush1.bf16.xpose.msra.mxu0 0
    %5659 = vmatprep.subr.bf16.mxu0 0
    %5660 = vmatpush1.bf16.xpose.msra.mxu0 0
    %5661 = vmatprep.subr.bf16.mxu0 0
    %5662 = vmatpush1.bf16.xpose.msra.mxu0 0
    %5663 = vmatprep.subr.bf16.mxu0 0
    %5664 = vmatpush1.bf16.xpose.msra.mxu0 0
    %5665 = vmatprep.subr.bf16.mxu0 0
    %5666 = vmatpush1.bf16.xpose.msra.mxu0 0
    %5667 = vmatprep.subr.bf16.mxu0 0
    %5668 = vmatpush1.bf16.xpose.msra.mxu0 0
    %5669 = vmatprep.mubr.bf16.mxu0 %v1107
    %5670 = vmatmul.mubr.bf16.gmra.mrb[0].mxu0 %v1106
    %v5671 = vpop.f32.mrb[0].mxu0
    %v5672 = vadd.f32 %v5632, %v5671
    %v5673 = vpop.f32.mrb[0].mxu0
    %v5674 = vpop.f32.mrb[0].mxu0
    %v5675 = vpop.f32.mrb[0].mxu0
    %5676 = vdwg.mxu0
    %5677 = vmatprep.subr.bf16.mxu0 %v4086
    %5678 = vmatpush1.bf16.xpose.msra.mxu0 %v4085
    %5679 = vmatprep.subr.bf16.mxu0 %v4176
    %5680 = vmatpush1.bf16.xpose.msra.mxu0 %v4175
    %5681 = vmatprep.subr.bf16.mxu0 %v4266
    %5682 = vmatpush1.bf16.xpose.msra.mxu0 %v4265
    %5683 = vmatprep.subr.bf16.mxu0 %v4356
    %5684 = vmatpush1.bf16.xpose.msra.mxu0 %v4355
    %5685 = vmatprep.subr.bf16.mxu0 %v4446
    %5686 = vmatpush1.bf16.xpose.msra.mxu0 %v4445
    %5687 = vmatprep.subr.bf16.mxu0 %v4536
    %5688 = vmatpush1.bf16.xpose.msra.mxu0 %v4535
    %5689 = vmatprep.subr.bf16.mxu0 %v4626
    %5690 = vmatpush1.bf16.xpose.msra.mxu0 %v4625
    %5691 = vmatprep.subr.bf16.mxu0 %v4716
    %5692 = vmatpush1.bf16.xpose.msra.mxu0 %v4715
    %5693 = vmatprep.subr.bf16.mxu0 0
    %5694 = vmatpush1.bf16.xpose.msra.mxu0 0
    %5695 = vmatprep.subr.bf16.mxu0 0
    %5696 = vmatpush1.bf16.xpose.msra.mxu0 0
    %5697 = vmatprep.subr.bf16.mxu0 0
    %5698 = vmatpush1.bf16.xpose.msra.mxu0 0
    %5699 = vmatprep.subr.bf16.mxu0 0
    %5700 = vmatpush1.bf16.xpose.msra.mxu0 0
    %5701 = vmatprep.subr.bf16.mxu0 0
    %5702 = vmatpush1.bf16.xpose.msra.mxu0 0
    %5703 = vmatprep.subr.bf16.mxu0 0
    %5704 = vmatpush1.bf16.xpose.msra.mxu0 0
    %5705 = vmatprep.subr.bf16.mxu0 0
    %5706 = vmatpush1.bf16.xpose.msra.mxu0 0
    %5707 = vmatprep.subr.bf16.mxu0 0
    %5708 = vmatpush1.bf16.xpose.msra.mxu0 0
    %5709 = vmatprep.mubr.bf16.mxu0 %v1109
    %5710 = vmatmul.mubr.bf16.gmra.mrb[0].mxu0 %v1108
    %v5711 = vpop.f32.mrb[0].mxu0
    %v5712 = vadd.f32 %v5672, %v5711
    %v5713 = vpop.f32.mrb[0].mxu0
    %v5714 = vpop.f32.mrb[0].mxu0
    %v5715 = vpop.f32.mrb[0].mxu0
    %5716 = vdwg.mxu0
    %5717 = vmatprep.subr.bf16.mxu0 %v4088
    %5718 = vmatpush1.bf16.xpose.msra.mxu0 %v4087
    %5719 = vmatprep.subr.bf16.mxu0 %v4178
    %5720 = vmatpush1.bf16.xpose.msra.mxu0 %v4177
    %5721 = vmatprep.subr.bf16.mxu0 %v4268
    %5722 = vmatpush1.bf16.xpose.msra.mxu0 %v4267
    %5723 = vmatprep.subr.bf16.mxu0 %v4358
    %5724 = vmatpush1.bf16.xpose.msra.mxu0 %v4357
    %5725 = vmatprep.subr.bf16.mxu0 %v4448
    %5726 = vmatpush1.bf16.xpose.msra.mxu0 %v4447
    %5727 = vmatprep.subr.bf16.mxu0 %v4538
    %5728 = vmatpush1.bf16.xpose.msra.mxu0 %v4537
    %5729 = vmatprep.subr.bf16.mxu0 %v4628
    %5730 = vmatpush1.bf16.xpose.msra.mxu0 %v4627
    %5731 = vmatprep.subr.bf16.mxu0 %v4718
    %5732 = vmatpush1.bf16.xpose.msra.mxu0 %v4717
    %5733 = vmatprep.subr.bf16.mxu0 0
    %5734 = vmatpush1.bf16.xpose.msra.mxu0 0
    %5735 = vmatprep.subr.bf16.mxu0 0
    %5736 = vmatpush1.bf16.xpose.msra.mxu0 0
    %5737 = vmatprep.subr.bf16.mxu0 0
    %5738 = vmatpush1.bf16.xpose.msra.mxu0 0
    %5739 = vmatprep.subr.bf16.mxu0 0
    %5740 = vmatpush1.bf16.xpose.msra.mxu0 0
    %5741 = vmatprep.subr.bf16.mxu0 0
    %5742 = vmatpush1.bf16.xpose.msra.mxu0 0
    %5743 = vmatprep.subr.bf16.mxu0 0
    %5744 = vmatpush1.bf16.xpose.msra.mxu0 0
    %5745 = vmatprep.subr.bf16.mxu0 0
    %5746 = vmatpush1.bf16.xpose.msra.mxu0 0
    %5747 = vmatprep.subr.bf16.mxu0 0
    %5748 = vmatpush1.bf16.xpose.msra.mxu0 0
    %5749 = vmatprep.mubr.bf16.mxu0 %v1111
    %5750 = vmatmul.mubr.bf16.gmra.mrb[0].mxu0 %v1110
    %v5751 = vpop.f32.mrb[0].mxu0
    %v5752 = vadd.f32 %v5712, %v5751
    %v5753 = vpop.f32.mrb[0].mxu0
    %v5754 = vpop.f32.mrb[0].mxu0
    %v5755 = vpop.f32.mrb[0].mxu0
    %5756 = vdwg.mxu0
    %5757 = vmatprep.subr.bf16.mxu0 %v4090
    %5758 = vmatpush1.bf16.xpose.msra.mxu0 %v4089
    %5759 = vmatprep.subr.bf16.mxu0 %v4180
    %5760 = vmatpush1.bf16.xpose.msra.mxu0 %v4179
    %5761 = vmatprep.subr.bf16.mxu0 %v4270
    %5762 = vmatpush1.bf16.xpose.msra.mxu0 %v4269
    %5763 = vmatprep.subr.bf16.mxu0 %v4360
    %5764 = vmatpush1.bf16.xpose.msra.mxu0 %v4359
    %5765 = vmatprep.subr.bf16.mxu0 %v4450
    %5766 = vmatpush1.bf16.xpose.msra.mxu0 %v4449
    %5767 = vmatprep.subr.bf16.mxu0 %v4540
    %5768 = vmatpush1.bf16.xpose.msra.mxu0 %v4539
    %5769 = vmatprep.subr.bf16.mxu0 %v4630
    %5770 = vmatpush1.bf16.xpose.msra.mxu0 %v4629
    %5771 = vmatprep.subr.bf16.mxu0 %v4720
    %5772 = vmatpush1.bf16.xpose.msra.mxu0 %v4719
    %5773 = vmatprep.subr.bf16.mxu0 0
    %5774 = vmatpush1.bf16.xpose.msra.mxu0 0
    %5775 = vmatprep.subr.bf16.mxu0 0
    %5776 = vmatpush1.bf16.xpose.msra.mxu0 0
    %5777 = vmatprep.subr.bf16.mxu0 0
    %5778 = vmatpush1.bf16.xpose.msra.mxu0 0
    %5779 = vmatprep.subr.bf16.mxu0 0
    %5780 = vmatpush1.bf16.xpose.msra.mxu0 0
    %5781 = vmatprep.subr.bf16.mxu0 0
    %5782 = vmatpush1.bf16.xpose.msra.mxu0 0
    %5783 = vmatprep.subr.bf16.mxu0 0
    %5784 = vmatpush1.bf16.xpose.msra.mxu0 0
    %5785 = vmatprep.subr.bf16.mxu0 0
    %5786 = vmatpush1.bf16.xpose.msra.mxu0 0
    %5787 = vmatprep.subr.bf16.mxu0 0
    %5788 = vmatpush1.bf16.xpose.msra.mxu0 0
    %5789 = vmatprep.mubr.bf16.mxu0 %v1113
    %5790 = vmatmul.mubr.bf16.gmra.mrb[0].mxu0 %v1112
    %v5791 = vpop.f32.mrb[0].mxu0
    %v5792 = vadd.f32 %v5752, %v5791
    %v5793 = vpop.f32.mrb[0].mxu0
    %v5794 = vpop.f32.mrb[0].mxu0
    %v5795 = vpop.f32.mrb[0].mxu0
    %5796 = vdwg.mxu0
    %5797 = vmatprep.subr.bf16.mxu0 %v4092
    %5798 = vmatpush1.bf16.xpose.msra.mxu0 %v4091
    %5799 = vmatprep.subr.bf16.mxu0 %v4182
    %5800 = vmatpush1.bf16.xpose.msra.mxu0 %v4181
    %5801 = vmatprep.subr.bf16.mxu0 %v4272
    %5802 = vmatpush1.bf16.xpose.msra.mxu0 %v4271
    %5803 = vmatprep.subr.bf16.mxu0 %v4362
    %5804 = vmatpush1.bf16.xpose.msra.mxu0 %v4361
    %5805 = vmatprep.subr.bf16.mxu0 %v4452
    %5806 = vmatpush1.bf16.xpose.msra.mxu0 %v4451
    %5807 = vmatprep.subr.bf16.mxu0 %v4542
    %5808 = vmatpush1.bf16.xpose.msra.mxu0 %v4541
    %5809 = vmatprep.subr.bf16.mxu0 %v4632
    %5810 = vmatpush1.bf16.xpose.msra.mxu0 %v4631
    %5811 = vmatprep.subr.bf16.mxu0 %v4722
    %5812 = vmatpush1.bf16.xpose.msra.mxu0 %v4721
    %5813 = vmatprep.subr.bf16.mxu0 0
    %5814 = vmatpush1.bf16.xpose.msra.mxu0 0
    %5815 = vmatprep.subr.bf16.mxu0 0
    %5816 = vmatpush1.bf16.xpose.msra.mxu0 0
    %5817 = vmatprep.subr.bf16.mxu0 0
    %5818 = vmatpush1.bf16.xpose.msra.mxu0 0
    %5819 = vmatprep.subr.bf16.mxu0 0
    %5820 = vmatpush1.bf16.xpose.msra.mxu0 0
    %5821 = vmatprep.subr.bf16.mxu0 0
    %5822 = vmatpush1.bf16.xpose.msra.mxu0 0
    %5823 = vmatprep.subr.bf16.mxu0 0
    %5824 = vmatpush1.bf16.xpose.msra.mxu0 0
    %5825 = vmatprep.subr.bf16.mxu0 0
    %5826 = vmatpush1.bf16.xpose.msra.mxu0 0
    %5827 = vmatprep.subr.bf16.mxu0 0
    %5828 = vmatpush1.bf16.xpose.msra.mxu0 0
    %5829 = vmatprep.mubr.bf16.mxu0 %v1115
    %5830 = vmatmul.mubr.bf16.gmra.mrb[0].mxu0 %v1114
    %v5831 = vpop.f32.mrb[0].mxu0
    %v5832 = vadd.f32 %v5792, %v5831
    %v5833 = vpop.f32.mrb[0].mxu0
    %v5834 = vpop.f32.mrb[0].mxu0
    %v5835 = vpop.f32.mrb[0].mxu0
    %5836 = vdwg.mxu0
    %5837 = vmatprep.subr.bf16.mxu0 %v4094
    %5838 = vmatpush1.bf16.xpose.msra.mxu0 %v4093
    %5839 = vmatprep.subr.bf16.mxu0 %v4184
    %5840 = vmatpush1.bf16.xpose.msra.mxu0 %v4183
    %5841 = vmatprep.subr.bf16.mxu0 %v4274
    %5842 = vmatpush1.bf16.xpose.msra.mxu0 %v4273
    %5843 = vmatprep.subr.bf16.mxu0 %v4364
    %5844 = vmatpush1.bf16.xpose.msra.mxu0 %v4363
    %5845 = vmatprep.subr.bf16.mxu0 %v4454
    %5846 = vmatpush1.bf16.xpose.msra.mxu0 %v4453
    %5847 = vmatprep.subr.bf16.mxu0 %v4544
    %5848 = vmatpush1.bf16.xpose.msra.mxu0 %v4543
    %5849 = vmatprep.subr.bf16.mxu0 %v4634
    %5850 = vmatpush1.bf16.xpose.msra.mxu0 %v4633
    %5851 = vmatprep.subr.bf16.mxu0 %v4724
    %5852 = vmatpush1.bf16.xpose.msra.mxu0 %v4723
    %5853 = vmatprep.subr.bf16.mxu0 0
    %5854 = vmatpush1.bf16.xpose.msra.mxu0 0
    %5855 = vmatprep.subr.bf16.mxu0 0
    %5856 = vmatpush1.bf16.xpose.msra.mxu0 0
    %5857 = vmatprep.subr.bf16.mxu0 0
    %5858 = vmatpush1.bf16.xpose.msra.mxu0 0
    %5859 = vmatprep.subr.bf16.mxu0 0
    %5860 = vmatpush1.bf16.xpose.msra.mxu0 0
    %5861 = vmatprep.subr.bf16.mxu0 0
    %5862 = vmatpush1.bf16.xpose.msra.mxu0 0
    %5863 = vmatprep.subr.bf16.mxu0 0
    %5864 = vmatpush1.bf16.xpose.msra.mxu0 0
    %5865 = vmatprep.subr.bf16.mxu0 0
    %5866 = vmatpush1.bf16.xpose.msra.mxu0 0
    %5867 = vmatprep.subr.bf16.mxu0 0
    %5868 = vmatpush1.bf16.xpose.msra.mxu0 0
    %5869 = vmatprep.mubr.bf16.mxu0 %v1117
    %5870 = vmatmul.mubr.bf16.gmra.mrb[0].mxu0 %v1116
    %v5871 = vpop.f32.mrb[0].mxu0
    %v5872 = vadd.f32 %v5832, %v5871
    %v5873 = vpop.f32.mrb[0].mxu0
    %v5874 = vpop.f32.mrb[0].mxu0
    %v5875 = vpop.f32.mrb[0].mxu0
    %5876 = vdwg.mxu0
    %5877 = vmatprep.subr.bf16.mxu0 %v4096
    %5878 = vmatpush1.bf16.xpose.msra.mxu0 %v4095
    %5879 = vmatprep.subr.bf16.mxu0 %v4186
    %5880 = vmatpush1.bf16.xpose.msra.mxu0 %v4185
    %5881 = vmatprep.subr.bf16.mxu0 %v4276
    %5882 = vmatpush1.bf16.xpose.msra.mxu0 %v4275
    %5883 = vmatprep.subr.bf16.mxu0 %v4366
    %5884 = vmatpush1.bf16.xpose.msra.mxu0 %v4365
    %5885 = vmatprep.subr.bf16.mxu0 %v4456
    %5886 = vmatpush1.bf16.xpose.msra.mxu0 %v4455
    %5887 = vmatprep.subr.bf16.mxu0 %v4546
    %5888 = vmatpush1.bf16.xpose.msra.mxu0 %v4545
    %5889 = vmatprep.subr.bf16.mxu0 %v4636
    %5890 = vmatpush1.bf16.xpose.msra.mxu0 %v4635
    %5891 = vmatprep.subr.bf16.mxu0 %v4726
    %5892 = vmatpush1.bf16.xpose.msra.mxu0 %v4725
    %5893 = vmatprep.subr.bf16.mxu0 0
    %5894 = vmatpush1.bf16.xpose.msra.mxu0 0
    %5895 = vmatprep.subr.bf16.mxu0 0
    %5896 = vmatpush1.bf16.xpose.msra.mxu0 0
    %5897 = vmatprep.subr.bf16.mxu0 0
    %5898 = vmatpush1.bf16.xpose.msra.mxu0 0
    %5899 = vmatprep.subr.bf16.mxu0 0
    %5900 = vmatpush1.bf16.xpose.msra.mxu0 0
    %5901 = vmatprep.subr.bf16.mxu0 0
    %5902 = vmatpush1.bf16.xpose.msra.mxu0 0
    %5903 = vmatprep.subr.bf16.mxu0 0
    %5904 = vmatpush1.bf16.xpose.msra.mxu0 0
    %5905 = vmatprep.subr.bf16.mxu0 0
    %5906 = vmatpush1.bf16.xpose.msra.mxu0 0
    %5907 = vmatprep.subr.bf16.mxu0 0
    %5908 = vmatpush1.bf16.xpose.msra.mxu0 0
    %5909 = vmatprep.mubr.bf16.mxu0 %v1119
    %5910 = vmatmul.mubr.bf16.gmra.mrb[0].mxu0 %v1118
    %v5911 = vpop.f32.mrb[0].mxu0
    %v5912 = vadd.f32 %v5872, %v5911
    %v5913 = vpop.f32.mrb[0].mxu0
    %v5914 = vpop.f32.mrb[0].mxu0
    %v5915 = vpop.f32.mrb[0].mxu0
    %5916 = vdwg.mxu0
    %5917 = vmatprep.subr.bf16.mxu0 %v4098
    %5918 = vmatpush1.bf16.xpose.msra.mxu0 %v4097
    %5919 = vmatprep.subr.bf16.mxu0 %v4188
    %5920 = vmatpush1.bf16.xpose.msra.mxu0 %v4187
    %5921 = vmatprep.subr.bf16.mxu0 %v4278
    %5922 = vmatpush1.bf16.xpose.msra.mxu0 %v4277
    %5923 = vmatprep.subr.bf16.mxu0 %v4368
    %5924 = vmatpush1.bf16.xpose.msra.mxu0 %v4367
    %5925 = vmatprep.subr.bf16.mxu0 %v4458
    %5926 = vmatpush1.bf16.xpose.msra.mxu0 %v4457
    %5927 = vmatprep.subr.bf16.mxu0 %v4548
    %5928 = vmatpush1.bf16.xpose.msra.mxu0 %v4547
    %5929 = vmatprep.subr.bf16.mxu0 %v4638
    %5930 = vmatpush1.bf16.xpose.msra.mxu0 %v4637
    %5931 = vmatprep.subr.bf16.mxu0 %v4728
    %5932 = vmatpush1.bf16.xpose.msra.mxu0 %v4727
    %5933 = vmatprep.subr.bf16.mxu0 0
    %5934 = vmatpush1.bf16.xpose.msra.mxu0 0
    %5935 = vmatprep.subr.bf16.mxu0 0
    %5936 = vmatpush1.bf16.xpose.msra.mxu0 0
    %5937 = vmatprep.subr.bf16.mxu0 0
    %5938 = vmatpush1.bf16.xpose.msra.mxu0 0
    %5939 = vmatprep.subr.bf16.mxu0 0
    %5940 = vmatpush1.bf16.xpose.msra.mxu0 0
    %5941 = vmatprep.subr.bf16.mxu0 0
    %5942 = vmatpush1.bf16.xpose.msra.mxu0 0
    %5943 = vmatprep.subr.bf16.mxu0 0
    %5944 = vmatpush1.bf16.xpose.msra.mxu0 0
    %5945 = vmatprep.subr.bf16.mxu0 0
    %5946 = vmatpush1.bf16.xpose.msra.mxu0 0
    %5947 = vmatprep.subr.bf16.mxu0 0
    %5948 = vmatpush1.bf16.xpose.msra.mxu0 0
    %5949 = vmatprep.mubr.bf16.mxu0 %v1121
    %5950 = vmatmul.mubr.bf16.gmra.mrb[0].mxu0 %v1120
    %v5951 = vpop.f32.mrb[0].mxu0
    %v5952 = vadd.f32 %v5912, %v5951
    %v5953 = vpop.f32.mrb[0].mxu0
    %v5954 = vpop.f32.mrb[0].mxu0
    %v5955 = vpop.f32.mrb[0].mxu0
    %5956 = vdwg.mxu0
    %5957 = vmatprep.subr.bf16.mxu0 %v4100
    %5958 = vmatpush1.bf16.xpose.msra.mxu0 %v4099
    %5959 = vmatprep.subr.bf16.mxu0 %v4190
    %5960 = vmatpush1.bf16.xpose.msra.mxu0 %v4189
    %5961 = vmatprep.subr.bf16.mxu0 %v4280
    %5962 = vmatpush1.bf16.xpose.msra.mxu0 %v4279
    %5963 = vmatprep.subr.bf16.mxu0 %v4370
    %5964 = vmatpush1.bf16.xpose.msra.mxu0 %v4369
    %5965 = vmatprep.subr.bf16.mxu0 %v4460
    %5966 = vmatpush1.bf16.xpose.msra.mxu0 %v4459
    %5967 = vmatprep.subr.bf16.mxu0 %v4550
    %5968 = vmatpush1.bf16.xpose.msra.mxu0 %v4549
    %5969 = vmatprep.subr.bf16.mxu0 %v4640
    %5970 = vmatpush1.bf16.xpose.msra.mxu0 %v4639
    %5971 = vmatprep.subr.bf16.mxu0 %v4730
    %5972 = vmatpush1.bf16.xpose.msra.mxu0 %v4729
    %5973 = vmatprep.subr.bf16.mxu0 0
    %5974 = vmatpush1.bf16.xpose.msra.mxu0 0
    %5975 = vmatprep.subr.bf16.mxu0 0
    %5976 = vmatpush1.bf16.xpose.msra.mxu0 0
    %5977 = vmatprep.subr.bf16.mxu0 0
    %5978 = vmatpush1.bf16.xpose.msra.mxu0 0
    %5979 = vmatprep.subr.bf16.mxu0 0
    %5980 = vmatpush1.bf16.xpose.msra.mxu0 0
    %5981 = vmatprep.subr.bf16.mxu0 0
    %5982 = vmatpush1.bf16.xpose.msra.mxu0 0
    %5983 = vmatprep.subr.bf16.mxu0 0
    %5984 = vmatpush1.bf16.xpose.msra.mxu0 0
    %5985 = vmatprep.subr.bf16.mxu0 0
    %5986 = vmatpush1.bf16.xpose.msra.mxu0 0
    %5987 = vmatprep.subr.bf16.mxu0 0
    %5988 = vmatpush1.bf16.xpose.msra.mxu0 0
    %5989 = vmatprep.mubr.bf16.mxu0 %v1123
    %5990 = vmatmul.mubr.bf16.gmra.mrb[0].mxu0 %v1122
    %v5991 = vpop.f32.mrb[0].mxu0
    %v5992 = vadd.f32 %v5952, %v5991
    %v5993 = vpop.f32.mrb[0].mxu0
    %v5994 = vpop.f32.mrb[0].mxu0
    %v5995 = vpop.f32.mrb[0].mxu0
    %5996 = vdwg.mxu0
    %5997 = vmatprep.subr.bf16.mxu0 %v4102
    %5998 = vmatpush1.bf16.xpose.msra.mxu0 %v4101
    %5999 = vmatprep.subr.bf16.mxu0 %v4192
    %6000 = vmatpush1.bf16.xpose.msra.mxu0 %v4191
    %6001 = vmatprep.subr.bf16.mxu0 %v4282
    %6002 = vmatpush1.bf16.xpose.msra.mxu0 %v4281
    %6003 = vmatprep.subr.bf16.mxu0 %v4372
    %6004 = vmatpush1.bf16.xpose.msra.mxu0 %v4371
    %6005 = vmatprep.subr.bf16.mxu0 %v4462
    %6006 = vmatpush1.bf16.xpose.msra.mxu0 %v4461
    %6007 = vmatprep.subr.bf16.mxu0 %v4552
    %6008 = vmatpush1.bf16.xpose.msra.mxu0 %v4551
    %6009 = vmatprep.subr.bf16.mxu0 %v4642
    %6010 = vmatpush1.bf16.xpose.msra.mxu0 %v4641
    %6011 = vmatprep.subr.bf16.mxu0 %v4732
    %6012 = vmatpush1.bf16.xpose.msra.mxu0 %v4731
    %6013 = vmatprep.subr.bf16.mxu0 0
    %6014 = vmatpush1.bf16.xpose.msra.mxu0 0
    %6015 = vmatprep.subr.bf16.mxu0 0
    %6016 = vmatpush1.bf16.xpose.msra.mxu0 0
    %6017 = vmatprep.subr.bf16.mxu0 0
    %6018 = vmatpush1.bf16.xpose.msra.mxu0 0
    %6019 = vmatprep.subr.bf16.mxu0 0
    %6020 = vmatpush1.bf16.xpose.msra.mxu0 0
    %6021 = vmatprep.subr.bf16.mxu0 0
    %6022 = vmatpush1.bf16.xpose.msra.mxu0 0
    %6023 = vmatprep.subr.bf16.mxu0 0
    %6024 = vmatpush1.bf16.xpose.msra.mxu0 0
    %6025 = vmatprep.subr.bf16.mxu0 0
    %6026 = vmatpush1.bf16.xpose.msra.mxu0 0
    %6027 = vmatprep.subr.bf16.mxu0 0
    %6028 = vmatpush1.bf16.xpose.msra.mxu0 0
    %6029 = vmatprep.mubr.bf16.mxu0 %v1125
    %6030 = vmatmul.mubr.bf16.gmra.mrb[0].mxu0 %v1124
    %v6031 = vpop.f32.mrb[0].mxu0
    %v6032 = vadd.f32 %v5992, %v6031
    %v6033 = vpop.f32.mrb[0].mxu0
    %v6034 = vpop.f32.mrb[0].mxu0
    %v6035 = vpop.f32.mrb[0].mxu0
    %6036 = vdwg.mxu0
    %6037 = vmatprep.subr.bf16.mxu0 %v4104
    %6038 = vmatpush1.bf16.xpose.msra.mxu0 %v4103
    %6039 = vmatprep.subr.bf16.mxu0 %v4194
    %6040 = vmatpush1.bf16.xpose.msra.mxu0 %v4193
    %6041 = vmatprep.subr.bf16.mxu0 %v4284
    %6042 = vmatpush1.bf16.xpose.msra.mxu0 %v4283
    %6043 = vmatprep.subr.bf16.mxu0 %v4374
    %6044 = vmatpush1.bf16.xpose.msra.mxu0 %v4373
    %6045 = vmatprep.subr.bf16.mxu0 %v4464
    %6046 = vmatpush1.bf16.xpose.msra.mxu0 %v4463
    %6047 = vmatprep.subr.bf16.mxu0 %v4554
    %6048 = vmatpush1.bf16.xpose.msra.mxu0 %v4553
    %6049 = vmatprep.subr.bf16.mxu0 %v4644
    %6050 = vmatpush1.bf16.xpose.msra.mxu0 %v4643
    %6051 = vmatprep.subr.bf16.mxu0 %v4734
    %6052 = vmatpush1.bf16.xpose.msra.mxu0 %v4733
    %6053 = vmatprep.subr.bf16.mxu0 0
    %6054 = vmatpush1.bf16.xpose.msra.mxu0 0
    %6055 = vmatprep.subr.bf16.mxu0 0
    %6056 = vmatpush1.bf16.xpose.msra.mxu0 0
    %6057 = vmatprep.subr.bf16.mxu0 0
    %6058 = vmatpush1.bf16.xpose.msra.mxu0 0
    %6059 = vmatprep.subr.bf16.mxu0 0
    %6060 = vmatpush1.bf16.xpose.msra.mxu0 0
    %6061 = vmatprep.subr.bf16.mxu0 0
    %6062 = vmatpush1.bf16.xpose.msra.mxu0 0
    %6063 = vmatprep.subr.bf16.mxu0 0
    %6064 = vmatpush1.bf16.xpose.msra.mxu0 0
    %6065 = vmatprep.subr.bf16.mxu0 0
    %6066 = vmatpush1.bf16.xpose.msra.mxu0 0
    %6067 = vmatprep.subr.bf16.mxu0 0
    %6068 = vmatpush1.bf16.xpose.msra.mxu0 0
    %6069 = vmatprep.mubr.bf16.mxu0 %v1127
    %6070 = vmatmul.mubr.bf16.gmra.mrb[0].mxu0 %v1126
    %v6071 = vpop.f32.mrb[0].mxu0
    %v6072 = vadd.f32 %v6032, %v6071
    %v6073 = vpop.f32.mrb[0].mxu0
    %v6074 = vpop.f32.mrb[0].mxu0
    %v6075 = vpop.f32.mrb[0].mxu0
    %6076 = vdwg.mxu0
    %6077 = vmatprep.subr.bf16.mxu0 %v4106
    %6078 = vmatpush1.bf16.xpose.msra.mxu0 %v4105
    %6079 = vmatprep.subr.bf16.mxu0 %v4196
    %6080 = vmatpush1.bf16.xpose.msra.mxu0 %v4195
    %6081 = vmatprep.subr.bf16.mxu0 %v4286
    %6082 = vmatpush1.bf16.xpose.msra.mxu0 %v4285
    %6083 = vmatprep.subr.bf16.mxu0 %v4376
    %6084 = vmatpush1.bf16.xpose.msra.mxu0 %v4375
    %6085 = vmatprep.subr.bf16.mxu0 %v4466
    %6086 = vmatpush1.bf16.xpose.msra.mxu0 %v4465
    %6087 = vmatprep.subr.bf16.mxu0 %v4556
    %6088 = vmatpush1.bf16.xpose.msra.mxu0 %v4555
    %6089 = vmatprep.subr.bf16.mxu0 %v4646
    %6090 = vmatpush1.bf16.xpose.msra.mxu0 %v4645
    %6091 = vmatprep.subr.bf16.mxu0 %v4736
    %6092 = vmatpush1.bf16.xpose.msra.mxu0 %v4735
    %6093 = vmatprep.subr.bf16.mxu0 0
    %6094 = vmatpush1.bf16.xpose.msra.mxu0 0
    %6095 = vmatprep.subr.bf16.mxu0 0
    %6096 = vmatpush1.bf16.xpose.msra.mxu0 0
    %6097 = vmatprep.subr.bf16.mxu0 0
    %6098 = vmatpush1.bf16.xpose.msra.mxu0 0
    %6099 = vmatprep.subr.bf16.mxu0 0
    %6100 = vmatpush1.bf16.xpose.msra.mxu0 0
    %6101 = vmatprep.subr.bf16.mxu0 0
    %6102 = vmatpush1.bf16.xpose.msra.mxu0 0
    %6103 = vmatprep.subr.bf16.mxu0 0
    %6104 = vmatpush1.bf16.xpose.msra.mxu0 0
    %6105 = vmatprep.subr.bf16.mxu0 0
    %6106 = vmatpush1.bf16.xpose.msra.mxu0 0
    %6107 = vmatprep.subr.bf16.mxu0 0
    %6108 = vmatpush1.bf16.xpose.msra.mxu0 0
    %6109 = vmatprep.mubr.bf16.mxu0 %v1129
    %6110 = vmatmul.mubr.bf16.gmra.mrb[0].mxu0 %v1128
    %v6111 = vpop.f32.mrb[0].mxu0
    %v6112 = vadd.f32 %v6072, %v6111
    %v6113 = vpop.f32.mrb[0].mxu0
    %v6114 = vpop.f32.mrb[0].mxu0
    %v6115 = vpop.f32.mrb[0].mxu0
    %6116 = vdwg.mxu0
    %6117 = vmatprep.subr.bf16.mxu0 %v4108
    %6118 = vmatpush1.bf16.xpose.msra.mxu0 %v4107
    %6119 = vmatprep.subr.bf16.mxu0 %v4198
    %6120 = vmatpush1.bf16.xpose.msra.mxu0 %v4197
    %6121 = vmatprep.subr.bf16.mxu0 %v4288
    %6122 = vmatpush1.bf16.xpose.msra.mxu0 %v4287
    %6123 = vmatprep.subr.bf16.mxu0 %v4378
    %6124 = vmatpush1.bf16.xpose.msra.mxu0 %v4377
    %6125 = vmatprep.subr.bf16.mxu0 %v4468
    %6126 = vmatpush1.bf16.xpose.msra.mxu0 %v4467
    %6127 = vmatprep.subr.bf16.mxu0 %v4558
    %6128 = vmatpush1.bf16.xpose.msra.mxu0 %v4557
    %6129 = vmatprep.subr.bf16.mxu0 %v4648
    %6130 = vmatpush1.bf16.xpose.msra.mxu0 %v4647
    %6131 = vmatprep.subr.bf16.mxu0 %v4738
    %6132 = vmatpush1.bf16.xpose.msra.mxu0 %v4737
    %6133 = vmatprep.subr.bf16.mxu0 0
    %6134 = vmatpush1.bf16.xpose.msra.mxu0 0
    %6135 = vmatprep.subr.bf16.mxu0 0
    %6136 = vmatpush1.bf16.xpose.msra.mxu0 0
    %6137 = vmatprep.subr.bf16.mxu0 0
    %6138 = vmatpush1.bf16.xpose.msra.mxu0 0
    %6139 = vmatprep.subr.bf16.mxu0 0
    %6140 = vmatpush1.bf16.xpose.msra.mxu0 0
    %6141 = vmatprep.subr.bf16.mxu0 0
    %6142 = vmatpush1.bf16.xpose.msra.mxu0 0
    %6143 = vmatprep.subr.bf16.mxu0 0
    %6144 = vmatpush1.bf16.xpose.msra.mxu0 0
    %6145 = vmatprep.subr.bf16.mxu0 0
    %6146 = vmatpush1.bf16.xpose.msra.mxu0 0
    %6147 = vmatprep.subr.bf16.mxu0 0
    %6148 = vmatpush1.bf16.xpose.msra.mxu0 0
    %6149 = vmatprep.mubr.bf16.mxu0 %v1131
    %6150 = vmatmul.mubr.bf16.gmra.mrb[0].mxu0 %v1130
    %v6151 = vpop.f32.mrb[0].mxu0
    %v6152 = vadd.f32 %v6112, %v6151
    %v6153 = vpop.f32.mrb[0].mxu0
    %v6154 = vpop.f32.mrb[0].mxu0
    %v6155 = vpop.f32.mrb[0].mxu0
    %6156 = vdwg.mxu0
    %6157 = vmatprep.subr.bf16.mxu0 %v4110
    %6158 = vmatpush1.bf16.xpose.msra.mxu0 %v4109
    %6159 = vmatprep.subr.bf16.mxu0 %v4200
    %6160 = vmatpush1.bf16.xpose.msra.mxu0 %v4199
    %6161 = vmatprep.subr.bf16.mxu0 %v4290
    %6162 = vmatpush1.bf16.xpose.msra.mxu0 %v4289
    %6163 = vmatprep.subr.bf16.mxu0 %v4380
    %6164 = vmatpush1.bf16.xpose.msra.mxu0 %v4379
    %6165 = vmatprep.subr.bf16.mxu0 %v4470
    %6166 = vmatpush1.bf16.xpose.msra.mxu0 %v4469
    %6167 = vmatprep.subr.bf16.mxu0 %v4560
    %6168 = vmatpush1.bf16.xpose.msra.mxu0 %v4559
    %6169 = vmatprep.subr.bf16.mxu0 %v4650
    %6170 = vmatpush1.bf16.xpose.msra.mxu0 %v4649
    %6171 = vmatprep.subr.bf16.mxu0 %v4740
    %6172 = vmatpush1.bf16.xpose.msra.mxu0 %v4739
    %6173 = vmatprep.subr.bf16.mxu0 0
    %6174 = vmatpush1.bf16.xpose.msra.mxu0 0
    %6175 = vmatprep.subr.bf16.mxu0 0
    %6176 = vmatpush1.bf16.xpose.msra.mxu0 0
    %6177 = vmatprep.subr.bf16.mxu0 0
    %6178 = vmatpush1.bf16.xpose.msra.mxu0 0
    %6179 = vmatprep.subr.bf16.mxu0 0
    %6180 = vmatpush1.bf16.xpose.msra.mxu0 0
    %6181 = vmatprep.subr.bf16.mxu0 0
    %6182 = vmatpush1.bf16.xpose.msra.mxu0 0
    %6183 = vmatprep.subr.bf16.mxu0 0
    %6184 = vmatpush1.bf16.xpose.msra.mxu0 0
    %6185 = vmatprep.subr.bf16.mxu0 0
    %6186 = vmatpush1.bf16.xpose.msra.mxu0 0
    %6187 = vmatprep.subr.bf16.mxu0 0
    %6188 = vmatpush1.bf16.xpose.msra.mxu0 0
    %6189 = vmatprep.mubr.bf16.mxu0 %v1133
    %6190 = vmatmul.mubr.bf16.gmra.mrb[0].mxu0 %v1132
    %v6191 = vpop.f32.mrb[0].mxu0
    %v6192 = vadd.f32 %v6152, %v6191
    %v6193 = vpop.f32.mrb[0].mxu0
    %v6194 = vpop.f32.mrb[0].mxu0
    %v6195 = vpop.f32.mrb[0].mxu0
    %6196 = vdwg.mxu0
    %6197 = vmatprep.subr.bf16.mxu0 %v4112
    %6198 = vmatpush1.bf16.xpose.msra.mxu0 %v4111
    %6199 = vmatprep.subr.bf16.mxu0 %v4202
    %6200 = vmatpush1.bf16.xpose.msra.mxu0 %v4201
    %6201 = vmatprep.subr.bf16.mxu0 %v4292
    %6202 = vmatpush1.bf16.xpose.msra.mxu0 %v4291
    %6203 = vmatprep.subr.bf16.mxu0 %v4382
    %6204 = vmatpush1.bf16.xpose.msra.mxu0 %v4381
    %6205 = vmatprep.subr.bf16.mxu0 %v4472
    %6206 = vmatpush1.bf16.xpose.msra.mxu0 %v4471
    %6207 = vmatprep.subr.bf16.mxu0 %v4562
    %6208 = vmatpush1.bf16.xpose.msra.mxu0 %v4561
    %6209 = vmatprep.subr.bf16.mxu0 %v4652
    %6210 = vmatpush1.bf16.xpose.msra.mxu0 %v4651
    %6211 = vmatprep.subr.bf16.mxu0 %v4742
    %6212 = vmatpush1.bf16.xpose.msra.mxu0 %v4741
    %6213 = vmatprep.subr.bf16.mxu0 0
    %6214 = vmatpush1.bf16.xpose.msra.mxu0 0
    %6215 = vmatprep.subr.bf16.mxu0 0
    %6216 = vmatpush1.bf16.xpose.msra.mxu0 0
    %6217 = vmatprep.subr.bf16.mxu0 0
    %6218 = vmatpush1.bf16.xpose.msra.mxu0 0
    %6219 = vmatprep.subr.bf16.mxu0 0
    %6220 = vmatpush1.bf16.xpose.msra.mxu0 0
    %6221 = vmatprep.subr.bf16.mxu0 0
    %6222 = vmatpush1.bf16.xpose.msra.mxu0 0
    %6223 = vmatprep.subr.bf16.mxu0 0
    %6224 = vmatpush1.bf16.xpose.msra.mxu0 0
    %6225 = vmatprep.subr.bf16.mxu0 0
    %6226 = vmatpush1.bf16.xpose.msra.mxu0 0
    %6227 = vmatprep.subr.bf16.mxu0 0
    %6228 = vmatpush1.bf16.xpose.msra.mxu0 0
    %6229 = vmatprep.mubr.bf16.mxu0 %v1135
    %6230 = vmatmul.mubr.bf16.gmra.mrb[0].mxu0 %v1134
    %v6231 = vpop.f32.mrb[0].mxu0
    %v6232 = vadd.f32 %v6192, %v6231
    %v6233 = vpop.f32.mrb[0].mxu0
    %v6234 = vpop.f32.mrb[0].mxu0
    %v6235 = vpop.f32.mrb[0].mxu0
    %6236 = vdwg.mxu0
    %6237 = vmatprep.subr.bf16.mxu0 %v4114
    %6238 = vmatpush1.bf16.xpose.msra.mxu0 %v4113
    %6239 = vmatprep.subr.bf16.mxu0 %v4204
    %6240 = vmatpush1.bf16.xpose.msra.mxu0 %v4203
    %6241 = vmatprep.subr.bf16.mxu0 %v4294
    %6242 = vmatpush1.bf16.xpose.msra.mxu0 %v4293
    %6243 = vmatprep.subr.bf16.mxu0 %v4384
    %6244 = vmatpush1.bf16.xpose.msra.mxu0 %v4383
    %6245 = vmatprep.subr.bf16.mxu0 %v4474
    %6246 = vmatpush1.bf16.xpose.msra.mxu0 %v4473
    %6247 = vmatprep.subr.bf16.mxu0 %v4564
    %6248 = vmatpush1.bf16.xpose.msra.mxu0 %v4563
    %6249 = vmatprep.subr.bf16.mxu0 %v4654
    %6250 = vmatpush1.bf16.xpose.msra.mxu0 %v4653
    %6251 = vmatprep.subr.bf16.mxu0 %v4744
    %6252 = vmatpush1.bf16.xpose.msra.mxu0 %v4743
    %6253 = vmatprep.subr.bf16.mxu0 0
    %6254 = vmatpush1.bf16.xpose.msra.mxu0 0
    %6255 = vmatprep.subr.bf16.mxu0 0
    %6256 = vmatpush1.bf16.xpose.msra.mxu0 0
    %6257 = vmatprep.subr.bf16.mxu0 0
    %6258 = vmatpush1.bf16.xpose.msra.mxu0 0
    %6259 = vmatprep.subr.bf16.mxu0 0
    %6260 = vmatpush1.bf16.xpose.msra.mxu0 0
    %6261 = vmatprep.subr.bf16.mxu0 0
    %6262 = vmatpush1.bf16.xpose.msra.mxu0 0
    %6263 = vmatprep.subr.bf16.mxu0 0
    %6264 = vmatpush1.bf16.xpose.msra.mxu0 0
    %6265 = vmatprep.subr.bf16.mxu0 0
    %6266 = vmatpush1.bf16.xpose.msra.mxu0 0
    %6267 = vmatprep.subr.bf16.mxu0 0
    %6268 = vmatpush1.bf16.xpose.msra.mxu0 0
    %6269 = vmatprep.mubr.bf16.mxu0 %v1137
    %6270 = vmatmul.mubr.bf16.gmra.mrb[0].mxu0 %v1136
    %v6271 = vpop.f32.mrb[0].mxu0
    %v6272 = vadd.f32 %v6232, %v6271
    %v6273 = vpop.f32.mrb[0].mxu0
    %v6274 = vpop.f32.mrb[0].mxu0
    %v6275 = vpop.f32.mrb[0].mxu0
    %6276 = vdwg.mxu0
    %6277 = vmatprep.subr.bf16.mxu0 %v4116
    %6278 = vmatpush1.bf16.xpose.msra.mxu0 %v4115
    %6279 = vmatprep.subr.bf16.mxu0 %v4206
    %6280 = vmatpush1.bf16.xpose.msra.mxu0 %v4205
    %6281 = vmatprep.subr.bf16.mxu0 %v4296
    %6282 = vmatpush1.bf16.xpose.msra.mxu0 %v4295
    %6283 = vmatprep.subr.bf16.mxu0 %v4386
    %6284 = vmatpush1.bf16.xpose.msra.mxu0 %v4385
    %6285 = vmatprep.subr.bf16.mxu0 %v4476
    %6286 = vmatpush1.bf16.xpose.msra.mxu0 %v4475
    %6287 = vmatprep.subr.bf16.mxu0 %v4566
    %6288 = vmatpush1.bf16.xpose.msra.mxu0 %v4565
    %6289 = vmatprep.subr.bf16.mxu0 %v4656
    %6290 = vmatpush1.bf16.xpose.msra.mxu0 %v4655
    %6291 = vmatprep.subr.bf16.mxu0 %v4746
    %6292 = vmatpush1.bf16.xpose.msra.mxu0 %v4745
    %6293 = vmatprep.subr.bf16.mxu0 0
    %6294 = vmatpush1.bf16.xpose.msra.mxu0 0
    %6295 = vmatprep.subr.bf16.mxu0 0
    %6296 = vmatpush1.bf16.xpose.msra.mxu0 0
    %6297 = vmatprep.subr.bf16.mxu0 0
    %6298 = vmatpush1.bf16.xpose.msra.mxu0 0
    %6299 = vmatprep.subr.bf16.mxu0 0
    %6300 = vmatpush1.bf16.xpose.msra.mxu0 0
    %6301 = vmatprep.subr.bf16.mxu0 0
    %6302 = vmatpush1.bf16.xpose.msra.mxu0 0
    %6303 = vmatprep.subr.bf16.mxu0 0
    %6304 = vmatpush1.bf16.xpose.msra.mxu0 0
    %6305 = vmatprep.subr.bf16.mxu0 0
    %6306 = vmatpush1.bf16.xpose.msra.mxu0 0
    %6307 = vmatprep.subr.bf16.mxu0 0
    %6308 = vmatpush1.bf16.xpose.msra.mxu0 0
    %6309 = vmatprep.mubr.bf16.mxu0 %v1139
    %6310 = vmatmul.mubr.bf16.gmra.mrb[0].mxu0 %v1138
    %v6311 = vpop.f32.mrb[0].mxu0
    %v6312 = vadd.f32 %v6272, %v6311
    %v6313 = vpop.f32.mrb[0].mxu0
    %v6314 = vpop.f32.mrb[0].mxu0
    %v6315 = vpop.f32.mrb[0].mxu0
    %6316 = vdwg.mxu0
    %6317 = vmatprep.subr.bf16.mxu0 %v4118
    %6318 = vmatpush1.bf16.xpose.msra.mxu0 %v4117
    %6319 = vmatprep.subr.bf16.mxu0 %v4208
    %6320 = vmatpush1.bf16.xpose.msra.mxu0 %v4207
    %6321 = vmatprep.subr.bf16.mxu0 %v4298
    %6322 = vmatpush1.bf16.xpose.msra.mxu0 %v4297
    %6323 = vmatprep.subr.bf16.mxu0 %v4388
    %6324 = vmatpush1.bf16.xpose.msra.mxu0 %v4387
    %6325 = vmatprep.subr.bf16.mxu0 %v4478
    %6326 = vmatpush1.bf16.xpose.msra.mxu0 %v4477
    %6327 = vmatprep.subr.bf16.mxu0 %v4568
    %6328 = vmatpush1.bf16.xpose.msra.mxu0 %v4567
    %6329 = vmatprep.subr.bf16.mxu0 %v4658
    %6330 = vmatpush1.bf16.xpose.msra.mxu0 %v4657
    %6331 = vmatprep.subr.bf16.mxu0 %v4748
    %6332 = vmatpush1.bf16.xpose.msra.mxu0 %v4747
    %6333 = vmatprep.subr.bf16.mxu0 0
    %6334 = vmatpush1.bf16.xpose.msra.mxu0 0
    %6335 = vmatprep.subr.bf16.mxu0 0
    %6336 = vmatpush1.bf16.xpose.msra.mxu0 0
    %6337 = vmatprep.subr.bf16.mxu0 0
    %6338 = vmatpush1.bf16.xpose.msra.mxu0 0
    %6339 = vmatprep.subr.bf16.mxu0 0
    %6340 = vmatpush1.bf16.xpose.msra.mxu0 0
    %6341 = vmatprep.subr.bf16.mxu0 0
    %6342 = vmatpush1.bf16.xpose.msra.mxu0 0
    %6343 = vmatprep.subr.bf16.mxu0 0
    %6344 = vmatpush1.bf16.xpose.msra.mxu0 0
    %6345 = vmatprep.subr.bf16.mxu0 0
    %6346 = vmatpush1.bf16.xpose.msra.mxu0 0
    %6347 = vmatprep.subr.bf16.mxu0 0
    %6348 = vmatpush1.bf16.xpose.msra.mxu0 0
    %6349 = vmatprep.mubr.bf16.mxu0 %v1141
    %6350 = vmatmul.mubr.bf16.gmra.mrb[0].mxu0 %v1140
    %v6351 = vpop.f32.mrb[0].mxu0
    %v6352 = vadd.f32 %v6312, %v6351
    %v6353 = vpop.f32.mrb[0].mxu0
    %v6354 = vpop.f32.mrb[0].mxu0
    %v6355 = vpop.f32.mrb[0].mxu0
    %6356 = vdwg.mxu0
    %6357 = vmatprep.subr.bf16.mxu0 %v4120
    %6358 = vmatpush1.bf16.xpose.msra.mxu0 %v4119
    %6359 = vmatprep.subr.bf16.mxu0 %v4210
    %6360 = vmatpush1.bf16.xpose.msra.mxu0 %v4209
    %6361 = vmatprep.subr.bf16.mxu0 %v4300
    %6362 = vmatpush1.bf16.xpose.msra.mxu0 %v4299
    %6363 = vmatprep.subr.bf16.mxu0 %v4390
    %6364 = vmatpush1.bf16.xpose.msra.mxu0 %v4389
    %6365 = vmatprep.subr.bf16.mxu0 %v4480
    %6366 = vmatpush1.bf16.xpose.msra.mxu0 %v4479
    %6367 = vmatprep.subr.bf16.mxu0 %v4570
    %6368 = vmatpush1.bf16.xpose.msra.mxu0 %v4569
    %6369 = vmatprep.subr.bf16.mxu0 %v4660
    %6370 = vmatpush1.bf16.xpose.msra.mxu0 %v4659
    %6371 = vmatprep.subr.bf16.mxu0 %v4750
    %6372 = vmatpush1.bf16.xpose.msra.mxu0 %v4749
    %6373 = vmatprep.subr.bf16.mxu0 0
    %6374 = vmatpush1.bf16.xpose.msra.mxu0 0
    %6375 = vmatprep.subr.bf16.mxu0 0
    %6376 = vmatpush1.bf16.xpose.msra.mxu0 0
    %6377 = vmatprep.subr.bf16.mxu0 0
    %6378 = vmatpush1.bf16.xpose.msra.mxu0 0
    %6379 = vmatprep.subr.bf16.mxu0 0
    %6380 = vmatpush1.bf16.xpose.msra.mxu0 0
    %6381 = vmatprep.subr.bf16.mxu0 0
    %6382 = vmatpush1.bf16.xpose.msra.mxu0 0
    %6383 = vmatprep.subr.bf16.mxu0 0
    %6384 = vmatpush1.bf16.xpose.msra.mxu0 0
    %6385 = vmatprep.subr.bf16.mxu0 0
    %6386 = vmatpush1.bf16.xpose.msra.mxu0 0
    %6387 = vmatprep.subr.bf16.mxu0 0
    %6388 = vmatpush1.bf16.xpose.msra.mxu0 0
    %6389 = vmatprep.mubr.bf16.mxu0 %v1143
    %6390 = vmatmul.mubr.bf16.gmra.mrb[0].mxu0 %v1142
    %v6391 = vpop.f32.mrb[0].mxu0
    %v6392 = vadd.f32 %v6352, %v6391
    %v6393 = vpop.f32.mrb[0].mxu0
    %v6394 = vpop.f32.mrb[0].mxu0
    %v6395 = vpop.f32.mrb[0].mxu0
    %6396 = vdwg.mxu0
    %6397 = vmatprep.subr.bf16.mxu0 %v4122
    %6398 = vmatpush1.bf16.xpose.msra.mxu0 %v4121
    %6399 = vmatprep.subr.bf16.mxu0 %v4212
    %6400 = vmatpush1.bf16.xpose.msra.mxu0 %v4211
    %6401 = vmatprep.subr.bf16.mxu0 %v4302
    %6402 = vmatpush1.bf16.xpose.msra.mxu0 %v4301
    %6403 = vmatprep.subr.bf16.mxu0 %v4392
    %6404 = vmatpush1.bf16.xpose.msra.mxu0 %v4391
    %6405 = vmatprep.subr.bf16.mxu0 %v4482
    %6406 = vmatpush1.bf16.xpose.msra.mxu0 %v4481
    %6407 = vmatprep.subr.bf16.mxu0 %v4572
    %6408 = vmatpush1.bf16.xpose.msra.mxu0 %v4571
    %6409 = vmatprep.subr.bf16.mxu0 %v4662
    %6410 = vmatpush1.bf16.xpose.msra.mxu0 %v4661
    %6411 = vmatprep.subr.bf16.mxu0 %v4752
    %6412 = vmatpush1.bf16.xpose.msra.mxu0 %v4751
    %6413 = vmatprep.subr.bf16.mxu0 0
    %6414 = vmatpush1.bf16.xpose.msra.mxu0 0
    %6415 = vmatprep.subr.bf16.mxu0 0
    %6416 = vmatpush1.bf16.xpose.msra.mxu0 0
    %6417 = vmatprep.subr.bf16.mxu0 0
    %6418 = vmatpush1.bf16.xpose.msra.mxu0 0
    %6419 = vmatprep.subr.bf16.mxu0 0
    %6420 = vmatpush1.bf16.xpose.msra.mxu0 0
    %6421 = vmatprep.subr.bf16.mxu0 0
    %6422 = vmatpush1.bf16.xpose.msra.mxu0 0
    %6423 = vmatprep.subr.bf16.mxu0 0
    %6424 = vmatpush1.bf16.xpose.msra.mxu0 0
    %6425 = vmatprep.subr.bf16.mxu0 0
    %6426 = vmatpush1.bf16.xpose.msra.mxu0 0
    %6427 = vmatprep.subr.bf16.mxu0 0
    %6428 = vmatpush1.bf16.xpose.msra.mxu0 0
    %6429 = vmatprep.mubr.bf16.mxu0 %v1145
    %6430 = vmatmul.mubr.bf16.gmra.mrb[0].mxu0 %v1144
    %v6431 = vpop.f32.mrb[0].mxu0
    %v6432 = vadd.f32 %v6392, %v6431
    %v6433 = vpop.f32.mrb[0].mxu0
    %v6434 = vpop.f32.mrb[0].mxu0
    %v6435 = vpop.f32.mrb[0].mxu0
    %6436 = vdwg.mxu0
    %6437 = vmatprep.subr.bf16.mxu0 %v4124
    %6438 = vmatpush1.bf16.xpose.msra.mxu0 %v4123
    %6439 = vmatprep.subr.bf16.mxu0 %v4214
    %6440 = vmatpush1.bf16.xpose.msra.mxu0 %v4213
    %6441 = vmatprep.subr.bf16.mxu0 %v4304
    %6442 = vmatpush1.bf16.xpose.msra.mxu0 %v4303
    %6443 = vmatprep.subr.bf16.mxu0 %v4394
    %6444 = vmatpush1.bf16.xpose.msra.mxu0 %v4393
    %6445 = vmatprep.subr.bf16.mxu0 %v4484
    %6446 = vmatpush1.bf16.xpose.msra.mxu0 %v4483
    %6447 = vmatprep.subr.bf16.mxu0 %v4574
    %6448 = vmatpush1.bf16.xpose.msra.mxu0 %v4573
    %6449 = vmatprep.subr.bf16.mxu0 %v4664
    %6450 = vmatpush1.bf16.xpose.msra.mxu0 %v4663
    %6451 = vmatprep.subr.bf16.mxu0 %v4754
    %6452 = vmatpush1.bf16.xpose.msra.mxu0 %v4753
    %6453 = vmatprep.subr.bf16.mxu0 0
    %6454 = vmatpush1.bf16.xpose.msra.mxu0 0
    %6455 = vmatprep.subr.bf16.mxu0 0
    %6456 = vmatpush1.bf16.xpose.msra.mxu0 0
    %6457 = vmatprep.subr.bf16.mxu0 0
    %6458 = vmatpush1.bf16.xpose.msra.mxu0 0
    %6459 = vmatprep.subr.bf16.mxu0 0
    %6460 = vmatpush1.bf16.xpose.msra.mxu0 0
    %6461 = vmatprep.subr.bf16.mxu0 0
    %6462 = vmatpush1.bf16.xpose.msra.mxu0 0
    %6463 = vmatprep.subr.bf16.mxu0 0
    %6464 = vmatpush1.bf16.xpose.msra.mxu0 0
    %6465 = vmatprep.subr.bf16.mxu0 0
    %6466 = vmatpush1.bf16.xpose.msra.mxu0 0
    %6467 = vmatprep.subr.bf16.mxu0 0
    %6468 = vmatpush1.bf16.xpose.msra.mxu0 0
    %6469 = vmatprep.mubr.bf16.mxu0 %v1147
    %6470 = vmatmul.mubr.bf16.gmra.mrb[0].mxu0 %v1146
    %v6471 = vpop.f32.mrb[0].mxu0
    %v6472 = vadd.f32 %v6432, %v6471
    %v6473 = vpop.f32.mrb[0].mxu0
    %v6474 = vpop.f32.mrb[0].mxu0
    %v6475 = vpop.f32.mrb[0].mxu0
    %6476 = vdwg.mxu0
    %6477 = vmatprep.subr.bf16.mxu0 %v4126
    %6478 = vmatpush1.bf16.xpose.msra.mxu0 %v4125
    %6479 = vmatprep.subr.bf16.mxu0 %v4216
    %6480 = vmatpush1.bf16.xpose.msra.mxu0 %v4215
    %6481 = vmatprep.subr.bf16.mxu0 %v4306
    %6482 = vmatpush1.bf16.xpose.msra.mxu0 %v4305
    %6483 = vmatprep.subr.bf16.mxu0 %v4396
    %6484 = vmatpush1.bf16.xpose.msra.mxu0 %v4395
    %6485 = vmatprep.subr.bf16.mxu0 %v4486
    %6486 = vmatpush1.bf16.xpose.msra.mxu0 %v4485
    %6487 = vmatprep.subr.bf16.mxu0 %v4576
    %6488 = vmatpush1.bf16.xpose.msra.mxu0 %v4575
    %6489 = vmatprep.subr.bf16.mxu0 %v4666
    %6490 = vmatpush1.bf16.xpose.msra.mxu0 %v4665
    %6491 = vmatprep.subr.bf16.mxu0 %v4756
    %6492 = vmatpush1.bf16.xpose.msra.mxu0 %v4755
    %6493 = vmatprep.subr.bf16.mxu0 0
    %6494 = vmatpush1.bf16.xpose.msra.mxu0 0
    %6495 = vmatprep.subr.bf16.mxu0 0
    %6496 = vmatpush1.bf16.xpose.msra.mxu0 0
    %6497 = vmatprep.subr.bf16.mxu0 0
    %6498 = vmatpush1.bf16.xpose.msra.mxu0 0
    %6499 = vmatprep.subr.bf16.mxu0 0
    %6500 = vmatpush1.bf16.xpose.msra.mxu0 0
    %6501 = vmatprep.subr.bf16.mxu0 0
    %6502 = vmatpush1.bf16.xpose.msra.mxu0 0
    %6503 = vmatprep.subr.bf16.mxu0 0
    %6504 = vmatpush1.bf16.xpose.msra.mxu0 0
    %6505 = vmatprep.subr.bf16.mxu0 0
    %6506 = vmatpush1.bf16.xpose.msra.mxu0 0
    %6507 = vmatprep.subr.bf16.mxu0 0
    %6508 = vmatpush1.bf16.xpose.msra.mxu0 0
    %6509 = vmatprep.mubr.bf16.mxu0 %v1149
    %6510 = vmatmul.mubr.bf16.gmra.mrb[0].mxu0 %v1148
    %v6511 = vpop.f32.mrb[0].mxu0
    %v6512 = vadd.f32 %v6472, %v6511
    %v6513 = vpop.f32.mrb[0].mxu0
    %v6514 = vpop.f32.mrb[0].mxu0
    %v6515 = vpop.f32.mrb[0].mxu0
    %6516 = vdwg.mxu0
    %6517 = vmatprep.subr.bf16.mxu0 %v4128
    %6518 = vmatpush1.bf16.xpose.msra.mxu0 %v4127
    %6519 = vmatprep.subr.bf16.mxu0 %v4218
    %6520 = vmatpush1.bf16.xpose.msra.mxu0 %v4217
    %6521 = vmatprep.subr.bf16.mxu0 %v4308
    %6522 = vmatpush1.bf16.xpose.msra.mxu0 %v4307
    %6523 = vmatprep.subr.bf16.mxu0 %v4398
    %6524 = vmatpush1.bf16.xpose.msra.mxu0 %v4397
    %6525 = vmatprep.subr.bf16.mxu0 %v4488
    %6526 = vmatpush1.bf16.xpose.msra.mxu0 %v4487
    %6527 = vmatprep.subr.bf16.mxu0 %v4578
    %6528 = vmatpush1.bf16.xpose.msra.mxu0 %v4577
    %6529 = vmatprep.subr.bf16.mxu0 %v4668
    %6530 = vmatpush1.bf16.xpose.msra.mxu0 %v4667
    %6531 = vmatprep.subr.bf16.mxu0 %v4758
    %6532 = vmatpush1.bf16.xpose.msra.mxu0 %v4757
    %6533 = vmatprep.subr.bf16.mxu0 0
    %6534 = vmatpush1.bf16.xpose.msra.mxu0 0
    %6535 = vmatprep.subr.bf16.mxu0 0
    %6536 = vmatpush1.bf16.xpose.msra.mxu0 0
    %6537 = vmatprep.subr.bf16.mxu0 0
    %6538 = vmatpush1.bf16.xpose.msra.mxu0 0
    %6539 = vmatprep.subr.bf16.mxu0 0
    %6540 = vmatpush1.bf16.xpose.msra.mxu0 0
    %6541 = vmatprep.subr.bf16.mxu0 0
    %6542 = vmatpush1.bf16.xpose.msra.mxu0 0
    %6543 = vmatprep.subr.bf16.mxu0 0
    %6544 = vmatpush1.bf16.xpose.msra.mxu0 0
    %6545 = vmatprep.subr.bf16.mxu0 0
    %6546 = vmatpush1.bf16.xpose.msra.mxu0 0
    %6547 = vmatprep.subr.bf16.mxu0 0
    %6548 = vmatpush1.bf16.xpose.msra.mxu0 0
    %6549 = vmatprep.mubr.bf16.mxu0 %v1151
    %6550 = vmatmul.mubr.bf16.gmra.mrb[0].mxu0 %v1150
    %v6551 = vpop.f32.mrb[0].mxu0
    %v6552 = vadd.f32 %v6512, %v6551
    %v6553 = vpop.f32.mrb[0].mxu0
    %v6554 = vpop.f32.mrb[0].mxu0
    %v6555 = vpop.f32.mrb[0].mxu0
    %6556 = vdwg.mxu0
    %6557 = vmatprep.subr.bf16.mxu0 %v4130
    %6558 = vmatpush1.bf16.xpose.msra.mxu0 %v4129
    %6559 = vmatprep.subr.bf16.mxu0 %v4220
    %6560 = vmatpush1.bf16.xpose.msra.mxu0 %v4219
    %6561 = vmatprep.subr.bf16.mxu0 %v4310
    %6562 = vmatpush1.bf16.xpose.msra.mxu0 %v4309
    %6563 = vmatprep.subr.bf16.mxu0 %v4400
    %6564 = vmatpush1.bf16.xpose.msra.mxu0 %v4399
    %6565 = vmatprep.subr.bf16.mxu0 %v4490
    %6566 = vmatpush1.bf16.xpose.msra.mxu0 %v4489
    %6567 = vmatprep.subr.bf16.mxu0 %v4580
    %6568 = vmatpush1.bf16.xpose.msra.mxu0 %v4579
    %6569 = vmatprep.subr.bf16.mxu0 %v4670
    %6570 = vmatpush1.bf16.xpose.msra.mxu0 %v4669
    %6571 = vmatprep.subr.bf16.mxu0 %v4760
    %6572 = vmatpush1.bf16.xpose.msra.mxu0 %v4759
    %6573 = vmatprep.subr.bf16.mxu0 0
    %6574 = vmatpush1.bf16.xpose.msra.mxu0 0
    %6575 = vmatprep.subr.bf16.mxu0 0
    %6576 = vmatpush1.bf16.xpose.msra.mxu0 0
    %6577 = vmatprep.subr.bf16.mxu0 0
    %6578 = vmatpush1.bf16.xpose.msra.mxu0 0
    %6579 = vmatprep.subr.bf16.mxu0 0
    %6580 = vmatpush1.bf16.xpose.msra.mxu0 0
    %6581 = vmatprep.subr.bf16.mxu0 0
    %6582 = vmatpush1.bf16.xpose.msra.mxu0 0
    %6583 = vmatprep.subr.bf16.mxu0 0
    %6584 = vmatpush1.bf16.xpose.msra.mxu0 0
    %6585 = vmatprep.subr.bf16.mxu0 0
    %6586 = vmatpush1.bf16.xpose.msra.mxu0 0
    %6587 = vmatprep.subr.bf16.mxu0 0
    %6588 = vmatpush1.bf16.xpose.msra.mxu0 0
    %6589 = vmatprep.mubr.bf16.mxu0 %v1153
    %6590 = vmatmul.mubr.bf16.gmra.mrb[0].mxu0 %v1152
    %v6591 = vpop.f32.mrb[0].mxu0
    %v6592 = vadd.f32 %v6552, %v6591
    %v6593 = vpop.f32.mrb[0].mxu0
    %v6594 = vpop.f32.mrb[0].mxu0
    %v6595 = vpop.f32.mrb[0].mxu0
    %6596 = vdwg.mxu0
    %6597 = vmatprep.subr.bf16.mxu0 %v4132
    %6598 = vmatpush1.bf16.xpose.msra.mxu0 %v4131
    %6599 = vmatprep.subr.bf16.mxu0 %v4222
    %6600 = vmatpush1.bf16.xpose.msra.mxu0 %v4221
    %6601 = vmatprep.subr.bf16.mxu0 %v4312
    %6602 = vmatpush1.bf16.xpose.msra.mxu0 %v4311
    %6603 = vmatprep.subr.bf16.mxu0 %v4402
    %6604 = vmatpush1.bf16.xpose.msra.mxu0 %v4401
    %6605 = vmatprep.subr.bf16.mxu0 %v4492
    %6606 = vmatpush1.bf16.xpose.msra.mxu0 %v4491
    %6607 = vmatprep.subr.bf16.mxu0 %v4582
    %6608 = vmatpush1.bf16.xpose.msra.mxu0 %v4581
    %6609 = vmatprep.subr.bf16.mxu0 %v4672
    %6610 = vmatpush1.bf16.xpose.msra.mxu0 %v4671
    %6611 = vmatprep.subr.bf16.mxu0 %v4762
    %6612 = vmatpush1.bf16.xpose.msra.mxu0 %v4761
    %6613 = vmatprep.subr.bf16.mxu0 0
    %6614 = vmatpush1.bf16.xpose.msra.mxu0 0
    %6615 = vmatprep.subr.bf16.mxu0 0
    %6616 = vmatpush1.bf16.xpose.msra.mxu0 0
    %6617 = vmatprep.subr.bf16.mxu0 0
    %6618 = vmatpush1.bf16.xpose.msra.mxu0 0
    %6619 = vmatprep.subr.bf16.mxu0 0
    %6620 = vmatpush1.bf16.xpose.msra.mxu0 0
    %6621 = vmatprep.subr.bf16.mxu0 0
    %6622 = vmatpush1.bf16.xpose.msra.mxu0 0
    %6623 = vmatprep.subr.bf16.mxu0 0
    %6624 = vmatpush1.bf16.xpose.msra.mxu0 0
    %6625 = vmatprep.subr.bf16.mxu0 0
    %6626 = vmatpush1.bf16.xpose.msra.mxu0 0
    %6627 = vmatprep.subr.bf16.mxu0 0
    %6628 = vmatpush1.bf16.xpose.msra.mxu0 0
    %6629 = vmatprep.mubr.bf16.mxu0 %v1155
    %6630 = vmatmul.mubr.bf16.gmra.mrb[0].mxu0 %v1154
    %v6631 = vpop.f32.mrb[0].mxu0
    %v6632 = vadd.f32 %v6592, %v6631
    %v6633 = vpop.f32.mrb[0].mxu0
    %v6634 = vpop.f32.mrb[0].mxu0
    %v6635 = vpop.f32.mrb[0].mxu0
    %6636 = vdwg.mxu0
    %6637 = vmatprep.subr.bf16.mxu0 %v4134
    %6638 = vmatpush1.bf16.xpose.msra.mxu0 %v4133
    %6639 = vmatprep.subr.bf16.mxu0 %v4224
    %6640 = vmatpush1.bf16.xpose.msra.mxu0 %v4223
    %6641 = vmatprep.subr.bf16.mxu0 %v4314
    %6642 = vmatpush1.bf16.xpose.msra.mxu0 %v4313
    %6643 = vmatprep.subr.bf16.mxu0 %v4404
    %6644 = vmatpush1.bf16.xpose.msra.mxu0 %v4403
    %6645 = vmatprep.subr.bf16.mxu0 %v4494
    %6646 = vmatpush1.bf16.xpose.msra.mxu0 %v4493
    %6647 = vmatprep.subr.bf16.mxu0 %v4584
    %6648 = vmatpush1.bf16.xpose.msra.mxu0 %v4583
    %6649 = vmatprep.subr.bf16.mxu0 %v4674
    %6650 = vmatpush1.bf16.xpose.msra.mxu0 %v4673
    %6651 = vmatprep.subr.bf16.mxu0 %v4764
    %6652 = vmatpush1.bf16.xpose.msra.mxu0 %v4763
    %6653 = vmatprep.subr.bf16.mxu0 0
    %6654 = vmatpush1.bf16.xpose.msra.mxu0 0
    %6655 = vmatprep.subr.bf16.mxu0 0
    %6656 = vmatpush1.bf16.xpose.msra.mxu0 0
    %6657 = vmatprep.subr.bf16.mxu0 0
    %6658 = vmatpush1.bf16.xpose.msra.mxu0 0
    %6659 = vmatprep.subr.bf16.mxu0 0
    %6660 = vmatpush1.bf16.xpose.msra.mxu0 0
    %6661 = vmatprep.subr.bf16.mxu0 0
    %6662 = vmatpush1.bf16.xpose.msra.mxu0 0
    %6663 = vmatprep.subr.bf16.mxu0 0
    %6664 = vmatpush1.bf16.xpose.msra.mxu0 0
    %6665 = vmatprep.subr.bf16.mxu0 0
    %6666 = vmatpush1.bf16.xpose.msra.mxu0 0
    %6667 = vmatprep.subr.bf16.mxu0 0
    %6668 = vmatpush1.bf16.xpose.msra.mxu0 0
    %6669 = vmatprep.mubr.bf16.mxu0 %v1157
    %6670 = vmatmul.mubr.bf16.gmra.mrb[0].mxu0 %v1156
    %v6671 = vpop.f32.mrb[0].mxu0
    %v6672 = vadd.f32 %v6632, %v6671
    %v6673 = vpop.f32.mrb[0].mxu0
    %v6674 = vpop.f32.mrb[0].mxu0
    %v6675 = vpop.f32.mrb[0].mxu0
    %6676 = vdwg.mxu0
    %6677 = vmatprep.subr.bf16.mxu0 %v4136
    %6678 = vmatpush1.bf16.xpose.msra.mxu0 %v4135
    %6679 = vmatprep.subr.bf16.mxu0 %v4226
    %6680 = vmatpush1.bf16.xpose.msra.mxu0 %v4225
    %6681 = vmatprep.subr.bf16.mxu0 %v4316
    %6682 = vmatpush1.bf16.xpose.msra.mxu0 %v4315
    %6683 = vmatprep.subr.bf16.mxu0 %v4406
    %6684 = vmatpush1.bf16.xpose.msra.mxu0 %v4405
    %6685 = vmatprep.subr.bf16.mxu0 %v4496
    %6686 = vmatpush1.bf16.xpose.msra.mxu0 %v4495
    %6687 = vmatprep.subr.bf16.mxu0 %v4586
    %6688 = vmatpush1.bf16.xpose.msra.mxu0 %v4585
    %6689 = vmatprep.subr.bf16.mxu0 %v4676
    %6690 = vmatpush1.bf16.xpose.msra.mxu0 %v4675
    %6691 = vmatprep.subr.bf16.mxu0 %v4766
    %6692 = vmatpush1.bf16.xpose.msra.mxu0 %v4765
    %6693 = vmatprep.subr.bf16.mxu0 0
    %6694 = vmatpush1.bf16.xpose.msra.mxu0 0
    %6695 = vmatprep.subr.bf16.mxu0 0
    %6696 = vmatpush1.bf16.xpose.msra.mxu0 0
    %6697 = vmatprep.subr.bf16.mxu0 0
    %6698 = vmatpush1.bf16.xpose.msra.mxu0 0
    %6699 = vmatprep.subr.bf16.mxu0 0
    %6700 = vmatpush1.bf16.xpose.msra.mxu0 0
    %6701 = vmatprep.subr.bf16.mxu0 0
    %6702 = vmatpush1.bf16.xpose.msra.mxu0 0
    %6703 = vmatprep.subr.bf16.mxu0 0
    %6704 = vmatpush1.bf16.xpose.msra.mxu0 0
    %6705 = vmatprep.subr.bf16.mxu0 0
    %6706 = vmatpush1.bf16.xpose.msra.mxu0 0
    %6707 = vmatprep.subr.bf16.mxu0 0
    %6708 = vmatpush1.bf16.xpose.msra.mxu0 0
    %6709 = vmatprep.mubr.bf16.mxu0 %v1159
    %6710 = vmatmul.mubr.bf16.gmra.mrb[0].mxu0 %v1158
    %v6711 = vpop.f32.mrb[0].mxu0
    %v6712 = vadd.f32 %v6672, %v6711
    %v6713 = vpop.f32.mrb[0].mxu0
    %v6714 = vpop.f32.mrb[0].mxu0
    %v6715 = vpop.f32.mrb[0].mxu0
    %6716 = vdwg.mxu0
    %6717 = vmatprep.subr.bf16.mxu0 %v4138
    %6718 = vmatpush1.bf16.xpose.msra.mxu0 %v4137
    %6719 = vmatprep.subr.bf16.mxu0 %v4228
    %6720 = vmatpush1.bf16.xpose.msra.mxu0 %v4227
    %6721 = vmatprep.subr.bf16.mxu0 %v4318
    %6722 = vmatpush1.bf16.xpose.msra.mxu0 %v4317
    %6723 = vmatprep.subr.bf16.mxu0 %v4408
    %6724 = vmatpush1.bf16.xpose.msra.mxu0 %v4407
    %6725 = vmatprep.subr.bf16.mxu0 %v4498
    %6726 = vmatpush1.bf16.xpose.msra.mxu0 %v4497
    %6727 = vmatprep.subr.bf16.mxu0 %v4588
    %6728 = vmatpush1.bf16.xpose.msra.mxu0 %v4587
    %6729 = vmatprep.subr.bf16.mxu0 %v4678
    %6730 = vmatpush1.bf16.xpose.msra.mxu0 %v4677
    %6731 = vmatprep.subr.bf16.mxu0 %v4768
    %6732 = vmatpush1.bf16.xpose.msra.mxu0 %v4767
    %6733 = vmatprep.subr.bf16.mxu0 0
    %6734 = vmatpush1.bf16.xpose.msra.mxu0 0
    %6735 = vmatprep.subr.bf16.mxu0 0
    %6736 = vmatpush1.bf16.xpose.msra.mxu0 0
    %6737 = vmatprep.subr.bf16.mxu0 0
    %6738 = vmatpush1.bf16.xpose.msra.mxu0 0
    %6739 = vmatprep.subr.bf16.mxu0 0
    %6740 = vmatpush1.bf16.xpose.msra.mxu0 0
    %6741 = vmatprep.subr.bf16.mxu0 0
    %6742 = vmatpush1.bf16.xpose.msra.mxu0 0
    %6743 = vmatprep.subr.bf16.mxu0 0
    %6744 = vmatpush1.bf16.xpose.msra.mxu0 0
    %6745 = vmatprep.subr.bf16.mxu0 0
    %6746 = vmatpush1.bf16.xpose.msra.mxu0 0
    %6747 = vmatprep.subr.bf16.mxu0 0
    %6748 = vmatpush1.bf16.xpose.msra.mxu0 0
    %6749 = vmatprep.mubr.bf16.mxu0 %v1161
    %6750 = vmatmul.mubr.bf16.gmra.mrb[0].mxu0 %v1160
    %v6751 = vpop.f32.mrb[0].mxu0
    %v6752 = vadd.f32 %v6712, %v6751
    %v6753 = vpop.f32.mrb[0].mxu0
    %v6754 = vpop.f32.mrb[0].mxu0
    %v6755 = vpop.f32.mrb[0].mxu0
    %6756 = vdwg.mxu0
    %6757 = vmatprep.subr.bf16.mxu0 %v4140
    %6758 = vmatpush1.bf16.xpose.msra.mxu0 %v4139
    %6759 = vmatprep.subr.bf16.mxu0 %v4230
    %6760 = vmatpush1.bf16.xpose.msra.mxu0 %v4229
    %6761 = vmatprep.subr.bf16.mxu0 %v4320
    %6762 = vmatpush1.bf16.xpose.msra.mxu0 %v4319
    %6763 = vmatprep.subr.bf16.mxu0 %v4410
    %6764 = vmatpush1.bf16.xpose.msra.mxu0 %v4409
    %6765 = vmatprep.subr.bf16.mxu0 %v4500
    %6766 = vmatpush1.bf16.xpose.msra.mxu0 %v4499
    %6767 = vmatprep.subr.bf16.mxu0 %v4590
    %6768 = vmatpush1.bf16.xpose.msra.mxu0 %v4589
    %6769 = vmatprep.subr.bf16.mxu0 %v4680
    %6770 = vmatpush1.bf16.xpose.msra.mxu0 %v4679
    %6771 = vmatprep.subr.bf16.mxu0 %v4770
    %6772 = vmatpush1.bf16.xpose.msra.mxu0 %v4769
    %6773 = vmatprep.subr.bf16.mxu0 0
    %6774 = vmatpush1.bf16.xpose.msra.mxu0 0
    %6775 = vmatprep.subr.bf16.mxu0 0
    %6776 = vmatpush1.bf16.xpose.msra.mxu0 0
    %6777 = vmatprep.subr.bf16.mxu0 0
    %6778 = vmatpush1.bf16.xpose.msra.mxu0 0
    %6779 = vmatprep.subr.bf16.mxu0 0
    %6780 = vmatpush1.bf16.xpose.msra.mxu0 0
    %6781 = vmatprep.subr.bf16.mxu0 0
    %6782 = vmatpush1.bf16.xpose.msra.mxu0 0
    %6783 = vmatprep.subr.bf16.mxu0 0
    %6784 = vmatpush1.bf16.xpose.msra.mxu0 0
    %6785 = vmatprep.subr.bf16.mxu0 0
    %6786 = vmatpush1.bf16.xpose.msra.mxu0 0
    %6787 = vmatprep.subr.bf16.mxu0 0
    %6788 = vmatpush1.bf16.xpose.msra.mxu0 0
    %6789 = vmatprep.mubr.bf16.mxu0 %v1163
    %6790 = vmatmul.mubr.bf16.gmra.mrb[0].mxu0 %v1162
    %v6791 = vpop.f32.mrb[0].mxu0
    %v6792 = vadd.f32 %v6752, %v6791
    %v6793 = vpop.f32.mrb[0].mxu0
    %v6794 = vpop.f32.mrb[0].mxu0
    %v6795 = vpop.f32.mrb[0].mxu0
    %6796 = vdwg.mxu0
    %6797 = vmatprep.subr.bf16.mxu0 %v4142
    %6798 = vmatpush1.bf16.xpose.msra.mxu0 %v4141
    %6799 = vmatprep.subr.bf16.mxu0 %v4232
    %6800 = vmatpush1.bf16.xpose.msra.mxu0 %v4231
    %6801 = vmatprep.subr.bf16.mxu0 %v4322
    %6802 = vmatpush1.bf16.xpose.msra.mxu0 %v4321
    %6803 = vmatprep.subr.bf16.mxu0 %v4412
    %6804 = vmatpush1.bf16.xpose.msra.mxu0 %v4411
    %6805 = vmatprep.subr.bf16.mxu0 %v4502
    %6806 = vmatpush1.bf16.xpose.msra.mxu0 %v4501
    %6807 = vmatprep.subr.bf16.mxu0 %v4592
    %6808 = vmatpush1.bf16.xpose.msra.mxu0 %v4591
    %6809 = vmatprep.subr.bf16.mxu0 %v4682
    %6810 = vmatpush1.bf16.xpose.msra.mxu0 %v4681
    %6811 = vmatprep.subr.bf16.mxu0 %v4772
    %6812 = vmatpush1.bf16.xpose.msra.mxu0 %v4771
    %6813 = vmatprep.subr.bf16.mxu0 0
    %6814 = vmatpush1.bf16.xpose.msra.mxu0 0
    %6815 = vmatprep.subr.bf16.mxu0 0
    %6816 = vmatpush1.bf16.xpose.msra.mxu0 0
    %6817 = vmatprep.subr.bf16.mxu0 0
    %6818 = vmatpush1.bf16.xpose.msra.mxu0 0
    %6819 = vmatprep.subr.bf16.mxu0 0
    %6820 = vmatpush1.bf16.xpose.msra.mxu0 0
    %6821 = vmatprep.subr.bf16.mxu0 0
    %6822 = vmatpush1.bf16.xpose.msra.mxu0 0
    %6823 = vmatprep.subr.bf16.mxu0 0
    %6824 = vmatpush1.bf16.xpose.msra.mxu0 0
    %6825 = vmatprep.subr.bf16.mxu0 0
    %6826 = vmatpush1.bf16.xpose.msra.mxu0 0
    %6827 = vmatprep.subr.bf16.mxu0 0
    %6828 = vmatpush1.bf16.xpose.msra.mxu0 0
    %6829 = vmatprep.mubr.bf16.mxu0 %v1165
    %6830 = vmatmul.mubr.bf16.gmra.mrb[0].mxu0 %v1164
    %v6831 = vpop.f32.mrb[0].mxu0
    %v6832 = vadd.f32 %v6792, %v6831
    %v6833 = vpop.f32.mrb[0].mxu0
    %v6834 = vpop.f32.mrb[0].mxu0
    %v6835 = vpop.f32.mrb[0].mxu0
    %6836 = vdwg.mxu0
    %6837 = vmatprep.subr.bf16.mxu0 %v4144
    %6838 = vmatpush1.bf16.xpose.msra.mxu0 %v4143
    %6839 = vmatprep.subr.bf16.mxu0 %v4234
    %6840 = vmatpush1.bf16.xpose.msra.mxu0 %v4233
    %6841 = vmatprep.subr.bf16.mxu0 %v4324
    %6842 = vmatpush1.bf16.xpose.msra.mxu0 %v4323
    %6843 = vmatprep.subr.bf16.mxu0 %v4414
    %6844 = vmatpush1.bf16.xpose.msra.mxu0 %v4413
    %6845 = vmatprep.subr.bf16.mxu0 %v4504
    %6846 = vmatpush1.bf16.xpose.msra.mxu0 %v4503
    %6847 = vmatprep.subr.bf16.mxu0 %v4594
    %6848 = vmatpush1.bf16.xpose.msra.mxu0 %v4593
    %6849 = vmatprep.subr.bf16.mxu0 %v4684
    %6850 = vmatpush1.bf16.xpose.msra.mxu0 %v4683
    %6851 = vmatprep.subr.bf16.mxu0 %v4774
    %6852 = vmatpush1.bf16.xpose.msra.mxu0 %v4773
    %6853 = vmatprep.subr.bf16.mxu0 0
    %6854 = vmatpush1.bf16.xpose.msra.mxu0 0
    %6855 = vmatprep.subr.bf16.mxu0 0
    %6856 = vmatpush1.bf16.xpose.msra.mxu0 0
    %6857 = vmatprep.subr.bf16.mxu0 0
    %6858 = vmatpush1.bf16.xpose.msra.mxu0 0
    %6859 = vmatprep.subr.bf16.mxu0 0
    %6860 = vmatpush1.bf16.xpose.msra.mxu0 0
    %6861 = vmatprep.subr.bf16.mxu0 0
    %6862 = vmatpush1.bf16.xpose.msra.mxu0 0
    %6863 = vmatprep.subr.bf16.mxu0 0
    %6864 = vmatpush1.bf16.xpose.msra.mxu0 0
    %6865 = vmatprep.subr.bf16.mxu0 0
    %6866 = vmatpush1.bf16.xpose.msra.mxu0 0
    %6867 = vmatprep.subr.bf16.mxu0 0
    %6868 = vmatpush1.bf16.xpose.msra.mxu0 0
    %6869 = vmatprep.mubr.bf16.mxu0 %v1167
    %6870 = vmatmul.mubr.bf16.gmra.mrb[0].mxu0 %v1166
    %v6871 = vpop.f32.mrb[0].mxu0
    %v6872 = vadd.f32 %v6832, %v6871
    %v6873 = vpop.f32.mrb[0].mxu0
    %v6874 = vpop.f32.mrb[0].mxu0
    %v6875 = vpop.f32.mrb[0].mxu0
    %6876 = vdwg.mxu0
    %6877 = vmatprep.subr.bf16.mxu0 %v4146
    %6878 = vmatpush1.bf16.xpose.msra.mxu0 %v4145
    %6879 = vmatprep.subr.bf16.mxu0 %v4236
    %6880 = vmatpush1.bf16.xpose.msra.mxu0 %v4235
    %6881 = vmatprep.subr.bf16.mxu0 %v4326
    %6882 = vmatpush1.bf16.xpose.msra.mxu0 %v4325
    %6883 = vmatprep.subr.bf16.mxu0 %v4416
    %6884 = vmatpush1.bf16.xpose.msra.mxu0 %v4415
    %6885 = vmatprep.subr.bf16.mxu0 %v4506
    %6886 = vmatpush1.bf16.xpose.msra.mxu0 %v4505
    %6887 = vmatprep.subr.bf16.mxu0 %v4596
    %6888 = vmatpush1.bf16.xpose.msra.mxu0 %v4595
    %6889 = vmatprep.subr.bf16.mxu0 %v4686
    %6890 = vmatpush1.bf16.xpose.msra.mxu0 %v4685
    %6891 = vmatprep.subr.bf16.mxu0 %v4776
    %6892 = vmatpush1.bf16.xpose.msra.mxu0 %v4775
    %6893 = vmatprep.subr.bf16.mxu0 0
    %6894 = vmatpush1.bf16.xpose.msra.mxu0 0
    %6895 = vmatprep.subr.bf16.mxu0 0
    %6896 = vmatpush1.bf16.xpose.msra.mxu0 0
    %6897 = vmatprep.subr.bf16.mxu0 0
    %6898 = vmatpush1.bf16.xpose.msra.mxu0 0
    %6899 = vmatprep.subr.bf16.mxu0 0
    %6900 = vmatpush1.bf16.xpose.msra.mxu0 0
    %6901 = vmatprep.subr.bf16.mxu0 0
    %6902 = vmatpush1.bf16.xpose.msra.mxu0 0
    %6903 = vmatprep.subr.bf16.mxu0 0
    %6904 = vmatpush1.bf16.xpose.msra.mxu0 0
    %6905 = vmatprep.subr.bf16.mxu0 0
    %6906 = vmatpush1.bf16.xpose.msra.mxu0 0
    %6907 = vmatprep.subr.bf16.mxu0 0
    %6908 = vmatpush1.bf16.xpose.msra.mxu0 0
    %6909 = vmatprep.mubr.bf16.mxu0 %v1169
    %6910 = vmatmul.mubr.bf16.gmra.mrb[0].mxu0 %v1168
    %v6911 = vpop.f32.mrb[0].mxu0
    %v6912 = vadd.f32 %v6872, %v6911
    %v6913 = vpop.f32.mrb[0].mxu0
    %v6914 = vpop.f32.mrb[0].mxu0
    %v6915 = vpop.f32.mrb[0].mxu0
    %6916 = vdwg.mxu0
    %6917 = vmatprep.subr.bf16.mxu0 %v4148
    %6918 = vmatpush1.bf16.xpose.msra.mxu0 %v4147
    %6919 = vmatprep.subr.bf16.mxu0 %v4238
    %6920 = vmatpush1.bf16.xpose.msra.mxu0 %v4237
    %6921 = vmatprep.subr.bf16.mxu0 %v4328
    %6922 = vmatpush1.bf16.xpose.msra.mxu0 %v4327
    %6923 = vmatprep.subr.bf16.mxu0 %v4418
    %6924 = vmatpush1.bf16.xpose.msra.mxu0 %v4417
    %6925 = vmatprep.subr.bf16.mxu0 %v4508
    %6926 = vmatpush1.bf16.xpose.msra.mxu0 %v4507
    %6927 = vmatprep.subr.bf16.mxu0 %v4598
    %6928 = vmatpush1.bf16.xpose.msra.mxu0 %v4597
    %6929 = vmatprep.subr.bf16.mxu0 %v4688
    %6930 = vmatpush1.bf16.xpose.msra.mxu0 %v4687
    %6931 = vmatprep.subr.bf16.mxu0 %v4778
    %6932 = vmatpush1.bf16.xpose.msra.mxu0 %v4777
    %6933 = vmatprep.subr.bf16.mxu0 0
    %6934 = vmatpush1.bf16.xpose.msra.mxu0 0
    %6935 = vmatprep.subr.bf16.mxu0 0
    %6936 = vmatpush1.bf16.xpose.msra.mxu0 0
    %6937 = vmatprep.subr.bf16.mxu0 0
    %6938 = vmatpush1.bf16.xpose.msra.mxu0 0
    %6939 = vmatprep.subr.bf16.mxu0 0
    %6940 = vmatpush1.bf16.xpose.msra.mxu0 0
    %6941 = vmatprep.subr.bf16.mxu0 0
    %6942 = vmatpush1.bf16.xpose.msra.mxu0 0
    %6943 = vmatprep.subr.bf16.mxu0 0
    %6944 = vmatpush1.bf16.xpose.msra.mxu0 0
    %6945 = vmatprep.subr.bf16.mxu0 0
    %6946 = vmatpush1.bf16.xpose.msra.mxu0 0
    %6947 = vmatprep.subr.bf16.mxu0 0
    %6948 = vmatpush1.bf16.xpose.msra.mxu0 0
    %6949 = vmatprep.mubr.bf16.mxu0 %v1171
    %6950 = vmatmul.mubr.bf16.gmra.mrb[0].mxu0 %v1170
    %v6951 = vpop.f32.mrb[0].mxu0
    %v6952 = vadd.f32 %v6912, %v6951
    %v6953 = vpop.f32.mrb[0].mxu0
    %v6954 = vpop.f32.mrb[0].mxu0
    %v6955 = vpop.f32.mrb[0].mxu0
    %6956 = vdwg.mxu0
    %6957 = vmatprep.subr.bf16.mxu0 %v4150
    %6958 = vmatpush1.bf16.xpose.msra.mxu0 %v4149
    %6959 = vmatprep.subr.bf16.mxu0 %v4240
    %6960 = vmatpush1.bf16.xpose.msra.mxu0 %v4239
    %6961 = vmatprep.subr.bf16.mxu0 %v4330
    %6962 = vmatpush1.bf16.xpose.msra.mxu0 %v4329
    %6963 = vmatprep.subr.bf16.mxu0 %v4420
    %6964 = vmatpush1.bf16.xpose.msra.mxu0 %v4419
    %6965 = vmatprep.subr.bf16.mxu0 %v4510
    %6966 = vmatpush1.bf16.xpose.msra.mxu0 %v4509
    %6967 = vmatprep.subr.bf16.mxu0 %v4600
    %6968 = vmatpush1.bf16.xpose.msra.mxu0 %v4599
    %6969 = vmatprep.subr.bf16.mxu0 %v4690
    %6970 = vmatpush1.bf16.xpose.msra.mxu0 %v4689
    %6971 = vmatprep.subr.bf16.mxu0 %v4780
    %6972 = vmatpush1.bf16.xpose.msra.mxu0 %v4779
    %6973 = vmatprep.subr.bf16.mxu0 0
    %6974 = vmatpush1.bf16.xpose.msra.mxu0 0
    %6975 = vmatprep.subr.bf16.mxu0 0
    %6976 = vmatpush1.bf16.xpose.msra.mxu0 0
    %6977 = vmatprep.subr.bf16.mxu0 0
    %6978 = vmatpush1.bf16.xpose.msra.mxu0 0
    %6979 = vmatprep.subr.bf16.mxu0 0
    %6980 = vmatpush1.bf16.xpose.msra.mxu0 0
    %6981 = vmatprep.subr.bf16.mxu0 0
    %6982 = vmatpush1.bf16.xpose.msra.mxu0 0
    %6983 = vmatprep.subr.bf16.mxu0 0
    %6984 = vmatpush1.bf16.xpose.msra.mxu0 0
    %6985 = vmatprep.subr.bf16.mxu0 0
    %6986 = vmatpush1.bf16.xpose.msra.mxu0 0
    %6987 = vmatprep.subr.bf16.mxu0 0
    %6988 = vmatpush1.bf16.xpose.msra.mxu0 0
    %6989 = vmatprep.mubr.bf16.mxu0 %v1173
    %6990 = vmatmul.mubr.bf16.gmra.mrb[0].mxu0 %v1172
    %v6991 = vpop.f32.mrb[0].mxu0
    %v6992 = vadd.f32 %v6952, %v6991
    %v6993 = vpop.f32.mrb[0].mxu0
    %v6994 = vpop.f32.mrb[0].mxu0
    %v6995 = vpop.f32.mrb[0].mxu0
    %6996 = vdwg.mxu0
    %6997 = vmatprep.subr.bf16.mxu0 %v4152
    %6998 = vmatpush1.bf16.xpose.msra.mxu0 %v4151
    %6999 = vmatprep.subr.bf16.mxu0 %v4242
    %7000 = vmatpush1.bf16.xpose.msra.mxu0 %v4241
    %7001 = vmatprep.subr.bf16.mxu0 %v4332
    %7002 = vmatpush1.bf16.xpose.msra.mxu0 %v4331
    %7003 = vmatprep.subr.bf16.mxu0 %v4422
    %7004 = vmatpush1.bf16.xpose.msra.mxu0 %v4421
    %7005 = vmatprep.subr.bf16.mxu0 %v4512
    %7006 = vmatpush1.bf16.xpose.msra.mxu0 %v4511
    %7007 = vmatprep.subr.bf16.mxu0 %v4602
    %7008 = vmatpush1.bf16.xpose.msra.mxu0 %v4601
    %7009 = vmatprep.subr.bf16.mxu0 %v4692
    %7010 = vmatpush1.bf16.xpose.msra.mxu0 %v4691
    %7011 = vmatprep.subr.bf16.mxu0 %v4782
    %7012 = vmatpush1.bf16.xpose.msra.mxu0 %v4781
    %7013 = vmatprep.subr.bf16.mxu0 0
    %7014 = vmatpush1.bf16.xpose.msra.mxu0 0
    %7015 = vmatprep.subr.bf16.mxu0 0
    %7016 = vmatpush1.bf16.xpose.msra.mxu0 0
    %7017 = vmatprep.subr.bf16.mxu0 0
    %7018 = vmatpush1.bf16.xpose.msra.mxu0 0
    %7019 = vmatprep.subr.bf16.mxu0 0
    %7020 = vmatpush1.bf16.xpose.msra.mxu0 0
    %7021 = vmatprep.subr.bf16.mxu0 0
    %7022 = vmatpush1.bf16.xpose.msra.mxu0 0
    %7023 = vmatprep.subr.bf16.mxu0 0
    %7024 = vmatpush1.bf16.xpose.msra.mxu0 0
    %7025 = vmatprep.subr.bf16.mxu0 0
    %7026 = vmatpush1.bf16.xpose.msra.mxu0 0
    %7027 = vmatprep.subr.bf16.mxu0 0
    %7028 = vmatpush1.bf16.xpose.msra.mxu0 0
    %7029 = vmatprep.mubr.bf16.mxu0 %v1175
    %7030 = vmatmul.mubr.bf16.gmra.mrb[0].mxu0 %v1174
    %v7031 = vpop.f32.mrb[0].mxu0
    %v7032 = vadd.f32 %v6992, %v7031
    %v7033 = vpop.f32.mrb[0].mxu0
    %v7034 = vpop.f32.mrb[0].mxu0
    %v7035 = vpop.f32.mrb[0].mxu0
    %7036 = vdwg.mxu0
    %7037 = vmatprep.subr.bf16.mxu0 %v4154
    %7038 = vmatpush1.bf16.xpose.msra.mxu0 %v4153
    %7039 = vmatprep.subr.bf16.mxu0 %v4244
    %7040 = vmatpush1.bf16.xpose.msra.mxu0 %v4243
    %7041 = vmatprep.subr.bf16.mxu0 %v4334
    %7042 = vmatpush1.bf16.xpose.msra.mxu0 %v4333
    %7043 = vmatprep.subr.bf16.mxu0 %v4424
    %7044 = vmatpush1.bf16.xpose.msra.mxu0 %v4423
    %7045 = vmatprep.subr.bf16.mxu0 %v4514
    %7046 = vmatpush1.bf16.xpose.msra.mxu0 %v4513
    %7047 = vmatprep.subr.bf16.mxu0 %v4604
    %7048 = vmatpush1.bf16.xpose.msra.mxu0 %v4603
    %7049 = vmatprep.subr.bf16.mxu0 %v4694
    %7050 = vmatpush1.bf16.xpose.msra.mxu0 %v4693
    %7051 = vmatprep.subr.bf16.mxu0 %v4784
    %7052 = vmatpush1.bf16.xpose.msra.mxu0 %v4783
    %7053 = vmatprep.subr.bf16.mxu0 0
    %7054 = vmatpush1.bf16.xpose.msra.mxu0 0
    %7055 = vmatprep.subr.bf16.mxu0 0
    %7056 = vmatpush1.bf16.xpose.msra.mxu0 0
    %7057 = vmatprep.subr.bf16.mxu0 0
    %7058 = vmatpush1.bf16.xpose.msra.mxu0 0
    %7059 = vmatprep.subr.bf16.mxu0 0
    %7060 = vmatpush1.bf16.xpose.msra.mxu0 0
    %7061 = vmatprep.subr.bf16.mxu0 0
    %7062 = vmatpush1.bf16.xpose.msra.mxu0 0
    %7063 = vmatprep.subr.bf16.mxu0 0
    %7064 = vmatpush1.bf16.xpose.msra.mxu0 0
    %7065 = vmatprep.subr.bf16.mxu0 0
    %7066 = vmatpush1.bf16.xpose.msra.mxu0 0
    %7067 = vmatprep.subr.bf16.mxu0 0
    %7068 = vmatpush1.bf16.xpose.msra.mxu0 0
    %7069 = vmatprep.mubr.bf16.mxu0 %v1177
    %7070 = vmatmul.mubr.bf16.gmra.mrb[0].mxu0 %v1176
    %v7071 = vpop.f32.mrb[0].mxu0
    %v7072 = vadd.f32 %v7032, %v7071
    %v7073 = vpop.f32.mrb[0].mxu0
    %v7074 = vpop.f32.mrb[0].mxu0
    %v7075 = vpop.f32.mrb[0].mxu0
    %7076 = vdwg.mxu0
    %7077 = vmatprep.subr.bf16.mxu0 %v4156
    %7078 = vmatpush1.bf16.xpose.msra.mxu0 %v4155
    %7079 = vmatprep.subr.bf16.mxu0 %v4246
    %7080 = vmatpush1.bf16.xpose.msra.mxu0 %v4245
    %7081 = vmatprep.subr.bf16.mxu0 %v4336
    %7082 = vmatpush1.bf16.xpose.msra.mxu0 %v4335
    %7083 = vmatprep.subr.bf16.mxu0 %v4426
    %7084 = vmatpush1.bf16.xpose.msra.mxu0 %v4425
    %7085 = vmatprep.subr.bf16.mxu0 %v4516
    %7086 = vmatpush1.bf16.xpose.msra.mxu0 %v4515
    %7087 = vmatprep.subr.bf16.mxu0 %v4606
    %7088 = vmatpush1.bf16.xpose.msra.mxu0 %v4605
    %7089 = vmatprep.subr.bf16.mxu0 %v4696
    %7090 = vmatpush1.bf16.xpose.msra.mxu0 %v4695
    %7091 = vmatprep.subr.bf16.mxu0 %v4786
    %7092 = vmatpush1.bf16.xpose.msra.mxu0 %v4785
    %7093 = vmatprep.subr.bf16.mxu0 0
    %7094 = vmatpush1.bf16.xpose.msra.mxu0 0
    %7095 = vmatprep.subr.bf16.mxu0 0
    %7096 = vmatpush1.bf16.xpose.msra.mxu0 0
    %7097 = vmatprep.subr.bf16.mxu0 0
    %7098 = vmatpush1.bf16.xpose.msra.mxu0 0
    %7099 = vmatprep.subr.bf16.mxu0 0
    %7100 = vmatpush1.bf16.xpose.msra.mxu0 0
    %7101 = vmatprep.subr.bf16.mxu0 0
    %7102 = vmatpush1.bf16.xpose.msra.mxu0 0
    %7103 = vmatprep.subr.bf16.mxu0 0
    %7104 = vmatpush1.bf16.xpose.msra.mxu0 0
    %7105 = vmatprep.subr.bf16.mxu0 0
    %7106 = vmatpush1.bf16.xpose.msra.mxu0 0
    %7107 = vmatprep.subr.bf16.mxu0 0
    %7108 = vmatpush1.bf16.xpose.msra.mxu0 0
    %7109 = vmatprep.mubr.bf16.mxu0 %v1179
    %7110 = vmatmul.mubr.bf16.gmra.mrb[0].mxu0 %v1178
    %v7111 = vpop.f32.mrb[0].mxu0
    %v7112 = vadd.f32 %v7072, %v7111
    %v7113 = vpop.f32.mrb[0].mxu0
    %v7114 = vpop.f32.mrb[0].mxu0
    %v7115 = vpop.f32.mrb[0].mxu0
    %7116 = vdwg.mxu0
    %7117 = vmatprep.subr.bf16.mxu0 %v4158
    %7118 = vmatpush1.bf16.xpose.msra.mxu0 %v4157
    %7119 = vmatprep.subr.bf16.mxu0 %v4248
    %7120 = vmatpush1.bf16.xpose.msra.mxu0 %v4247
    %7121 = vmatprep.subr.bf16.mxu0 %v4338
    %7122 = vmatpush1.bf16.xpose.msra.mxu0 %v4337
    %7123 = vmatprep.subr.bf16.mxu0 %v4428
    %7124 = vmatpush1.bf16.xpose.msra.mxu0 %v4427
    %7125 = vmatprep.subr.bf16.mxu0 %v4518
    %7126 = vmatpush1.bf16.xpose.msra.mxu0 %v4517
    %7127 = vmatprep.subr.bf16.mxu0 %v4608
    %7128 = vmatpush1.bf16.xpose.msra.mxu0 %v4607
    %7129 = vmatprep.subr.bf16.mxu0 %v4698
    %7130 = vmatpush1.bf16.xpose.msra.mxu0 %v4697
    %7131 = vmatprep.subr.bf16.mxu0 %v4788
    %7132 = vmatpush1.bf16.xpose.msra.mxu0 %v4787
    %7133 = vmatprep.subr.bf16.mxu0 0
    %7134 = vmatpush1.bf16.xpose.msra.mxu0 0
    %7135 = vmatprep.subr.bf16.mxu0 0
    %7136 = vmatpush1.bf16.xpose.msra.mxu0 0
    %7137 = vmatprep.subr.bf16.mxu0 0
    %7138 = vmatpush1.bf16.xpose.msra.mxu0 0
    %7139 = vmatprep.subr.bf16.mxu0 0
    %7140 = vmatpush1.bf16.xpose.msra.mxu0 0
    %7141 = vmatprep.subr.bf16.mxu0 0
    %7142 = vmatpush1.bf16.xpose.msra.mxu0 0
    %7143 = vmatprep.subr.bf16.mxu0 0
    %7144 = vmatpush1.bf16.xpose.msra.mxu0 0
    %7145 = vmatprep.subr.bf16.mxu0 0
    %7146 = vmatpush1.bf16.xpose.msra.mxu0 0
    %7147 = vmatprep.subr.bf16.mxu0 0
    %7148 = vmatpush1.bf16.xpose.msra.mxu0 0
    %7149 = vmatprep.mubr.bf16.mxu0 %v1181
    %7150 = vmatmul.mubr.bf16.gmra.mrb[0].mxu0 %v1180
    %v7151 = vpop.f32.mrb[0].mxu0
    %v7152 = vadd.f32 %v7112, %v7151
    %v7153 = vpop.f32.mrb[0].mxu0
    %v7154 = vpop.f32.mrb[0].mxu0
    %v7155 = vpop.f32.mrb[0].mxu0
    %7156 = vdwg.mxu0
    %7157 = vmatprep.subr.bf16.mxu0 %v4160
    %7158 = vmatpush1.bf16.xpose.msra.mxu0 %v4159
    %7159 = vmatprep.subr.bf16.mxu0 %v4250
    %7160 = vmatpush1.bf16.xpose.msra.mxu0 %v4249
    %7161 = vmatprep.subr.bf16.mxu0 %v4340
    %7162 = vmatpush1.bf16.xpose.msra.mxu0 %v4339
    %7163 = vmatprep.subr.bf16.mxu0 %v4430
    %7164 = vmatpush1.bf16.xpose.msra.mxu0 %v4429
    %7165 = vmatprep.subr.bf16.mxu0 %v4520
    %7166 = vmatpush1.bf16.xpose.msra.mxu0 %v4519
    %7167 = vmatprep.subr.bf16.mxu0 %v4610
    %7168 = vmatpush1.bf16.xpose.msra.mxu0 %v4609
    %7169 = vmatprep.subr.bf16.mxu0 %v4700
    %7170 = vmatpush1.bf16.xpose.msra.mxu0 %v4699
    %7171 = vmatprep.subr.bf16.mxu0 %v4790
    %7172 = vmatpush1.bf16.xpose.msra.mxu0 %v4789
    %7173 = vmatprep.subr.bf16.mxu0 0
    %7174 = vmatpush1.bf16.xpose.msra.mxu0 0
    %7175 = vmatprep.subr.bf16.mxu0 0
    %7176 = vmatpush1.bf16.xpose.msra.mxu0 0
    %7177 = vmatprep.subr.bf16.mxu0 0
    %7178 = vmatpush1.bf16.xpose.msra.mxu0 0
    %7179 = vmatprep.subr.bf16.mxu0 0
    %7180 = vmatpush1.bf16.xpose.msra.mxu0 0
    %7181 = vmatprep.subr.bf16.mxu0 0
    %7182 = vmatpush1.bf16.xpose.msra.mxu0 0
    %7183 = vmatprep.subr.bf16.mxu0 0
    %7184 = vmatpush1.bf16.xpose.msra.mxu0 0
    %7185 = vmatprep.subr.bf16.mxu0 0
    %7186 = vmatpush1.bf16.xpose.msra.mxu0 0
    %7187 = vmatprep.subr.bf16.mxu0 0
    %7188 = vmatpush1.bf16.xpose.msra.mxu0 0
    %7189 = vmatprep.mubr.bf16.mxu0 %v1183
    %7190 = vmatmul.mubr.bf16.gmra.mrb[0].mxu0 %v1182
    %v7191 = vpop.f32.mrb[0].mxu0
    %v7192 = vadd.f32 %v7152, %v7191
    %v7193 = vpop.f32.mrb[0].mxu0
    %v7194 = vpop.f32.mrb[0].mxu0
    %v7195 = vpop.f32.mrb[0].mxu0
    %7196 = vdwg.mxu0
    %7197 = vmatprep.subr.bf16.mxu0 %v4162
    %7198 = vmatpush1.bf16.xpose.msra.mxu0 %v4161
    %7199 = vmatprep.subr.bf16.mxu0 %v4252
    %7200 = vmatpush1.bf16.xpose.msra.mxu0 %v4251
    %7201 = vmatprep.subr.bf16.mxu0 %v4342
    %7202 = vmatpush1.bf16.xpose.msra.mxu0 %v4341
    %7203 = vmatprep.subr.bf16.mxu0 %v4432
    %7204 = vmatpush1.bf16.xpose.msra.mxu0 %v4431
    %7205 = vmatprep.subr.bf16.mxu0 %v4522
    %7206 = vmatpush1.bf16.xpose.msra.mxu0 %v4521
    %7207 = vmatprep.subr.bf16.mxu0 %v4612
    %7208 = vmatpush1.bf16.xpose.msra.mxu0 %v4611
    %7209 = vmatprep.subr.bf16.mxu0 %v4702
    %7210 = vmatpush1.bf16.xpose.msra.mxu0 %v4701
    %7211 = vmatprep.subr.bf16.mxu0 %v4792
    %7212 = vmatpush1.bf16.xpose.msra.mxu0 %v4791
    %7213 = vmatprep.subr.bf16.mxu0 0
    %7214 = vmatpush1.bf16.xpose.msra.mxu0 0
    %7215 = vmatprep.subr.bf16.mxu0 0
    %7216 = vmatpush1.bf16.xpose.msra.mxu0 0
    %7217 = vmatprep.subr.bf16.mxu0 0
    %7218 = vmatpush1.bf16.xpose.msra.mxu0 0
    %7219 = vmatprep.subr.bf16.mxu0 0
    %7220 = vmatpush1.bf16.xpose.msra.mxu0 0
    %7221 = vmatprep.subr.bf16.mxu0 0
    %7222 = vmatpush1.bf16.xpose.msra.mxu0 0
    %7223 = vmatprep.subr.bf16.mxu0 0
    %7224 = vmatpush1.bf16.xpose.msra.mxu0 0
    %7225 = vmatprep.subr.bf16.mxu0 0
    %7226 = vmatpush1.bf16.xpose.msra.mxu0 0
    %7227 = vmatprep.subr.bf16.mxu0 0
    %7228 = vmatpush1.bf16.xpose.msra.mxu0 0
    %7229 = vmatprep.mubr.bf16.mxu0 %v1185
    %7230 = vmatmul.mubr.bf16.gmra.mrb[0].mxu0 %v1184
    %v7231 = vpop.f32.mrb[0].mxu0
    %v7232 = vadd.f32 %v7192, %v7231
    %v7233 = vpop.f32.mrb[0].mxu0
    %v7234 = vpop.f32.mrb[0].mxu0
    %v7235 = vpop.f32.mrb[0].mxu0
    %7236 = vdwg.mxu0
    %7237 = vmatprep.subr.bf16.mxu0 %v4164
    %7238 = vmatpush1.bf16.xpose.msra.mxu0 %v4163
    %7239 = vmatprep.subr.bf16.mxu0 %v4254
    %7240 = vmatpush1.bf16.xpose.msra.mxu0 %v4253
    %7241 = vmatprep.subr.bf16.mxu0 %v4344
    %7242 = vmatpush1.bf16.xpose.msra.mxu0 %v4343
    %7243 = vmatprep.subr.bf16.mxu0 %v4434
    %7244 = vmatpush1.bf16.xpose.msra.mxu0 %v4433
    %7245 = vmatprep.subr.bf16.mxu0 %v4524
    %7246 = vmatpush1.bf16.xpose.msra.mxu0 %v4523
    %7247 = vmatprep.subr.bf16.mxu0 %v4614
    %7248 = vmatpush1.bf16.xpose.msra.mxu0 %v4613
    %7249 = vmatprep.subr.bf16.mxu0 %v4704
    %7250 = vmatpush1.bf16.xpose.msra.mxu0 %v4703
    %7251 = vmatprep.subr.bf16.mxu0 %v4794
    %7252 = vmatpush1.bf16.xpose.msra.mxu0 %v4793
    %7253 = vmatprep.subr.bf16.mxu0 0
    %7254 = vmatpush1.bf16.xpose.msra.mxu0 0
    %7255 = vmatprep.subr.bf16.mxu0 0
    %7256 = vmatpush1.bf16.xpose.msra.mxu0 0
    %7257 = vmatprep.subr.bf16.mxu0 0
    %7258 = vmatpush1.bf16.xpose.msra.mxu0 0
    %7259 = vmatprep.subr.bf16.mxu0 0
    %7260 = vmatpush1.bf16.xpose.msra.mxu0 0
    %7261 = vmatprep.subr.bf16.mxu0 0
    %7262 = vmatpush1.bf16.xpose.msra.mxu0 0
    %7263 = vmatprep.subr.bf16.mxu0 0
    %7264 = vmatpush1.bf16.xpose.msra.mxu0 0
    %7265 = vmatprep.subr.bf16.mxu0 0
    %7266 = vmatpush1.bf16.xpose.msra.mxu0 0
    %7267 = vmatprep.subr.bf16.mxu0 0
    %7268 = vmatpush1.bf16.xpose.msra.mxu0 0
    %7269 = vmatprep.mubr.bf16.mxu0 %v1187
    %7270 = vmatmul.mubr.bf16.gmra.mrb[0].mxu0 %v1186
    %v7271 = vpop.f32.mrb[0].mxu0
    %v7272 = vadd.f32 %v7232, %v7271
    %v7273 = vpop.f32.mrb[0].mxu0
    %v7274 = vpop.f32.mrb[0].mxu0
    %v7275 = vpop.f32.mrb[0].mxu0
    %7276 = vdwg.mxu0
    %7277 = vmatprep.subr.bf16.mxu0 %v4166
    %7278 = vmatpush1.bf16.xpose.msra.mxu0 %v4165
    %7279 = vmatprep.subr.bf16.mxu0 %v4256
    %7280 = vmatpush1.bf16.xpose.msra.mxu0 %v4255
    %7281 = vmatprep.subr.bf16.mxu0 %v4346
    %7282 = vmatpush1.bf16.xpose.msra.mxu0 %v4345
    %7283 = vmatprep.subr.bf16.mxu0 %v4436
    %7284 = vmatpush1.bf16.xpose.msra.mxu0 %v4435
    %7285 = vmatprep.subr.bf16.mxu0 %v4526
    %7286 = vmatpush1.bf16.xpose.msra.mxu0 %v4525
    %7287 = vmatprep.subr.bf16.mxu0 %v4616
    %7288 = vmatpush1.bf16.xpose.msra.mxu0 %v4615
    %7289 = vmatprep.subr.bf16.mxu0 %v4706
    %7290 = vmatpush1.bf16.xpose.msra.mxu0 %v4705
    %7291 = vmatprep.subr.bf16.mxu0 %v4796
    %7292 = vmatpush1.bf16.xpose.msra.mxu0 %v4795
    %7293 = vmatprep.subr.bf16.mxu0 0
    %7294 = vmatpush1.bf16.xpose.msra.mxu0 0
    %7295 = vmatprep.subr.bf16.mxu0 0
    %7296 = vmatpush1.bf16.xpose.msra.mxu0 0
    %7297 = vmatprep.subr.bf16.mxu0 0
    %7298 = vmatpush1.bf16.xpose.msra.mxu0 0
    %7299 = vmatprep.subr.bf16.mxu0 0
    %7300 = vmatpush1.bf16.xpose.msra.mxu0 0
    %7301 = vmatprep.subr.bf16.mxu0 0
    %7302 = vmatpush1.bf16.xpose.msra.mxu0 0
    %7303 = vmatprep.subr.bf16.mxu0 0
    %7304 = vmatpush1.bf16.xpose.msra.mxu0 0
    %7305 = vmatprep.subr.bf16.mxu0 0
    %7306 = vmatpush1.bf16.xpose.msra.mxu0 0
    %7307 = vmatprep.subr.bf16.mxu0 0
    %7308 = vmatpush1.bf16.xpose.msra.mxu0 0
    %7309 = vmatprep.mubr.bf16.mxu0 %v1189
    %7310 = vmatmul.mubr.bf16.gmra.mrb[0].mxu0 %v1188
    %v7311 = vpop.f32.mrb[0].mxu0
    %v7312 = vadd.f32 %v7272, %v7311
    %v7313 = vpop.f32.mrb[0].mxu0
    %v7314 = vpop.f32.mrb[0].mxu0
    %v7315 = vpop.f32.mrb[0].mxu0
    %7316 = vdwg.mxu0
    %7317 = vst [vmem:[#allocation2] sm:$0xff] %v7312
    // Predicated region
    $region14: #{edge_classifier_forward.1} parent=1 // pred_check
      _
    $region15: #{edge_classifier_forward.1} parent=1 // pred_check_branch
      %7319 = sbr.rel (0) target = $region17
    $region16: #{edge_classifier_forward.1} parent=1 // pred_region
      %s7321 = ssub.s32 128, 32
      %7322 = vsyncadd [#allocation3], %s7321
      %s7323 = sshll.u32 [#allocation2], 4
      %s7324 = int_to_ptr.vmem [resolvable:$true] %s7323
      %7329 = dma.vmem_to_hbm [thread:$0]  %s7324, 32, %s3, [#allocation3], 32, 32, 2
    $region17: #{edge_classifier_forward.1} parent=1 // pred_fallthru
      _
    // Predicated region
    $region18: #{edge_classifier_forward.1} parent=1 // pred_check
      _
    $region19: #{edge_classifier_forward.1} parent=1 // pred_check_branch
      %7331 = sbr.rel (0) target = $region21
    $region20: #{edge_classifier_forward.1} parent=1 // pred_region
      %7332 = dma.done [#allocation3], 128
    $region21: #{edge_classifier_forward.1} parent=1 // pred_fallthru
      _
    %7333 = vsyncpa [#allocation3], 1

</llo_original>
